<compile_context>
chip_gen: v5e
topology: v5e:2x2
jax: 0.10.0
libtpu: 0.0.40
codegen_flags: <defaults>
</compile_context>

<pallas_src>
import functools

import jax
import jax.numpy as jnp
from jax.experimental import pallas as pl
from jax.experimental.pallas import tpu as pltpu


# bf16 MXU operands (f32 accumulation preserved via preferred_element_type).
MXU_DTYPE = jnp.bfloat16


# ----------------------------------------------------------------------------
# Fused expert-bank kernel: one grid step == one batch element, ALL experts.
# ----------------------------------------------------------------------------
def attention_bank_expert_kernel(x_ref, w_qkv_ref, temp_ref, w_dw_ref, w_proj_ref,
                                 bias_ref, masks_ref, logit_ref, out_ref,
                                 *, img_w, num_experts, roll_mult):
    """x_ref:(1,C,HW)  w_qkv_ref:(NE,3C,C) bf16  temp_ref:(NE,C,1)  w_dw_ref:(NE,C,9)
    w_proj_ref:(NE,C,C) bf16  bias_ref:(C,C)  masks_ref:(9,HW)  logit_ref:(B,NE) SMEM
    out_ref:(1,C,HW) f32."""
    b = pl.program_id(0)
    c = x_ref.shape[1]
    hw = x_ref.shape[2]

    x_mx = x_ref[0].astype(MXU_DTYPE)                       # (C, HW)
    bias = bias_ref[...]                                    # (C, C) f32, 0 / -1e30
    masks = masks_ref[...]                                  # (9, HW) f32

    out_ref[...] = jnp.zeros_like(out_ref)

    for e in range(num_experts):
        @pl.when(logit_ref[b, e] > 0.0)                     # skip dead experts (ReLU zeros)
        def _(e=e):
            # ---- QKV 1x1 conv: (3C, C) @ (C, HW) on the MXU ------------------------
            qkv = jnp.dot(w_qkv_ref[e], x_mx,
                          preferred_element_type=jnp.float32)           # (3C, HW) f32
            q = qkv[0:c]
            k = qkv[c:2 * c]
            v = qkv[2 * c:3 * c]

            # ---- F.normalize(dim=-1): row-wise L2 over HW (rsqrt -> EUP) -----------
            qn = q * jax.lax.rsqrt(jnp.maximum(jnp.sum(q * q, axis=-1, keepdims=True), 1e-24))
            kn = k * jax.lax.rsqrt(jnp.maximum(jnp.sum(k * k, axis=-1, keepdims=True), 1e-24))

            # ---- per-head attention as ONE dense (C, C) matmul + block-diag bias ---
            attn = jax.lax.dot_general(qn.astype(MXU_DTYPE), kn.astype(MXU_DTYPE),
                                       (((1,), (1,)), ((), ())),
                                       preferred_element_type=jnp.float32)   # (C, C)
            attn = attn * temp_ref[e] + bias                 # per-row (per-head) temperature
            m = jnp.max(attn, axis=-1, keepdims=True)
            p = jnp.exp(attn - m)
            attn = p * pl.reciprocal(jnp.sum(p, axis=-1, keepdims=True), approx=True)

            y = jnp.dot(attn.astype(MXU_DTYPE), v.astype(MXU_DTYPE),
                        preferred_element_type=jnp.float32)               # (C, HW) f32

            # ---- 3x3 depthwise conv (padding=1) as 9 lane rotations + masks --------
            # tap(dy,dx)[ch, y*W+x] = y_img[ch, y+dy, x+dx] (zero outside).
            w_dw = w_dw_ref[e]                                            # (C, 9) f32
            terms = []
            tap = 0
            for dy in (-1, 0, 1):
                for dx in (-1, 0, 1):
                    off = dy * img_w + dx
                    if off == 0:
                        shifted = y
                    elif roll_mult is None:
                        shifted = jnp.roll(y, -off, axis=1)               # safe fallback
                    else:
                        shifted = pltpu.roll(y, (roll_mult * off) % hw, axis=1)
                    terms.append(shifted * masks[tap:tap + 1, :] * w_dw[:, tap:tap + 1])
                    tap += 1
            while len(terms) > 1:       # balanced reduce-add: keeps accumulator in vregs
                terms = [terms[i] + terms[i + 1] if i + 1 < len(terms) else terms[i]
                         for i in range(0, len(terms), 2)]
            dw = terms[0]                                                 # (C, HW) f32

            # ---- 1x1 projection with the routing weight folded into (C, C) ---------
            wp = (w_proj_ref[e].astype(jnp.float32) * logit_ref[b, e]).astype(MXU_DTYPE)
            out_ref[0] += jnp.dot(wp, dw.astype(MXU_DTYPE),
                                  preferred_element_type=jnp.float32)


# ----------------------------------------------------------------------------
# Host-side constant builders (constant-folded under jit)
# ----------------------------------------------------------------------------
def _dw_tap_masks(h, w):
    """(9, H*W) validity masks for the 3x3 depthwise taps in flattened layout."""
    idx = jnp.arange(h * w, dtype=jnp.int32)
    xs = idx % w
    ys = idx // w
    rows = []
    for dy in (-1, 0, 1):
        for dx in (-1, 0, 1):
            valid = ((xs + dx >= 0) & (xs + dx < w) &
                     (ys + dy >= 0) & (ys + dy < h))
            rows.append(valid.astype(jnp.float32))
    return jnp.stack(rows)


def _block_diag_attn_bias(c, num_heads):
    """(C, C) additive bias: 0 inside each head's diagonal block, -1e30 elsewhere."""
    d = c // num_heads
    head = jnp.arange(c, dtype=jnp.int32) // d
    same = head[:, None] == head[None, :]
    return jnp.where(same, 0.0, -1e30).astype(jnp.float32)


def _probe_pltpu_roll():
    """Determine pltpu.roll's rotation direction on this backend.

    Returns m such that pltpu.roll(y, (m*off) % n, axis=1)[..., i] == y[..., (i+off) % n],
    or None to fall back to jnp.roll (if pltpu.roll is unavailable or mismatched).
    """
    try:
        x = jnp.arange(8 * 256, dtype=jnp.float32).reshape(8, 256)

        def k(x_ref, o_ref):
            o_ref[...] = pltpu.roll(x_ref[...], 3, 1)

        y = pl.pallas_call(k, out_shape=jax.ShapeDtypeStruct((8, 256), jnp.float32))(x)
        if bool(jnp.array_equal(y, jnp.roll(x, 3, axis=1))):
            return -1          # matches jnp.roll semantics -> use shift = -off
        if bool(jnp.array_equal(y, jnp.roll(x, -3, axis=1))):
            return 1           # opposite convention -> use shift = +off
    except Exception:
        pass
    return None                # fall back to jnp.roll inside the kernel


# ----------------------------------------------------------------------------
# Forward wrapper
# ----------------------------------------------------------------------------
def attention_bank_forward(x, hidden, params, *, num_heads, roll_mult=None):
    b, c, h, w = x.shape
    hw = h * w
    ne = params['w_qkv'].shape[0]
    hd = hidden.shape[1]

    x_flat = x.reshape(b, c, hw)
    hidden2d = hidden.reshape(b, hd)

    # ---- routing in plain XLA (sub-vreg shapes) -------------------------------------
    x_global = jnp.mean(x_flat, axis=-1)                               # AdaptiveAvgPool2d(1)
    pre = jnp.concatenate([x_global, hidden2d], axis=-1) @ params['w1_t'] + params['b1']
    hidden_new = jax.nn.gelu(pre, approximate=False)                   # exact erf GELU
    logit = jnp.maximum(hidden_new @ params['w3_t'] + params['b3'], 0.0)   # (B, NE)

    bias = _block_diag_attn_bias(c, num_heads)                         # (C, C)
    masks = _dw_tap_masks(h, w)                                        # (9, HW)

    kernel = functools.partial(attention_bank_expert_kernel, img_w=w,
                               num_experts=ne, roll_mult=roll_mult)

    # ---- fused expert bank: one launch, grid = (B,), all experts per step ----------
    out_flat = pl.pallas_call(
        kernel,
        out_shape=jax.ShapeDtypeStruct((b, c, hw), jnp.float32),
        grid=(b,),
        in_specs=[
            pl.BlockSpec((1, c, hw), lambda i: (i, 0, 0)),             # x (per batch)
            pl.BlockSpec((ne, 3 * c, c), lambda i: (0, 0, 0)),         # qkv weights (resident)
            pl.BlockSpec((ne, c, 1), lambda i: (0, 0, 0)),             # per-row temperature
            pl.BlockSpec((ne, c, 9), lambda i: (0, 0, 0)),             # depthwise weights
            pl.BlockSpec((ne, c, c), lambda i: (0, 0, 0)),             # projection weights
            pl.BlockSpec((c, c), lambda i: (0, 0)),                    # block-diag bias
            pl.BlockSpec((9, hw), lambda i: (0, 0)),                   # dw boundary masks
            pl.BlockSpec(memory_space=pltpu.MemorySpace.SMEM),         # routing logits
        ],
        out_specs=pl.BlockSpec((1, c, hw), lambda i: (i, 0, 0)),
        compiler_params=pltpu.CompilerParams(
            dimension_semantics=("parallel",)),                        # both TCs on v7x for B>=2
    )(x_flat, params['w_qkv'], params['temp_rows'], params['w_dw'],
      params['w_proj'], bias, masks, logit)

    out = out_flat.reshape(b, c, h, w)
    return out, hidden_new.reshape(b, hd, 1, 1), logit.reshape(b, ne, 1, 1, 1)


# ----------------------------------------------------------------------------
# Plain-JAX reference (direct transcription of the PyTorch module) for self-check
# ----------------------------------------------------------------------------
def attention_bank_reference(x, hidden, params, *, num_heads):
    b, c, h, w = x.shape
    hw = h * w
    ne = params['w_qkv'].shape[0]
    d = c // num_heads

    x_flat = x.reshape(b, c, hw)
    x_global = jnp.mean(x_flat, axis=-1)
    pre = jnp.concatenate([x_global, hidden.reshape(b, -1)], axis=-1) @ params['w1_t'] + params['b1']
    hidden_new = jax.nn.gelu(pre, approximate=False)
    logit = jnp.maximum(hidden_new @ params['w3_t'] + params['b3'], 0.0)

    outs = []
    for e in range(ne):
        w_qkv = params['w_qkv'][e]
        temp = params['temp_rows'][e, :, 0].reshape(num_heads, d)[:, 0]     # (heads,)
        w_dw = params['w_dw'][e].reshape(c, 1, 3, 3)
        w_proj = params['w_proj'][e]

        qkv = jnp.einsum('oc,bcl->bol', w_qkv, x_flat)
        q = qkv[:, 0:c].reshape(b, num_heads, d, hw)
        k = qkv[:, c:2 * c].reshape(b, num_heads, d, hw)
        v = qkv[:, 2 * c:].reshape(b, num_heads, d, hw)
        qn = q / jnp.maximum(jnp.sqrt(jnp.sum(q * q, -1, keepdims=True)), 1e-12)
        kn = k / jnp.maximum(jnp.sqrt(jnp.sum(k * k, -1, keepdims=True)), 1e-12)
        attn = jnp.einsum('bhdl,bhel->bhde', qn, kn) * temp[None, :, None, None]
        attn = jax.nn.softmax(attn, axis=-1)
        y = jnp.einsum('bhde,bhel->bhdl', attn, v).reshape(b, c, h, w)
        y = jax.lax.conv_general_dilated(
            y, w_dw, window_strides=(1, 1), padding=((1, 1), (1, 1)),
            feature_group_count=c, dimension_numbers=('NCHW', 'OIHW', 'NCHW'))
        y = jnp.einsum('oc,bchw->bohw', w_proj, y)
        outs.append(y)

    out_matrix = jnp.stack(outs, axis=1)
    out = jnp.sum(out_matrix * logit[:, :, None, None, None], axis=1)
    return out, hidden_new.reshape(b, -1, 1, 1), logit.reshape(b, ne, 1, 1, 1)


# ----------------------------------------------------------------------------
# Deterministic parameter init (shapes follow the PyTorch __init__; bias=False convs)
# ----------------------------------------------------------------------------
def init_params(key, c, *, num_heads=16, num_experts=3, hidden_dim=16):
    d = c // num_heads
    keys = jax.random.split(key, num_experts + 4)
    w_qkv_l, temp_l, w_dw_l, w_proj_l = [], [], [], []
    for i in range(num_experts):
        k_qkv, k_dw, k_proj = jax.random.split(keys[i], 3)
        w_qkv_l.append(jax.random.normal(k_qkv, (3 * c, c), jnp.float32) * 0.05)   # Conv2d(c,3c,1)
        temp_l.append(jnp.ones((num_heads,), jnp.float32))                         # Parameter(ones(heads,1,1))
        w_dw_l.append(jax.random.normal(k_dw, (c, 3, 3), jnp.float32) * 0.05)      # Conv2d(c,c,3,groups=c)
        w_proj_l.append(jax.random.normal(k_proj, (c, c), jnp.float32) * 0.05)     # Conv2d(c,c,1)

    temps = jnp.stack(temp_l)                                           # (NE, heads)
    w1 = jax.random.normal(keys[num_experts + 0], (hidden_dim, c + hidden_dim), jnp.float32) * 0.05
    b1 = jax.random.normal(keys[num_experts + 1], (hidden_dim,), jnp.float32) * 0.05
    w3 = jax.random.normal(keys[num_experts + 2], (num_experts, hidden_dim), jnp.float32) * 0.05
    # positive-leaning routing bias so some experts are active and some ReLU-gated off
    b3 = jax.random.uniform(keys[num_experts + 3], (num_experts,), jnp.float32, 0.01, 0.10)

    return dict(
        # big MXU weights stored bf16 in HBM (halves weight DMA, feeds MXU directly)
        w_qkv=jnp.stack(w_qkv_l).astype(MXU_DTYPE),                     # (NE, 3C, C)
        temp_rows=jnp.repeat(temps, d, axis=1)[..., None],              # (NE, C, 1) f32
        w_dw=jnp.stack(w_dw_l).reshape(num_experts, c, 9),              # (NE, C, 9) f32 (VPU path)
        w_proj=jnp.stack(w_proj_l).astype(MXU_DTYPE),                   # (NE, C, C)
        w1_t=w1.T, b1=b1.reshape(1, hidden_dim),
        w3_t=w3.T, b3=b3.reshape(1, num_experts),
    )


if __name__ == "__main__":
    B, C, H, W = 2, 64, 16, 16           # C divisible by num_heads=16
    NUM_HEADS = 16
    NUM_EXPERTS = 3                      # ch_exp_list = [1, 2, 3]
    HIDDEN_DIM = 16
    assert C % NUM_HEADS == 0

    key = jax.random.PRNGKey(0)
    k_x, k_h, k_p = jax.random.split(key, 3)
    x = jax.random.normal(k_x, (B, C, H, W), jnp.float32)
    hidden = jax.random.normal(k_h, (B, HIDDEN_DIM, 1, 1), jnp.float32)
    params = init_params(k_p, C, num_heads=NUM_HEADS,
                         num_experts=NUM_EXPERTS, hidden_dim=HIDDEN_DIM)

    # probe pltpu.roll direction once (falls back to jnp.roll if unusable)
    roll_mult = _probe_pltpu_roll()

    fwd = jax.jit(functools.partial(attention_bank_forward,
                                    num_heads=NUM_HEADS, roll_mult=roll_mult))
    out, hidden_new, logit = fwd(x, hidden, params)
    jax.block_until_ready((out, hidden_new, logit))

    assert out.shape == (B, C, H, W)
    assert hidden_new.shape == (B, HIDDEN_DIM, 1, 1)
    assert logit.shape == (B, NUM_EXPERTS, 1, 1, 1)

    # numerical self-check against a plain-JAX transcription of the PyTorch module
    ref_fn = jax.jit(functools.partial(attention_bank_reference, num_heads=NUM_HEADS))
    out_r, hidden_r, logit_r = ref_fn(x, hidden, params)
    jax.block_until_ready((out_r, hidden_r, logit_r))

    # bf16 MXU operands + approx reciprocal => loose output tolerance
    assert jnp.allclose(out, out_r, rtol=2e-2, atol=2e-3), \
        f"max abs diff {float(jnp.max(jnp.abs(out - out_r)))}"
    assert jnp.allclose(hidden_new, hidden_r, rtol=1e-4, atol=1e-5)
    assert jnp.allclose(logit, logit_r, rtol=1e-4, atol=1e-5)

    print("KERNEL_OK")
</pallas_src>

<mosaic_0001>
module attributes {stable_mosaic.version = 11 : i64} {
  func.func @k(%arg0: memref<8x256xf32, #tpu.memory_space<vmem>>, %arg1: memref<8x256xf32, #tpu.memory_space<vmem>>) attributes {dimension_semantics = [], scalar_prefetch = 0 : i64, scratch_operands = 0 : i64, tpu.core_type = #tpu.core_type<tc>} {
    %c0 = arith.constant 0 : index
    %c0_0 = arith.constant 0 : index
    %0 = vector.load %arg0[%c0, %c0_0] : memref<8x256xf32, #tpu.memory_space<vmem>>, vector<8x256xf32>
    %c3_i32 = arith.constant 3 : i32
    %1 = tpu.dynamic_rotate %0 by %c3_i32 dim 1 : vector<8x256xf32>, i32 -> vector<8x256xf32>
    %c0_1 = arith.constant 0 : index
    %c0_2 = arith.constant 0 : index
    %2 = vector.load %arg1[%c0_1, %c0_2] : memref<8x256xf32, #tpu.memory_space<vmem>>, vector<8x256xf32>
    tpu.vector_store %arg1[%c0_1, %c0_2], %1 {strides = array<i32>} : memref<8x256xf32, #tpu.memory_space<vmem>>, vector<8x256xf32>,
    return
  }
}

module attributes {stable_mosaic.version = 11 : i64} {
  func.func @attention_bank_expert_kernel(%arg0: i32, %arg1: memref<1x64x256xf32, #tpu.memory_space<vmem>>, %arg2: memref<3x192x64xbf16, #tpu.memory_space<vmem>>, %arg3: memref<3x64x1xf32, #tpu.memory_space<vmem>>, %arg4: memref<3x64x9xf32, #tpu.memory_space<vmem>>, %arg5: memref<3x64x64xbf16, #tpu.memory_space<vmem>>, %arg6: memref<64x64xf32, #tpu.memory_space<vmem>>, %arg7: memref<9x256xf32, #tpu.memory_space<vmem>>, %arg8: memref<2x3xf32, #tpu.memory_space<smem>>, %arg9: memref<1x64x256xf32, #tpu.memory_space<vmem>>) attributes {dimension_semantics = [#tpu.dimension_semantics<parallel>], iteration_bounds = array<i64: 2>, scalar_prefetch = 0 : i64, scratch_operands = 0 : i64, tpu.core_type = #tpu.core_type<tc>, window_params = [{transform_indices = @transform_0, window_bounds = array<i64: 1, 64, 256>}, {pipeline_mode = #tpu.pipeline_mode<synchronous>, transform_indices = @transform_1, window_bounds = array<i64: 3, 192, 64>}, {pipeline_mode = #tpu.pipeline_mode<synchronous>, transform_indices = @transform_2, window_bounds = array<i64: 3, 64, 1>}, {pipeline_mode = #tpu.pipeline_mode<synchronous>, transform_indices = @transform_3, window_bounds = array<i64: 3, 64, 9>}, {pipeline_mode = #tpu.pipeline_mode<synchronous>, transform_indices = @transform_4, window_bounds = array<i64: 3, 64, 64>}, {pipeline_mode = #tpu.pipeline_mode<synchronous>, transform_indices = @transform_5, window_bounds = array<i64: 64, 64>}, {pipeline_mode = #tpu.pipeline_mode<synchronous>, transform_indices = @transform_6, window_bounds = array<i64: 9, 256>}, {transform_indices = @transform_7, window_bounds = array<i64: 2, 3>}, {transform_indices = @transform_8, window_bounds = array<i64: 1, 64, 256>}]} {
    %c0 = arith.constant 0 : index
    %c0_0 = arith.constant 0 : index
    %c0_1 = arith.constant 0 : index
    %0 = vector.load %arg1[%c0, %c0_0, %c0_1] : memref<1x64x256xf32, #tpu.memory_space<vmem>>, vector<1x64x256xf32>
    %1 = vector.shape_cast %0 : vector<1x64x256xf32> to vector<64x256xf32>
    %2 = arith.truncf %1 : vector<64x256xf32> to vector<64x256xbf16>
    %c0_2 = arith.constant 0 : index
    %c0_3 = arith.constant 0 : index
    %3 = vector.load %arg6[%c0_2, %c0_3] : memref<64x64xf32, #tpu.memory_space<vmem>>, vector<64x64xf32>
    %c0_4 = arith.constant 0 : index
    %c0_5 = arith.constant 0 : index
    %4 = vector.load %arg7[%c0_4, %c0_5] : memref<9x256xf32, #tpu.memory_space<vmem>>, vector<9x256xf32>
    %cst = arith.constant 0.000000e+00 : f32
    %5 = vector.broadcast %cst : f32 to vector<1x64x256xf32>
    %c0_6 = arith.constant 0 : index
    %c0_7 = arith.constant 0 : index
    %c0_8 = arith.constant 0 : index
    %6 = vector.load %arg9[%c0_6, %c0_7, %c0_8] : memref<1x64x256xf32, #tpu.memory_space<vmem>>, vector<1x64x256xf32>
    tpu.vector_store %arg9[%c0_6, %c0_7, %c0_8], %5 {strides = array<i32>} : memref<1x64x256xf32, #tpu.memory_space<vmem>>, vector<1x64x256xf32>,
    %7 = arith.index_cast %arg0 : i32 to index
    %c0_9 = arith.constant 0 : index
    %8 = memref.load %arg8[%7, %c0_9] : memref<2x3xf32, #tpu.memory_space<smem>>
    %cst_10 = arith.constant 0.000000e+00 : f32
    %9 = arith.cmpf ogt, %8, %cst_10 : f32
    %10 = arith.extui %9 : i1 to i32
    %c0_i32 = arith.constant 0 : i32
    %11 = arith.cmpi ne, %10, %c0_i32 : i32
    scf.if %11 {
      %c0_15 = arith.constant 0 : index
      %c0_16 = arith.constant 0 : index
      %c0_17 = arith.constant 0 : index
      %22 = vector.load %arg2[%c0_15, %c0_16, %c0_17] : memref<3x192x64xbf16, #tpu.memory_space<vmem>>, vector<1x192x64xbf16>
      %23 = vector.shape_cast %22 : vector<1x192x64xbf16> to vector<192x64xbf16>
      %cst_18 = arith.constant dense<0.000000e+00> : vector<192x256xf32>
      %24 = tpu.matmul %23, %2, %cst_18 {dimension_numbers = #tpu.dot_dimension_numbers<[1], [0], [0], [1], [0, 0, 1, 1], [], []>} : vector<192x64xbf16>, vector<64x256xbf16>, vector<192x256xf32> -> vector<192x256xf32>
      %25 = vector.extract_strided_slice %24 {offsets = [0, 0], sizes = [64, 256], strides = [1, 1]} : vector<192x256xf32> to vector<64x256xf32>
      %26 = vector.extract_strided_slice %24 {offsets = [64, 0], sizes = [64, 256], strides = [1, 1]} : vector<192x256xf32> to vector<64x256xf32>
      %27 = vector.extract_strided_slice %24 {offsets = [128, 0], sizes = [64, 256], strides = [1, 1]} : vector<192x256xf32> to vector<64x256xf32>
      %28 = arith.mulf %25, %25 : vector<64x256xf32>
      %cst_19 = arith.constant dense<0.000000e+00> : vector<64xf32>
      %29 = vector.multi_reduction <add>, %28, %cst_19 [1] : vector<64x256xf32> to vector<64xf32>
      %30 = vector.shape_cast %29 : vector<64xf32> to vector<64x1xf32>
      %cst_20 = arith.constant 1.000000e-24 : f32
      %31 = vector.broadcast %cst_20 : f32 to vector<64x1xf32>
      %32 = arith.maximumf %30, %31 : vector<64x1xf32>
      %33 = math.rsqrt %32 : vector<64x1xf32>
      %34 = vector.broadcast %33 : vector<64x1xf32> to vector<64x256xf32>
      %35 = arith.mulf %25, %34 : vector<64x256xf32>
      %36 = arith.mulf %26, %26 : vector<64x256xf32>
      %cst_21 = arith.constant dense<0.000000e+00> : vector<64xf32>
      %37 = vector.multi_reduction <add>, %36, %cst_21 [1] : vector<64x256xf32> to vector<64xf32>
      %38 = vector.shape_cast %37 : vector<64xf32> to vector<64x1xf32>
      %cst_22 = arith.constant 1.000000e-24 : f32
      %39 = vector.broadcast %cst_22 : f32 to vector<64x1xf32>
      %40 = arith.maximumf %38, %39 : vector<64x1xf32>
      %41 = math.rsqrt %40 : vector<64x1xf32>
      %42 = vector.broadcast %41 : vector<64x1xf32> to vector<64x256xf32>
      %43 = arith.mulf %26, %42 : vector<64x256xf32>
      %44 = arith.truncf %35 : vector<64x256xf32> to vector<64x256xbf16>
      %45 = arith.truncf %43 : vector<64x256xf32> to vector<64x256xbf16>
      %cst_23 = arith.constant dense<0.000000e+00> : vector<64x64xf32>
      %46 = tpu.matmul %44, %45, %cst_23 {dimension_numbers = #tpu.dot_dimension_numbers<[1], [1], [0], [0], [0, 0, 1, 0], [], []>} : vector<64x256xbf16>, vector<64x256xbf16>, vector<64x64xf32> -> vector<64x64xf32>
      %c0_24 = arith.constant 0 : index
      %c0_25 = arith.constant 0 : index
      %c0_26 = arith.constant 0 : index
      %47 = vector.load %arg3[%c0_24, %c0_25, %c0_26] : memref<3x64x1xf32, #tpu.memory_space<vmem>>, vector<1x64x1xf32>
      %48 = vector.shape_cast %47 : vector<1x64x1xf32> to vector<64x1xf32>
      %49 = vector.broadcast %48 : vector<64x1xf32> to vector<64x64xf32>
      %50 = arith.mulf %46, %49 : vector<64x64xf32>
      %51 = arith.addf %50, %3 : vector<64x64xf32>
      %cst_27 = arith.constant dense<0xFF800000> : vector<64xf32>
      %52 = vector.multi_reduction <maximumf>, %51, %cst_27 [1] : vector<64x64xf32> to vector<64xf32>
      %53 = vector.shape_cast %52 : vector<64xf32> to vector<64x1xf32>
      %54 = vector.broadcast %53 : vector<64x1xf32> to vector<64x64xf32>
      %55 = arith.subf %51, %54 : vector<64x64xf32>
      %56 = math.exp %55 : vector<64x64xf32>
      %cst_28 = arith.constant dense<0.000000e+00> : vector<64xf32>
      %57 = vector.multi_reduction <add>, %56, %cst_28 [1] : vector<64x64xf32> to vector<64xf32>
      %58 = vector.shape_cast %57 : vector<64xf32> to vector<64x1xf32>
      %59 = tpu.reciprocal %58 {approx = true} : vector<64x1xf32> -> vector<64x1xf32>
      %60 = vector.broadcast %59 : vector<64x1xf32> to vector<64x64xf32>
      %61 = arith.mulf %56, %60 : vector<64x64xf32>
      %62 = arith.truncf %61 : vector<64x64xf32> to vector<64x64xbf16>
      %63 = arith.truncf %27 : vector<64x256xf32> to vector<64x256xbf16>
      %cst_29 = arith.constant dense<0.000000e+00> : vector<64x256xf32>
      %64 = tpu.matmul %62, %63, %cst_29 {dimension_numbers = #tpu.dot_dimension_numbers<[1], [0], [0], [1], [0, 0, 1, 1], [], []>} : vector<64x64xbf16>, vector<64x256xbf16>, vector<64x256xf32> -> vector<64x256xf32>
      %c0_30 = arith.constant 0 : index
      %c0_31 = arith.constant 0 : index
      %c0_32 = arith.constant 0 : index
      %65 = vector.load %arg4[%c0_30, %c0_31, %c0_32] : memref<3x64x9xf32, #tpu.memory_space<vmem>>, vector<1x64x9xf32>
      %66 = vector.shape_cast %65 : vector<1x64x9xf32> to vector<64x9xf32>
      %67 = vector.extract_strided_slice %64 {offsets = [0, 239], sizes = [64, 17], strides = [1, 1]} : vector<64x256xf32> to vector<64x17xf32>
      %68 = vector.extract_strided_slice %64 {offsets = [0, 0], sizes = [64, 239], strides = [1, 1]} : vector<64x256xf32> to vector<64x239xf32>
      %69 = tpu.concatenate %67, %68 in 1 : vector<64x17xf32>, vector<64x239xf32> -> vector<64x256xf32>
      %70 = vector.extract_strided_slice %4 {offsets = [0, 0], sizes = [1, 256], strides = [1, 1]} : vector<9x256xf32> to vector<1x256xf32>
      %71 = vector.broadcast %70 : vector<1x256xf32> to vector<64x256xf32>
      %72 = arith.mulf %69, %71 : vector<64x256xf32>
      %73 = vector.extract_strided_slice %66 {offsets = [0, 0], sizes = [64, 1], strides = [1, 1]} : vector<64x9xf32> to vector<64x1xf32>
      %74 = vector.broadcast %73 : vector<64x1xf32> to vector<64x256xf32>
      %75 = arith.mulf %72, %74 : vector<64x256xf32>
      %76 = vector.extract_strided_slice %64 {offsets = [0, 240], sizes = [64, 16], strides = [1, 1]} : vector<64x256xf32> to vector<64x16xf32>
      %77 = vector.extract_strided_slice %64 {offsets = [0, 0], sizes = [64, 240], strides = [1, 1]} : vector<64x256xf32> to vector<64x240xf32>
      %78 = tpu.concatenate %76, %77 in 1 : vector<64x16xf32>, vector<64x240xf32> -> vector<64x256xf32>
      %79 = vector.extract_strided_slice %4 {offsets = [1, 0], sizes = [1, 256], strides = [1, 1]} : vector<9x256xf32> to vector<1x256xf32>
      %80 = vector.broadcast %79 : vector<1x256xf32> to vector<64x256xf32>
      %81 = arith.mulf %78, %80 : vector<64x256xf32>
      %82 = vector.extract_strided_slice %66 {offsets = [0, 1], sizes = [64, 1], strides = [1, 1]} : vector<64x9xf32> to vector<64x1xf32>
      %83 = vector.broadcast %82 : vector<64x1xf32> to vector<64x256xf32>
      %84 = arith.mulf %81, %83 : vector<64x256xf32>
      %85 = vector.extract_strided_slice %64 {offsets = [0, 241], sizes = [64, 15], strides = [1, 1]} : vector<64x256xf32> to vector<64x15xf32>
      %86 = vector.extract_strided_slice %64 {offsets = [0, 0], sizes = [64, 241], strides = [1, 1]} : vector<64x256xf32> to vector<64x241xf32>
      %87 = tpu.concatenate %85, %86 in 1 : vector<64x15xf32>, vector<64x241xf32> -> vector<64x256xf32>
      %88 = vector.extract_strided_slice %4 {offsets = [2, 0], sizes = [1, 256], strides = [1, 1]} : vector<9x256xf32> to vector<1x256xf32>
      %89 = vector.broadcast %88 : vector<1x256xf32> to vector<64x256xf32>
      %90 = arith.mulf %87, %89 : vector<64x256xf32>
      %91 = vector.extract_strided_slice %66 {offsets = [0, 2], sizes = [64, 1], strides = [1, 1]} : vector<64x9xf32> to vector<64x1xf32>
      %92 = vector.broadcast %91 : vector<64x1xf32> to vector<64x256xf32>
      %93 = arith.mulf %90, %92 : vector<64x256xf32>
      %94 = vector.extract_strided_slice %64 {offsets = [0, 255], sizes = [64, 1], strides = [1, 1]} : vector<64x256xf32> to vector<64x1xf32>
      %95 = vector.extract_strided_slice %64 {offsets = [0, 0], sizes = [64, 255], strides = [1, 1]} : vector<64x256xf32> to vector<64x255xf32>
      %96 = tpu.concatenate %94, %95 in 1 : vector<64x1xf32>, vector<64x255xf32> -> vector<64x256xf32>
      %97 = vector.extract_strided_slice %4 {offsets = [3, 0], sizes = [1, 256], strides = [1, 1]} : vector<9x256xf32> to vector<1x256xf32>
      %98 = vector.broadcast %97 : vector<1x256xf32> to vector<64x256xf32>
      %99 = arith.mulf %96, %98 : vector<64x256xf32>
      %100 = vector.extract_strided_slice %66 {offsets = [0, 3], sizes = [64, 1], strides = [1, 1]} : vector<64x9xf32> to vector<64x1xf32>
      %101 = vector.broadcast %100 : vector<64x1xf32> to vector<64x256xf32>
      %102 = arith.mulf %99, %101 : vector<64x256xf32>
      %103 = vector.extract_strided_slice %4 {offsets = [4, 0], sizes = [1, 256], strides = [1, 1]} : vector<9x256xf32> to vector<1x256xf32>
      %104 = vector.broadcast %103 : vector<1x256xf32> to vector<64x256xf32>
      %105 = arith.mulf %64, %104 : vector<64x256xf32>
      %106 = vector.extract_strided_slice %66 {offsets = [0, 4], sizes = [64, 1], strides = [1, 1]} : vector<64x9xf32> to vector<64x1xf32>
      %107 = vector.broadcast %106 : vector<64x1xf32> to vector<64x256xf32>
      %108 = arith.mulf %105, %107 : vector<64x256xf32>
      %109 = vector.extract_strided_slice %64 {offsets = [0, 1], sizes = [64, 255], strides = [1, 1]} : vector<64x256xf32> to vector<64x255xf32>
      %110 = vector.extract_strided_slice %64 {offsets = [0, 0], sizes = [64, 1], strides = [1, 1]} : vector<64x256xf32> to vector<64x1xf32>
      %111 = tpu.concatenate %109, %110 in 1 : vector<64x255xf32>, vector<64x1xf32> -> vector<64x256xf32>
      %112 = vector.extract_strided_slice %4 {offsets = [5, 0], sizes = [1, 256], strides = [1, 1]} : vector<9x256xf32> to vector<1x256xf32>
      %113 = vector.broadcast %112 : vector<1x256xf32> to vector<64x256xf32>
      %114 = arith.mulf %111, %113 : vector<64x256xf32>
      %115 = vector.extract_strided_slice %66 {offsets = [0, 5], sizes = [64, 1], strides = [1, 1]} : vector<64x9xf32> to vector<64x1xf32>
      %116 = vector.broadcast %115 : vector<64x1xf32> to vector<64x256xf32>
      %117 = arith.mulf %114, %116 : vector<64x256xf32>
      %118 = vector.extract_strided_slice %64 {offsets = [0, 15], sizes = [64, 241], strides = [1, 1]} : vector<64x256xf32> to vector<64x241xf32>
      %119 = vector.extract_strided_slice %64 {offsets = [0, 0], sizes = [64, 15], strides = [1, 1]} : vector<64x256xf32> to vector<64x15xf32>
      %120 = tpu.concatenate %118, %119 in 1 : vector<64x241xf32>, vector<64x15xf32> -> vector<64x256xf32>
      %121 = vector.extract_strided_slice %4 {offsets = [6, 0], sizes = [1, 256], strides = [1, 1]} : vector<9x256xf32> to vector<1x256xf32>
      %122 = vector.broadcast %121 : vector<1x256xf32> to vector<64x256xf32>
      %123 = arith.mulf %120, %122 : vector<64x256xf32>
      %124 = vector.extract_strided_slice %66 {offsets = [0, 6], sizes = [64, 1], strides = [1, 1]} : vector<64x9xf32> to vector<64x1xf32>
      %125 = vector.broadcast %124 : vector<64x1xf32> to vector<64x256xf32>
      %126 = arith.mulf %123, %125 : vector<64x256xf32>
      %127 = vector.extract_strided_slice %64 {offsets = [0, 16], sizes = [64, 240], strides = [1, 1]} : vector<64x256xf32> to vector<64x240xf32>
      %128 = vector.extract_strided_slice %64 {offsets = [0, 0], sizes = [64, 16], strides = [1, 1]} : vector<64x256xf32> to vector<64x16xf32>
      %129 = tpu.concatenate %127, %128 in 1 : vector<64x240xf32>, vector<64x16xf32> -> vector<64x256xf32>
      %130 = vector.extract_strided_slice %4 {offsets = [7, 0], sizes = [1, 256], strides = [1, 1]} : vector<9x256xf32> to vector<1x256xf32>
      %131 = vector.broadcast %130 : vector<1x256xf32> to vector<64x256xf32>
      %132 = arith.mulf %129, %131 : vector<64x256xf32>
      %133 = vector.extract_strided_slice %66 {offsets = [0, 7], sizes = [64, 1], strides = [1, 1]} : vector<64x9xf32> to vector<64x1xf32>
      %134 = vector.broadcast %133 : vector<64x1xf32> to vector<64x256xf32>
      %135 = arith.mulf %132, %134 : vector<64x256xf32>
      %136 = vector.extract_strided_slice %64 {offsets = [0, 17], sizes = [64, 239], strides = [1, 1]} : vector<64x256xf32> to vector<64x239xf32>
      %137 = vector.extract_strided_slice %64 {offsets = [0, 0], sizes = [64, 17], strides = [1, 1]} : vector<64x256xf32> to vector<64x17xf32>
      %138 = tpu.concatenate %136, %137 in 1 : vector<64x239xf32>, vector<64x17xf32> -> vector<64x256xf32>
      %139 = vector.extract_strided_slice %4 {offsets = [8, 0], sizes = [1, 256], strides = [1, 1]} : vector<9x256xf32> to vector<1x256xf32>
      %140 = vector.broadcast %139 : vector<1x256xf32> to vector<64x256xf32>
      %141 = arith.mulf %138, %140 : vector<64x256xf32>
      %142 = vector.extract_strided_slice %66 {offsets = [0, 8], sizes = [64, 1], strides = [1, 1]} : vector<64x9xf32> to vector<64x1xf32>
      %143 = vector.broadcast %142 : vector<64x1xf32> to vector<64x256xf32>
      %144 = arith.mulf %141, %143 : vector<64x256xf32>
      %145 = arith.addf %75, %84 : vector<64x256xf32>
      %146 = arith.addf %93, %102 : vector<64x256xf32>
      %147 = arith.addf %108, %117 : vector<64x256xf32>
      %148 = arith.addf %126, %135 : vector<64x256xf32>
      %149 = arith.addf %145, %146 : vector<64x256xf32>
      %150 = arith.addf %147, %148 : vector<64x256xf32>
      %151 = arith.addf %149, %150 : vector<64x256xf32>
      %152 = arith.addf %151, %144 : vector<64x256xf32>
      %c0_33 = arith.constant 0 : index
      %c0_34 = arith.constant 0 : index
      %c0_35 = arith.constant 0 : index
      %153 = vector.load %arg5[%c0_33, %c0_34, %c0_35] : memref<3x64x64xbf16, #tpu.memory_space<vmem>>, vector<1x64x64xbf16>
      %154 = vector.shape_cast %153 : vector<1x64x64xbf16> to vector<64x64xbf16>
      %155 = arith.extf %154 : vector<64x64xbf16> to vector<64x64xf32>
      %156 = arith.index_cast %arg0 : i32 to index
      %c0_36 = arith.constant 0 : index
      %157 = memref.load %arg8[%156, %c0_36] : memref<2x3xf32, #tpu.memory_space<smem>>
      %158 = vector.broadcast %157 : f32 to vector<64x64xf32>
      %159 = arith.mulf %155, %158 : vector<64x64xf32>
      %160 = arith.truncf %159 : vector<64x64xf32> to vector<64x64xbf16>
      %c0_37 = arith.constant 0 : index
      %c0_38 = arith.constant 0 : index
      %c0_39 = arith.constant 0 : index
      %161 = vector.load %arg9[%c0_37, %c0_38, %c0_39] : memref<1x64x256xf32, #tpu.memory_space<vmem>>, vector<1x64x256xf32>
      %162 = vector.shape_cast %161 : vector<1x64x256xf32> to vector<64x256xf32>
      %163 = arith.truncf %152 : vector<64x256xf32> to vector<64x256xbf16>
      %cst_40 = arith.constant dense<0.000000e+00> : vector<64x256xf32>
      %164 = tpu.matmul %160, %163, %cst_40 {dimension_numbers = #tpu.dot_dimension_numbers<[1], [0], [0], [1], [0, 0, 1, 1], [], []>} : vector<64x64xbf16>, vector<64x256xbf16>, vector<64x256xf32> -> vector<64x256xf32>
      %165 = arith.addf %162, %164 : vector<64x256xf32>
      %c0_41 = arith.constant 0 : index
      %c0_42 = arith.constant 0 : index
      %c0_43 = arith.constant 0 : index
      %166 = vector.load %arg9[%c0_41, %c0_42, %c0_43] : memref<1x64x256xf32, #tpu.memory_space<vmem>>, vector<1x64x256xf32>
      %167 = vector.shape_cast %166 : vector<1x64x256xf32> to vector<64x256xf32>
      %168 = vector.shape_cast %165 : vector<64x256xf32> to vector<1x64x256xf32>
      tpu.vector_store %arg9[%c0_41, %c0_42, %c0_43], %168 {strides = array<i32>} : memref<1x64x256xf32, #tpu.memory_space<vmem>>, vector<1x64x256xf32>,
    } else {
    }
    %12 = arith.index_cast %arg0 : i32 to index
    %c1 = arith.constant 1 : index
    %13 = memref.load %arg8[%12, %c1] : memref<2x3xf32, #tpu.memory_space<smem>>
    %cst_11 = arith.constant 0.000000e+00 : f32
    %14 = arith.cmpf ogt, %13, %cst_11 : f32
    %15 = arith.extui %14 : i1 to i32
    %c0_i32_12 = arith.constant 0 : i32
    %16 = arith.cmpi ne, %15, %c0_i32_12 : i32
    scf.if %16 {
      %c1_15 = arith.constant 1 : index
      %c0_16 = arith.constant 0 : index
      %c0_17 = arith.constant 0 : index
      %22 = vector.load %arg2[%c1_15, %c0_16, %c0_17] : memref<3x192x64xbf16, #tpu.memory_space<vmem>>, vector<1x192x64xbf16>
      %23 = vector.shape_cast %22 : vector<1x192x64xbf16> to vector<192x64xbf16>
      %cst_18 = arith.constant dense<0.000000e+00> : vector<192x256xf32>
      %24 = tpu.matmul %23, %2, %cst_18 {dimension_numbers = #tpu.dot_dimension_numbers<[1], [0], [0], [1], [0, 0, 1, 1], [], []>} : vector<192x64xbf16>, vector<64x256xbf16>, vector<192x256xf32> -> vector<192x256xf32>
      %25 = vector.extract_strided_slice %24 {offsets = [0, 0], sizes = [64, 256], strides = [1, 1]} : vector<192x256xf32> to vector<64x256xf32>
      %26 = vector.extract_strided_slice %24 {offsets = [64, 0], sizes = [64, 256], strides = [1, 1]} : vector<192x256xf32> to vector<64x256xf32>
      %27 = vector.extract_strided_slice %24 {offsets = [128, 0], sizes = [64, 256], strides = [1, 1]} : vector<192x256xf32> to vector<64x256xf32>
      %28 = arith.mulf %25, %25 : vector<64x256xf32>
      %cst_19 = arith.constant dense<0.000000e+00> : vector<64xf32>
      %29 = vector.multi_reduction <add>, %28, %cst_19 [1] : vector<64x256xf32> to vector<64xf32>
      %30 = vector.shape_cast %29 : vector<64xf32> to vector<64x1xf32>
      %cst_20 = arith.constant 1.000000e-24 : f32
      %31 = vector.broadcast %cst_20 : f32 to vector<64x1xf32>
      %32 = arith.maximumf %30, %31 : vector<64x1xf32>
      %33 = math.rsqrt %32 : vector<64x1xf32>
      %34 = vector.broadcast %33 : vector<64x1xf32> to vector<64x256xf32>
      %35 = arith.mulf %25, %34 : vector<64x256xf32>
      %36 = arith.mulf %26, %26 : vector<64x256xf32>
      %cst_21 = arith.constant dense<0.000000e+00> : vector<64xf32>
      %37 = vector.multi_reduction <add>, %36, %cst_21 [1] : vector<64x256xf32> to vector<64xf32>
      %38 = vector.shape_cast %37 : vector<64xf32> to vector<64x1xf32>
      %cst_22 = arith.constant 1.000000e-24 : f32
      %39 = vector.broadcast %cst_22 : f32 to vector<64x1xf32>
      %40 = arith.maximumf %38, %39 : vector<64x1xf32>
      %41 = math.rsqrt %40 : vector<64x1xf32>
      %42 = vector.broadcast %41 : vector<64x1xf32> to vector<64x256xf32>
      %43 = arith.mulf %26, %42 : vector<64x256xf32>
      %44 = arith.truncf %35 : vector<64x256xf32> to vector<64x256xbf16>
      %45 = arith.truncf %43 : vector<64x256xf32> to vector<64x256xbf16>
      %cst_23 = arith.constant dense<0.000000e+00> : vector<64x64xf32>
      %46 = tpu.matmul %44, %45, %cst_23 {dimension_numbers = #tpu.dot_dimension_numbers<[1], [1], [0], [0], [0, 0, 1, 0], [], []>} : vector<64x256xbf16>, vector<64x256xbf16>, vector<64x64xf32> -> vector<64x64xf32>
      %c1_24 = arith.constant 1 : index
      %c0_25 = arith.constant 0 : index
      %c0_26 = arith.constant 0 : index
      %47 = vector.load %arg3[%c1_24, %c0_25, %c0_26] : memref<3x64x1xf32, #tpu.memory_space<vmem>>, vector<1x64x1xf32>
      %48 = vector.shape_cast %47 : vector<1x64x1xf32> to vector<64x1xf32>
      %49 = vector.broadcast %48 : vector<64x1xf32> to vector<64x64xf32>
      %50 = arith.mulf %46, %49 : vector<64x64xf32>
      %51 = arith.addf %50, %3 : vector<64x64xf32>
      %cst_27 = arith.constant dense<0xFF800000> : vector<64xf32>
      %52 = vector.multi_reduction <maximumf>, %51, %cst_27 [1] : vector<64x64xf32> to vector<64xf32>
      %53 = vector.shape_cast %52 : vector<64xf32> to vector<64x1xf32>
      %54 = vector.broadcast %53 : vector<64x1xf32> to vector<64x64xf32>
      %55 = arith.subf %51, %54 : vector<64x64xf32>
      %56 = math.exp %55 : vector<64x64xf32>
      %cst_28 = arith.constant dense<0.000000e+00> : vector<64xf32>
      %57 = vector.multi_reduction <add>, %56, %cst_28 [1] : vector<64x64xf32> to vector<64xf32>
      %58 = vector.shape_cast %57 : vector<64xf32> to vector<64x1xf32>
      %59 = tpu.reciprocal %58 {approx = true} : vector<64x1xf32> -> vector<64x1xf32>
      %60 = vector.broadcast %59 : vector<64x1xf32> to vector<64x64xf32>
      %61 = arith.mulf %56, %60 : vector<64x64xf32>
      %62 = arith.truncf %61 : vector<64x64xf32> to vector<64x64xbf16>
      %63 = arith.truncf %27 : vector<64x256xf32> to vector<64x256xbf16>
      %cst_29 = arith.constant dense<0.000000e+00> : vector<64x256xf32>
      %64 = tpu.matmul %62, %63, %cst_29 {dimension_numbers = #tpu.dot_dimension_numbers<[1], [0], [0], [1], [0, 0, 1, 1], [], []>} : vector<64x64xbf16>, vector<64x256xbf16>, vector<64x256xf32> -> vector<64x256xf32>
      %c1_30 = arith.constant 1 : index
      %c0_31 = arith.constant 0 : index
      %c0_32 = arith.constant 0 : index
      %65 = vector.load %arg4[%c1_30, %c0_31, %c0_32] : memref<3x64x9xf32, #tpu.memory_space<vmem>>, vector<1x64x9xf32>
      %66 = vector.shape_cast %65 : vector<1x64x9xf32> to vector<64x9xf32>
      %67 = vector.extract_strided_slice %64 {offsets = [0, 239], sizes = [64, 17], strides = [1, 1]} : vector<64x256xf32> to vector<64x17xf32>
      %68 = vector.extract_strided_slice %64 {offsets = [0, 0], sizes = [64, 239], strides = [1, 1]} : vector<64x256xf32> to vector<64x239xf32>
      %69 = tpu.concatenate %67, %68 in 1 : vector<64x17xf32>, vector<64x239xf32> -> vector<64x256xf32>
      %70 = vector.extract_strided_slice %4 {offsets = [0, 0], sizes = [1, 256], strides = [1, 1]} : vector<9x256xf32> to vector<1x256xf32>
      %71 = vector.broadcast %70 : vector<1x256xf32> to vector<64x256xf32>
      %72 = arith.mulf %69, %71 : vector<64x256xf32>
      %73 = vector.extract_strided_slice %66 {offsets = [0, 0], sizes = [64, 1], strides = [1, 1]} : vector<64x9xf32> to vector<64x1xf32>
      %74 = vector.broadcast %73 : vector<64x1xf32> to vector<64x256xf32>
      %75 = arith.mulf %72, %74 : vector<64x256xf32>
      %76 = vector.extract_strided_slice %64 {offsets = [0, 240], sizes = [64, 16], strides = [1, 1]} : vector<64x256xf32> to vector<64x16xf32>
      %77 = vector.extract_strided_slice %64 {offsets = [0, 0], sizes = [64, 240], strides = [1, 1]} : vector<64x256xf32> to vector<64x240xf32>
      %78 = tpu.concatenate %76, %77 in 1 : vector<64x16xf32>, vector<64x240xf32> -> vector<64x256xf32>
      %79 = vector.extract_strided_slice %4 {offsets = [1, 0], sizes = [1, 256], strides = [1, 1]} : vector<9x256xf32> to vector<1x256xf32>
      %80 = vector.broadcast %79 : vector<1x256xf32> to vector<64x256xf32>
      %81 = arith.mulf %78, %80 : vector<64x256xf32>
      %82 = vector.extract_strided_slice %66 {offsets = [0, 1], sizes = [64, 1], strides = [1, 1]} : vector<64x9xf32> to vector<64x1xf32>
      %83 = vector.broadcast %82 : vector<64x1xf32> to vector<64x256xf32>
      %84 = arith.mulf %81, %83 : vector<64x256xf32>
      %85 = vector.extract_strided_slice %64 {offsets = [0, 241], sizes = [64, 15], strides = [1, 1]} : vector<64x256xf32> to vector<64x15xf32>
      %86 = vector.extract_strided_slice %64 {offsets = [0, 0], sizes = [64, 241], strides = [1, 1]} : vector<64x256xf32> to vector<64x241xf32>
      %87 = tpu.concatenate %85, %86 in 1 : vector<64x15xf32>, vector<64x241xf32> -> vector<64x256xf32>
      %88 = vector.extract_strided_slice %4 {offsets = [2, 0], sizes = [1, 256], strides = [1, 1]} : vector<9x256xf32> to vector<1x256xf32>
      %89 = vector.broadcast %88 : vector<1x256xf32> to vector<64x256xf32>
      %90 = arith.mulf %87, %89 : vector<64x256xf32>
      %91 = vector.extract_strided_slice %66 {offsets = [0, 2], sizes = [64, 1], strides = [1, 1]} : vector<64x9xf32> to vector<64x1xf32>
      %92 = vector.broadcast %91 : vector<64x1xf32> to vector<64x256xf32>
      %93 = arith.mulf %90, %92 : vector<64x256xf32>
      %94 = vector.extract_strided_slice %64 {offsets = [0, 255], sizes = [64, 1], strides = [1, 1]} : vector<64x256xf32> to vector<64x1xf32>
      %95 = vector.extract_strided_slice %64 {offsets = [0, 0], sizes = [64, 255], strides = [1, 1]} : vector<64x256xf32> to vector<64x255xf32>
      %96 = tpu.concatenate %94, %95 in 1 : vector<64x1xf32>, vector<64x255xf32> -> vector<64x256xf32>
      %97 = vector.extract_strided_slice %4 {offsets = [3, 0], sizes = [1, 256], strides = [1, 1]} : vector<9x256xf32> to vector<1x256xf32>
      %98 = vector.broadcast %97 : vector<1x256xf32> to vector<64x256xf32>
      %99 = arith.mulf %96, %98 : vector<64x256xf32>
      %100 = vector.extract_strided_slice %66 {offsets = [0, 3], sizes = [64, 1], strides = [1, 1]} : vector<64x9xf32> to vector<64x1xf32>
      %101 = vector.broadcast %100 : vector<64x1xf32> to vector<64x256xf32>
      %102 = arith.mulf %99, %101 : vector<64x256xf32>
      %103 = vector.extract_strided_slice %4 {offsets = [4, 0], sizes = [1, 256], strides = [1, 1]} : vector<9x256xf32> to vector<1x256xf32>
      %104 = vector.broadcast %103 : vector<1x256xf32> to vector<64x256xf32>
      %105 = arith.mulf %64, %104 : vector<64x256xf32>
      %106 = vector.extract_strided_slice %66 {offsets = [0, 4], sizes = [64, 1], strides = [1, 1]} : vector<64x9xf32> to vector<64x1xf32>
      %107 = vector.broadcast %106 : vector<64x1xf32> to vector<64x256xf32>
      %108 = arith.mulf %105, %107 : vector<64x256xf32>
      %109 = vector.extract_strided_slice %64 {offsets = [0, 1], sizes = [64, 255], strides = [1, 1]} : vector<64x256xf32> to vector<64x255xf32>
      %110 = vector.extract_strided_slice %64 {offsets = [0, 0], sizes = [64, 1], strides = [1, 1]} : vector<64x256xf32> to vector<64x1xf32>
      %111 = tpu.concatenate %109, %110 in 1 : vector<64x255xf32>, vector<64x1xf32> -> vector<64x256xf32>
      %112 = vector.extract_strided_slice %4 {offsets = [5, 0], sizes = [1, 256], strides = [1, 1]} : vector<9x256xf32> to vector<1x256xf32>
      %113 = vector.broadcast %112 : vector<1x256xf32> to vector<64x256xf32>
      %114 = arith.mulf %111, %113 : vector<64x256xf32>
      %115 = vector.extract_strided_slice %66 {offsets = [0, 5], sizes = [64, 1], strides = [1, 1]} : vector<64x9xf32> to vector<64x1xf32>
      %116 = vector.broadcast %115 : vector<64x1xf32> to vector<64x256xf32>
      %117 = arith.mulf %114, %116 : vector<64x256xf32>
      %118 = vector.extract_strided_slice %64 {offsets = [0, 15], sizes = [64, 241], strides = [1, 1]} : vector<64x256xf32> to vector<64x241xf32>
      %119 = vector.extract_strided_slice %64 {offsets = [0, 0], sizes = [64, 15], strides = [1, 1]} : vector<64x256xf32> to vector<64x15xf32>
      %120 = tpu.concatenate %118, %119 in 1 : vector<64x241xf32>, vector<64x15xf32> -> vector<64x256xf32>
      %121 = vector.extract_strided_slice %4 {offsets = [6, 0], sizes = [1, 256], strides = [1, 1]} : vector<9x256xf32> to vector<1x256xf32>
      %122 = vector.broadcast %121 : vector<1x256xf32> to vector<64x256xf32>
      %123 = arith.mulf %120, %122 : vector<64x256xf32>
      %124 = vector.extract_strided_slice %66 {offsets = [0, 6], sizes = [64, 1], strides = [1, 1]} : vector<64x9xf32> to vector<64x1xf32>
      %125 = vector.broadcast %124 : vector<64x1xf32> to vector<64x256xf32>
      %126 = arith.mulf %123, %125 : vector<64x256xf32>
      %127 = vector.extract_strided_slice %64 {offsets = [0, 16], sizes = [64, 240], strides = [1, 1]} : vector<64x256xf32> to vector<64x240xf32>
      %128 = vector.extract_strided_slice %64 {offsets = [0, 0], sizes = [64, 16], strides = [1, 1]} : vector<64x256xf32> to vector<64x16xf32>
      %129 = tpu.concatenate %127, %128 in 1 : vector<64x240xf32>, vector<64x16xf32> -> vector<64x256xf32>
      %130 = vector.extract_strided_slice %4 {offsets = [7, 0], sizes = [1, 256], strides = [1, 1]} : vector<9x256xf32> to vector<1x256xf32>
      %131 = vector.broadcast %130 : vector<1x256xf32> to vector<64x256xf32>
      %132 = arith.mulf %129, %131 : vector<64x256xf32>
      %133 = vector.extract_strided_slice %66 {offsets = [0, 7], sizes = [64, 1], strides = [1, 1]} : vector<64x9xf32> to vector<64x1xf32>
      %134 = vector.broadcast %133 : vector<64x1xf32> to vector<64x256xf32>
      %135 = arith.mulf %132, %134 : vector<64x256xf32>
      %136 = vector.extract_strided_slice %64 {offsets = [0, 17], sizes = [64, 239], strides = [1, 1]} : vector<64x256xf32> to vector<64x239xf32>
      %137 = vector.extract_strided_slice %64 {offsets = [0, 0], sizes = [64, 17], strides = [1, 1]} : vector<64x256xf32> to vector<64x17xf32>
      %138 = tpu.concatenate %136, %137 in 1 : vector<64x239xf32>, vector<64x17xf32> -> vector<64x256xf32>
      %139 = vector.extract_strided_slice %4 {offsets = [8, 0], sizes = [1, 256], strides = [1, 1]} : vector<9x256xf32> to vector<1x256xf32>
      %140 = vector.broadcast %139 : vector<1x256xf32> to vector<64x256xf32>
      %141 = arith.mulf %138, %140 : vector<64x256xf32>
      %142 = vector.extract_strided_slice %66 {offsets = [0, 8], sizes = [64, 1], strides = [1, 1]} : vector<64x9xf32> to vector<64x1xf32>
      %143 = vector.broadcast %142 : vector<64x1xf32> to vector<64x256xf32>
      %144 = arith.mulf %141, %143 : vector<64x256xf32>
      %145 = arith.addf %75, %84 : vector<64x256xf32>
      %146 = arith.addf %93, %102 : vector<64x256xf32>
      %147 = arith.addf %108, %117 : vector<64x256xf32>
      %148 = arith.addf %126, %135 : vector<64x256xf32>
      %149 = arith.addf %145, %146 : vector<64x256xf32>
      %150 = arith.addf %147, %148 : vector<64x256xf32>
      %151 = arith.addf %149, %150 : vector<64x256xf32>
      %152 = arith.addf %151, %144 : vector<64x256xf32>
      %c1_33 = arith.constant 1 : index
      %c0_34 = arith.constant 0 : index
      %c0_35 = arith.constant 0 : index
      %153 = vector.load %arg5[%c1_33, %c0_34, %c0_35] : memref<3x64x64xbf16, #tpu.memory_space<vmem>>, vector<1x64x64xbf16>
      %154 = vector.shape_cast %153 : vector<1x64x64xbf16> to vector<64x64xbf16>
      %155 = arith.extf %154 : vector<64x64xbf16> to vector<64x64xf32>
      %156 = arith.index_cast %arg0 : i32 to index
      %c1_36 = arith.constant 1 : index
      %157 = memref.load %arg8[%156, %c1_36] : memref<2x3xf32, #tpu.memory_space<smem>>
      %158 = vector.broadcast %157 : f32 to vector<64x64xf32>
      %159 = arith.mulf %155, %158 : vector<64x64xf32>
      %160 = arith.truncf %159 : vector<64x64xf32> to vector<64x64xbf16>
      %c0_37 = arith.constant 0 : index
      %c0_38 = arith.constant 0 : index
      %c0_39 = arith.constant 0 : index
      %161 = vector.load %arg9[%c0_37, %c0_38, %c0_39] : memref<1x64x256xf32, #tpu.memory_space<vmem>>, vector<1x64x256xf32>
      %162 = vector.shape_cast %161 : vector<1x64x256xf32> to vector<64x256xf32>
      %163 = arith.truncf %152 : vector<64x256xf32> to vector<64x256xbf16>
      %cst_40 = arith.constant dense<0.000000e+00> : vector<64x256xf32>
      %164 = tpu.matmul %160, %163, %cst_40 {dimension_numbers = #tpu.dot_dimension_numbers<[1], [0], [0], [1], [0, 0, 1, 1], [], []>} : vector<64x64xbf16>, vector<64x256xbf16>, vector<64x256xf32> -> vector<64x256xf32>
      %165 = arith.addf %162, %164 : vector<64x256xf32>
      %c0_41 = arith.constant 0 : index
      %c0_42 = arith.constant 0 : index
      %c0_43 = arith.constant 0 : index
      %166 = vector.load %arg9[%c0_41, %c0_42, %c0_43] : memref<1x64x256xf32, #tpu.memory_space<vmem>>, vector<1x64x256xf32>
      %167 = vector.shape_cast %166 : vector<1x64x256xf32> to vector<64x256xf32>
      %168 = vector.shape_cast %165 : vector<64x256xf32> to vector<1x64x256xf32>
      tpu.vector_store %arg9[%c0_41, %c0_42, %c0_43], %168 {strides = array<i32>} : memref<1x64x256xf32, #tpu.memory_space<vmem>>, vector<1x64x256xf32>,
    } else {
    }
    %17 = arith.index_cast %arg0 : i32 to index
    %c2 = arith.constant 2 : index
    %18 = memref.load %arg8[%17, %c2] : memref<2x3xf32, #tpu.memory_space<smem>>
    %cst_13 = arith.constant 0.000000e+00 : f32
    %19 = arith.cmpf ogt, %18, %cst_13 : f32
    %20 = arith.extui %19 : i1 to i32
    %c0_i32_14 = arith.constant 0 : i32
    %21 = arith.cmpi ne, %20, %c0_i32_14 : i32
    scf.if %21 {
      %c2_15 = arith.constant 2 : index
      %c0_16 = arith.constant 0 : index
      %c0_17 = arith.constant 0 : index
      %22 = vector.load %arg2[%c2_15, %c0_16, %c0_17] : memref<3x192x64xbf16, #tpu.memory_space<vmem>>, vector<1x192x64xbf16>
      %23 = vector.shape_cast %22 : vector<1x192x64xbf16> to vector<192x64xbf16>
      %cst_18 = arith.constant dense<0.000000e+00> : vector<192x256xf32>
      %24 = tpu.matmul %23, %2, %cst_18 {dimension_numbers = #tpu.dot_dimension_numbers<[1], [0], [0], [1], [0, 0, 1, 1], [], []>} : vector<192x64xbf16>, vector<64x256xbf16>, vector<192x256xf32> -> vector<192x256xf32>
      %25 = vector.extract_strided_slice %24 {offsets = [0, 0], sizes = [64, 256], strides = [1, 1]} : vector<192x256xf32> to vector<64x256xf32>
      %26 = vector.extract_strided_slice %24 {offsets = [64, 0], sizes = [64, 256], strides = [1, 1]} : vector<192x256xf32> to vector<64x256xf32>
      %27 = vector.extract_strided_slice %24 {offsets = [128, 0], sizes = [64, 256], strides = [1, 1]} : vector<192x256xf32> to vector<64x256xf32>
      %28 = arith.mulf %25, %25 : vector<64x256xf32>
      %cst_19 = arith.constant dense<0.000000e+00> : vector<64xf32>
      %29 = vector.multi_reduction <add>, %28, %cst_19 [1] : vector<64x256xf32> to vector<64xf32>
      %30 = vector.shape_cast %29 : vector<64xf32> to vector<64x1xf32>
      %cst_20 = arith.constant 1.000000e-24 : f32
      %31 = vector.broadcast %cst_20 : f32 to vector<64x1xf32>
      %32 = arith.maximumf %30, %31 : vector<64x1xf32>
      %33 = math.rsqrt %32 : vector<64x1xf32>
      %34 = vector.broadcast %33 : vector<64x1xf32> to vector<64x256xf32>
      %35 = arith.mulf %25, %34 : vector<64x256xf32>
      %36 = arith.mulf %26, %26 : vector<64x256xf32>
      %cst_21 = arith.constant dense<0.000000e+00> : vector<64xf32>
      %37 = vector.multi_reduction <add>, %36, %cst_21 [1] : vector<64x256xf32> to vector<64xf32>
      %38 = vector.shape_cast %37 : vector<64xf32> to vector<64x1xf32>
      %cst_22 = arith.constant 1.000000e-24 : f32
      %39 = vector.broadcast %cst_22 : f32 to vector<64x1xf32>
      %40 = arith.maximumf %38, %39 : vector<64x1xf32>
      %41 = math.rsqrt %40 : vector<64x1xf32>
      %42 = vector.broadcast %41 : vector<64x1xf32> to vector<64x256xf32>
      %43 = arith.mulf %26, %42 : vector<64x256xf32>
      %44 = arith.truncf %35 : vector<64x256xf32> to vector<64x256xbf16>
      %45 = arith.truncf %43 : vector<64x256xf32> to vector<64x256xbf16>
      %cst_23 = arith.constant dense<0.000000e+00> : vector<64x64xf32>
      %46 = tpu.matmul %44, %45, %cst_23 {dimension_numbers = #tpu.dot_dimension_numbers<[1], [1], [0], [0], [0, 0, 1, 0], [], []>} : vector<64x256xbf16>, vector<64x256xbf16>, vector<64x64xf32> -> vector<64x64xf32>
      %c2_24 = arith.constant 2 : index
      %c0_25 = arith.constant 0 : index
      %c0_26 = arith.constant 0 : index
      %47 = vector.load %arg3[%c2_24, %c0_25, %c0_26] : memref<3x64x1xf32, #tpu.memory_space<vmem>>, vector<1x64x1xf32>
      %48 = vector.shape_cast %47 : vector<1x64x1xf32> to vector<64x1xf32>
      %49 = vector.broadcast %48 : vector<64x1xf32> to vector<64x64xf32>
      %50 = arith.mulf %46, %49 : vector<64x64xf32>
      %51 = arith.addf %50, %3 : vector<64x64xf32>
      %cst_27 = arith.constant dense<0xFF800000> : vector<64xf32>
      %52 = vector.multi_reduction <maximumf>, %51, %cst_27 [1] : vector<64x64xf32> to vector<64xf32>
      %53 = vector.shape_cast %52 : vector<64xf32> to vector<64x1xf32>
      %54 = vector.broadcast %53 : vector<64x1xf32> to vector<64x64xf32>
      %55 = arith.subf %51, %54 : vector<64x64xf32>
      %56 = math.exp %55 : vector<64x64xf32>
      %cst_28 = arith.constant dense<0.000000e+00> : vector<64xf32>
      %57 = vector.multi_reduction <add>, %56, %cst_28 [1] : vector<64x64xf32> to vector<64xf32>
      %58 = vector.shape_cast %57 : vector<64xf32> to vector<64x1xf32>
      %59 = tpu.reciprocal %58 {approx = true} : vector<64x1xf32> -> vector<64x1xf32>
      %60 = vector.broadcast %59 : vector<64x1xf32> to vector<64x64xf32>
      %61 = arith.mulf %56, %60 : vector<64x64xf32>
      %62 = arith.truncf %61 : vector<64x64xf32> to vector<64x64xbf16>
      %63 = arith.truncf %27 : vector<64x256xf32> to vector<64x256xbf16>
      %cst_29 = arith.constant dense<0.000000e+00> : vector<64x256xf32>
      %64 = tpu.matmul %62, %63, %cst_29 {dimension_numbers = #tpu.dot_dimension_numbers<[1], [0], [0], [1], [0, 0, 1, 1], [], []>} : vector<64x64xbf16>, vector<64x256xbf16>, vector<64x256xf32> -> vector<64x256xf32>
      %c2_30 = arith.constant 2 : index
      %c0_31 = arith.constant 0 : index
      %c0_32 = arith.constant 0 : index
      %65 = vector.load %arg4[%c2_30, %c0_31, %c0_32] : memref<3x64x9xf32, #tpu.memory_space<vmem>>, vector<1x64x9xf32>
      %66 = vector.shape_cast %65 : vector<1x64x9xf32> to vector<64x9xf32>
      %67 = vector.extract_strided_slice %64 {offsets = [0, 239], sizes = [64, 17], strides = [1, 1]} : vector<64x256xf32> to vector<64x17xf32>
      %68 = vector.extract_strided_slice %64 {offsets = [0, 0], sizes = [64, 239], strides = [1, 1]} : vector<64x256xf32> to vector<64x239xf32>
      %69 = tpu.concatenate %67, %68 in 1 : vector<64x17xf32>, vector<64x239xf32> -> vector<64x256xf32>
      %70 = vector.extract_strided_slice %4 {offsets = [0, 0], sizes = [1, 256], strides = [1, 1]} : vector<9x256xf32> to vector<1x256xf32>
      %71 = vector.broadcast %70 : vector<1x256xf32> to vector<64x256xf32>
      %72 = arith.mulf %69, %71 : vector<64x256xf32>
      %73 = vector.extract_strided_slice %66 {offsets = [0, 0], sizes = [64, 1], strides = [1, 1]} : vector<64x9xf32> to vector<64x1xf32>
      %74 = vector.broadcast %73 : vector<64x1xf32> to vector<64x256xf32>
      %75 = arith.mulf %72, %74 : vector<64x256xf32>
      %76 = vector.extract_strided_slice %64 {offsets = [0, 240], sizes = [64, 16], strides = [1, 1]} : vector<64x256xf32> to vector<64x16xf32>
      %77 = vector.extract_strided_slice %64 {offsets = [0, 0], sizes = [64, 240], strides = [1, 1]} : vector<64x256xf32> to vector<64x240xf32>
      %78 = tpu.concatenate %76, %77 in 1 : vector<64x16xf32>, vector<64x240xf32> -> vector<64x256xf32>
      %79 = vector.extract_strided_slice %4 {offsets = [1, 0], sizes = [1, 256], strides = [1, 1]} : vector<9x256xf32> to vector<1x256xf32>
      %80 = vector.broadcast %79 : vector<1x256xf32> to vector<64x256xf32>
      %81 = arith.mulf %78, %80 : vector<64x256xf32>
      %82 = vector.extract_strided_slice %66 {offsets = [0, 1], sizes = [64, 1], strides = [1, 1]} : vector<64x9xf32> to vector<64x1xf32>
      %83 = vector.broadcast %82 : vector<64x1xf32> to vector<64x256xf32>
      %84 = arith.mulf %81, %83 : vector<64x256xf32>
      %85 = vector.extract_strided_slice %64 {offsets = [0, 241], sizes = [64, 15], strides = [1, 1]} : vector<64x256xf32> to vector<64x15xf32>
      %86 = vector.extract_strided_slice %64 {offsets = [0, 0], sizes = [64, 241], strides = [1, 1]} : vector<64x256xf32> to vector<64x241xf32>
      %87 = tpu.concatenate %85, %86 in 1 : vector<64x15xf32>, vector<64x241xf32> -> vector<64x256xf32>
      %88 = vector.extract_strided_slice %4 {offsets = [2, 0], sizes = [1, 256], strides = [1, 1]} : vector<9x256xf32> to vector<1x256xf32>
      %89 = vector.broadcast %88 : vector<1x256xf32> to vector<64x256xf32>
      %90 = arith.mulf %87, %89 : vector<64x256xf32>
      %91 = vector.extract_strided_slice %66 {offsets = [0, 2], sizes = [64, 1], strides = [1, 1]} : vector<64x9xf32> to vector<64x1xf32>
      %92 = vector.broadcast %91 : vector<64x1xf32> to vector<64x256xf32>
      %93 = arith.mulf %90, %92 : vector<64x256xf32>
      %94 = vector.extract_strided_slice %64 {offsets = [0, 255], sizes = [64, 1], strides = [1, 1]} : vector<64x256xf32> to vector<64x1xf32>
      %95 = vector.extract_strided_slice %64 {offsets = [0, 0], sizes = [64, 255], strides = [1, 1]} : vector<64x256xf32> to vector<64x255xf32>
      %96 = tpu.concatenate %94, %95 in 1 : vector<64x1xf32>, vector<64x255xf32> -> vector<64x256xf32>
      %97 = vector.extract_strided_slice %4 {offsets = [3, 0], sizes = [1, 256], strides = [1, 1]} : vector<9x256xf32> to vector<1x256xf32>
      %98 = vector.broadcast %97 : vector<1x256xf32> to vector<64x256xf32>
      %99 = arith.mulf %96, %98 : vector<64x256xf32>
      %100 = vector.extract_strided_slice %66 {offsets = [0, 3], sizes = [64, 1], strides = [1, 1]} : vector<64x9xf32> to vector<64x1xf32>
      %101 = vector.broadcast %100 : vector<64x1xf32> to vector<64x256xf32>
      %102 = arith.mulf %99, %101 : vector<64x256xf32>
      %103 = vector.extract_strided_slice %4 {offsets = [4, 0], sizes = [1, 256], strides = [1, 1]} : vector<9x256xf32> to vector<1x256xf32>
      %104 = vector.broadcast %103 : vector<1x256xf32> to vector<64x256xf32>
      %105 = arith.mulf %64, %104 : vector<64x256xf32>
      %106 = vector.extract_strided_slice %66 {offsets = [0, 4], sizes = [64, 1], strides = [1, 1]} : vector<64x9xf32> to vector<64x1xf32>
      %107 = vector.broadcast %106 : vector<64x1xf32> to vector<64x256xf32>
      %108 = arith.mulf %105, %107 : vector<64x256xf32>
      %109 = vector.extract_strided_slice %64 {offsets = [0, 1], sizes = [64, 255], strides = [1, 1]} : vector<64x256xf32> to vector<64x255xf32>
      %110 = vector.extract_strided_slice %64 {offsets = [0, 0], sizes = [64, 1], strides = [1, 1]} : vector<64x256xf32> to vector<64x1xf32>
      %111 = tpu.concatenate %109, %110 in 1 : vector<64x255xf32>, vector<64x1xf32> -> vector<64x256xf32>
      %112 = vector.extract_strided_slice %4 {offsets = [5, 0], sizes = [1, 256], strides = [1, 1]} : vector<9x256xf32> to vector<1x256xf32>
      %113 = vector.broadcast %112 : vector<1x256xf32> to vector<64x256xf32>
      %114 = arith.mulf %111, %113 : vector<64x256xf32>
      %115 = vector.extract_strided_slice %66 {offsets = [0, 5], sizes = [64, 1], strides = [1, 1]} : vector<64x9xf32> to vector<64x1xf32>
      %116 = vector.broadcast %115 : vector<64x1xf32> to vector<64x256xf32>
      %117 = arith.mulf %114, %116 : vector<64x256xf32>
      %118 = vector.extract_strided_slice %64 {offsets = [0, 15], sizes = [64, 241], strides = [1, 1]} : vector<64x256xf32> to vector<64x241xf32>
      %119 = vector.extract_strided_slice %64 {offsets = [0, 0], sizes = [64, 15], strides = [1, 1]} : vector<64x256xf32> to vector<64x15xf32>
      %120 = tpu.concatenate %118, %119 in 1 : vector<64x241xf32>, vector<64x15xf32> -> vector<64x256xf32>
      %121 = vector.extract_strided_slice %4 {offsets = [6, 0], sizes = [1, 256], strides = [1, 1]} : vector<9x256xf32> to vector<1x256xf32>
      %122 = vector.broadcast %121 : vector<1x256xf32> to vector<64x256xf32>
      %123 = arith.mulf %120, %122 : vector<64x256xf32>
      %124 = vector.extract_strided_slice %66 {offsets = [0, 6], sizes = [64, 1], strides = [1, 1]} : vector<64x9xf32> to vector<64x1xf32>
      %125 = vector.broadcast %124 : vector<64x1xf32> to vector<64x256xf32>
      %126 = arith.mulf %123, %125 : vector<64x256xf32>
      %127 = vector.extract_strided_slice %64 {offsets = [0, 16], sizes = [64, 240], strides = [1, 1]} : vector<64x256xf32> to vector<64x240xf32>
      %128 = vector.extract_strided_slice %64 {offsets = [0, 0], sizes = [64, 16], strides = [1, 1]} : vector<64x256xf32> to vector<64x16xf32>
      %129 = tpu.concatenate %127, %128 in 1 : vector<64x240xf32>, vector<64x16xf32> -> vector<64x256xf32>
      %130 = vector.extract_strided_slice %4 {offsets = [7, 0], sizes = [1, 256], strides = [1, 1]} : vector<9x256xf32> to vector<1x256xf32>
      %131 = vector.broadcast %130 : vector<1x256xf32> to vector<64x256xf32>
      %132 = arith.mulf %129, %131 : vector<64x256xf32>
      %133 = vector.extract_strided_slice %66 {offsets = [0, 7], sizes = [64, 1], strides = [1, 1]} : vector<64x9xf32> to vector<64x1xf32>
      %134 = vector.broadcast %133 : vector<64x1xf32> to vector<64x256xf32>
      %135 = arith.mulf %132, %134 : vector<64x256xf32>
      %136 = vector.extract_strided_slice %64 {offsets = [0, 17], sizes = [64, 239], strides = [1, 1]} : vector<64x256xf32> to vector<64x239xf32>
      %137 = vector.extract_strided_slice %64 {offsets = [0, 0], sizes = [64, 17], strides = [1, 1]} : vector<64x256xf32> to vector<64x17xf32>
      %138 = tpu.concatenate %136, %137 in 1 : vector<64x239xf32>, vector<64x17xf32> -> vector<64x256xf32>
      %139 = vector.extract_strided_slice %4 {offsets = [8, 0], sizes = [1, 256], strides = [1, 1]} : vector<9x256xf32> to vector<1x256xf32>
      %140 = vector.broadcast %139 : vector<1x256xf32> to vector<64x256xf32>
      %141 = arith.mulf %138, %140 : vector<64x256xf32>
      %142 = vector.extract_strided_slice %66 {offsets = [0, 8], sizes = [64, 1], strides = [1, 1]} : vector<64x9xf32> to vector<64x1xf32>
      %143 = vector.broadcast %142 : vector<64x1xf32> to vector<64x256xf32>
      %144 = arith.mulf %141, %143 : vector<64x256xf32>
      %145 = arith.addf %75, %84 : vector<64x256xf32>
      %146 = arith.addf %93, %102 : vector<64x256xf32>
      %147 = arith.addf %108, %117 : vector<64x256xf32>
      %148 = arith.addf %126, %135 : vector<64x256xf32>
      %149 = arith.addf %145, %146 : vector<64x256xf32>
      %150 = arith.addf %147, %148 : vector<64x256xf32>
      %151 = arith.addf %149, %150 : vector<64x256xf32>
      %152 = arith.addf %151, %144 : vector<64x256xf32>
      %c2_33 = arith.constant 2 : index
      %c0_34 = arith.constant 0 : index
      %c0_35 = arith.constant 0 : index
      %153 = vector.load %arg5[%c2_33, %c0_34, %c0_35] : memref<3x64x64xbf16, #tpu.memory_space<vmem>>, vector<1x64x64xbf16>
      %154 = vector.shape_cast %153 : vector<1x64x64xbf16> to vector<64x64xbf16>
      %155 = arith.extf %154 : vector<64x64xbf16> to vector<64x64xf32>
      %156 = arith.index_cast %arg0 : i32 to index
      %c2_36 = arith.constant 2 : index
      %157 = memref.load %arg8[%156, %c2_36] : memref<2x3xf32, #tpu.memory_space<smem>>
      %158 = vector.broadcast %157 : f32 to vector<64x64xf32>
      %159 = arith.mulf %155, %158 : vector<64x64xf32>
      %160 = arith.truncf %159 : vector<64x64xf32> to vector<64x64xbf16>
      %c0_37 = arith.constant 0 : index
      %c0_38 = arith.constant 0 : index
      %c0_39 = arith.constant 0 : index
      %161 = vector.load %arg9[%c0_37, %c0_38, %c0_39] : memref<1x64x256xf32, #tpu.memory_space<vmem>>, vector<1x64x256xf32>
      %162 = vector.shape_cast %161 : vector<1x64x256xf32> to vector<64x256xf32>
      %163 = arith.truncf %152 : vector<64x256xf32> to vector<64x256xbf16>
      %cst_40 = arith.constant dense<0.000000e+00> : vector<64x256xf32>
      %164 = tpu.matmul %160, %163, %cst_40 {dimension_numbers = #tpu.dot_dimension_numbers<[1], [0], [0], [1], [0, 0, 1, 1], [], []>} : vector<64x64xbf16>, vector<64x256xbf16>, vector<64x256xf32> -> vector<64x256xf32>
      %165 = arith.addf %162, %164 : vector<64x256xf32>
      %c0_41 = arith.constant 0 : index
      %c0_42 = arith.constant 0 : index
      %c0_43 = arith.constant 0 : index
      %166 = vector.load %arg9[%c0_41, %c0_42, %c0_43] : memref<1x64x256xf32, #tpu.memory_space<vmem>>, vector<1x64x256xf32>
      %167 = vector.shape_cast %166 : vector<1x64x256xf32> to vector<64x256xf32>
      %168 = vector.shape_cast %165 : vector<64x256xf32> to vector<1x64x256xf32>
      tpu.vector_store %arg9[%c0_41, %c0_42, %c0_43], %168 {strides = array<i32>} : memref<1x64x256xf32, #tpu.memory_space<vmem>>, vector<1x64x256xf32>,
    } else {
    }
    return
  }
  func.func @transform_0(%arg0: i32) -> (i32, i32, i32) {
    %c0_i32 = arith.constant 0 : i32
    %c0_i32_0 = arith.constant 0 : i32
    %c0_i32_1 = arith.constant 0 : i32
    return %arg0, %c0_i32, %c0_i32_0 : i32, i32, i32
  }
  func.func @transform_1(%arg0: i32) -> (i32, i32, i32) {
    %c0_i32 = arith.constant 0 : i32
    %c0_i32_0 = arith.constant 0 : i32
    %c0_i32_1 = arith.constant 0 : i32
    %c0_i32_2 = arith.constant 0 : i32
    return %c0_i32, %c0_i32_0, %c0_i32_1 : i32, i32, i32
  }
  func.func @transform_2(%arg0: i32) -> (i32, i32, i32) {
    %c0_i32 = arith.constant 0 : i32
    %c0_i32_0 = arith.constant 0 : i32
    %c0_i32_1 = arith.constant 0 : i32
    %c0_i32_2 = arith.constant 0 : i32
    return %c0_i32, %c0_i32_0, %c0_i32_1 : i32, i32, i32
  }
  func.func @transform_3(%arg0: i32) -> (i32, i32, i32) {
    %c0_i32 = arith.constant 0 : i32
    %c0_i32_0 = arith.constant 0 : i32
    %c0_i32_1 = arith.constant 0 : i32
    %c0_i32_2 = arith.constant 0 : i32
    return %c0_i32, %c0_i32_0, %c0_i32_1 : i32, i32, i32
  }
  func.func @transform_4(%arg0: i32) -> (i32, i32, i32) {
    %c0_i32 = arith.constant 0 : i32
    %c0_i32_0 = arith.constant 0 : i32
    %c0_i32_1 = arith.constant 0 : i32
    %c0_i32_2 = arith.constant 0 : i32
    return %c0_i32, %c0_i32_0, %c0_i32_1 : i32, i32, i32
  }
  func.func @transform_5(%arg0: i32) -> (i32, i32) {
    %c0_i32 = arith.constant 0 : i32
    %c0_i32_0 = arith.constant 0 : i32
    %c0_i32_1 = arith.constant 0 : i32
    return %c0_i32, %c0_i32_0 : i32, i32
  }
  func.func @transform_6(%arg0: i32) -> (i32, i32) {
    %c0_i32 = arith.constant 0 : i32
    %c0_i32_0 = arith.constant 0 : i32
    %c0_i32_1 = arith.constant 0 : i32
    return %c0_i32, %c0_i32_0 : i32, i32
  }
  func.func @transform_7(%arg0: i32) -> (i32, i32) {
    %c0_i32 = arith.constant 0 : i32
    %c0_i32_0 = arith.constant 0 : i32
    %c0_i32_1 = arith.constant 0 : i32
    return %c0_i32, %c0_i32_0 : i32, i32
  }
  func.func @transform_8(%arg0: i32) -> (i32, i32, i32) {
    %c0_i32 = arith.constant 0 : i32
    %c0_i32_0 = arith.constant 0 : i32
    %c0_i32_1 = arith.constant 0 : i32
    return %arg0, %c0_i32, %c0_i32_0 : i32, i32, i32
  }
}

</mosaic_0001>

<llo_original>
// kernel: tpu_custom_call.1
$region0: #{tpu_custom_call.1}
  #allocation0 [shape = 'u32[]', space=smem, size = 0x4, offset = 0x4, fixed_abs, tag = 'smem constant byte address 0x4 - core index']
  #allocation1 [shape = 'u32[72,128]{1,0:T(1,128)}', space=vmem, size = 0x9000, scoped, tag = 'internal scratch']
  %s0 = inlined_call_operand.hbm [shape: f32[8,256], index: 0, kind: input, shape index: {}]
  %s1 = inlined_call_operand.hbm [shape: f32[8,256], index: 1, kind: output, shape index: {}]
  %s2 = sld [smem:[#allocation0]]
  $region18: #{tpu_custom_call.1} parent=0
    _
  %s4 = ssub.s32 1, %s2
  %s5 = scalar_select 0, %s4, %s2
  $region1: #{tpu_custom_call.1} parent=0
    #allocation2 [shape = 'u8[8192]{0}', space=vmem, size = 0x2000, scoped, tag = 'input window, operand 0, single buffered']
    #allocation3 [shape = 's32[1]{0}', space=sflag, size = 0x4, scoped, tag = 'scoped memory for tpu_custom_call.1']
    #allocation4 [shape = 's32[1]{0}', space=sflag, size = 0x4, scoped, tag = 'scoped memory for tpu_custom_call.1']
    #allocation5 [shape = 'u8[8192]{0}', space=vmem, size = 0x2000, scoped, tag = 'output window, operand 0, single buffered']
    %6 = vsyncpa [#allocation3], 0
    %7 = vsyncpa [#allocation4], 0
    // Predicated region
    $region2: #{tpu_custom_call.1} parent=1 // pred_check
      _
    $region3: #{tpu_custom_call.1} parent=1 // pred_check_branch
      %9 = sbr.rel (0) target = $region5
    $region4: #{tpu_custom_call.1} parent=1 // pred_region
      %11 = vsyncadd [#allocation3], 0
      %s13 = sshll.u32 %s0, 4
      %s14 = int_to_ptr.hbm [resolvable:$true] %s13
      %s15 = sshll.u32 [#allocation2], 4
      %s16 = int_to_ptr.vmem [resolvable:$true] %s15
      %18 = dma.hbm_to_vmem [thread:$0]  %s14, 256, %s16, [#allocation3]
    $region5: #{tpu_custom_call.1} parent=1 // pred_fallthru
      _
    // Predicated region
    $region6: #{tpu_custom_call.1} parent=1 // pred_check
      _
    $region7: #{tpu_custom_call.1} parent=1 // pred_check_branch
      %20 = sbr.rel (0) target = $region9
    $region8: #{tpu_custom_call.1} parent=1 // pred_region
      %22 = dma.done [#allocation3], 256
    $region9: #{tpu_custom_call.1} parent=1 // pred_fallthru
      _
    %v23 = vld [vmem:[#allocation2] sm:$0xff]
    %v24 = vld [vmem:[#allocation2 + $0x8] sm:$0xff]
    %25 = vrot.lane.b32.xlu0 %v23, 3
    %v26 = vpop.permute.xlu0 %25
    %27 = vrot.lane.b32.xlu0 %v24, 3
    %v28 = vpop.permute.xlu0 %27
    %v29 = vlaneseq
    %v30 = vand.u32 %v29, 127
    %vm31 = vcmp.lt.s32.totalorder %v30, 3
    %v32 = vsel %vm31, %v26, %v28
    %v33 = vsel %vm31, %v28, %v26
    %34 = vst [vmem:[#allocation5] sm:$0xff] %v33
    %35 = vst [vmem:[#allocation5 + $0x8] sm:$0xff] %v32
    // Predicated region
    $region10: #{tpu_custom_call.1} parent=1 // pred_check
      _
    $region11: #{tpu_custom_call.1} parent=1 // pred_check_branch
      %37 = sbr.rel (0) target = $region13
    $region12: #{tpu_custom_call.1} parent=1 // pred_region
      %39 = vsyncadd [#allocation4], 0
      %s41 = sshll.u32 [#allocation5], 4
      %s42 = int_to_ptr.vmem [resolvable:$true] %s41
      %s43 = sshll.u32 %s1, 4
      %s44 = int_to_ptr.hbm [resolvable:$true] %s43
      %46 = dma.vmem_to_hbm [thread:$0]  %s42, 256, %s44, [#allocation4]
    $region13: #{tpu_custom_call.1} parent=1 // pred_fallthru
      _
    // Predicated region
    $region14: #{tpu_custom_call.1} parent=1 // pred_check
      _
    $region15: #{tpu_custom_call.1} parent=1 // pred_check_branch
      %48 = sbr.rel (0) target = $region17
    $region16: #{tpu_custom_call.1} parent=1 // pred_region
      %50 = dma.done [#allocation4], 256
    $region17: #{tpu_custom_call.1} parent=1 // pred_fallthru
      _
    %51 = vsyncpa [#allocation3], 1
    %52 = vsyncpa [#allocation4], 1

// kernel: attention_bank_forward.1
$region0: #{attention_bank_forward.1}
  #allocation0 [shape = 'u32[]', space=smem, size = 0x4, offset = 0x4, fixed_abs, tag = 'smem constant byte address 0x4 - core index']
  #allocation1 [shape = 'u32[72,128]{1,0:T(1,128)}', space=vmem, size = 0x9000, scoped, tag = 'internal scratch']
  %s0 = inlined_call_operand.vmem [shape: f32[2,64,256], index: 0, kind: input, shape index: {}]
  %s1 = inlined_call_operand.vmem [shape: bf16[3,192,64], index: 1, kind: input, shape index: {}]
  %s2 = inlined_call_operand.vmem [shape: f32[3,64,1], index: 2, kind: input, shape index: {}]
  %s3 = inlined_call_operand.vmem [shape: f32[3,64,9], index: 3, kind: input, shape index: {}]
  %s4 = inlined_call_operand.vmem [shape: bf16[3,64,64], index: 4, kind: input, shape index: {}]
  %s5 = inlined_call_operand.vmem [shape: f32[64,64], index: 5, kind: input, shape index: {}]
  %s6 = inlined_call_operand.vmem [shape: f32[9,256], index: 6, kind: input, shape index: {}]
  %s7 = inlined_call_operand.vmem [shape: f32[2,3], index: 7, kind: input, shape index: {}]
  %s8 = inlined_call_operand.vmem [shape: f32[2,64,256], index: 8, kind: output, shape index: {}]
  %s9 = sld [smem:[#allocation0]]
  $region81: #{attention_bank_forward.1} parent=0
    _
  %s11 = ssub.s32 1, %s9
  %s12 = scalar_select 0, %s11, %s9
  $region1: #{attention_bank_forward.1} parent=0
    #allocation2 [shape = 'u8[1024]{0}', space=smem, size = 0x400, scoped, tag = 'input window, operand 7, single buffered']
    #allocation3 [shape = 's32[2]{0}', space=sflag, size = 0x8, scoped, tag = 'scoped memory for attention_bank_forward.1']
    %13 = vsyncpa [#allocation3], 0
    loop: start=0, step=1, limit=4
    $region2: #{attention_bank_forward.1} parent=1 // loop_pre_header
      _
    $region3: #{attention_bank_forward.1} parent=1 // loop_header
      %s15 = sphi 0, %s19
      %p16 = scmp.ge.s32.totalorder %s15, 4
      %s25 = sphi 0, %s27
      %s28 = sphi 0, %s25
      %s29 = sphi 0, %s28
      %s45 = sphi 0, %s29
      %s49 = sphi 0, %s49
      %s51 = sphi 0, %s49
      %s52 = sphi 0, %s51
      %s66 = sphi 0, %s52
      %s70 = sphi 0, %s70
      %s72 = sphi 0, %s70
      %s73 = sphi 0, %s72
      %s87 = sphi 0, %s73
      %s91 = sphi 0, %s91
      %s93 = sphi 0, %s91
      %s94 = sphi 0, %s93
      %s108 = sphi 0, %s94
      %s112 = sphi 0, %s112
      %s114 = sphi 0, %s112
      %s115 = sphi 0, %s114
      %s129 = sphi 0, %s115
      %s133 = sphi 0, %s133
      %s135 = sphi 0, %s133
      %s136 = sphi 0, %s135
      %s150 = sphi 0, %s136
      %s154 = sphi 0, %s154
      %s156 = sphi 0, %s154
      %s157 = sphi 0, %s156
      %s171 = sphi 0, %s157
      %s175 = sphi 0, %s175
      %s177 = sphi 0, %s175
      %s178 = sphi 0, %s177
      %s192 = sphi 0, %s178
      %s198 = sphi 0, %s200
      %s201 = sphi 0, %s198
      %s202 = sphi 0, %s201
      %s218 = sphi 0, %s202
    $region4: #{attention_bank_forward.1} parent=1 // loop_header_branch
      %18 = sbr.rel (%p16) target = $region8
    $region5: #{attention_bank_forward.1} parent=1 // loop_body
      %s20 = ssub.s32 %s15, 1
      %s21 = ssub.s32 %s15, 2
      %s22 = sadd.s32 %s15, 1
      %s23 = ssub.s32 %s15, %s22
      %p24 = scmp.eq.s32.totalorder %s23, 0
      %s26 = sadd.s32 %s25, 1
      %s27 = scalar_select %p24, %s25, %s26
      %p30 = pneg %p24
      %p31 = scmp.eq.s32.totalorder %s15, 1
      %p32 = por %p30, %p31
      %p33 = scmp.ne.s32.totalorder %s25, %s28
      %p34 = scmp.eq.s32.totalorder %s15, 0
      %p35 = por %p33, %p34
      %p36 = scmp.ne.s32.totalorder %s25, %s28
      %p37 = scmp.eq.s32.totalorder %s20, 1
      %p38 = por %p36, %p37
      %p39 = scmp.ne.s32.totalorder %s28, %s29
      %p40 = scmp.eq.s32.totalorder %s20, 0
      %p41 = por %p39, %p40
      %p42 = scmp.ne.s32.totalorder %s28, %s29
      %p43 = scmp.eq.s32.totalorder %s21, 1
      %p44 = por %p42, %p43
      %p46 = scmp.ne.s32.totalorder %s29, %s45
      %p47 = scmp.eq.s32.totalorder %s21, 0
      %p48 = por %p46, %p47
      %s50 = sadd.s32 %s49, 1
      %p53 = scmp.eq.s32.totalorder %s15, 1
      %p54 = scmp.ne.s32.totalorder %s49, %s51
      %p55 = scmp.eq.s32.totalorder %s15, 0
      %p56 = por %p54, %p55
      %p57 = scmp.ne.s32.totalorder %s49, %s51
      %p58 = scmp.eq.s32.totalorder %s20, 1
      %p59 = por %p57, %p58
      %p60 = scmp.ne.s32.totalorder %s51, %s52
      %p61 = scmp.eq.s32.totalorder %s20, 0
      %p62 = por %p60, %p61
      %p63 = scmp.ne.s32.totalorder %s51, %s52
      %p64 = scmp.eq.s32.totalorder %s21, 1
      %p65 = por %p63, %p64
      %p67 = scmp.ne.s32.totalorder %s52, %s66
      %p68 = scmp.eq.s32.totalorder %s21, 0
      %p69 = por %p67, %p68
      %s71 = sadd.s32 %s70, 1
      %p74 = scmp.eq.s32.totalorder %s15, 1
      %p75 = scmp.ne.s32.totalorder %s70, %s72
      %p76 = scmp.eq.s32.totalorder %s15, 0
      %p77 = por %p75, %p76
      %p78 = scmp.ne.s32.totalorder %s70, %s72
      %p79 = scmp.eq.s32.totalorder %s20, 1
      %p80 = por %p78, %p79
      %p81 = scmp.ne.s32.totalorder %s72, %s73
      %p82 = scmp.eq.s32.totalorder %s20, 0
      %p83 = por %p81, %p82
      %p84 = scmp.ne.s32.totalorder %s72, %s73
      %p85 = scmp.eq.s32.totalorder %s21, 1
      %p86 = por %p84, %p85
      %p88 = scmp.ne.s32.totalorder %s73, %s87
      %p89 = scmp.eq.s32.totalorder %s21, 0
      %p90 = por %p88, %p89
      %s92 = sadd.s32 %s91, 1
      %p95 = scmp.eq.s32.totalorder %s15, 1
      %p96 = scmp.ne.s32.totalorder %s91, %s93
      %p97 = scmp.eq.s32.totalorder %s15, 0
      %p98 = por %p96, %p97
      %p99 = scmp.ne.s32.totalorder %s91, %s93
      %p100 = scmp.eq.s32.totalorder %s20, 1
      %p101 = por %p99, %p100
      %p102 = scmp.ne.s32.totalorder %s93, %s94
      %p103 = scmp.eq.s32.totalorder %s20, 0
      %p104 = por %p102, %p103
      %p105 = scmp.ne.s32.totalorder %s93, %s94
      %p106 = scmp.eq.s32.totalorder %s21, 1
      %p107 = por %p105, %p106
      %p109 = scmp.ne.s32.totalorder %s94, %s108
      %p110 = scmp.eq.s32.totalorder %s21, 0
      %p111 = por %p109, %p110
      %s113 = sadd.s32 %s112, 1
      %p116 = scmp.eq.s32.totalorder %s15, 1
      %p117 = scmp.ne.s32.totalorder %s112, %s114
      %p118 = scmp.eq.s32.totalorder %s15, 0
      %p119 = por %p117, %p118
      %p120 = scmp.ne.s32.totalorder %s112, %s114
      %p121 = scmp.eq.s32.totalorder %s20, 1
      %p122 = por %p120, %p121
      %p123 = scmp.ne.s32.totalorder %s114, %s115
      %p124 = scmp.eq.s32.totalorder %s20, 0
      %p125 = por %p123, %p124
      %p126 = scmp.ne.s32.totalorder %s114, %s115
      %p127 = scmp.eq.s32.totalorder %s21, 1
      %p128 = por %p126, %p127
      %p130 = scmp.ne.s32.totalorder %s115, %s129
      %p131 = scmp.eq.s32.totalorder %s21, 0
      %p132 = por %p130, %p131
      %s134 = sadd.s32 %s133, 1
      %p137 = scmp.eq.s32.totalorder %s15, 1
      %p138 = scmp.ne.s32.totalorder %s133, %s135
      %p139 = scmp.eq.s32.totalorder %s15, 0
      %p140 = por %p138, %p139
      %p141 = scmp.ne.s32.totalorder %s133, %s135
      %p142 = scmp.eq.s32.totalorder %s20, 1
      %p143 = por %p141, %p142
      %p144 = scmp.ne.s32.totalorder %s135, %s136
      %p145 = scmp.eq.s32.totalorder %s20, 0
      %p146 = por %p144, %p145
      %p147 = scmp.ne.s32.totalorder %s135, %s136
      %p148 = scmp.eq.s32.totalorder %s21, 1
      %p149 = por %p147, %p148
      %p151 = scmp.ne.s32.totalorder %s136, %s150
      %p152 = scmp.eq.s32.totalorder %s21, 0
      %p153 = por %p151, %p152
      %s155 = sadd.s32 %s154, 1
      %p158 = scmp.eq.s32.totalorder %s15, 1
      %p159 = scmp.ne.s32.totalorder %s154, %s156
      %p160 = scmp.eq.s32.totalorder %s15, 0
      %p161 = por %p159, %p160
      %p162 = scmp.ne.s32.totalorder %s154, %s156
      %p163 = scmp.eq.s32.totalorder %s20, 1
      %p164 = por %p162, %p163
      %p165 = scmp.ne.s32.totalorder %s156, %s157
      %p166 = scmp.eq.s32.totalorder %s20, 0
      %p167 = por %p165, %p166
      %p168 = scmp.ne.s32.totalorder %s156, %s157
      %p169 = scmp.eq.s32.totalorder %s21, 1
      %p170 = por %p168, %p169
      %p172 = scmp.ne.s32.totalorder %s157, %s171
      %p173 = scmp.eq.s32.totalorder %s21, 0
      %p174 = por %p172, %p173
      %s176 = sadd.s32 %s175, 1
      %p179 = scmp.eq.s32.totalorder %s15, 1
      %p180 = scmp.ne.s32.totalorder %s175, %s177
      %p181 = scmp.eq.s32.totalorder %s15, 0
      %p182 = por %p180, %p181
      %p183 = scmp.ne.s32.totalorder %s175, %s177
      %p184 = scmp.eq.s32.totalorder %s20, 1
      %p185 = por %p183, %p184
      %p186 = scmp.ne.s32.totalorder %s177, %s178
      %p187 = scmp.eq.s32.totalorder %s20, 0
      %p188 = por %p186, %p187
      %p189 = scmp.ne.s32.totalorder %s177, %s178
      %p190 = scmp.eq.s32.totalorder %s21, 1
      %p191 = por %p189, %p190
      %p193 = scmp.ne.s32.totalorder %s178, %s192
      %p194 = scmp.eq.s32.totalorder %s21, 0
      %p195 = por %p193, %p194
      %s196 = ssub.s32 %s15, %s22
      %p197 = scmp.eq.s32.totalorder %s196, 0
      %s199 = sadd.s32 %s198, 1
      %s200 = scalar_select %p197, %s198, %s199
      %p203 = pneg %p197
      %p204 = scmp.eq.s32.totalorder %s15, 1
      %p205 = por %p203, %p204
      %p206 = scmp.ne.s32.totalorder %s198, %s201
      %p207 = scmp.eq.s32.totalorder %s15, 0
      %p208 = por %p206, %p207
      %p209 = scmp.ne.s32.totalorder %s198, %s201
      %p210 = scmp.eq.s32.totalorder %s20, 1
      %p211 = por %p209, %p210
      %p212 = scmp.ne.s32.totalorder %s201, %s202
      %p213 = scmp.eq.s32.totalorder %s20, 0
      %p214 = por %p212, %p213
      %p215 = scmp.ne.s32.totalorder %s201, %s202
      %p216 = scmp.eq.s32.totalorder %s21, 1
      %p217 = por %p215, %p216
      %p219 = scmp.ne.s32.totalorder %s202, %s218
      %p220 = scmp.eq.s32.totalorder %s21, 0
      %p221 = por %p219, %p220
      %p222 = scmp.le.s32.totalorder 1, %s15
      %p223 = scmp.lt.s32.totalorder %s15, 3
      %p224 = pnand %p222, %p223
      %p225 = pneg %p224
      // Predicated region
      $region9: #{attention_bank_forward.1} parent=5 // pred_check
        _
      $region10: #{attention_bank_forward.1} parent=5 // pred_check_branch
        %227 = sbr.rel (%p224) target = $region12
      $region11: #{attention_bank_forward.1} parent=5 // pred_region
        %s228 = ssub.s32 %s15, 1
        // Predicated region
        $region13: #{attention_bank_forward.1} parent=11 // pred_check
          %p229 = pneg %p62
        $region14: #{attention_bank_forward.1} parent=11 // pred_check_branch
          %231 = sbr.rel (%p229) target = $region16
        $region15: #{attention_bank_forward.1} parent=11 // pred_region
          _
        $region16: #{attention_bank_forward.1} parent=11 // pred_fallthru
          _
        // Predicated region
        $region17: #{attention_bank_forward.1} parent=11 // pred_check
          %p232 = pneg %p83
        $region18: #{attention_bank_forward.1} parent=11 // pred_check_branch
          %234 = sbr.rel (%p232) target = $region20
        $region19: #{attention_bank_forward.1} parent=11 // pred_region
          _
        $region20: #{attention_bank_forward.1} parent=11 // pred_fallthru
          _
        // Predicated region
        $region21: #{attention_bank_forward.1} parent=11 // pred_check
          %p235 = pneg %p104
        $region22: #{attention_bank_forward.1} parent=11 // pred_check_branch
          %237 = sbr.rel (%p235) target = $region24
        $region23: #{attention_bank_forward.1} parent=11 // pred_region
          _
        $region24: #{attention_bank_forward.1} parent=11 // pred_fallthru
          _
        // Predicated region
        $region25: #{attention_bank_forward.1} parent=11 // pred_check
          %p238 = pneg %p125
        $region26: #{attention_bank_forward.1} parent=11 // pred_check_branch
          %240 = sbr.rel (%p238) target = $region28
        $region27: #{attention_bank_forward.1} parent=11 // pred_region
          _
        $region28: #{attention_bank_forward.1} parent=11 // pred_fallthru
          _
        // Predicated region
        $region29: #{attention_bank_forward.1} parent=11 // pred_check
          %p241 = pneg %p146
        $region30: #{attention_bank_forward.1} parent=11 // pred_check_branch
          %243 = sbr.rel (%p241) target = $region32
        $region31: #{attention_bank_forward.1} parent=11 // pred_region
          _
        $region32: #{attention_bank_forward.1} parent=11 // pred_fallthru
          _
        // Predicated region
        $region33: #{attention_bank_forward.1} parent=11 // pred_check
          %p244 = pneg %p167
        $region34: #{attention_bank_forward.1} parent=11 // pred_check_branch
          %246 = sbr.rel (%p244) target = $region36
        $region35: #{attention_bank_forward.1} parent=11 // pred_region
          _
        $region36: #{attention_bank_forward.1} parent=11 // pred_fallthru
          _
        // Predicated region
        $region37: #{attention_bank_forward.1} parent=11 // pred_check
          %p247 = pneg %p188
        $region38: #{attention_bank_forward.1} parent=11 // pred_check_branch
          %249 = sbr.rel (%p247) target = $region40
        $region39: #{attention_bank_forward.1} parent=11 // pred_region
          %251 = vsyncadd [#allocation3], 0
          %s253 = sshll.u32 %s7, 4
          %s254 = int_to_ptr.vmem [resolvable:$true] %s253
          %256 = dma.vmem_to_smem %s254, 32, [#allocation2], [#allocation3]
        $region40: #{attention_bank_forward.1} parent=11 // pred_fallthru
          _
      $region12: #{attention_bank_forward.1} parent=5 // pred_fallthru
        _
      %p257 = scmp.lt.s32.totalorder %s15, 2
      // Predicated region
      $region41: #{attention_bank_forward.1} parent=5 // pred_check
        %p258 = pneg %p257
      $region42: #{attention_bank_forward.1} parent=5 // pred_check_branch
        %260 = sbr.rel (%p258) target = $region44
      $region43: #{attention_bank_forward.1} parent=5 // pred_region
        // Predicated region
        $region45: #{attention_bank_forward.1} parent=43 // pred_check
          %p261 = pneg %p35
        $region46: #{attention_bank_forward.1} parent=43 // pred_check_branch
          %263 = sbr.rel (%p261) target = $region48
        $region47: #{attention_bank_forward.1} parent=43 // pred_region
          %p264 = scmp.lt.s32.totalorder %s15, 1
          %s265 = scalar_select %p264, %s15, 1
          %s266 = smul.addr %s265, 16
          %s267 = smul.addr %s266, 8
          %s268 = scalar_lea.vmem %s0, %s267
        $region48: #{attention_bank_forward.1} parent=43 // pred_fallthru
          _
      $region44: #{attention_bank_forward.1} parent=5 // pred_fallthru
        _
      %p269 = scmp.le.s32.totalorder 1, %s15
      %p270 = scmp.lt.s32.totalorder %s15, 3
      %p271 = pnand %p269, %p270
      %p272 = pneg %p271
      // Predicated region
      $region49: #{attention_bank_forward.1} parent=5 // pred_check
        _
      $region50: #{attention_bank_forward.1} parent=5 // pred_check_branch
        %274 = sbr.rel (%p271) target = $region52
      $region51: #{attention_bank_forward.1} parent=5 // pred_region
        %s275 = ssub.s32 %s15, 1
        // Predicated region
        $region53: #{attention_bank_forward.1} parent=51 // pred_check
          %p276 = pneg %p188
        $region54: #{attention_bank_forward.1} parent=51 // pred_check_branch
          %278 = sbr.rel (%p276) target = $region56
        $region55: #{attention_bank_forward.1} parent=51 // pred_region
          %280 = dma.done [#allocation3], 32
        $region56: #{attention_bank_forward.1} parent=51 // pred_fallthru
          _
        %281 = sfence
        %p282 = scmp.lt.s32.totalorder %s20, 1
        %s283 = scalar_select %p282, %s20, 1
        %s284 = smul.addr %s283, 16
        %s285 = smul.addr %s284, 8
        %s286 = scalar_lea.vmem %s0, %s285
        %p287 = pneg %p41
        %p288 = pneg %p38
        %p289 = pneg %p62
        %p290 = pneg %p59
        %p291 = pneg %p83
        %p292 = pneg %p80
        %p293 = pneg %p104
        %p294 = pneg %p101
        %p295 = pneg %p125
        %p296 = pneg %p122
        %p297 = pneg %p146
        %p298 = pneg %p143
        %p299 = pneg %p167
        %p300 = pneg %p164
        %p301 = pneg %p188
        %p302 = pneg %p185
        %p303 = pneg %p214
        %p304 = pneg %p211
        %p305 = scmp.lt.s32.totalorder %s20, 1
        %s306 = scalar_select %p305, %s20, 1
        %s307 = smul.addr %s306, 16
        %s308 = smul.addr %s307, 8
        %s309 = scalar_lea.vmem %s8, %s308
        %p310 = scmp.lt.s32.totalorder %s20, 1
        %s311 = scalar_select %p310, %s20, 1
        %s312 = smul.addr %s311, 16
        %s313 = smul.addr %s312, 8
        %s314 = scalar_lea.vmem %s0, %s313
        %p315 = scmp.lt.s32.totalorder %s20, 1
        %s316 = scalar_select %p315, %s20, 1
        %s317 = smul.addr %s316, 16
        %s318 = smul.addr %s317, 8
        %s319 = scalar_lea.vmem %s8, %s318
        %v321 = vld [vmem:[%s314] sm:$0xff]
        %v322 = vld [vmem:[%s314 + $0x8] sm:$0xff]
        %v323 = vld [vmem:[%s314 + $0x10] sm:$0xff]
        %v324 = vld [vmem:[%s314 + $0x18] sm:$0xff]
        %v325 = vld [vmem:[%s314 + $0x20] sm:$0xff]
        %v326 = vld [vmem:[%s314 + $0x28] sm:$0xff]
        %v327 = vld [vmem:[%s314 + $0x30] sm:$0xff]
        %v328 = vld [vmem:[%s314 + $0x38] sm:$0xff]
        %v329 = vld [vmem:[%s314 + $0x40] sm:$0xff]
        %v330 = vld [vmem:[%s314 + $0x48] sm:$0xff]
        %v331 = vld [vmem:[%s314 + $0x50] sm:$0xff]
        %v332 = vld [vmem:[%s314 + $0x58] sm:$0xff]
        %v333 = vld [vmem:[%s314 + $0x60] sm:$0xff]
        %v334 = vld [vmem:[%s314 + $0x68] sm:$0xff]
        %v335 = vld [vmem:[%s314 + $0x70] sm:$0xff]
        %v336 = vld [vmem:[%s314 + $0x78] sm:$0xff]
        %v337 = vpack.c.bf16 %v323, %v321
        %v338 = vpack.c.bf16 %v324, %v322
        %v339 = vpack.c.bf16 %v327, %v325
        %v340 = vpack.c.bf16 %v328, %v326
        %v341 = vpack.c.bf16 %v331, %v329
        %v342 = vpack.c.bf16 %v332, %v330
        %v343 = vpack.c.bf16 %v335, %v333
        %v344 = vpack.c.bf16 %v336, %v334
        %v345 = vld [vmem:[%s5] sm:$0xff]
        %v346 = vld [vmem:[%s5 + $0x8] sm:$0xff]
        %v347 = vld [vmem:[%s5 + $0x10] sm:$0xff]
        %v348 = vld [vmem:[%s5 + $0x18] sm:$0xff]
        %v349 = vld [vmem:[%s5 + $0x20] sm:$0xff]
        %v350 = vld [vmem:[%s5 + $0x28] sm:$0xff]
        %v351 = vld [vmem:[%s5 + $0x30] sm:$0xff]
        %v352 = vld [vmem:[%s5 + $0x38] sm:$0xff]
        %v353 = vld [vmem:[%s6] sm:$0xff]
        %v354 = vld [vmem:[%s6 + $0x8] sm:$0xff]
        %v355 = vld [vmem:[%s6 + $0x10] sm:$0x1]
        %v356 = vld [vmem:[%s6 + $0x18] sm:$0x1]
        %357 = vst [vmem:[%s319] sm:$0xff] 0.0
        %358 = vst [vmem:[%s319 + $0x8] sm:$0xff] 0.0
        %359 = vst [vmem:[%s319 + $0x10] sm:$0xff] 0.0
        %360 = vst [vmem:[%s319 + $0x18] sm:$0xff] 0.0
        %361 = vst [vmem:[%s319 + $0x20] sm:$0xff] 0.0
        %362 = vst [vmem:[%s319 + $0x28] sm:$0xff] 0.0
        %363 = vst [vmem:[%s319 + $0x30] sm:$0xff] 0.0
        %364 = vst [vmem:[%s319 + $0x38] sm:$0xff] 0.0
        %365 = vst [vmem:[%s319 + $0x40] sm:$0xff] 0.0
        %366 = vst [vmem:[%s319 + $0x48] sm:$0xff] 0.0
        %367 = vst [vmem:[%s319 + $0x50] sm:$0xff] 0.0
        %368 = vst [vmem:[%s319 + $0x58] sm:$0xff] 0.0
        %369 = vst [vmem:[%s319 + $0x60] sm:$0xff] 0.0
        %370 = vst [vmem:[%s319 + $0x68] sm:$0xff] 0.0
        %371 = vst [vmem:[%s319 + $0x70] sm:$0xff] 0.0
        %372 = vst [vmem:[%s319 + $0x78] sm:$0xff] 0.0
        %s373 = smul.u32 %s20, 128
        %s374 = sld [smem:[#allocation2 + %s373]]
        %p375 = scmp.gt.f32.partialorder %s374, 0.0
        // Predicated region
        $region57: #{attention_bank_forward.1} parent=51 // pred_check
          %p376 = pneg %p375
        $region58: #{attention_bank_forward.1} parent=51 // pred_check_branch
          %378 = sbr.rel (%p376) target = $region60
        $region59: #{attention_bank_forward.1} parent=51 // pred_region
          %v379 = vld [vmem:[%s1] sm:$0xf]
          %v380 = vld [vmem:[%s1 + $0x4] sm:$0xf]
          %v381 = vld [vmem:[%s1 + $0x8] sm:$0xf]
          %v382 = vld [vmem:[%s1 + $0xc] sm:$0xf]
          %v383 = vld [vmem:[%s1 + $0x10] sm:$0xf]
          %v384 = vld [vmem:[%s1 + $0x14] sm:$0xf]
          %v385 = vld [vmem:[%s1 + $0x18] sm:$0xf]
          %v386 = vld [vmem:[%s1 + $0x1c] sm:$0xf]
          %v387 = vld [vmem:[%s1 + $0x20] sm:$0xf]
          %v388 = vld [vmem:[%s1 + $0x24] sm:$0xf]
          %v389 = vld [vmem:[%s1 + $0x28] sm:$0xf]
          %v390 = vld [vmem:[%s1 + $0x2c] sm:$0xf]
          %v391 = vld [vmem:[%s1 + $0x30] sm:$0xf]
          %v392 = vld [vmem:[%s1 + $0x34] sm:$0xf]
          %v393 = vld [vmem:[%s1 + $0x38] sm:$0xf]
          %v394 = vld [vmem:[%s1 + $0x3c] sm:$0xf]
          %v395 = vld [vmem:[%s1 + $0x40] sm:$0xf]
          %v396 = vld [vmem:[%s1 + $0x44] sm:$0xf]
          %v397 = vld [vmem:[%s1 + $0x48] sm:$0xf]
          %v398 = vld [vmem:[%s1 + $0x4c] sm:$0xf]
          %v399 = vld [vmem:[%s1 + $0x50] sm:$0xf]
          %v400 = vld [vmem:[%s1 + $0x54] sm:$0xf]
          %v401 = vld [vmem:[%s1 + $0x58] sm:$0xf]
          %v402 = vld [vmem:[%s1 + $0x5c] sm:$0xf]
          %v427 = vunpack.c.l.b16 %v379
          %v428 = vunpack.c.l.b16 %v380
          %v429 = vunpack.c.l.b16 %v381
          %v430 = vunpack.c.l.b16 %v382
          %v431 = vunpack.c.l.b16 %v383
          %v432 = vunpack.c.l.b16 %v384
          %v433 = vunpack.c.l.b16 %v385
          %v434 = vunpack.c.l.b16 %v386
          %v435 = vunpack.c.l.b16 %v387
          %v436 = vunpack.c.l.b16 %v388
          %v437 = vunpack.c.l.b16 %v389
          %v438 = vunpack.c.l.b16 %v390
          %v439 = vunpack.c.l.b16 %v391
          %v440 = vunpack.c.l.b16 %v392
          %v441 = vunpack.c.l.b16 %v393
          %v442 = vunpack.c.l.b16 %v394
          %v443 = vunpack.c.l.b16 %v395
          %v444 = vunpack.c.l.b16 %v396
          %v445 = vunpack.c.l.b16 %v397
          %v446 = vunpack.c.l.b16 %v398
          %v447 = vunpack.c.l.b16 %v399
          %v448 = vunpack.c.l.b16 %v400
          %v449 = vunpack.c.l.b16 %v401
          %v450 = vunpack.c.l.b16 %v402
          %v451 = vpack.c.b16 %v428, %v427
          %v452 = vpack.c.b16 %v430, %v429
          %v453 = vpack.c.b16 %v432, %v431
          %v454 = vpack.c.b16 %v434, %v433
          %v455 = vpack.c.b16 %v436, %v435
          %v456 = vpack.c.b16 %v438, %v437
          %v457 = vpack.c.b16 %v440, %v439
          %v458 = vpack.c.b16 %v442, %v441
          %v459 = vpack.c.b16 %v444, %v443
          %v460 = vpack.c.b16 %v446, %v445
          %v461 = vpack.c.b16 %v448, %v447
          %v462 = vpack.c.b16 %v450, %v449
          %vm463 = vcmask 523264
          %v465 = vsel %vm463, %v451, 0
          %v468 = vsel %vm463, %v452, 0
          %v471 = vsel %vm463, %v453, 0
          %v474 = vsel %vm463, %v454, 0
          %v477 = vsel %vm463, %v455, 0
          %v480 = vsel %vm463, %v456, 0
          %v483 = vsel %vm463, %v457, 0
          %v486 = vsel %vm463, %v458, 0
          %v489 = vsel %vm463, %v459, 0
          %v492 = vsel %vm463, %v460, 0
          %v495 = vsel %vm463, %v461, 0
          %v498 = vsel %vm463, %v462, 0
          %500 = vmatpush.bf16.msra.mxu0 0
          %501 = vmatpush.bf16.msra.mxu0 0
          %502 = vmatpush.bf16.msra.mxu0 0
          %503 = vmatpush.bf16.msra.mxu0 0
          %504 = vmatpush.bf16.msra.mxu0 %v343
          %505 = vmatpush.bf16.msra.mxu0 %v341
          %506 = vmatpush.bf16.msra.mxu0 %v339
          %507 = vmatpush.bf16.msra.mxu0 %v337
          %508 = vmatmul.bf16.gmra.mxu0 %v465
          %v509 = vpop.f32.mrf.mxu0
          %v510 = vadd.f32 0.0, %v509
          %v511 = vpop.f32.mrf.mxu0
          %v512 = vadd.f32 0.0, %v511
          %513 = vmatmul.bf16.gmra.mxu0 %v468
          %v514 = vpop.f32.mrf.mxu0
          %v515 = vadd.f32 0.0, %v514
          %v516 = vpop.f32.mrf.mxu0
          %v517 = vadd.f32 0.0, %v516
          %518 = vmatmul.bf16.gmra.mxu0 %v471
          %v519 = vpop.f32.mrf.mxu0
          %v520 = vadd.f32 0.0, %v519
          %v521 = vpop.f32.mrf.mxu0
          %v522 = vadd.f32 0.0, %v521
          %523 = vmatmul.bf16.gmra.mxu0 %v474
          %v524 = vpop.f32.mrf.mxu0
          %v525 = vadd.f32 0.0, %v524
          %v526 = vpop.f32.mrf.mxu0
          %v527 = vadd.f32 0.0, %v526
          %528 = vmatmul.bf16.gmra.mxu0 %v477
          %v529 = vpop.f32.mrf.mxu0
          %v530 = vadd.f32 0.0, %v529
          %v531 = vpop.f32.mrf.mxu0
          %v532 = vadd.f32 0.0, %v531
          %533 = vmatmul.bf16.gmra.mxu0 %v480
          %v534 = vpop.f32.mrf.mxu0
          %v535 = vadd.f32 0.0, %v534
          %v536 = vpop.f32.mrf.mxu0
          %v537 = vadd.f32 0.0, %v536
          %538 = vmatmul.bf16.gmra.mxu0 %v483
          %v539 = vpop.f32.mrf.mxu0
          %v540 = vadd.f32 0.0, %v539
          %v541 = vpop.f32.mrf.mxu0
          %v542 = vadd.f32 0.0, %v541
          %543 = vmatmul.bf16.gmra.mxu0 %v486
          %v544 = vpop.f32.mrf.mxu0
          %v545 = vadd.f32 0.0, %v544
          %v546 = vpop.f32.mrf.mxu0
          %v547 = vadd.f32 0.0, %v546
          %548 = vmatmul.bf16.gmra.mxu0 %v489
          %v549 = vpop.f32.mrf.mxu0
          %v550 = vadd.f32 0.0, %v549
          %v551 = vpop.f32.mrf.mxu0
          %v552 = vadd.f32 0.0, %v551
          %553 = vmatmul.bf16.gmra.mxu0 %v492
          %v554 = vpop.f32.mrf.mxu0
          %v555 = vadd.f32 0.0, %v554
          %v556 = vpop.f32.mrf.mxu0
          %v557 = vadd.f32 0.0, %v556
          %558 = vmatmul.bf16.gmra.mxu0 %v495
          %v559 = vpop.f32.mrf.mxu0
          %v560 = vadd.f32 0.0, %v559
          %v561 = vpop.f32.mrf.mxu0
          %v562 = vadd.f32 0.0, %v561
          %563 = vmatmul.bf16.gmra.mxu0 %v498
          %v564 = vpop.f32.mrf.mxu0
          %v565 = vadd.f32 0.0, %v564
          %v566 = vpop.f32.mrf.mxu0
          %v567 = vadd.f32 0.0, %v566
          %568 = vdwg.mxu0
          %569 = vmatpush.bf16.msra.mxu0 0
          %570 = vmatpush.bf16.msra.mxu0 0
          %571 = vmatpush.bf16.msra.mxu0 0
          %572 = vmatpush.bf16.msra.mxu0 0
          %573 = vmatpush.bf16.msra.mxu0 %v344
          %574 = vmatpush.bf16.msra.mxu0 %v342
          %575 = vmatpush.bf16.msra.mxu0 %v340
          %576 = vmatpush.bf16.msra.mxu0 %v338
          %577 = vmatmul.bf16.gmra.mxu0 %v465
          %v578 = vpop.f32.mrf.mxu0
          %v579 = vadd.f32 0.0, %v578
          %v580 = vpop.f32.mrf.mxu0
          %v581 = vadd.f32 0.0, %v580
          %582 = vmatmul.bf16.gmra.mxu0 %v468
          %v583 = vpop.f32.mrf.mxu0
          %v584 = vadd.f32 0.0, %v583
          %v585 = vpop.f32.mrf.mxu0
          %v586 = vadd.f32 0.0, %v585
          %587 = vmatmul.bf16.gmra.mxu0 %v471
          %v588 = vpop.f32.mrf.mxu0
          %v589 = vadd.f32 0.0, %v588
          %v590 = vpop.f32.mrf.mxu0
          %v591 = vadd.f32 0.0, %v590
          %592 = vmatmul.bf16.gmra.mxu0 %v474
          %v593 = vpop.f32.mrf.mxu0
          %v594 = vadd.f32 0.0, %v593
          %v595 = vpop.f32.mrf.mxu0
          %v596 = vadd.f32 0.0, %v595
          %597 = vmatmul.bf16.gmra.mxu0 %v477
          %v598 = vpop.f32.mrf.mxu0
          %v599 = vadd.f32 0.0, %v598
          %v600 = vpop.f32.mrf.mxu0
          %v601 = vadd.f32 0.0, %v600
          %602 = vmatmul.bf16.gmra.mxu0 %v480
          %v603 = vpop.f32.mrf.mxu0
          %v604 = vadd.f32 0.0, %v603
          %v605 = vpop.f32.mrf.mxu0
          %v606 = vadd.f32 0.0, %v605
          %607 = vmatmul.bf16.gmra.mxu0 %v483
          %v608 = vpop.f32.mrf.mxu0
          %v609 = vadd.f32 0.0, %v608
          %v610 = vpop.f32.mrf.mxu0
          %v611 = vadd.f32 0.0, %v610
          %612 = vmatmul.bf16.gmra.mxu0 %v486
          %v613 = vpop.f32.mrf.mxu0
          %v614 = vadd.f32 0.0, %v613
          %v615 = vpop.f32.mrf.mxu0
          %v616 = vadd.f32 0.0, %v615
          %617 = vmatmul.bf16.gmra.mxu0 %v489
          %v618 = vpop.f32.mrf.mxu0
          %v619 = vadd.f32 0.0, %v618
          %v620 = vpop.f32.mrf.mxu0
          %v621 = vadd.f32 0.0, %v620
          %622 = vmatmul.bf16.gmra.mxu0 %v492
          %v623 = vpop.f32.mrf.mxu0
          %v624 = vadd.f32 0.0, %v623
          %v625 = vpop.f32.mrf.mxu0
          %v626 = vadd.f32 0.0, %v625
          %627 = vmatmul.bf16.gmra.mxu0 %v495
          %v628 = vpop.f32.mrf.mxu0
          %v629 = vadd.f32 0.0, %v628
          %v630 = vpop.f32.mrf.mxu0
          %v631 = vadd.f32 0.0, %v630
          %632 = vmatmul.bf16.gmra.mxu0 %v498
          %v633 = vpop.f32.mrf.mxu0
          %v634 = vadd.f32 0.0, %v633
          %v635 = vpop.f32.mrf.mxu0
          %v636 = vadd.f32 0.0, %v635
          %637 = vdwg.mxu0
          %v638 = vmul.f32 %v510, %v510
          %v639 = vmul.f32 %v579, %v579
          %v640 = vmul.f32 %v512, %v512
          %v641 = vmul.f32 %v581, %v581
          %v642 = vmul.f32 %v515, %v515
          %v643 = vmul.f32 %v584, %v584
          %v644 = vmul.f32 %v517, %v517
          %v645 = vmul.f32 %v586, %v586
          %v646 = vmul.f32 %v520, %v520
          %v647 = vmul.f32 %v589, %v589
          %v648 = vmul.f32 %v522, %v522
          %v649 = vmul.f32 %v591, %v591
          %v650 = vmul.f32 %v525, %v525
          %v651 = vmul.f32 %v594, %v594
          %v652 = vmul.f32 %v527, %v527
          %v653 = vmul.f32 %v596, %v596
          %v654 = vadd.f32 %v638, %v639
          %655 = vadd.xlane.f32.xlu0 %v654
          %v656 = vpop.xlane.xlu0 %655
          %v657 = vadd.f32 %v640, %v641
          %658 = vadd.xlane.f32.xlu0 %v657
          %v659 = vpop.xlane.xlu0 %658
          %v660 = vadd.f32 %v642, %v643
          %661 = vadd.xlane.f32.xlu0 %v660
          %v662 = vpop.xlane.xlu0 %661
          %v663 = vadd.f32 %v644, %v645
          %664 = vadd.xlane.f32.xlu0 %v663
          %v665 = vpop.xlane.xlu0 %664
          %v666 = vadd.f32 %v646, %v647
          %667 = vadd.xlane.f32.xlu0 %v666
          %v668 = vpop.xlane.xlu0 %667
          %v669 = vadd.f32 %v648, %v649
          %670 = vadd.xlane.f32.xlu0 %v669
          %v671 = vpop.xlane.xlu0 %670
          %v672 = vadd.f32 %v650, %v651
          %673 = vadd.xlane.f32.xlu0 %v672
          %v674 = vpop.xlane.xlu0 %673
          %v675 = vadd.f32 %v652, %v653
          %676 = vadd.xlane.f32.xlu0 %v675
          %v677 = vpop.xlane.xlu0 %676
          %v678 = vmax.f32 %v656, 1e-24
          %v679 = vmax.f32 %v659, 1e-24
          %v680 = vmax.f32 %v662, 1e-24
          %v681 = vmax.f32 %v665, 1e-24
          %v682 = vmax.f32 %v668, 1e-24
          %v683 = vmax.f32 %v671, 1e-24
          %v684 = vmax.f32 %v674, 1e-24
          %v685 = vmax.f32 %v677, 1e-24
          %v686 = vrsqrt.pop %v678
          %v687 = vmul.f32 %v686, %v678
          %v688 = vmul.f32 %v687, %v686
          %v689 = vmul.f32 0.5, %v688
          %v690 = vsub.f32 1.5, %v689
          %v691 = vmul.f32 %v686, %v690
          %vm692 = vweird.f32 %v678
          %vm693 = vweird.f32 %v686
          %vm694 = vmor %vm692, %vm693
          %v695 = vsel %vm694, %v686, %v691
          %v696 = vrsqrt.pop %v679
          %v697 = vmul.f32 %v696, %v679
          %v698 = vmul.f32 %v697, %v696
          %v699 = vmul.f32 0.5, %v698
          %v700 = vsub.f32 1.5, %v699
          %v701 = vmul.f32 %v696, %v700
          %vm702 = vweird.f32 %v679
          %vm703 = vweird.f32 %v696
          %vm704 = vmor %vm702, %vm703
          %v705 = vsel %vm704, %v696, %v701
          %v706 = vrsqrt.pop %v680
          %v707 = vmul.f32 %v706, %v680
          %v708 = vmul.f32 %v707, %v706
          %v709 = vmul.f32 0.5, %v708
          %v710 = vsub.f32 1.5, %v709
          %v711 = vmul.f32 %v706, %v710
          %vm712 = vweird.f32 %v680
          %vm713 = vweird.f32 %v706
          %vm714 = vmor %vm712, %vm713
          %v715 = vsel %vm714, %v706, %v711
          %v716 = vrsqrt.pop %v681
          %v717 = vmul.f32 %v716, %v681
          %v718 = vmul.f32 %v717, %v716
          %v719 = vmul.f32 0.5, %v718
          %v720 = vsub.f32 1.5, %v719
          %v721 = vmul.f32 %v716, %v720
          %vm722 = vweird.f32 %v681
          %vm723 = vweird.f32 %v716
          %vm724 = vmor %vm722, %vm723
          %v725 = vsel %vm724, %v716, %v721
          %v726 = vrsqrt.pop %v682
          %v727 = vmul.f32 %v726, %v682
          %v728 = vmul.f32 %v727, %v726
          %v729 = vmul.f32 0.5, %v728
          %v730 = vsub.f32 1.5, %v729
          %v731 = vmul.f32 %v726, %v730
          %vm732 = vweird.f32 %v682
          %vm733 = vweird.f32 %v726
          %vm734 = vmor %vm732, %vm733
          %v735 = vsel %vm734, %v726, %v731
          %v736 = vrsqrt.pop %v683
          %v737 = vmul.f32 %v736, %v683
          %v738 = vmul.f32 %v737, %v736
          %v739 = vmul.f32 0.5, %v738
          %v740 = vsub.f32 1.5, %v739
          %v741 = vmul.f32 %v736, %v740
          %vm742 = vweird.f32 %v683
          %vm743 = vweird.f32 %v736
          %vm744 = vmor %vm742, %vm743
          %v745 = vsel %vm744, %v736, %v741
          %v746 = vrsqrt.pop %v684
          %v747 = vmul.f32 %v746, %v684
          %v748 = vmul.f32 %v747, %v746
          %v749 = vmul.f32 0.5, %v748
          %v750 = vsub.f32 1.5, %v749
          %v751 = vmul.f32 %v746, %v750
          %vm752 = vweird.f32 %v684
          %vm753 = vweird.f32 %v746
          %vm754 = vmor %vm752, %vm753
          %v755 = vsel %vm754, %v746, %v751
          %v756 = vrsqrt.pop %v685
          %v757 = vmul.f32 %v756, %v685
          %v758 = vmul.f32 %v757, %v756
          %v759 = vmul.f32 0.5, %v758
          %v760 = vsub.f32 1.5, %v759
          %v761 = vmul.f32 %v756, %v760
          %vm762 = vweird.f32 %v685
          %vm763 = vweird.f32 %v756
          %vm764 = vmor %vm762, %vm763
          %v765 = vsel %vm764, %v756, %v761
          %v766 = vmul.f32 %v510, %v695
          %v767 = vmul.f32 %v579, %v695
          %v768 = vmul.f32 %v512, %v705
          %v769 = vmul.f32 %v581, %v705
          %v770 = vmul.f32 %v515, %v715
          %v771 = vmul.f32 %v584, %v715
          %v772 = vmul.f32 %v517, %v725
          %v773 = vmul.f32 %v586, %v725
          %v774 = vmul.f32 %v520, %v735
          %v775 = vmul.f32 %v589, %v735
          %v776 = vmul.f32 %v522, %v745
          %v777 = vmul.f32 %v591, %v745
          %v778 = vmul.f32 %v525, %v755
          %v779 = vmul.f32 %v594, %v755
          %v780 = vmul.f32 %v527, %v765
          %v781 = vmul.f32 %v596, %v765
          %v782 = vmul.f32 %v530, %v530
          %v783 = vmul.f32 %v599, %v599
          %v784 = vmul.f32 %v532, %v532
          %v785 = vmul.f32 %v601, %v601
          %v786 = vmul.f32 %v535, %v535
          %v787 = vmul.f32 %v604, %v604
          %v788 = vmul.f32 %v537, %v537
          %v789 = vmul.f32 %v606, %v606
          %v790 = vmul.f32 %v540, %v540
          %v791 = vmul.f32 %v609, %v609
          %v792 = vmul.f32 %v542, %v542
          %v793 = vmul.f32 %v611, %v611
          %v794 = vmul.f32 %v545, %v545
          %v795 = vmul.f32 %v614, %v614
          %v796 = vmul.f32 %v547, %v547
          %v797 = vmul.f32 %v616, %v616
          %v798 = vadd.f32 %v782, %v783
          %799 = vadd.xlane.f32.xlu0 %v798
          %v800 = vpop.xlane.xlu0 %799
          %v801 = vadd.f32 %v784, %v785
          %802 = vadd.xlane.f32.xlu0 %v801
          %v803 = vpop.xlane.xlu0 %802
          %v804 = vadd.f32 %v786, %v787
          %805 = vadd.xlane.f32.xlu0 %v804
          %v806 = vpop.xlane.xlu0 %805
          %v807 = vadd.f32 %v788, %v789
          %808 = vadd.xlane.f32.xlu0 %v807
          %v809 = vpop.xlane.xlu0 %808
          %v810 = vadd.f32 %v790, %v791
          %811 = vadd.xlane.f32.xlu0 %v810
          %v812 = vpop.xlane.xlu0 %811
          %v813 = vadd.f32 %v792, %v793
          %814 = vadd.xlane.f32.xlu0 %v813
          %v815 = vpop.xlane.xlu0 %814
          %v816 = vadd.f32 %v794, %v795
          %817 = vadd.xlane.f32.xlu0 %v816
          %v818 = vpop.xlane.xlu0 %817
          %v819 = vadd.f32 %v796, %v797
          %820 = vadd.xlane.f32.xlu0 %v819
          %v821 = vpop.xlane.xlu0 %820
          %v822 = vmax.f32 %v800, 1e-24
          %v823 = vmax.f32 %v803, 1e-24
          %v824 = vmax.f32 %v806, 1e-24
          %v825 = vmax.f32 %v809, 1e-24
          %v826 = vmax.f32 %v812, 1e-24
          %v827 = vmax.f32 %v815, 1e-24
          %v828 = vmax.f32 %v818, 1e-24
          %v829 = vmax.f32 %v821, 1e-24
          %v830 = vrsqrt.pop %v822
          %v831 = vmul.f32 %v830, %v822
          %v832 = vmul.f32 %v831, %v830
          %v833 = vmul.f32 0.5, %v832
          %v834 = vsub.f32 1.5, %v833
          %v835 = vmul.f32 %v830, %v834
          %vm836 = vweird.f32 %v822
          %vm837 = vweird.f32 %v830
          %vm838 = vmor %vm836, %vm837
          %v839 = vsel %vm838, %v830, %v835
          %v840 = vrsqrt.pop %v823
          %v841 = vmul.f32 %v840, %v823
          %v842 = vmul.f32 %v841, %v840
          %v843 = vmul.f32 0.5, %v842
          %v844 = vsub.f32 1.5, %v843
          %v845 = vmul.f32 %v840, %v844
          %vm846 = vweird.f32 %v823
          %vm847 = vweird.f32 %v840
          %vm848 = vmor %vm846, %vm847
          %v849 = vsel %vm848, %v840, %v845
          %v850 = vrsqrt.pop %v824
          %v851 = vmul.f32 %v850, %v824
          %v852 = vmul.f32 %v851, %v850
          %v853 = vmul.f32 0.5, %v852
          %v854 = vsub.f32 1.5, %v853
          %v855 = vmul.f32 %v850, %v854
          %vm856 = vweird.f32 %v824
          %vm857 = vweird.f32 %v850
          %vm858 = vmor %vm856, %vm857
          %v859 = vsel %vm858, %v850, %v855
          %v860 = vrsqrt.pop %v825
          %v861 = vmul.f32 %v860, %v825
          %v862 = vmul.f32 %v861, %v860
          %v863 = vmul.f32 0.5, %v862
          %v864 = vsub.f32 1.5, %v863
          %v865 = vmul.f32 %v860, %v864
          %vm866 = vweird.f32 %v825
          %vm867 = vweird.f32 %v860
          %vm868 = vmor %vm866, %vm867
          %v869 = vsel %vm868, %v860, %v865
          %v870 = vrsqrt.pop %v826
          %v871 = vmul.f32 %v870, %v826
          %v872 = vmul.f32 %v871, %v870
          %v873 = vmul.f32 0.5, %v872
          %v874 = vsub.f32 1.5, %v873
          %v875 = vmul.f32 %v870, %v874
          %vm876 = vweird.f32 %v826
          %vm877 = vweird.f32 %v870
          %vm878 = vmor %vm876, %vm877
          %v879 = vsel %vm878, %v870, %v875
          %v880 = vrsqrt.pop %v827
          %v881 = vmul.f32 %v880, %v827
          %v882 = vmul.f32 %v881, %v880
          %v883 = vmul.f32 0.5, %v882
          %v884 = vsub.f32 1.5, %v883
          %v885 = vmul.f32 %v880, %v884
          %vm886 = vweird.f32 %v827
          %vm887 = vweird.f32 %v880
          %vm888 = vmor %vm886, %vm887
          %v889 = vsel %vm888, %v880, %v885
          %v890 = vrsqrt.pop %v828
          %v891 = vmul.f32 %v890, %v828
          %v892 = vmul.f32 %v891, %v890
          %v893 = vmul.f32 0.5, %v892
          %v894 = vsub.f32 1.5, %v893
          %v895 = vmul.f32 %v890, %v894
          %vm896 = vweird.f32 %v828
          %vm897 = vweird.f32 %v890
          %vm898 = vmor %vm896, %vm897
          %v899 = vsel %vm898, %v890, %v895
          %v900 = vrsqrt.pop %v829
          %v901 = vmul.f32 %v900, %v829
          %v902 = vmul.f32 %v901, %v900
          %v903 = vmul.f32 0.5, %v902
          %v904 = vsub.f32 1.5, %v903
          %v905 = vmul.f32 %v900, %v904
          %vm906 = vweird.f32 %v829
          %vm907 = vweird.f32 %v900
          %vm908 = vmor %vm906, %vm907
          %v909 = vsel %vm908, %v900, %v905
          %v910 = vmul.f32 %v530, %v839
          %v911 = vmul.f32 %v599, %v839
          %v912 = vmul.f32 %v532, %v849
          %v913 = vmul.f32 %v601, %v849
          %v914 = vmul.f32 %v535, %v859
          %v915 = vmul.f32 %v604, %v859
          %v916 = vmul.f32 %v537, %v869
          %v917 = vmul.f32 %v606, %v869
          %v918 = vmul.f32 %v540, %v879
          %v919 = vmul.f32 %v609, %v879
          %v920 = vmul.f32 %v542, %v889
          %v921 = vmul.f32 %v611, %v889
          %v922 = vmul.f32 %v545, %v899
          %v923 = vmul.f32 %v614, %v899
          %v924 = vmul.f32 %v547, %v909
          %v925 = vmul.f32 %v616, %v909
          %v926 = vpack.c.bf16 %v768, %v766
          %v927 = vpack.c.bf16 %v769, %v767
          %v928 = vpack.c.bf16 %v772, %v770
          %v929 = vpack.c.bf16 %v773, %v771
          %v930 = vpack.c.bf16 %v776, %v774
          %v931 = vpack.c.bf16 %v777, %v775
          %v932 = vpack.c.bf16 %v780, %v778
          %v933 = vpack.c.bf16 %v781, %v779
          %v934 = vpack.c.bf16 %v912, %v910
          %v935 = vpack.c.bf16 %v913, %v911
          %v936 = vpack.c.bf16 %v916, %v914
          %v937 = vpack.c.bf16 %v917, %v915
          %v938 = vpack.c.bf16 %v920, %v918
          %v939 = vpack.c.bf16 %v921, %v919
          %v940 = vpack.c.bf16 %v924, %v922
          %v941 = vpack.c.bf16 %v925, %v923
          %942 = vmatpush.bf16.xpose.msra.mxu0 0
          %943 = vmatpush.bf16.xpose.msra.mxu0 0
          %944 = vmatpush.bf16.xpose.msra.mxu0 0
          %945 = vmatpush.bf16.xpose.msra.mxu0 0
          %946 = vmatpush.bf16.xpose.msra.mxu0 %v940
          %947 = vmatpush.bf16.xpose.msra.mxu0 %v938
          %948 = vmatpush.bf16.xpose.msra.mxu0 %v936
          %949 = vmatpush.bf16.xpose.msra.mxu0 %v934
          %950 = vmatmul.bf16.gmra.mxu0 %v926
          %v951 = vpop.f32.mrf.mxu0
          %v952 = vadd.f32 0.0, %v951
          %v953 = vpop.f32.mrf.mxu0
          %v954 = vadd.f32 0.0, %v953
          %955 = vmatmul.bf16.gmra.mxu0 %v928
          %v956 = vpop.f32.mrf.mxu0
          %v957 = vadd.f32 0.0, %v956
          %v958 = vpop.f32.mrf.mxu0
          %v959 = vadd.f32 0.0, %v958
          %960 = vmatmul.bf16.gmra.mxu0 %v930
          %v961 = vpop.f32.mrf.mxu0
          %v962 = vadd.f32 0.0, %v961
          %v963 = vpop.f32.mrf.mxu0
          %v964 = vadd.f32 0.0, %v963
          %965 = vmatmul.bf16.gmra.mxu0 %v932
          %v966 = vpop.f32.mrf.mxu0
          %v967 = vadd.f32 0.0, %v966
          %v968 = vpop.f32.mrf.mxu0
          %v969 = vadd.f32 0.0, %v968
          %970 = vdwg.mxu0
          %971 = vmatpush.bf16.xpose.msra.mxu0 0
          %972 = vmatpush.bf16.xpose.msra.mxu0 0
          %973 = vmatpush.bf16.xpose.msra.mxu0 0
          %974 = vmatpush.bf16.xpose.msra.mxu0 0
          %975 = vmatpush.bf16.xpose.msra.mxu0 %v941
          %976 = vmatpush.bf16.xpose.msra.mxu0 %v939
          %977 = vmatpush.bf16.xpose.msra.mxu0 %v937
          %978 = vmatpush.bf16.xpose.msra.mxu0 %v935
          %979 = vmatmul.bf16.gmra.mxu0 %v927
          %v980 = vpop.f32.mrf.mxu0
          %v981 = vadd.f32 %v952, %v980
          %v982 = vpop.f32.mrf.mxu0
          %v983 = vadd.f32 %v954, %v982
          %984 = vmatmul.bf16.gmra.mxu0 %v929
          %v985 = vpop.f32.mrf.mxu0
          %v986 = vadd.f32 %v957, %v985
          %v987 = vpop.f32.mrf.mxu0
          %v988 = vadd.f32 %v959, %v987
          %989 = vmatmul.bf16.gmra.mxu0 %v931
          %v990 = vpop.f32.mrf.mxu0
          %v991 = vadd.f32 %v962, %v990
          %v992 = vpop.f32.mrf.mxu0
          %v993 = vadd.f32 %v964, %v992
          %994 = vmatmul.bf16.gmra.mxu0 %v933
          %v995 = vpop.f32.mrf.mxu0
          %v996 = vadd.f32 %v967, %v995
          %v997 = vpop.f32.mrf.mxu0
          %v998 = vadd.f32 %v969, %v997
          %999 = vdwg.mxu0
          %v1000 = vld [vmem:[%s2] sm:$0xff]
          %v1001 = vld [vmem:[%s2 + $0x8] sm:$0xff]
          %v1002 = vld [vmem:[%s2 + $0x10] sm:$0xff]
          %v1003 = vld [vmem:[%s2 + $0x18] sm:$0xff]
          %v1004 = vld [vmem:[%s2 + $0x20] sm:$0xff]
          %v1005 = vld [vmem:[%s2 + $0x28] sm:$0xff]
          %v1006 = vld [vmem:[%s2 + $0x30] sm:$0xff]
          %v1007 = vld [vmem:[%s2 + $0x38] sm:$0xff]
          %1009 = vset.pattern.permute.xlu0 0
          %1010 = vperm.xlu0 %1009, %v1000
          %v1011 = vpop.permute.xlu0 %1010
          %1014 = vset.pattern.permute.xlu0 0
          %1015 = vperm.xlu0 %1014, %v1001
          %v1016 = vpop.permute.xlu0 %1015
          %1019 = vset.pattern.permute.xlu0 0
          %1020 = vperm.xlu0 %1019, %v1002
          %v1021 = vpop.permute.xlu0 %1020
          %1024 = vset.pattern.permute.xlu0 0
          %1025 = vperm.xlu0 %1024, %v1003
          %v1026 = vpop.permute.xlu0 %1025
          %1029 = vset.pattern.permute.xlu0 0
          %1030 = vperm.xlu0 %1029, %v1004
          %v1031 = vpop.permute.xlu0 %1030
          %1034 = vset.pattern.permute.xlu0 0
          %1035 = vperm.xlu0 %1034, %v1005
          %v1036 = vpop.permute.xlu0 %1035
          %1039 = vset.pattern.permute.xlu0 0
          %1040 = vperm.xlu0 %1039, %v1006
          %v1041 = vpop.permute.xlu0 %1040
          %1044 = vset.pattern.permute.xlu0 0
          %1045 = vperm.xlu0 %1044, %v1007
          %v1046 = vpop.permute.xlu0 %1045
          %v1048 = vmul.f32 %v981, %v1011
          %v1049 = vmul.f32 %v983, %v1016
          %v1050 = vmul.f32 %v986, %v1021
          %v1051 = vmul.f32 %v988, %v1026
          %v1052 = vmul.f32 %v991, %v1031
          %v1053 = vmul.f32 %v993, %v1036
          %v1054 = vmul.f32 %v996, %v1041
          %v1055 = vmul.f32 %v998, %v1046
          %v1056 = vadd.f32 %v1048, %v345
          %v1057 = vadd.f32 %v1049, %v346
          %v1058 = vadd.f32 %v1050, %v347
          %v1059 = vadd.f32 %v1051, %v348
          %v1060 = vadd.f32 %v1052, %v349
          %v1061 = vadd.f32 %v1053, %v350
          %v1062 = vadd.f32 %v1054, %v351
          %v1063 = vadd.f32 %v1055, %v352
          %v1064 = vsel %vm463, %v1056, -inf
          %1065 = vmax.xlane.f32.xlu0 %v1064
          %v1066 = vpop.xlane.xlu0 %1065
          %v1067 = vsel %vm463, %v1057, -inf
          %1068 = vmax.xlane.f32.xlu0 %v1067
          %v1069 = vpop.xlane.xlu0 %1068
          %v1070 = vsel %vm463, %v1058, -inf
          %1071 = vmax.xlane.f32.xlu0 %v1070
          %v1072 = vpop.xlane.xlu0 %1071
          %v1073 = vsel %vm463, %v1059, -inf
          %1074 = vmax.xlane.f32.xlu0 %v1073
          %v1075 = vpop.xlane.xlu0 %1074
          %v1076 = vsel %vm463, %v1060, -inf
          %1077 = vmax.xlane.f32.xlu0 %v1076
          %v1078 = vpop.xlane.xlu0 %1077
          %v1079 = vsel %vm463, %v1061, -inf
          %1080 = vmax.xlane.f32.xlu0 %v1079
          %v1081 = vpop.xlane.xlu0 %1080
          %v1082 = vsel %vm463, %v1062, -inf
          %1083 = vmax.xlane.f32.xlu0 %v1082
          %v1084 = vpop.xlane.xlu0 %1083
          %v1085 = vsel %vm463, %v1063, -inf
          %1086 = vmax.xlane.f32.xlu0 %v1085
          %v1087 = vpop.xlane.xlu0 %1086
          %v1088 = vsub.f32 %v1056, %v1066
          %v1089 = vsub.f32 %v1057, %v1069
          %v1090 = vsub.f32 %v1058, %v1072
          %v1091 = vsub.f32 %v1059, %v1075
          %v1092 = vsub.f32 %v1060, %v1078
          %v1093 = vsub.f32 %v1061, %v1081
          %v1094 = vsub.f32 %v1062, %v1084
          %v1095 = vsub.f32 %v1063, %v1087
          %v1096 = vmul.f32 %v1088, 1.442695
          %v1097 = vpow.pop %v1096
          %v1098 = vmul.f32 %v1089, 1.442695
          %v1099 = vpow.pop %v1098
          %v1100 = vmul.f32 %v1090, 1.442695
          %v1101 = vpow.pop %v1100
          %v1102 = vmul.f32 %v1091, 1.442695
          %v1103 = vpow.pop %v1102
          %v1104 = vmul.f32 %v1092, 1.442695
          %v1105 = vpow.pop %v1104
          %v1106 = vmul.f32 %v1093, 1.442695
          %v1107 = vpow.pop %v1106
          %v1108 = vmul.f32 %v1094, 1.442695
          %v1109 = vpow.pop %v1108
          %v1110 = vmul.f32 %v1095, 1.442695
          %v1111 = vpow.pop %v1110
          %v1112 = vsel %vm463, %v1097, 0.0
          %1113 = vadd.xlane.f32.xlu0 %v1112
          %v1114 = vpop.xlane.xlu0 %1113
          %v1115 = vsel %vm463, %v1099, 0.0
          %1116 = vadd.xlane.f32.xlu0 %v1115
          %v1117 = vpop.xlane.xlu0 %1116
          %v1118 = vsel %vm463, %v1101, 0.0
          %1119 = vadd.xlane.f32.xlu0 %v1118
          %v1120 = vpop.xlane.xlu0 %1119
          %v1121 = vsel %vm463, %v1103, 0.0
          %1122 = vadd.xlane.f32.xlu0 %v1121
          %v1123 = vpop.xlane.xlu0 %1122
          %v1124 = vsel %vm463, %v1105, 0.0
          %1125 = vadd.xlane.f32.xlu0 %v1124
          %v1126 = vpop.xlane.xlu0 %1125
          %v1127 = vsel %vm463, %v1107, 0.0
          %1128 = vadd.xlane.f32.xlu0 %v1127
          %v1129 = vpop.xlane.xlu0 %1128
          %v1130 = vsel %vm463, %v1109, 0.0
          %1131 = vadd.xlane.f32.xlu0 %v1130
          %v1132 = vpop.xlane.xlu0 %1131
          %v1133 = vsel %vm463, %v1111, 0.0
          %1134 = vadd.xlane.f32.xlu0 %v1133
          %v1135 = vpop.xlane.xlu0 %1134
          %v1136 = vrcp.pop %v1114
          %v1137 = vrcp.pop %v1117
          %v1138 = vrcp.pop %v1120
          %v1139 = vrcp.pop %v1123
          %v1140 = vrcp.pop %v1126
          %v1141 = vrcp.pop %v1129
          %v1142 = vrcp.pop %v1132
          %v1143 = vrcp.pop %v1135
          %v1144 = vmul.f32 %v1097, %v1136
          %v1145 = vmul.f32 %v1099, %v1137
          %v1146 = vmul.f32 %v1101, %v1138
          %v1147 = vmul.f32 %v1103, %v1139
          %v1148 = vmul.f32 %v1105, %v1140
          %v1149 = vmul.f32 %v1107, %v1141
          %v1150 = vmul.f32 %v1109, %v1142
          %v1151 = vmul.f32 %v1111, %v1143
          %v1152 = vpack.c.bf16 %v1145, %v1144
          %v1153 = vpack.c.bf16 %v1147, %v1146
          %v1154 = vpack.c.bf16 %v1149, %v1148
          %v1155 = vpack.c.bf16 %v1151, %v1150
          %v1156 = vpack.c.bf16 %v552, %v550
          %v1157 = vpack.c.bf16 %v621, %v619
          %v1158 = vpack.c.bf16 %v557, %v555
          %v1159 = vpack.c.bf16 %v626, %v624
          %v1160 = vpack.c.bf16 %v562, %v560
          %v1161 = vpack.c.bf16 %v631, %v629
          %v1162 = vpack.c.bf16 %v567, %v565
          %v1163 = vpack.c.bf16 %v636, %v634
          %v1165 = vsel %vm463, %v1152, 0
          %v1168 = vsel %vm463, %v1153, 0
          %v1171 = vsel %vm463, %v1154, 0
          %v1174 = vsel %vm463, %v1155, 0
          %1176 = vmatpush.bf16.msra.mxu0 0
          %1177 = vmatpush.bf16.msra.mxu0 0
          %1178 = vmatpush.bf16.msra.mxu0 0
          %1179 = vmatpush.bf16.msra.mxu0 0
          %1180 = vmatpush.bf16.msra.mxu0 %v1162
          %1181 = vmatpush.bf16.msra.mxu0 %v1160
          %1182 = vmatpush.bf16.msra.mxu0 %v1158
          %1183 = vmatpush.bf16.msra.mxu0 %v1156
          %1184 = vmatmul.bf16.gmra.mxu0 %v1165
          %v1185 = vpop.f32.mrf.mxu0
          %v1186 = vadd.f32 0.0, %v1185
          %v1187 = vpop.f32.mrf.mxu0
          %v1188 = vadd.f32 0.0, %v1187
          %1189 = vmatmul.bf16.gmra.mxu0 %v1168
          %v1190 = vpop.f32.mrf.mxu0
          %v1191 = vadd.f32 0.0, %v1190
          %v1192 = vpop.f32.mrf.mxu0
          %v1193 = vadd.f32 0.0, %v1192
          %1194 = vmatmul.bf16.gmra.mxu0 %v1171
          %v1195 = vpop.f32.mrf.mxu0
          %v1196 = vadd.f32 0.0, %v1195
          %v1197 = vpop.f32.mrf.mxu0
          %v1198 = vadd.f32 0.0, %v1197
          %1199 = vmatmul.bf16.gmra.mxu0 %v1174
          %v1200 = vpop.f32.mrf.mxu0
          %v1201 = vadd.f32 0.0, %v1200
          %v1202 = vpop.f32.mrf.mxu0
          %v1203 = vadd.f32 0.0, %v1202
          %1204 = vdwg.mxu0
          %1205 = vmatpush.bf16.msra.mxu0 0
          %1206 = vmatpush.bf16.msra.mxu0 0
          %1207 = vmatpush.bf16.msra.mxu0 0
          %1208 = vmatpush.bf16.msra.mxu0 0
          %1209 = vmatpush.bf16.msra.mxu0 %v1163
          %1210 = vmatpush.bf16.msra.mxu0 %v1161
          %1211 = vmatpush.bf16.msra.mxu0 %v1159
          %1212 = vmatpush.bf16.msra.mxu0 %v1157
          %1213 = vmatmul.bf16.gmra.mxu0 %v1165
          %v1214 = vpop.f32.mrf.mxu0
          %v1215 = vadd.f32 0.0, %v1214
          %v1216 = vpop.f32.mrf.mxu0
          %v1217 = vadd.f32 0.0, %v1216
          %1218 = vmatmul.bf16.gmra.mxu0 %v1168
          %v1219 = vpop.f32.mrf.mxu0
          %v1220 = vadd.f32 0.0, %v1219
          %v1221 = vpop.f32.mrf.mxu0
          %v1222 = vadd.f32 0.0, %v1221
          %1223 = vmatmul.bf16.gmra.mxu0 %v1171
          %v1224 = vpop.f32.mrf.mxu0
          %v1225 = vadd.f32 0.0, %v1224
          %v1226 = vpop.f32.mrf.mxu0
          %v1227 = vadd.f32 0.0, %v1226
          %1228 = vmatmul.bf16.gmra.mxu0 %v1174
          %v1229 = vpop.f32.mrf.mxu0
          %v1230 = vadd.f32 0.0, %v1229
          %v1231 = vpop.f32.mrf.mxu0
          %v1232 = vadd.f32 0.0, %v1231
          %1233 = vdwg.mxu0
          %v1234 = vld [vmem:[%s3] sm:$0xff]
          %v1235 = vld [vmem:[%s3 + $0x8] sm:$0xff]
          %v1236 = vld [vmem:[%s3 + $0x10] sm:$0xff]
          %v1237 = vld [vmem:[%s3 + $0x18] sm:$0xff]
          %v1238 = vld [vmem:[%s3 + $0x20] sm:$0xff]
          %v1239 = vld [vmem:[%s3 + $0x28] sm:$0xff]
          %v1240 = vld [vmem:[%s3 + $0x30] sm:$0xff]
          %v1241 = vld [vmem:[%s3 + $0x38] sm:$0xff]
          %1250 = vrot.lane.b32.xlu0 %v1215, 17
          %v1251 = vpop.permute.xlu0 %1250
          %1252 = vrot.lane.b32.xlu0 %v1217, 17
          %v1253 = vpop.permute.xlu0 %1252
          %1254 = vrot.lane.b32.xlu0 %v1220, 17
          %v1255 = vpop.permute.xlu0 %1254
          %1256 = vrot.lane.b32.xlu0 %v1222, 17
          %v1257 = vpop.permute.xlu0 %1256
          %1258 = vrot.lane.b32.xlu0 %v1225, 17
          %v1259 = vpop.permute.xlu0 %1258
          %1260 = vrot.lane.b32.xlu0 %v1227, 17
          %v1261 = vpop.permute.xlu0 %1260
          %1262 = vrot.lane.b32.xlu0 %v1230, 17
          %v1263 = vpop.permute.xlu0 %1262
          %1264 = vrot.lane.b32.xlu0 %v1232, 17
          %v1265 = vpop.permute.xlu0 %1264
          %1282 = vrot.lane.b32.xlu0 %v1186, 17
          %v1283 = vpop.permute.xlu0 %1282
          %1284 = vrot.lane.b32.xlu0 %v1188, 17
          %v1285 = vpop.permute.xlu0 %1284
          %1286 = vrot.lane.b32.xlu0 %v1191, 17
          %v1287 = vpop.permute.xlu0 %1286
          %1288 = vrot.lane.b32.xlu0 %v1193, 17
          %v1289 = vpop.permute.xlu0 %1288
          %1290 = vrot.lane.b32.xlu0 %v1196, 17
          %v1291 = vpop.permute.xlu0 %1290
          %1292 = vrot.lane.b32.xlu0 %v1198, 17
          %v1293 = vpop.permute.xlu0 %1292
          %1294 = vrot.lane.b32.xlu0 %v1201, 17
          %v1295 = vpop.permute.xlu0 %1294
          %1296 = vrot.lane.b32.xlu0 %v1203, 17
          %v1297 = vpop.permute.xlu0 %1296
          %vm1298 = vcmask 138240
          %v1299 = vsel %vm1298, %v1283, %v1251
          %v1300 = vsel %vm1298, %v1285, %v1253
          %v1301 = vsel %vm1298, %v1287, %v1255
          %v1302 = vsel %vm1298, %v1289, %v1257
          %v1303 = vsel %vm1298, %v1291, %v1259
          %v1304 = vsel %vm1298, %v1293, %v1261
          %v1305 = vsel %vm1298, %v1295, %v1263
          %v1306 = vsel %vm1298, %v1297, %v1265
          %v1323 = vsel %vm1298, %v1251, %v1283
          %v1324 = vsel %vm1298, %v1253, %v1285
          %v1325 = vsel %vm1298, %v1255, %v1287
          %v1326 = vsel %vm1298, %v1257, %v1289
          %v1327 = vsel %vm1298, %v1259, %v1291
          %v1328 = vsel %vm1298, %v1261, %v1293
          %v1329 = vsel %vm1298, %v1263, %v1295
          %v1330 = vsel %vm1298, %v1265, %v1297
          %v1331 = vperm.slane %v353, 0
          %v1332 = vperm.slane %v354, 0
          %v1333 = vmul.f32 %v1323, %v1331
          %v1334 = vmul.f32 %v1299, %v1332
          %v1335 = vmul.f32 %v1324, %v1331
          %v1336 = vmul.f32 %v1300, %v1332
          %v1337 = vmul.f32 %v1325, %v1331
          %v1338 = vmul.f32 %v1301, %v1332
          %v1339 = vmul.f32 %v1326, %v1331
          %v1340 = vmul.f32 %v1302, %v1332
          %v1341 = vmul.f32 %v1327, %v1331
          %v1342 = vmul.f32 %v1303, %v1332
          %v1343 = vmul.f32 %v1328, %v1331
          %v1344 = vmul.f32 %v1304, %v1332
          %v1345 = vmul.f32 %v1329, %v1331
          %v1346 = vmul.f32 %v1305, %v1332
          %v1347 = vmul.f32 %v1330, %v1331
          %v1348 = vmul.f32 %v1306, %v1332
          %1350 = vset.pattern.permute.xlu0 0
          %1351 = vperm.xlu0 %1350, %v1234
          %v1352 = vpop.permute.xlu0 %1351
          %1355 = vset.pattern.permute.xlu0 0
          %1356 = vperm.xlu0 %1355, %v1235
          %v1357 = vpop.permute.xlu0 %1356
          %1360 = vset.pattern.permute.xlu0 0
          %1361 = vperm.xlu0 %1360, %v1236
          %v1362 = vpop.permute.xlu0 %1361
          %1365 = vset.pattern.permute.xlu0 0
          %1366 = vperm.xlu0 %1365, %v1237
          %v1367 = vpop.permute.xlu0 %1366
          %1370 = vset.pattern.permute.xlu0 0
          %1371 = vperm.xlu0 %1370, %v1238
          %v1372 = vpop.permute.xlu0 %1371
          %1375 = vset.pattern.permute.xlu0 0
          %1376 = vperm.xlu0 %1375, %v1239
          %v1377 = vpop.permute.xlu0 %1376
          %1380 = vset.pattern.permute.xlu0 0
          %1381 = vperm.xlu0 %1380, %v1240
          %v1382 = vpop.permute.xlu0 %1381
          %1385 = vset.pattern.permute.xlu0 0
          %1386 = vperm.xlu0 %1385, %v1241
          %v1387 = vpop.permute.xlu0 %1386
          %v1389 = vmul.f32 %v1333, %v1352
          %v1390 = vmul.f32 %v1334, %v1352
          %v1391 = vmul.f32 %v1335, %v1357
          %v1392 = vmul.f32 %v1336, %v1357
          %v1393 = vmul.f32 %v1337, %v1362
          %v1394 = vmul.f32 %v1338, %v1362
          %v1395 = vmul.f32 %v1339, %v1367
          %v1396 = vmul.f32 %v1340, %v1367
          %v1397 = vmul.f32 %v1341, %v1372
          %v1398 = vmul.f32 %v1342, %v1372
          %v1399 = vmul.f32 %v1343, %v1377
          %v1400 = vmul.f32 %v1344, %v1377
          %v1401 = vmul.f32 %v1345, %v1382
          %v1402 = vmul.f32 %v1346, %v1382
          %v1403 = vmul.f32 %v1347, %v1387
          %v1404 = vmul.f32 %v1348, %v1387
          %1405 = vrot.lane.b32.xlu0 %v1215, 16
          %v1406 = vpop.permute.xlu0 %1405
          %1407 = vrot.lane.b32.xlu0 %v1217, 16
          %v1408 = vpop.permute.xlu0 %1407
          %1409 = vrot.lane.b32.xlu0 %v1220, 16
          %v1410 = vpop.permute.xlu0 %1409
          %1411 = vrot.lane.b32.xlu0 %v1222, 16
          %v1412 = vpop.permute.xlu0 %1411
          %1413 = vrot.lane.b32.xlu0 %v1225, 16
          %v1414 = vpop.permute.xlu0 %1413
          %1415 = vrot.lane.b32.xlu0 %v1227, 16
          %v1416 = vpop.permute.xlu0 %1415
          %1417 = vrot.lane.b32.xlu0 %v1230, 16
          %v1418 = vpop.permute.xlu0 %1417
          %1419 = vrot.lane.b32.xlu0 %v1232, 16
          %v1420 = vpop.permute.xlu0 %1419
          %1429 = vrot.lane.b32.xlu0 %v1186, 16
          %v1430 = vpop.permute.xlu0 %1429
          %1431 = vrot.lane.b32.xlu0 %v1188, 16
          %v1432 = vpop.permute.xlu0 %1431
          %1433 = vrot.lane.b32.xlu0 %v1191, 16
          %v1434 = vpop.permute.xlu0 %1433
          %1435 = vrot.lane.b32.xlu0 %v1193, 16
          %v1436 = vpop.permute.xlu0 %1435
          %1437 = vrot.lane.b32.xlu0 %v1196, 16
          %v1438 = vpop.permute.xlu0 %1437
          %1439 = vrot.lane.b32.xlu0 %v1198, 16
          %v1440 = vpop.permute.xlu0 %1439
          %1441 = vrot.lane.b32.xlu0 %v1201, 16
          %v1442 = vpop.permute.xlu0 %1441
          %1443 = vrot.lane.b32.xlu0 %v1203, 16
          %v1444 = vpop.permute.xlu0 %1443
          %vm1445 = vcmask 130048
          %v1446 = vsel %vm1445, %v1430, %v1406
          %v1447 = vsel %vm1445, %v1432, %v1408
          %v1448 = vsel %vm1445, %v1434, %v1410
          %v1449 = vsel %vm1445, %v1436, %v1412
          %v1450 = vsel %vm1445, %v1438, %v1414
          %v1451 = vsel %vm1445, %v1440, %v1416
          %v1452 = vsel %vm1445, %v1442, %v1418
          %v1453 = vsel %vm1445, %v1444, %v1420
          %v1470 = vsel %vm1445, %v1406, %v1430
          %v1471 = vsel %vm1445, %v1408, %v1432
          %v1472 = vsel %vm1445, %v1410, %v1434
          %v1473 = vsel %vm1445, %v1412, %v1436
          %v1474 = vsel %vm1445, %v1414, %v1438
          %v1475 = vsel %vm1445, %v1416, %v1440
          %v1476 = vsel %vm1445, %v1418, %v1442
          %v1477 = vsel %vm1445, %v1420, %v1444
          %v1478 = vperm.slane %v353, 1
          %v1479 = vperm.slane %v354, 1
          %v1480 = vmul.f32 %v1470, %v1478
          %v1481 = vmul.f32 %v1446, %v1479
          %v1482 = vmul.f32 %v1471, %v1478
          %v1483 = vmul.f32 %v1447, %v1479
          %v1484 = vmul.f32 %v1472, %v1478
          %v1485 = vmul.f32 %v1448, %v1479
          %v1486 = vmul.f32 %v1473, %v1478
          %v1487 = vmul.f32 %v1449, %v1479
          %v1488 = vmul.f32 %v1474, %v1478
          %v1489 = vmul.f32 %v1450, %v1479
          %v1490 = vmul.f32 %v1475, %v1478
          %v1491 = vmul.f32 %v1451, %v1479
          %v1492 = vmul.f32 %v1476, %v1478
          %v1493 = vmul.f32 %v1452, %v1479
          %v1494 = vmul.f32 %v1477, %v1478
          %v1495 = vmul.f32 %v1453, %v1479
          %1496 = vset.pattern.permute.xlu0 1
          %1497 = vperm.xlu0 %1496, %v1234
          %v1498 = vpop.permute.xlu0 %1497
          %1500 = vset.pattern.permute.xlu0 1
          %1501 = vperm.xlu0 %1500, %v1235
          %v1502 = vpop.permute.xlu0 %1501
          %1504 = vset.pattern.permute.xlu0 1
          %1505 = vperm.xlu0 %1504, %v1236
          %v1506 = vpop.permute.xlu0 %1505
          %1508 = vset.pattern.permute.xlu0 1
          %1509 = vperm.xlu0 %1508, %v1237
          %v1510 = vpop.permute.xlu0 %1509
          %1512 = vset.pattern.permute.xlu0 1
          %1513 = vperm.xlu0 %1512, %v1238
          %v1514 = vpop.permute.xlu0 %1513
          %1516 = vset.pattern.permute.xlu0 1
          %1517 = vperm.xlu0 %1516, %v1239
          %v1518 = vpop.permute.xlu0 %1517
          %1520 = vset.pattern.permute.xlu0 1
          %1521 = vperm.xlu0 %1520, %v1240
          %v1522 = vpop.permute.xlu0 %1521
          %1524 = vset.pattern.permute.xlu0 1
          %1525 = vperm.xlu0 %1524, %v1241
          %v1526 = vpop.permute.xlu0 %1525
          %v1528 = vmul.f32 %v1480, %v1498
          %v1529 = vmul.f32 %v1481, %v1498
          %v1530 = vmul.f32 %v1482, %v1502
          %v1531 = vmul.f32 %v1483, %v1502
          %v1532 = vmul.f32 %v1484, %v1506
          %v1533 = vmul.f32 %v1485, %v1506
          %v1534 = vmul.f32 %v1486, %v1510
          %v1535 = vmul.f32 %v1487, %v1510
          %v1536 = vmul.f32 %v1488, %v1514
          %v1537 = vmul.f32 %v1489, %v1514
          %v1538 = vmul.f32 %v1490, %v1518
          %v1539 = vmul.f32 %v1491, %v1518
          %v1540 = vmul.f32 %v1492, %v1522
          %v1541 = vmul.f32 %v1493, %v1522
          %v1542 = vmul.f32 %v1494, %v1526
          %v1543 = vmul.f32 %v1495, %v1526
          %1544 = vrot.lane.b32.xlu0 %v1215, 15
          %v1545 = vpop.permute.xlu0 %1544
          %1546 = vrot.lane.b32.xlu0 %v1217, 15
          %v1547 = vpop.permute.xlu0 %1546
          %1548 = vrot.lane.b32.xlu0 %v1220, 15
          %v1549 = vpop.permute.xlu0 %1548
          %1550 = vrot.lane.b32.xlu0 %v1222, 15
          %v1551 = vpop.permute.xlu0 %1550
          %1552 = vrot.lane.b32.xlu0 %v1225, 15
          %v1553 = vpop.permute.xlu0 %1552
          %1554 = vrot.lane.b32.xlu0 %v1227, 15
          %v1555 = vpop.permute.xlu0 %1554
          %1556 = vrot.lane.b32.xlu0 %v1230, 15
          %v1557 = vpop.permute.xlu0 %1556
          %1558 = vrot.lane.b32.xlu0 %v1232, 15
          %v1559 = vpop.permute.xlu0 %1558
          %1568 = vrot.lane.b32.xlu0 %v1186, 15
          %v1569 = vpop.permute.xlu0 %1568
          %1570 = vrot.lane.b32.xlu0 %v1188, 15
          %v1571 = vpop.permute.xlu0 %1570
          %1572 = vrot.lane.b32.xlu0 %v1191, 15
          %v1573 = vpop.permute.xlu0 %1572
          %1574 = vrot.lane.b32.xlu0 %v1193, 15
          %v1575 = vpop.permute.xlu0 %1574
          %1576 = vrot.lane.b32.xlu0 %v1196, 15
          %v1577 = vpop.permute.xlu0 %1576
          %1578 = vrot.lane.b32.xlu0 %v1198, 15
          %v1579 = vpop.permute.xlu0 %1578
          %1580 = vrot.lane.b32.xlu0 %v1201, 15
          %v1581 = vpop.permute.xlu0 %1580
          %1582 = vrot.lane.b32.xlu0 %v1203, 15
          %v1583 = vpop.permute.xlu0 %1582
          %vm1584 = vcmask 121856
          %v1585 = vsel %vm1584, %v1569, %v1545
          %v1586 = vsel %vm1584, %v1571, %v1547
          %v1587 = vsel %vm1584, %v1573, %v1549
          %v1588 = vsel %vm1584, %v1575, %v1551
          %v1589 = vsel %vm1584, %v1577, %v1553
          %v1590 = vsel %vm1584, %v1579, %v1555
          %v1591 = vsel %vm1584, %v1581, %v1557
          %v1592 = vsel %vm1584, %v1583, %v1559
          %v1609 = vsel %vm1584, %v1545, %v1569
          %v1610 = vsel %vm1584, %v1547, %v1571
          %v1611 = vsel %vm1584, %v1549, %v1573
          %v1612 = vsel %vm1584, %v1551, %v1575
          %v1613 = vsel %vm1584, %v1553, %v1577
          %v1614 = vsel %vm1584, %v1555, %v1579
          %v1615 = vsel %vm1584, %v1557, %v1581
          %v1616 = vsel %vm1584, %v1559, %v1583
          %v1617 = vperm.slane %v353, 2
          %v1618 = vperm.slane %v354, 2
          %v1619 = vmul.f32 %v1609, %v1617
          %v1620 = vmul.f32 %v1585, %v1618
          %v1621 = vmul.f32 %v1610, %v1617
          %v1622 = vmul.f32 %v1586, %v1618
          %v1623 = vmul.f32 %v1611, %v1617
          %v1624 = vmul.f32 %v1587, %v1618
          %v1625 = vmul.f32 %v1612, %v1617
          %v1626 = vmul.f32 %v1588, %v1618
          %v1627 = vmul.f32 %v1613, %v1617
          %v1628 = vmul.f32 %v1589, %v1618
          %v1629 = vmul.f32 %v1614, %v1617
          %v1630 = vmul.f32 %v1590, %v1618
          %v1631 = vmul.f32 %v1615, %v1617
          %v1632 = vmul.f32 %v1591, %v1618
          %v1633 = vmul.f32 %v1616, %v1617
          %v1634 = vmul.f32 %v1592, %v1618
          %1635 = vset.pattern.permute.xlu0 2
          %1636 = vperm.xlu0 %1635, %v1234
          %v1637 = vpop.permute.xlu0 %1636
          %1639 = vset.pattern.permute.xlu0 2
          %1640 = vperm.xlu0 %1639, %v1235
          %v1641 = vpop.permute.xlu0 %1640
          %1643 = vset.pattern.permute.xlu0 2
          %1644 = vperm.xlu0 %1643, %v1236
          %v1645 = vpop.permute.xlu0 %1644
          %1647 = vset.pattern.permute.xlu0 2
          %1648 = vperm.xlu0 %1647, %v1237
          %v1649 = vpop.permute.xlu0 %1648
          %1651 = vset.pattern.permute.xlu0 2
          %1652 = vperm.xlu0 %1651, %v1238
          %v1653 = vpop.permute.xlu0 %1652
          %1655 = vset.pattern.permute.xlu0 2
          %1656 = vperm.xlu0 %1655, %v1239
          %v1657 = vpop.permute.xlu0 %1656
          %1659 = vset.pattern.permute.xlu0 2
          %1660 = vperm.xlu0 %1659, %v1240
          %v1661 = vpop.permute.xlu0 %1660
          %1663 = vset.pattern.permute.xlu0 2
          %1664 = vperm.xlu0 %1663, %v1241
          %v1665 = vpop.permute.xlu0 %1664
          %v1667 = vmul.f32 %v1619, %v1637
          %v1668 = vmul.f32 %v1620, %v1637
          %v1669 = vmul.f32 %v1621, %v1641
          %v1670 = vmul.f32 %v1622, %v1641
          %v1671 = vmul.f32 %v1623, %v1645
          %v1672 = vmul.f32 %v1624, %v1645
          %v1673 = vmul.f32 %v1625, %v1649
          %v1674 = vmul.f32 %v1626, %v1649
          %v1675 = vmul.f32 %v1627, %v1653
          %v1676 = vmul.f32 %v1628, %v1653
          %v1677 = vmul.f32 %v1629, %v1657
          %v1678 = vmul.f32 %v1630, %v1657
          %v1679 = vmul.f32 %v1631, %v1661
          %v1680 = vmul.f32 %v1632, %v1661
          %v1681 = vmul.f32 %v1633, %v1665
          %v1682 = vmul.f32 %v1634, %v1665
          %1683 = vrot.lane.b32.xlu0 %v1215, 1
          %v1684 = vpop.permute.xlu0 %1683
          %1685 = vrot.lane.b32.xlu0 %v1217, 1
          %v1686 = vpop.permute.xlu0 %1685
          %1687 = vrot.lane.b32.xlu0 %v1220, 1
          %v1688 = vpop.permute.xlu0 %1687
          %1689 = vrot.lane.b32.xlu0 %v1222, 1
          %v1690 = vpop.permute.xlu0 %1689
          %1691 = vrot.lane.b32.xlu0 %v1225, 1
          %v1692 = vpop.permute.xlu0 %1691
          %1693 = vrot.lane.b32.xlu0 %v1227, 1
          %v1694 = vpop.permute.xlu0 %1693
          %1695 = vrot.lane.b32.xlu0 %v1230, 1
          %v1696 = vpop.permute.xlu0 %1695
          %1697 = vrot.lane.b32.xlu0 %v1232, 1
          %v1698 = vpop.permute.xlu0 %1697
          %1707 = vrot.lane.b32.xlu0 %v1186, 1
          %v1708 = vpop.permute.xlu0 %1707
          %1709 = vrot.lane.b32.xlu0 %v1188, 1
          %v1710 = vpop.permute.xlu0 %1709
          %1711 = vrot.lane.b32.xlu0 %v1191, 1
          %v1712 = vpop.permute.xlu0 %1711
          %1713 = vrot.lane.b32.xlu0 %v1193, 1
          %v1714 = vpop.permute.xlu0 %1713
          %1715 = vrot.lane.b32.xlu0 %v1196, 1
          %v1716 = vpop.permute.xlu0 %1715
          %1717 = vrot.lane.b32.xlu0 %v1198, 1
          %v1718 = vpop.permute.xlu0 %1717
          %1719 = vrot.lane.b32.xlu0 %v1201, 1
          %v1720 = vpop.permute.xlu0 %1719
          %1721 = vrot.lane.b32.xlu0 %v1203, 1
          %v1722 = vpop.permute.xlu0 %1721
          %vm1723 = vcmask 7168
          %v1724 = vsel %vm1723, %v1708, %v1684
          %v1725 = vsel %vm1723, %v1710, %v1686
          %v1726 = vsel %vm1723, %v1712, %v1688
          %v1727 = vsel %vm1723, %v1714, %v1690
          %v1728 = vsel %vm1723, %v1716, %v1692
          %v1729 = vsel %vm1723, %v1718, %v1694
          %v1730 = vsel %vm1723, %v1720, %v1696
          %v1731 = vsel %vm1723, %v1722, %v1698
          %v1748 = vsel %vm1723, %v1684, %v1708
          %v1749 = vsel %vm1723, %v1686, %v1710
          %v1750 = vsel %vm1723, %v1688, %v1712
          %v1751 = vsel %vm1723, %v1690, %v1714
          %v1752 = vsel %vm1723, %v1692, %v1716
          %v1753 = vsel %vm1723, %v1694, %v1718
          %v1754 = vsel %vm1723, %v1696, %v1720
          %v1755 = vsel %vm1723, %v1698, %v1722
          %v1756 = vperm.slane %v353, 3
          %v1757 = vperm.slane %v354, 3
          %v1758 = vmul.f32 %v1748, %v1756
          %v1759 = vmul.f32 %v1724, %v1757
          %v1760 = vmul.f32 %v1749, %v1756
          %v1761 = vmul.f32 %v1725, %v1757
          %v1762 = vmul.f32 %v1750, %v1756
          %v1763 = vmul.f32 %v1726, %v1757
          %v1764 = vmul.f32 %v1751, %v1756
          %v1765 = vmul.f32 %v1727, %v1757
          %v1766 = vmul.f32 %v1752, %v1756
          %v1767 = vmul.f32 %v1728, %v1757
          %v1768 = vmul.f32 %v1753, %v1756
          %v1769 = vmul.f32 %v1729, %v1757
          %v1770 = vmul.f32 %v1754, %v1756
          %v1771 = vmul.f32 %v1730, %v1757
          %v1772 = vmul.f32 %v1755, %v1756
          %v1773 = vmul.f32 %v1731, %v1757
          %1774 = vset.pattern.permute.xlu0 3
          %1775 = vperm.xlu0 %1774, %v1234
          %v1776 = vpop.permute.xlu0 %1775
          %1778 = vset.pattern.permute.xlu0 3
          %1779 = vperm.xlu0 %1778, %v1235
          %v1780 = vpop.permute.xlu0 %1779
          %1782 = vset.pattern.permute.xlu0 3
          %1783 = vperm.xlu0 %1782, %v1236
          %v1784 = vpop.permute.xlu0 %1783
          %1786 = vset.pattern.permute.xlu0 3
          %1787 = vperm.xlu0 %1786, %v1237
          %v1788 = vpop.permute.xlu0 %1787
          %1790 = vset.pattern.permute.xlu0 3
          %1791 = vperm.xlu0 %1790, %v1238
          %v1792 = vpop.permute.xlu0 %1791
          %1794 = vset.pattern.permute.xlu0 3
          %1795 = vperm.xlu0 %1794, %v1239
          %v1796 = vpop.permute.xlu0 %1795
          %1798 = vset.pattern.permute.xlu0 3
          %1799 = vperm.xlu0 %1798, %v1240
          %v1800 = vpop.permute.xlu0 %1799
          %1802 = vset.pattern.permute.xlu0 3
          %1803 = vperm.xlu0 %1802, %v1241
          %v1804 = vpop.permute.xlu0 %1803
          %v1806 = vmul.f32 %v1758, %v1776
          %v1807 = vmul.f32 %v1759, %v1776
          %v1808 = vmul.f32 %v1760, %v1780
          %v1809 = vmul.f32 %v1761, %v1780
          %v1810 = vmul.f32 %v1762, %v1784
          %v1811 = vmul.f32 %v1763, %v1784
          %v1812 = vmul.f32 %v1764, %v1788
          %v1813 = vmul.f32 %v1765, %v1788
          %v1814 = vmul.f32 %v1766, %v1792
          %v1815 = vmul.f32 %v1767, %v1792
          %v1816 = vmul.f32 %v1768, %v1796
          %v1817 = vmul.f32 %v1769, %v1796
          %v1818 = vmul.f32 %v1770, %v1800
          %v1819 = vmul.f32 %v1771, %v1800
          %v1820 = vmul.f32 %v1772, %v1804
          %v1821 = vmul.f32 %v1773, %v1804
          %v1822 = vperm.slane %v353, 4
          %v1823 = vperm.slane %v354, 4
          %v1824 = vmul.f32 %v1186, %v1822
          %v1825 = vmul.f32 %v1215, %v1823
          %v1826 = vmul.f32 %v1188, %v1822
          %v1827 = vmul.f32 %v1217, %v1823
          %v1828 = vmul.f32 %v1191, %v1822
          %v1829 = vmul.f32 %v1220, %v1823
          %v1830 = vmul.f32 %v1193, %v1822
          %v1831 = vmul.f32 %v1222, %v1823
          %v1832 = vmul.f32 %v1196, %v1822
          %v1833 = vmul.f32 %v1225, %v1823
          %v1834 = vmul.f32 %v1198, %v1822
          %v1835 = vmul.f32 %v1227, %v1823
          %v1836 = vmul.f32 %v1201, %v1822
          %v1837 = vmul.f32 %v1230, %v1823
          %v1838 = vmul.f32 %v1203, %v1822
          %v1839 = vmul.f32 %v1232, %v1823
          %1840 = vset.pattern.permute.xlu0 4
          %1841 = vperm.xlu0 %1840, %v1234
          %v1842 = vpop.permute.xlu0 %1841
          %1844 = vset.pattern.permute.xlu0 4
          %1845 = vperm.xlu0 %1844, %v1235
          %v1846 = vpop.permute.xlu0 %1845
          %1848 = vset.pattern.permute.xlu0 4
          %1849 = vperm.xlu0 %1848, %v1236
          %v1850 = vpop.permute.xlu0 %1849
          %1852 = vset.pattern.permute.xlu0 4
          %1853 = vperm.xlu0 %1852, %v1237
          %v1854 = vpop.permute.xlu0 %1853
          %1856 = vset.pattern.permute.xlu0 4
          %1857 = vperm.xlu0 %1856, %v1238
          %v1858 = vpop.permute.xlu0 %1857
          %1860 = vset.pattern.permute.xlu0 4
          %1861 = vperm.xlu0 %1860, %v1239
          %v1862 = vpop.permute.xlu0 %1861
          %1864 = vset.pattern.permute.xlu0 4
          %1865 = vperm.xlu0 %1864, %v1240
          %v1866 = vpop.permute.xlu0 %1865
          %1868 = vset.pattern.permute.xlu0 4
          %1869 = vperm.xlu0 %1868, %v1241
          %v1870 = vpop.permute.xlu0 %1869
          %v1872 = vmul.f32 %v1824, %v1842
          %v1873 = vmul.f32 %v1825, %v1842
          %v1874 = vmul.f32 %v1826, %v1846
          %v1875 = vmul.f32 %v1827, %v1846
          %v1876 = vmul.f32 %v1828, %v1850
          %v1877 = vmul.f32 %v1829, %v1850
          %v1878 = vmul.f32 %v1830, %v1854
          %v1879 = vmul.f32 %v1831, %v1854
          %v1880 = vmul.f32 %v1832, %v1858
          %v1881 = vmul.f32 %v1833, %v1858
          %v1882 = vmul.f32 %v1834, %v1862
          %v1883 = vmul.f32 %v1835, %v1862
          %v1884 = vmul.f32 %v1836, %v1866
          %v1885 = vmul.f32 %v1837, %v1866
          %v1886 = vmul.f32 %v1838, %v1870
          %v1887 = vmul.f32 %v1839, %v1870
          %1888 = vrot.lane.b32.xlu0 %v1186, 127
          %v1889 = vpop.permute.xlu0 %1888
          %1890 = vrot.lane.b32.xlu0 %v1215, 127
          %v1891 = vpop.permute.xlu0 %1890
          %1892 = vrot.lane.b32.xlu0 %v1188, 127
          %v1893 = vpop.permute.xlu0 %1892
          %1894 = vrot.lane.b32.xlu0 %v1217, 127
          %v1895 = vpop.permute.xlu0 %1894
          %1896 = vrot.lane.b32.xlu0 %v1191, 127
          %v1897 = vpop.permute.xlu0 %1896
          %1898 = vrot.lane.b32.xlu0 %v1220, 127
          %v1899 = vpop.permute.xlu0 %1898
          %1900 = vrot.lane.b32.xlu0 %v1193, 127
          %v1901 = vpop.permute.xlu0 %1900
          %1902 = vrot.lane.b32.xlu0 %v1222, 127
          %v1903 = vpop.permute.xlu0 %1902
          %1904 = vrot.lane.b32.xlu0 %v1196, 127
          %v1905 = vpop.permute.xlu0 %1904
          %1906 = vrot.lane.b32.xlu0 %v1225, 127
          %v1907 = vpop.permute.xlu0 %1906
          %1908 = vrot.lane.b32.xlu0 %v1198, 127
          %v1909 = vpop.permute.xlu0 %1908
          %1910 = vrot.lane.b32.xlu0 %v1227, 127
          %v1911 = vpop.permute.xlu0 %1910
          %1912 = vrot.lane.b32.xlu0 %v1201, 127
          %v1913 = vpop.permute.xlu0 %1912
          %1914 = vrot.lane.b32.xlu0 %v1230, 127
          %v1915 = vpop.permute.xlu0 %1914
          %1916 = vrot.lane.b32.xlu0 %v1203, 127
          %v1917 = vpop.permute.xlu0 %1916
          %1918 = vrot.lane.b32.xlu0 %v1232, 127
          %v1919 = vpop.permute.xlu0 %1918
          %vm1920 = vcmask 1039360
          %v1921 = vsel %vm1920, %v1889, %v1891
          %v1922 = vsel %vm1920, %v1893, %v1895
          %v1923 = vsel %vm1920, %v1897, %v1899
          %v1924 = vsel %vm1920, %v1901, %v1903
          %v1925 = vsel %vm1920, %v1905, %v1907
          %v1926 = vsel %vm1920, %v1909, %v1911
          %v1927 = vsel %vm1920, %v1913, %v1915
          %v1928 = vsel %vm1920, %v1917, %v1919
          %v1953 = vsel %vm1920, %v1891, %v1889
          %v1954 = vsel %vm1920, %v1895, %v1893
          %v1955 = vsel %vm1920, %v1899, %v1897
          %v1956 = vsel %vm1920, %v1903, %v1901
          %v1957 = vsel %vm1920, %v1907, %v1905
          %v1958 = vsel %vm1920, %v1911, %v1909
          %v1959 = vsel %vm1920, %v1915, %v1913
          %v1960 = vsel %vm1920, %v1919, %v1917
          %v1961 = vperm.slane %v353, 5
          %v1962 = vperm.slane %v354, 5
          %v1963 = vmul.f32 %v1921, %v1961
          %v1964 = vmul.f32 %v1953, %v1962
          %v1965 = vmul.f32 %v1922, %v1961
          %v1966 = vmul.f32 %v1954, %v1962
          %v1967 = vmul.f32 %v1923, %v1961
          %v1968 = vmul.f32 %v1955, %v1962
          %v1969 = vmul.f32 %v1924, %v1961
          %v1970 = vmul.f32 %v1956, %v1962
          %v1971 = vmul.f32 %v1925, %v1961
          %v1972 = vmul.f32 %v1957, %v1962
          %v1973 = vmul.f32 %v1926, %v1961
          %v1974 = vmul.f32 %v1958, %v1962
          %v1975 = vmul.f32 %v1927, %v1961
          %v1976 = vmul.f32 %v1959, %v1962
          %v1977 = vmul.f32 %v1928, %v1961
          %v1978 = vmul.f32 %v1960, %v1962
          %1979 = vset.pattern.permute.xlu0 5
          %1980 = vperm.xlu0 %1979, %v1234
          %v1981 = vpop.permute.xlu0 %1980
          %1983 = vset.pattern.permute.xlu0 5
          %1984 = vperm.xlu0 %1983, %v1235
          %v1985 = vpop.permute.xlu0 %1984
          %1987 = vset.pattern.permute.xlu0 5
          %1988 = vperm.xlu0 %1987, %v1236
          %v1989 = vpop.permute.xlu0 %1988
          %1991 = vset.pattern.permute.xlu0 5
          %1992 = vperm.xlu0 %1991, %v1237
          %v1993 = vpop.permute.xlu0 %1992
          %1995 = vset.pattern.permute.xlu0 5
          %1996 = vperm.xlu0 %1995, %v1238
          %v1997 = vpop.permute.xlu0 %1996
          %1999 = vset.pattern.permute.xlu0 5
          %2000 = vperm.xlu0 %1999, %v1239
          %v2001 = vpop.permute.xlu0 %2000
          %2003 = vset.pattern.permute.xlu0 5
          %2004 = vperm.xlu0 %2003, %v1240
          %v2005 = vpop.permute.xlu0 %2004
          %2007 = vset.pattern.permute.xlu0 5
          %2008 = vperm.xlu0 %2007, %v1241
          %v2009 = vpop.permute.xlu0 %2008
          %v2011 = vmul.f32 %v1963, %v1981
          %v2012 = vmul.f32 %v1964, %v1981
          %v2013 = vmul.f32 %v1965, %v1985
          %v2014 = vmul.f32 %v1966, %v1985
          %v2015 = vmul.f32 %v1967, %v1989
          %v2016 = vmul.f32 %v1968, %v1989
          %v2017 = vmul.f32 %v1969, %v1993
          %v2018 = vmul.f32 %v1970, %v1993
          %v2019 = vmul.f32 %v1971, %v1997
          %v2020 = vmul.f32 %v1972, %v1997
          %v2021 = vmul.f32 %v1973, %v2001
          %v2022 = vmul.f32 %v1974, %v2001
          %v2023 = vmul.f32 %v1975, %v2005
          %v2024 = vmul.f32 %v1976, %v2005
          %v2025 = vmul.f32 %v1977, %v2009
          %v2026 = vmul.f32 %v1978, %v2009
          %2027 = vrot.lane.b32.xlu0 %v1186, 113
          %v2028 = vpop.permute.xlu0 %2027
          %2029 = vrot.lane.b32.xlu0 %v1215, 113
          %v2030 = vpop.permute.xlu0 %2029
          %2031 = vrot.lane.b32.xlu0 %v1188, 113
          %v2032 = vpop.permute.xlu0 %2031
          %2033 = vrot.lane.b32.xlu0 %v1217, 113
          %v2034 = vpop.permute.xlu0 %2033
          %2035 = vrot.lane.b32.xlu0 %v1191, 113
          %v2036 = vpop.permute.xlu0 %2035
          %2037 = vrot.lane.b32.xlu0 %v1220, 113
          %v2038 = vpop.permute.xlu0 %2037
          %2039 = vrot.lane.b32.xlu0 %v1193, 113
          %v2040 = vpop.permute.xlu0 %2039
          %2041 = vrot.lane.b32.xlu0 %v1222, 113
          %v2042 = vpop.permute.xlu0 %2041
          %2043 = vrot.lane.b32.xlu0 %v1196, 113
          %v2044 = vpop.permute.xlu0 %2043
          %2045 = vrot.lane.b32.xlu0 %v1225, 113
          %v2046 = vpop.permute.xlu0 %2045
          %2047 = vrot.lane.b32.xlu0 %v1198, 113
          %v2048 = vpop.permute.xlu0 %2047
          %2049 = vrot.lane.b32.xlu0 %v1227, 113
          %v2050 = vpop.permute.xlu0 %2049
          %2051 = vrot.lane.b32.xlu0 %v1201, 113
          %v2052 = vpop.permute.xlu0 %2051
          %2053 = vrot.lane.b32.xlu0 %v1230, 113
          %v2054 = vpop.permute.xlu0 %2053
          %2055 = vrot.lane.b32.xlu0 %v1203, 113
          %v2056 = vpop.permute.xlu0 %2055
          %2057 = vrot.lane.b32.xlu0 %v1232, 113
          %v2058 = vpop.permute.xlu0 %2057
          %vm2059 = vcmask 924672
          %v2060 = vsel %vm2059, %v2028, %v2030
          %v2061 = vsel %vm2059, %v2032, %v2034
          %v2062 = vsel %vm2059, %v2036, %v2038
          %v2063 = vsel %vm2059, %v2040, %v2042
          %v2064 = vsel %vm2059, %v2044, %v2046
          %v2065 = vsel %vm2059, %v2048, %v2050
          %v2066 = vsel %vm2059, %v2052, %v2054
          %v2067 = vsel %vm2059, %v2056, %v2058
          %v2092 = vsel %vm2059, %v2030, %v2028
          %v2093 = vsel %vm2059, %v2034, %v2032
          %v2094 = vsel %vm2059, %v2038, %v2036
          %v2095 = vsel %vm2059, %v2042, %v2040
          %v2096 = vsel %vm2059, %v2046, %v2044
          %v2097 = vsel %vm2059, %v2050, %v2048
          %v2098 = vsel %vm2059, %v2054, %v2052
          %v2099 = vsel %vm2059, %v2058, %v2056
          %v2100 = vperm.slane %v353, 6
          %v2101 = vperm.slane %v354, 6
          %v2102 = vmul.f32 %v2060, %v2100
          %v2103 = vmul.f32 %v2092, %v2101
          %v2104 = vmul.f32 %v2061, %v2100
          %v2105 = vmul.f32 %v2093, %v2101
          %v2106 = vmul.f32 %v2062, %v2100
          %v2107 = vmul.f32 %v2094, %v2101
          %v2108 = vmul.f32 %v2063, %v2100
          %v2109 = vmul.f32 %v2095, %v2101
          %v2110 = vmul.f32 %v2064, %v2100
          %v2111 = vmul.f32 %v2096, %v2101
          %v2112 = vmul.f32 %v2065, %v2100
          %v2113 = vmul.f32 %v2097, %v2101
          %v2114 = vmul.f32 %v2066, %v2100
          %v2115 = vmul.f32 %v2098, %v2101
          %v2116 = vmul.f32 %v2067, %v2100
          %v2117 = vmul.f32 %v2099, %v2101
          %2118 = vset.pattern.permute.xlu0 6
          %2119 = vperm.xlu0 %2118, %v1234
          %v2120 = vpop.permute.xlu0 %2119
          %2122 = vset.pattern.permute.xlu0 6
          %2123 = vperm.xlu0 %2122, %v1235
          %v2124 = vpop.permute.xlu0 %2123
          %2126 = vset.pattern.permute.xlu0 6
          %2127 = vperm.xlu0 %2126, %v1236
          %v2128 = vpop.permute.xlu0 %2127
          %2130 = vset.pattern.permute.xlu0 6
          %2131 = vperm.xlu0 %2130, %v1237
          %v2132 = vpop.permute.xlu0 %2131
          %2134 = vset.pattern.permute.xlu0 6
          %2135 = vperm.xlu0 %2134, %v1238
          %v2136 = vpop.permute.xlu0 %2135
          %2138 = vset.pattern.permute.xlu0 6
          %2139 = vperm.xlu0 %2138, %v1239
          %v2140 = vpop.permute.xlu0 %2139
          %2142 = vset.pattern.permute.xlu0 6
          %2143 = vperm.xlu0 %2142, %v1240
          %v2144 = vpop.permute.xlu0 %2143
          %2146 = vset.pattern.permute.xlu0 6
          %2147 = vperm.xlu0 %2146, %v1241
          %v2148 = vpop.permute.xlu0 %2147
          %v2150 = vmul.f32 %v2102, %v2120
          %v2151 = vmul.f32 %v2103, %v2120
          %v2152 = vmul.f32 %v2104, %v2124
          %v2153 = vmul.f32 %v2105, %v2124
          %v2154 = vmul.f32 %v2106, %v2128
          %v2155 = vmul.f32 %v2107, %v2128
          %v2156 = vmul.f32 %v2108, %v2132
          %v2157 = vmul.f32 %v2109, %v2132
          %v2158 = vmul.f32 %v2110, %v2136
          %v2159 = vmul.f32 %v2111, %v2136
          %v2160 = vmul.f32 %v2112, %v2140
          %v2161 = vmul.f32 %v2113, %v2140
          %v2162 = vmul.f32 %v2114, %v2144
          %v2163 = vmul.f32 %v2115, %v2144
          %v2164 = vmul.f32 %v2116, %v2148
          %v2165 = vmul.f32 %v2117, %v2148
          %2166 = vrot.lane.b32.xlu0 %v1186, 112
          %v2167 = vpop.permute.xlu0 %2166
          %2168 = vrot.lane.b32.xlu0 %v1215, 112
          %v2169 = vpop.permute.xlu0 %2168
          %2170 = vrot.lane.b32.xlu0 %v1188, 112
          %v2171 = vpop.permute.xlu0 %2170
          %2172 = vrot.lane.b32.xlu0 %v1217, 112
          %v2173 = vpop.permute.xlu0 %2172
          %2174 = vrot.lane.b32.xlu0 %v1191, 112
          %v2175 = vpop.permute.xlu0 %2174
          %2176 = vrot.lane.b32.xlu0 %v1220, 112
          %v2177 = vpop.permute.xlu0 %2176
          %2178 = vrot.lane.b32.xlu0 %v1193, 112
          %v2179 = vpop.permute.xlu0 %2178
          %2180 = vrot.lane.b32.xlu0 %v1222, 112
          %v2181 = vpop.permute.xlu0 %2180
          %2182 = vrot.lane.b32.xlu0 %v1196, 112
          %v2183 = vpop.permute.xlu0 %2182
          %2184 = vrot.lane.b32.xlu0 %v1225, 112
          %v2185 = vpop.permute.xlu0 %2184
          %2186 = vrot.lane.b32.xlu0 %v1198, 112
          %v2187 = vpop.permute.xlu0 %2186
          %2188 = vrot.lane.b32.xlu0 %v1227, 112
          %v2189 = vpop.permute.xlu0 %2188
          %2190 = vrot.lane.b32.xlu0 %v1201, 112
          %v2191 = vpop.permute.xlu0 %2190
          %2192 = vrot.lane.b32.xlu0 %v1230, 112
          %v2193 = vpop.permute.xlu0 %2192
          %2194 = vrot.lane.b32.xlu0 %v1203, 112
          %v2195 = vpop.permute.xlu0 %2194
          %2196 = vrot.lane.b32.xlu0 %v1232, 112
          %v2197 = vpop.permute.xlu0 %2196
          %vm2198 = vcmask 916480
          %v2199 = vsel %vm2198, %v2167, %v2169
          %v2200 = vsel %vm2198, %v2171, %v2173
          %v2201 = vsel %vm2198, %v2175, %v2177
          %v2202 = vsel %vm2198, %v2179, %v2181
          %v2203 = vsel %vm2198, %v2183, %v2185
          %v2204 = vsel %vm2198, %v2187, %v2189
          %v2205 = vsel %vm2198, %v2191, %v2193
          %v2206 = vsel %vm2198, %v2195, %v2197
          %v2231 = vsel %vm2198, %v2169, %v2167
          %v2232 = vsel %vm2198, %v2173, %v2171
          %v2233 = vsel %vm2198, %v2177, %v2175
          %v2234 = vsel %vm2198, %v2181, %v2179
          %v2235 = vsel %vm2198, %v2185, %v2183
          %v2236 = vsel %vm2198, %v2189, %v2187
          %v2237 = vsel %vm2198, %v2193, %v2191
          %v2238 = vsel %vm2198, %v2197, %v2195
          %v2239 = vperm.slane %v353, 7
          %v2240 = vperm.slane %v354, 7
          %v2241 = vmul.f32 %v2199, %v2239
          %v2242 = vmul.f32 %v2231, %v2240
          %v2243 = vmul.f32 %v2200, %v2239
          %v2244 = vmul.f32 %v2232, %v2240
          %v2245 = vmul.f32 %v2201, %v2239
          %v2246 = vmul.f32 %v2233, %v2240
          %v2247 = vmul.f32 %v2202, %v2239
          %v2248 = vmul.f32 %v2234, %v2240
          %v2249 = vmul.f32 %v2203, %v2239
          %v2250 = vmul.f32 %v2235, %v2240
          %v2251 = vmul.f32 %v2204, %v2239
          %v2252 = vmul.f32 %v2236, %v2240
          %v2253 = vmul.f32 %v2205, %v2239
          %v2254 = vmul.f32 %v2237, %v2240
          %v2255 = vmul.f32 %v2206, %v2239
          %v2256 = vmul.f32 %v2238, %v2240
          %2257 = vset.pattern.permute.xlu0 7
          %2258 = vperm.xlu0 %2257, %v1234
          %v2259 = vpop.permute.xlu0 %2258
          %2261 = vset.pattern.permute.xlu0 7
          %2262 = vperm.xlu0 %2261, %v1235
          %v2263 = vpop.permute.xlu0 %2262
          %2265 = vset.pattern.permute.xlu0 7
          %2266 = vperm.xlu0 %2265, %v1236
          %v2267 = vpop.permute.xlu0 %2266
          %2269 = vset.pattern.permute.xlu0 7
          %2270 = vperm.xlu0 %2269, %v1237
          %v2271 = vpop.permute.xlu0 %2270
          %2273 = vset.pattern.permute.xlu0 7
          %2274 = vperm.xlu0 %2273, %v1238
          %v2275 = vpop.permute.xlu0 %2274
          %2277 = vset.pattern.permute.xlu0 7
          %2278 = vperm.xlu0 %2277, %v1239
          %v2279 = vpop.permute.xlu0 %2278
          %2281 = vset.pattern.permute.xlu0 7
          %2282 = vperm.xlu0 %2281, %v1240
          %v2283 = vpop.permute.xlu0 %2282
          %2285 = vset.pattern.permute.xlu0 7
          %2286 = vperm.xlu0 %2285, %v1241
          %v2287 = vpop.permute.xlu0 %2286
          %v2289 = vmul.f32 %v2241, %v2259
          %v2290 = vmul.f32 %v2242, %v2259
          %v2291 = vmul.f32 %v2243, %v2263
          %v2292 = vmul.f32 %v2244, %v2263
          %v2293 = vmul.f32 %v2245, %v2267
          %v2294 = vmul.f32 %v2246, %v2267
          %v2295 = vmul.f32 %v2247, %v2271
          %v2296 = vmul.f32 %v2248, %v2271
          %v2297 = vmul.f32 %v2249, %v2275
          %v2298 = vmul.f32 %v2250, %v2275
          %v2299 = vmul.f32 %v2251, %v2279
          %v2300 = vmul.f32 %v2252, %v2279
          %v2301 = vmul.f32 %v2253, %v2283
          %v2302 = vmul.f32 %v2254, %v2283
          %v2303 = vmul.f32 %v2255, %v2287
          %v2304 = vmul.f32 %v2256, %v2287
          %2305 = vrot.lane.b32.xlu0 %v1186, 111
          %v2306 = vpop.permute.xlu0 %2305
          %2307 = vrot.lane.b32.xlu0 %v1215, 111
          %v2308 = vpop.permute.xlu0 %2307
          %2309 = vrot.lane.b32.xlu0 %v1188, 111
          %v2310 = vpop.permute.xlu0 %2309
          %2311 = vrot.lane.b32.xlu0 %v1217, 111
          %v2312 = vpop.permute.xlu0 %2311
          %2313 = vrot.lane.b32.xlu0 %v1191, 111
          %v2314 = vpop.permute.xlu0 %2313
          %2315 = vrot.lane.b32.xlu0 %v1220, 111
          %v2316 = vpop.permute.xlu0 %2315
          %2317 = vrot.lane.b32.xlu0 %v1193, 111
          %v2318 = vpop.permute.xlu0 %2317
          %2319 = vrot.lane.b32.xlu0 %v1222, 111
          %v2320 = vpop.permute.xlu0 %2319
          %2321 = vrot.lane.b32.xlu0 %v1196, 111
          %v2322 = vpop.permute.xlu0 %2321
          %2323 = vrot.lane.b32.xlu0 %v1225, 111
          %v2324 = vpop.permute.xlu0 %2323
          %2325 = vrot.lane.b32.xlu0 %v1198, 111
          %v2326 = vpop.permute.xlu0 %2325
          %2327 = vrot.lane.b32.xlu0 %v1227, 111
          %v2328 = vpop.permute.xlu0 %2327
          %2329 = vrot.lane.b32.xlu0 %v1201, 111
          %v2330 = vpop.permute.xlu0 %2329
          %2331 = vrot.lane.b32.xlu0 %v1230, 111
          %v2332 = vpop.permute.xlu0 %2331
          %2333 = vrot.lane.b32.xlu0 %v1203, 111
          %v2334 = vpop.permute.xlu0 %2333
          %2335 = vrot.lane.b32.xlu0 %v1232, 111
          %v2336 = vpop.permute.xlu0 %2335
          %vm2337 = vcmask 908288
          %v2338 = vsel %vm2337, %v2306, %v2308
          %v2339 = vsel %vm2337, %v2310, %v2312
          %v2340 = vsel %vm2337, %v2314, %v2316
          %v2341 = vsel %vm2337, %v2318, %v2320
          %v2342 = vsel %vm2337, %v2322, %v2324
          %v2343 = vsel %vm2337, %v2326, %v2328
          %v2344 = vsel %vm2337, %v2330, %v2332
          %v2345 = vsel %vm2337, %v2334, %v2336
          %v2370 = vsel %vm2337, %v2308, %v2306
          %v2371 = vsel %vm2337, %v2312, %v2310
          %v2372 = vsel %vm2337, %v2316, %v2314
          %v2373 = vsel %vm2337, %v2320, %v2318
          %v2374 = vsel %vm2337, %v2324, %v2322
          %v2375 = vsel %vm2337, %v2328, %v2326
          %v2376 = vsel %vm2337, %v2332, %v2330
          %v2377 = vsel %vm2337, %v2336, %v2334
          %v2378 = vperm.slane %v355, 0
          %v2379 = vperm.slane %v356, 0
          %v2380 = vmul.f32 %v2338, %v2378
          %v2381 = vmul.f32 %v2370, %v2379
          %v2382 = vmul.f32 %v2339, %v2378
          %v2383 = vmul.f32 %v2371, %v2379
          %v2384 = vmul.f32 %v2340, %v2378
          %v2385 = vmul.f32 %v2372, %v2379
          %v2386 = vmul.f32 %v2341, %v2378
          %v2387 = vmul.f32 %v2373, %v2379
          %v2388 = vmul.f32 %v2342, %v2378
          %v2389 = vmul.f32 %v2374, %v2379
          %v2390 = vmul.f32 %v2343, %v2378
          %v2391 = vmul.f32 %v2375, %v2379
          %v2392 = vmul.f32 %v2344, %v2378
          %v2393 = vmul.f32 %v2376, %v2379
          %v2394 = vmul.f32 %v2345, %v2378
          %v2395 = vmul.f32 %v2377, %v2379
          %2396 = vset.pattern.permute.xlu0 8
          %2397 = vperm.xlu0 %2396, %v1234
          %v2398 = vpop.permute.xlu0 %2397
          %2400 = vset.pattern.permute.xlu0 8
          %2401 = vperm.xlu0 %2400, %v1235
          %v2402 = vpop.permute.xlu0 %2401
          %2404 = vset.pattern.permute.xlu0 8
          %2405 = vperm.xlu0 %2404, %v1236
          %v2406 = vpop.permute.xlu0 %2405
          %2408 = vset.pattern.permute.xlu0 8
          %2409 = vperm.xlu0 %2408, %v1237
          %v2410 = vpop.permute.xlu0 %2409
          %2412 = vset.pattern.permute.xlu0 8
          %2413 = vperm.xlu0 %2412, %v1238
          %v2414 = vpop.permute.xlu0 %2413
          %2416 = vset.pattern.permute.xlu0 8
          %2417 = vperm.xlu0 %2416, %v1239
          %v2418 = vpop.permute.xlu0 %2417
          %2420 = vset.pattern.permute.xlu0 8
          %2421 = vperm.xlu0 %2420, %v1240
          %v2422 = vpop.permute.xlu0 %2421
          %2424 = vset.pattern.permute.xlu0 8
          %2425 = vperm.xlu0 %2424, %v1241
          %v2426 = vpop.permute.xlu0 %2425
          %v2428 = vmul.f32 %v2380, %v2398
          %v2429 = vmul.f32 %v2381, %v2398
          %v2430 = vmul.f32 %v2382, %v2402
          %v2431 = vmul.f32 %v2383, %v2402
          %v2432 = vmul.f32 %v2384, %v2406
          %v2433 = vmul.f32 %v2385, %v2406
          %v2434 = vmul.f32 %v2386, %v2410
          %v2435 = vmul.f32 %v2387, %v2410
          %v2436 = vmul.f32 %v2388, %v2414
          %v2437 = vmul.f32 %v2389, %v2414
          %v2438 = vmul.f32 %v2390, %v2418
          %v2439 = vmul.f32 %v2391, %v2418
          %v2440 = vmul.f32 %v2392, %v2422
          %v2441 = vmul.f32 %v2393, %v2422
          %v2442 = vmul.f32 %v2394, %v2426
          %v2443 = vmul.f32 %v2395, %v2426
          %v2444 = vadd.f32 %v1389, %v1528
          %v2445 = vadd.f32 %v1390, %v1529
          %v2446 = vadd.f32 %v1391, %v1530
          %v2447 = vadd.f32 %v1392, %v1531
          %v2448 = vadd.f32 %v1393, %v1532
          %v2449 = vadd.f32 %v1394, %v1533
          %v2450 = vadd.f32 %v1395, %v1534
          %v2451 = vadd.f32 %v1396, %v1535
          %v2452 = vadd.f32 %v1397, %v1536
          %v2453 = vadd.f32 %v1398, %v1537
          %v2454 = vadd.f32 %v1399, %v1538
          %v2455 = vadd.f32 %v1400, %v1539
          %v2456 = vadd.f32 %v1401, %v1540
          %v2457 = vadd.f32 %v1402, %v1541
          %v2458 = vadd.f32 %v1403, %v1542
          %v2459 = vadd.f32 %v1404, %v1543
          %v2460 = vadd.f32 %v1667, %v1806
          %v2461 = vadd.f32 %v1668, %v1807
          %v2462 = vadd.f32 %v1669, %v1808
          %v2463 = vadd.f32 %v1670, %v1809
          %v2464 = vadd.f32 %v1671, %v1810
          %v2465 = vadd.f32 %v1672, %v1811
          %v2466 = vadd.f32 %v1673, %v1812
          %v2467 = vadd.f32 %v1674, %v1813
          %v2468 = vadd.f32 %v1675, %v1814
          %v2469 = vadd.f32 %v1676, %v1815
          %v2470 = vadd.f32 %v1677, %v1816
          %v2471 = vadd.f32 %v1678, %v1817
          %v2472 = vadd.f32 %v1679, %v1818
          %v2473 = vadd.f32 %v1680, %v1819
          %v2474 = vadd.f32 %v1681, %v1820
          %v2475 = vadd.f32 %v1682, %v1821
          %v2476 = vadd.f32 %v1872, %v2011
          %v2477 = vadd.f32 %v1873, %v2012
          %v2478 = vadd.f32 %v1874, %v2013
          %v2479 = vadd.f32 %v1875, %v2014
          %v2480 = vadd.f32 %v1876, %v2015
          %v2481 = vadd.f32 %v1877, %v2016
          %v2482 = vadd.f32 %v1878, %v2017
          %v2483 = vadd.f32 %v1879, %v2018
          %v2484 = vadd.f32 %v1880, %v2019
          %v2485 = vadd.f32 %v1881, %v2020
          %v2486 = vadd.f32 %v1882, %v2021
          %v2487 = vadd.f32 %v1883, %v2022
          %v2488 = vadd.f32 %v1884, %v2023
          %v2489 = vadd.f32 %v1885, %v2024
          %v2490 = vadd.f32 %v1886, %v2025
          %v2491 = vadd.f32 %v1887, %v2026
          %v2492 = vadd.f32 %v2150, %v2289
          %v2493 = vadd.f32 %v2151, %v2290
          %v2494 = vadd.f32 %v2152, %v2291
          %v2495 = vadd.f32 %v2153, %v2292
          %v2496 = vadd.f32 %v2154, %v2293
          %v2497 = vadd.f32 %v2155, %v2294
          %v2498 = vadd.f32 %v2156, %v2295
          %v2499 = vadd.f32 %v2157, %v2296
          %v2500 = vadd.f32 %v2158, %v2297
          %v2501 = vadd.f32 %v2159, %v2298
          %v2502 = vadd.f32 %v2160, %v2299
          %v2503 = vadd.f32 %v2161, %v2300
          %v2504 = vadd.f32 %v2162, %v2301
          %v2505 = vadd.f32 %v2163, %v2302
          %v2506 = vadd.f32 %v2164, %v2303
          %v2507 = vadd.f32 %v2165, %v2304
          %v2508 = vadd.f32 %v2444, %v2460
          %v2509 = vadd.f32 %v2445, %v2461
          %v2510 = vadd.f32 %v2446, %v2462
          %v2511 = vadd.f32 %v2447, %v2463
          %v2512 = vadd.f32 %v2448, %v2464
          %v2513 = vadd.f32 %v2449, %v2465
          %v2514 = vadd.f32 %v2450, %v2466
          %v2515 = vadd.f32 %v2451, %v2467
          %v2516 = vadd.f32 %v2452, %v2468
          %v2517 = vadd.f32 %v2453, %v2469
          %v2518 = vadd.f32 %v2454, %v2470
          %v2519 = vadd.f32 %v2455, %v2471
          %v2520 = vadd.f32 %v2456, %v2472
          %v2521 = vadd.f32 %v2457, %v2473
          %v2522 = vadd.f32 %v2458, %v2474
          %v2523 = vadd.f32 %v2459, %v2475
          %v2524 = vadd.f32 %v2476, %v2492
          %v2525 = vadd.f32 %v2477, %v2493
          %v2526 = vadd.f32 %v2478, %v2494
          %v2527 = vadd.f32 %v2479, %v2495
          %v2528 = vadd.f32 %v2480, %v2496
          %v2529 = vadd.f32 %v2481, %v2497
          %v2530 = vadd.f32 %v2482, %v2498
          %v2531 = vadd.f32 %v2483, %v2499
          %v2532 = vadd.f32 %v2484, %v2500
          %v2533 = vadd.f32 %v2485, %v2501
          %v2534 = vadd.f32 %v2486, %v2502
          %v2535 = vadd.f32 %v2487, %v2503
          %v2536 = vadd.f32 %v2488, %v2504
          %v2537 = vadd.f32 %v2489, %v2505
          %v2538 = vadd.f32 %v2490, %v2506
          %v2539 = vadd.f32 %v2491, %v2507
          %v2540 = vadd.f32 %v2508, %v2524
          %v2541 = vadd.f32 %v2509, %v2525
          %v2542 = vadd.f32 %v2510, %v2526
          %v2543 = vadd.f32 %v2511, %v2527
          %v2544 = vadd.f32 %v2512, %v2528
          %v2545 = vadd.f32 %v2513, %v2529
          %v2546 = vadd.f32 %v2514, %v2530
          %v2547 = vadd.f32 %v2515, %v2531
          %v2548 = vadd.f32 %v2516, %v2532
          %v2549 = vadd.f32 %v2517, %v2533
          %v2550 = vadd.f32 %v2518, %v2534
          %v2551 = vadd.f32 %v2519, %v2535
          %v2552 = vadd.f32 %v2520, %v2536
          %v2553 = vadd.f32 %v2521, %v2537
          %v2554 = vadd.f32 %v2522, %v2538
          %v2555 = vadd.f32 %v2523, %v2539
          %v2556 = vadd.f32 %v2540, %v2428
          %v2557 = vadd.f32 %v2541, %v2429
          %v2558 = vadd.f32 %v2542, %v2430
          %v2559 = vadd.f32 %v2543, %v2431
          %v2560 = vadd.f32 %v2544, %v2432
          %v2561 = vadd.f32 %v2545, %v2433
          %v2562 = vadd.f32 %v2546, %v2434
          %v2563 = vadd.f32 %v2547, %v2435
          %v2564 = vadd.f32 %v2548, %v2436
          %v2565 = vadd.f32 %v2549, %v2437
          %v2566 = vadd.f32 %v2550, %v2438
          %v2567 = vadd.f32 %v2551, %v2439
          %v2568 = vadd.f32 %v2552, %v2440
          %v2569 = vadd.f32 %v2553, %v2441
          %v2570 = vadd.f32 %v2554, %v2442
          %v2571 = vadd.f32 %v2555, %v2443
          %v2572 = vld [vmem:[%s4] sm:$0xf]
          %v2573 = vld [vmem:[%s4 + $0x4] sm:$0xf]
          %v2574 = vld [vmem:[%s4 + $0x8] sm:$0xf]
          %v2575 = vld [vmem:[%s4 + $0xc] sm:$0xf]
          %v2576 = vld [vmem:[%s4 + $0x10] sm:$0xf]
          %v2577 = vld [vmem:[%s4 + $0x14] sm:$0xf]
          %v2578 = vld [vmem:[%s4 + $0x18] sm:$0xf]
          %v2579 = vld [vmem:[%s4 + $0x1c] sm:$0xf]
          %v2580 = vunpack.c.l.bf16 %v2572
          %v2581 = vunpack.c.l.bf16 %v2573
          %v2582 = vunpack.c.l.bf16 %v2574
          %v2583 = vunpack.c.l.bf16 %v2575
          %v2584 = vunpack.c.l.bf16 %v2576
          %v2585 = vunpack.c.l.bf16 %v2577
          %v2586 = vunpack.c.l.bf16 %v2578
          %v2587 = vunpack.c.l.bf16 %v2579
          %s2588 = sld [smem:[#allocation2 + %s373]]
          %v2589 = vstv %s2588
          %v2590 = vmul.f32 %v2580, %v2589
          %v2591 = vmul.f32 %v2581, %v2589
          %v2592 = vmul.f32 %v2582, %v2589
          %v2593 = vmul.f32 %v2583, %v2589
          %v2594 = vmul.f32 %v2584, %v2589
          %v2595 = vmul.f32 %v2585, %v2589
          %v2596 = vmul.f32 %v2586, %v2589
          %v2597 = vmul.f32 %v2587, %v2589
          %v2598 = vpack.c.bf16 %v2591, %v2590
          %v2599 = vpack.c.bf16 %v2593, %v2592
          %v2600 = vpack.c.bf16 %v2595, %v2594
          %v2601 = vpack.c.bf16 %v2597, %v2596
          %v2602 = vld [vmem:[%s319] sm:$0xff]
          %v2603 = vld [vmem:[%s319 + $0x8] sm:$0xff]
          %v2604 = vld [vmem:[%s319 + $0x10] sm:$0xff]
          %v2605 = vld [vmem:[%s319 + $0x18] sm:$0xff]
          %v2606 = vld [vmem:[%s319 + $0x20] sm:$0xff]
          %v2607 = vld [vmem:[%s319 + $0x28] sm:$0xff]
          %v2608 = vld [vmem:[%s319 + $0x30] sm:$0xff]
          %v2609 = vld [vmem:[%s319 + $0x38] sm:$0xff]
          %v2610 = vld [vmem:[%s319 + $0x40] sm:$0xff]
          %v2611 = vld [vmem:[%s319 + $0x48] sm:$0xff]
          %v2612 = vld [vmem:[%s319 + $0x50] sm:$0xff]
          %v2613 = vld [vmem:[%s319 + $0x58] sm:$0xff]
          %v2614 = vld [vmem:[%s319 + $0x60] sm:$0xff]
          %v2615 = vld [vmem:[%s319 + $0x68] sm:$0xff]
          %v2616 = vld [vmem:[%s319 + $0x70] sm:$0xff]
          %v2617 = vld [vmem:[%s319 + $0x78] sm:$0xff]
          %v2618 = vpack.c.bf16 %v2558, %v2556
          %v2619 = vpack.c.bf16 %v2559, %v2557
          %v2620 = vpack.c.bf16 %v2562, %v2560
          %v2621 = vpack.c.bf16 %v2563, %v2561
          %v2622 = vpack.c.bf16 %v2566, %v2564
          %v2623 = vpack.c.bf16 %v2567, %v2565
          %v2624 = vpack.c.bf16 %v2570, %v2568
          %v2625 = vpack.c.bf16 %v2571, %v2569
          %v2627 = vsel %vm463, %v2598, 0
          %v2630 = vsel %vm463, %v2599, 0
          %v2633 = vsel %vm463, %v2600, 0
          %v2636 = vsel %vm463, %v2601, 0
          %2638 = vmatpush.bf16.msra.mxu0 0
          %2639 = vmatpush.bf16.msra.mxu0 0
          %2640 = vmatpush.bf16.msra.mxu0 0
          %2641 = vmatpush.bf16.msra.mxu0 0
          %2642 = vmatpush.bf16.msra.mxu0 %v2624
          %2643 = vmatpush.bf16.msra.mxu0 %v2622
          %2644 = vmatpush.bf16.msra.mxu0 %v2620
          %2645 = vmatpush.bf16.msra.mxu0 %v2618
          %2646 = vmatmul.bf16.gmra.mxu0 %v2627
          %v2647 = vpop.f32.mrf.mxu0
          %v2648 = vadd.f32 0.0, %v2647
          %v2649 = vpop.f32.mrf.mxu0
          %v2650 = vadd.f32 0.0, %v2649
          %2651 = vmatmul.bf16.gmra.mxu0 %v2630
          %v2652 = vpop.f32.mrf.mxu0
          %v2653 = vadd.f32 0.0, %v2652
          %v2654 = vpop.f32.mrf.mxu0
          %v2655 = vadd.f32 0.0, %v2654
          %2656 = vmatmul.bf16.gmra.mxu0 %v2633
          %v2657 = vpop.f32.mrf.mxu0
          %v2658 = vadd.f32 0.0, %v2657
          %v2659 = vpop.f32.mrf.mxu0
          %v2660 = vadd.f32 0.0, %v2659
          %2661 = vmatmul.bf16.gmra.mxu0 %v2636
          %v2662 = vpop.f32.mrf.mxu0
          %v2663 = vadd.f32 0.0, %v2662
          %v2664 = vpop.f32.mrf.mxu0
          %v2665 = vadd.f32 0.0, %v2664
          %2666 = vdwg.mxu0
          %2667 = vmatpush.bf16.msra.mxu0 0
          %2668 = vmatpush.bf16.msra.mxu0 0
          %2669 = vmatpush.bf16.msra.mxu0 0
          %2670 = vmatpush.bf16.msra.mxu0 0
          %2671 = vmatpush.bf16.msra.mxu0 %v2625
          %2672 = vmatpush.bf16.msra.mxu0 %v2623
          %2673 = vmatpush.bf16.msra.mxu0 %v2621
          %2674 = vmatpush.bf16.msra.mxu0 %v2619
          %2675 = vmatmul.bf16.gmra.mxu0 %v2627
          %v2676 = vpop.f32.mrf.mxu0
          %v2677 = vadd.f32 0.0, %v2676
          %v2678 = vpop.f32.mrf.mxu0
          %v2679 = vadd.f32 0.0, %v2678
          %2680 = vmatmul.bf16.gmra.mxu0 %v2630
          %v2681 = vpop.f32.mrf.mxu0
          %v2682 = vadd.f32 0.0, %v2681
          %v2683 = vpop.f32.mrf.mxu0
          %v2684 = vadd.f32 0.0, %v2683
          %2685 = vmatmul.bf16.gmra.mxu0 %v2633
          %v2686 = vpop.f32.mrf.mxu0
          %v2687 = vadd.f32 0.0, %v2686
          %v2688 = vpop.f32.mrf.mxu0
          %v2689 = vadd.f32 0.0, %v2688
          %2690 = vmatmul.bf16.gmra.mxu0 %v2636
          %v2691 = vpop.f32.mrf.mxu0
          %v2692 = vadd.f32 0.0, %v2691
          %v2693 = vpop.f32.mrf.mxu0
          %v2694 = vadd.f32 0.0, %v2693
          %2695 = vdwg.mxu0
          %v2696 = vadd.f32 %v2602, %v2648
          %v2697 = vadd.f32 %v2603, %v2677
          %v2698 = vadd.f32 %v2604, %v2650
          %v2699 = vadd.f32 %v2605, %v2679
          %v2700 = vadd.f32 %v2606, %v2653
          %v2701 = vadd.f32 %v2607, %v2682
          %v2702 = vadd.f32 %v2608, %v2655
          %v2703 = vadd.f32 %v2609, %v2684
          %v2704 = vadd.f32 %v2610, %v2658
          %v2705 = vadd.f32 %v2611, %v2687
          %v2706 = vadd.f32 %v2612, %v2660
          %v2707 = vadd.f32 %v2613, %v2689
          %v2708 = vadd.f32 %v2614, %v2663
          %v2709 = vadd.f32 %v2615, %v2692
          %v2710 = vadd.f32 %v2616, %v2665
          %v2711 = vadd.f32 %v2617, %v2694
          %2712 = vst [vmem:[%s319] sm:$0xff] %v2696
          %2713 = vst [vmem:[%s319 + $0x8] sm:$0xff] %v2697
          %2714 = vst [vmem:[%s319 + $0x10] sm:$0xff] %v2698
          %2715 = vst [vmem:[%s319 + $0x18] sm:$0xff] %v2699
          %2716 = vst [vmem:[%s319 + $0x20] sm:$0xff] %v2700
          %2717 = vst [vmem:[%s319 + $0x28] sm:$0xff] %v2701
          %2718 = vst [vmem:[%s319 + $0x30] sm:$0xff] %v2702
          %2719 = vst [vmem:[%s319 + $0x38] sm:$0xff] %v2703
          %2720 = vst [vmem:[%s319 + $0x40] sm:$0xff] %v2704
          %2721 = vst [vmem:[%s319 + $0x48] sm:$0xff] %v2705
          %2722 = vst [vmem:[%s319 + $0x50] sm:$0xff] %v2706
          %2723 = vst [vmem:[%s319 + $0x58] sm:$0xff] %v2707
          %2724 = vst [vmem:[%s319 + $0x60] sm:$0xff] %v2708
          %2725 = vst [vmem:[%s319 + $0x68] sm:$0xff] %v2709
          %2726 = vst [vmem:[%s319 + $0x70] sm:$0xff] %v2710
          %2727 = vst [vmem:[%s319 + $0x78] sm:$0xff] %v2711
        $region60: #{attention_bank_forward.1} parent=51 // pred_fallthru
          _
        %s2728 = sadd.s32 %s373, 1
        %s2729 = sld [smem:[#allocation2 + %s2728]]
        %p2730 = scmp.gt.f32.partialorder %s2729, 0.0
        // Predicated region
        $region61: #{attention_bank_forward.1} parent=51 // pred_check
          %p2731 = pneg %p2730
        $region62: #{attention_bank_forward.1} parent=51 // pred_check_branch
          %2733 = sbr.rel (%p2731) target = $region64
        $region63: #{attention_bank_forward.1} parent=51 // pred_region
          %s2734 = scalar_lea.vmem %s1, 96
          %v2735 = vld [vmem:[%s2734] sm:$0xf]
          %v2736 = vld [vmem:[%s2734 + $0x4] sm:$0xf]
          %v2737 = vld [vmem:[%s2734 + $0x8] sm:$0xf]
          %v2738 = vld [vmem:[%s2734 + $0xc] sm:$0xf]
          %v2739 = vld [vmem:[%s2734 + $0x10] sm:$0xf]
          %v2740 = vld [vmem:[%s2734 + $0x14] sm:$0xf]
          %v2741 = vld [vmem:[%s2734 + $0x18] sm:$0xf]
          %v2742 = vld [vmem:[%s2734 + $0x1c] sm:$0xf]
          %v2743 = vld [vmem:[%s2734 + $0x20] sm:$0xf]
          %v2744 = vld [vmem:[%s2734 + $0x24] sm:$0xf]
          %v2745 = vld [vmem:[%s2734 + $0x28] sm:$0xf]
          %v2746 = vld [vmem:[%s2734 + $0x2c] sm:$0xf]
          %v2747 = vld [vmem:[%s2734 + $0x30] sm:$0xf]
          %v2748 = vld [vmem:[%s2734 + $0x34] sm:$0xf]
          %v2749 = vld [vmem:[%s2734 + $0x38] sm:$0xf]
          %v2750 = vld [vmem:[%s2734 + $0x3c] sm:$0xf]
          %v2751 = vld [vmem:[%s2734 + $0x40] sm:$0xf]
          %v2752 = vld [vmem:[%s2734 + $0x44] sm:$0xf]
          %v2753 = vld [vmem:[%s2734 + $0x48] sm:$0xf]
          %v2754 = vld [vmem:[%s2734 + $0x4c] sm:$0xf]
          %v2755 = vld [vmem:[%s2734 + $0x50] sm:$0xf]
          %v2756 = vld [vmem:[%s2734 + $0x54] sm:$0xf]
          %v2757 = vld [vmem:[%s2734 + $0x58] sm:$0xf]
          %v2758 = vld [vmem:[%s2734 + $0x5c] sm:$0xf]
          %v2783 = vunpack.c.l.b16 %v2735
          %v2784 = vunpack.c.l.b16 %v2736
          %v2785 = vunpack.c.l.b16 %v2737
          %v2786 = vunpack.c.l.b16 %v2738
          %v2787 = vunpack.c.l.b16 %v2739
          %v2788 = vunpack.c.l.b16 %v2740
          %v2789 = vunpack.c.l.b16 %v2741
          %v2790 = vunpack.c.l.b16 %v2742
          %v2791 = vunpack.c.l.b16 %v2743
          %v2792 = vunpack.c.l.b16 %v2744
          %v2793 = vunpack.c.l.b16 %v2745
          %v2794 = vunpack.c.l.b16 %v2746
          %v2795 = vunpack.c.l.b16 %v2747
          %v2796 = vunpack.c.l.b16 %v2748
          %v2797 = vunpack.c.l.b16 %v2749
          %v2798 = vunpack.c.l.b16 %v2750
          %v2799 = vunpack.c.l.b16 %v2751
          %v2800 = vunpack.c.l.b16 %v2752
          %v2801 = vunpack.c.l.b16 %v2753
          %v2802 = vunpack.c.l.b16 %v2754
          %v2803 = vunpack.c.l.b16 %v2755
          %v2804 = vunpack.c.l.b16 %v2756
          %v2805 = vunpack.c.l.b16 %v2757
          %v2806 = vunpack.c.l.b16 %v2758
          %v2807 = vpack.c.b16 %v2784, %v2783
          %v2808 = vpack.c.b16 %v2786, %v2785
          %v2809 = vpack.c.b16 %v2788, %v2787
          %v2810 = vpack.c.b16 %v2790, %v2789
          %v2811 = vpack.c.b16 %v2792, %v2791
          %v2812 = vpack.c.b16 %v2794, %v2793
          %v2813 = vpack.c.b16 %v2796, %v2795
          %v2814 = vpack.c.b16 %v2798, %v2797
          %v2815 = vpack.c.b16 %v2800, %v2799
          %v2816 = vpack.c.b16 %v2802, %v2801
          %v2817 = vpack.c.b16 %v2804, %v2803
          %v2818 = vpack.c.b16 %v2806, %v2805
          %vm2819 = vcmask 523264
          %v2821 = vsel %vm2819, %v2807, 0
          %v2824 = vsel %vm2819, %v2808, 0
          %v2827 = vsel %vm2819, %v2809, 0
          %v2830 = vsel %vm2819, %v2810, 0
          %v2833 = vsel %vm2819, %v2811, 0
          %v2836 = vsel %vm2819, %v2812, 0
          %v2839 = vsel %vm2819, %v2813, 0
          %v2842 = vsel %vm2819, %v2814, 0
          %v2845 = vsel %vm2819, %v2815, 0
          %v2848 = vsel %vm2819, %v2816, 0
          %v2851 = vsel %vm2819, %v2817, 0
          %v2854 = vsel %vm2819, %v2818, 0
          %2856 = vmatpush.bf16.msra.mxu0 0
          %2857 = vmatpush.bf16.msra.mxu0 0
          %2858 = vmatpush.bf16.msra.mxu0 0
          %2859 = vmatpush.bf16.msra.mxu0 0
          %2860 = vmatpush.bf16.msra.mxu0 %v343
          %2861 = vmatpush.bf16.msra.mxu0 %v341
          %2862 = vmatpush.bf16.msra.mxu0 %v339
          %2863 = vmatpush.bf16.msra.mxu0 %v337
          %2864 = vmatmul.bf16.gmra.mxu0 %v2821
          %v2865 = vpop.f32.mrf.mxu0
          %v2866 = vadd.f32 0.0, %v2865
          %v2867 = vpop.f32.mrf.mxu0
          %v2868 = vadd.f32 0.0, %v2867
          %2869 = vmatmul.bf16.gmra.mxu0 %v2824
          %v2870 = vpop.f32.mrf.mxu0
          %v2871 = vadd.f32 0.0, %v2870
          %v2872 = vpop.f32.mrf.mxu0
          %v2873 = vadd.f32 0.0, %v2872
          %2874 = vmatmul.bf16.gmra.mxu0 %v2827
          %v2875 = vpop.f32.mrf.mxu0
          %v2876 = vadd.f32 0.0, %v2875
          %v2877 = vpop.f32.mrf.mxu0
          %v2878 = vadd.f32 0.0, %v2877
          %2879 = vmatmul.bf16.gmra.mxu0 %v2830
          %v2880 = vpop.f32.mrf.mxu0
          %v2881 = vadd.f32 0.0, %v2880
          %v2882 = vpop.f32.mrf.mxu0
          %v2883 = vadd.f32 0.0, %v2882
          %2884 = vmatmul.bf16.gmra.mxu0 %v2833
          %v2885 = vpop.f32.mrf.mxu0
          %v2886 = vadd.f32 0.0, %v2885
          %v2887 = vpop.f32.mrf.mxu0
          %v2888 = vadd.f32 0.0, %v2887
          %2889 = vmatmul.bf16.gmra.mxu0 %v2836
          %v2890 = vpop.f32.mrf.mxu0
          %v2891 = vadd.f32 0.0, %v2890
          %v2892 = vpop.f32.mrf.mxu0
          %v2893 = vadd.f32 0.0, %v2892
          %2894 = vmatmul.bf16.gmra.mxu0 %v2839
          %v2895 = vpop.f32.mrf.mxu0
          %v2896 = vadd.f32 0.0, %v2895
          %v2897 = vpop.f32.mrf.mxu0
          %v2898 = vadd.f32 0.0, %v2897
          %2899 = vmatmul.bf16.gmra.mxu0 %v2842
          %v2900 = vpop.f32.mrf.mxu0
          %v2901 = vadd.f32 0.0, %v2900
          %v2902 = vpop.f32.mrf.mxu0
          %v2903 = vadd.f32 0.0, %v2902
          %2904 = vmatmul.bf16.gmra.mxu0 %v2845
          %v2905 = vpop.f32.mrf.mxu0
          %v2906 = vadd.f32 0.0, %v2905
          %v2907 = vpop.f32.mrf.mxu0
          %v2908 = vadd.f32 0.0, %v2907
          %2909 = vmatmul.bf16.gmra.mxu0 %v2848
          %v2910 = vpop.f32.mrf.mxu0
          %v2911 = vadd.f32 0.0, %v2910
          %v2912 = vpop.f32.mrf.mxu0
          %v2913 = vadd.f32 0.0, %v2912
          %2914 = vmatmul.bf16.gmra.mxu0 %v2851
          %v2915 = vpop.f32.mrf.mxu0
          %v2916 = vadd.f32 0.0, %v2915
          %v2917 = vpop.f32.mrf.mxu0
          %v2918 = vadd.f32 0.0, %v2917
          %2919 = vmatmul.bf16.gmra.mxu0 %v2854
          %v2920 = vpop.f32.mrf.mxu0
          %v2921 = vadd.f32 0.0, %v2920
          %v2922 = vpop.f32.mrf.mxu0
          %v2923 = vadd.f32 0.0, %v2922
          %2924 = vdwg.mxu0
          %2925 = vmatpush.bf16.msra.mxu0 0
          %2926 = vmatpush.bf16.msra.mxu0 0
          %2927 = vmatpush.bf16.msra.mxu0 0
          %2928 = vmatpush.bf16.msra.mxu0 0
          %2929 = vmatpush.bf16.msra.mxu0 %v344
          %2930 = vmatpush.bf16.msra.mxu0 %v342
          %2931 = vmatpush.bf16.msra.mxu0 %v340
          %2932 = vmatpush.bf16.msra.mxu0 %v338
          %2933 = vmatmul.bf16.gmra.mxu0 %v2821
          %v2934 = vpop.f32.mrf.mxu0
          %v2935 = vadd.f32 0.0, %v2934
          %v2936 = vpop.f32.mrf.mxu0
          %v2937 = vadd.f32 0.0, %v2936
          %2938 = vmatmul.bf16.gmra.mxu0 %v2824
          %v2939 = vpop.f32.mrf.mxu0
          %v2940 = vadd.f32 0.0, %v2939
          %v2941 = vpop.f32.mrf.mxu0
          %v2942 = vadd.f32 0.0, %v2941
          %2943 = vmatmul.bf16.gmra.mxu0 %v2827
          %v2944 = vpop.f32.mrf.mxu0
          %v2945 = vadd.f32 0.0, %v2944
          %v2946 = vpop.f32.mrf.mxu0
          %v2947 = vadd.f32 0.0, %v2946
          %2948 = vmatmul.bf16.gmra.mxu0 %v2830
          %v2949 = vpop.f32.mrf.mxu0
          %v2950 = vadd.f32 0.0, %v2949
          %v2951 = vpop.f32.mrf.mxu0
          %v2952 = vadd.f32 0.0, %v2951
          %2953 = vmatmul.bf16.gmra.mxu0 %v2833
          %v2954 = vpop.f32.mrf.mxu0
          %v2955 = vadd.f32 0.0, %v2954
          %v2956 = vpop.f32.mrf.mxu0
          %v2957 = vadd.f32 0.0, %v2956
          %2958 = vmatmul.bf16.gmra.mxu0 %v2836
          %v2959 = vpop.f32.mrf.mxu0
          %v2960 = vadd.f32 0.0, %v2959
          %v2961 = vpop.f32.mrf.mxu0
          %v2962 = vadd.f32 0.0, %v2961
          %2963 = vmatmul.bf16.gmra.mxu0 %v2839
          %v2964 = vpop.f32.mrf.mxu0
          %v2965 = vadd.f32 0.0, %v2964
          %v2966 = vpop.f32.mrf.mxu0
          %v2967 = vadd.f32 0.0, %v2966
          %2968 = vmatmul.bf16.gmra.mxu0 %v2842
          %v2969 = vpop.f32.mrf.mxu0
          %v2970 = vadd.f32 0.0, %v2969
          %v2971 = vpop.f32.mrf.mxu0
          %v2972 = vadd.f32 0.0, %v2971
          %2973 = vmatmul.bf16.gmra.mxu0 %v2845
          %v2974 = vpop.f32.mrf.mxu0
          %v2975 = vadd.f32 0.0, %v2974
          %v2976 = vpop.f32.mrf.mxu0
          %v2977 = vadd.f32 0.0, %v2976
          %2978 = vmatmul.bf16.gmra.mxu0 %v2848
          %v2979 = vpop.f32.mrf.mxu0
          %v2980 = vadd.f32 0.0, %v2979
          %v2981 = vpop.f32.mrf.mxu0
          %v2982 = vadd.f32 0.0, %v2981
          %2983 = vmatmul.bf16.gmra.mxu0 %v2851
          %v2984 = vpop.f32.mrf.mxu0
          %v2985 = vadd.f32 0.0, %v2984
          %v2986 = vpop.f32.mrf.mxu0
          %v2987 = vadd.f32 0.0, %v2986
          %2988 = vmatmul.bf16.gmra.mxu0 %v2854
          %v2989 = vpop.f32.mrf.mxu0
          %v2990 = vadd.f32 0.0, %v2989
          %v2991 = vpop.f32.mrf.mxu0
          %v2992 = vadd.f32 0.0, %v2991
          %2993 = vdwg.mxu0
          %v2994 = vmul.f32 %v2866, %v2866
          %v2995 = vmul.f32 %v2935, %v2935
          %v2996 = vmul.f32 %v2868, %v2868
          %v2997 = vmul.f32 %v2937, %v2937
          %v2998 = vmul.f32 %v2871, %v2871
          %v2999 = vmul.f32 %v2940, %v2940
          %v3000 = vmul.f32 %v2873, %v2873
          %v3001 = vmul.f32 %v2942, %v2942
          %v3002 = vmul.f32 %v2876, %v2876
          %v3003 = vmul.f32 %v2945, %v2945
          %v3004 = vmul.f32 %v2878, %v2878
          %v3005 = vmul.f32 %v2947, %v2947
          %v3006 = vmul.f32 %v2881, %v2881
          %v3007 = vmul.f32 %v2950, %v2950
          %v3008 = vmul.f32 %v2883, %v2883
          %v3009 = vmul.f32 %v2952, %v2952
          %v3010 = vadd.f32 %v2994, %v2995
          %3011 = vadd.xlane.f32.xlu0 %v3010
          %v3012 = vpop.xlane.xlu0 %3011
          %v3013 = vadd.f32 %v2996, %v2997
          %3014 = vadd.xlane.f32.xlu0 %v3013
          %v3015 = vpop.xlane.xlu0 %3014
          %v3016 = vadd.f32 %v2998, %v2999
          %3017 = vadd.xlane.f32.xlu0 %v3016
          %v3018 = vpop.xlane.xlu0 %3017
          %v3019 = vadd.f32 %v3000, %v3001
          %3020 = vadd.xlane.f32.xlu0 %v3019
          %v3021 = vpop.xlane.xlu0 %3020
          %v3022 = vadd.f32 %v3002, %v3003
          %3023 = vadd.xlane.f32.xlu0 %v3022
          %v3024 = vpop.xlane.xlu0 %3023
          %v3025 = vadd.f32 %v3004, %v3005
          %3026 = vadd.xlane.f32.xlu0 %v3025
          %v3027 = vpop.xlane.xlu0 %3026
          %v3028 = vadd.f32 %v3006, %v3007
          %3029 = vadd.xlane.f32.xlu0 %v3028
          %v3030 = vpop.xlane.xlu0 %3029
          %v3031 = vadd.f32 %v3008, %v3009
          %3032 = vadd.xlane.f32.xlu0 %v3031
          %v3033 = vpop.xlane.xlu0 %3032
          %v3034 = vmax.f32 %v3012, 1e-24
          %v3035 = vmax.f32 %v3015, 1e-24
          %v3036 = vmax.f32 %v3018, 1e-24
          %v3037 = vmax.f32 %v3021, 1e-24
          %v3038 = vmax.f32 %v3024, 1e-24
          %v3039 = vmax.f32 %v3027, 1e-24
          %v3040 = vmax.f32 %v3030, 1e-24
          %v3041 = vmax.f32 %v3033, 1e-24
          %v3042 = vrsqrt.pop %v3034
          %v3043 = vmul.f32 %v3042, %v3034
          %v3044 = vmul.f32 %v3043, %v3042
          %v3045 = vmul.f32 0.5, %v3044
          %v3046 = vsub.f32 1.5, %v3045
          %v3047 = vmul.f32 %v3042, %v3046
          %vm3048 = vweird.f32 %v3034
          %vm3049 = vweird.f32 %v3042
          %vm3050 = vmor %vm3048, %vm3049
          %v3051 = vsel %vm3050, %v3042, %v3047
          %v3052 = vrsqrt.pop %v3035
          %v3053 = vmul.f32 %v3052, %v3035
          %v3054 = vmul.f32 %v3053, %v3052
          %v3055 = vmul.f32 0.5, %v3054
          %v3056 = vsub.f32 1.5, %v3055
          %v3057 = vmul.f32 %v3052, %v3056
          %vm3058 = vweird.f32 %v3035
          %vm3059 = vweird.f32 %v3052
          %vm3060 = vmor %vm3058, %vm3059
          %v3061 = vsel %vm3060, %v3052, %v3057
          %v3062 = vrsqrt.pop %v3036
          %v3063 = vmul.f32 %v3062, %v3036
          %v3064 = vmul.f32 %v3063, %v3062
          %v3065 = vmul.f32 0.5, %v3064
          %v3066 = vsub.f32 1.5, %v3065
          %v3067 = vmul.f32 %v3062, %v3066
          %vm3068 = vweird.f32 %v3036
          %vm3069 = vweird.f32 %v3062
          %vm3070 = vmor %vm3068, %vm3069
          %v3071 = vsel %vm3070, %v3062, %v3067
          %v3072 = vrsqrt.pop %v3037
          %v3073 = vmul.f32 %v3072, %v3037
          %v3074 = vmul.f32 %v3073, %v3072
          %v3075 = vmul.f32 0.5, %v3074
          %v3076 = vsub.f32 1.5, %v3075
          %v3077 = vmul.f32 %v3072, %v3076
          %vm3078 = vweird.f32 %v3037
          %vm3079 = vweird.f32 %v3072
          %vm3080 = vmor %vm3078, %vm3079
          %v3081 = vsel %vm3080, %v3072, %v3077
          %v3082 = vrsqrt.pop %v3038
          %v3083 = vmul.f32 %v3082, %v3038
          %v3084 = vmul.f32 %v3083, %v3082
          %v3085 = vmul.f32 0.5, %v3084
          %v3086 = vsub.f32 1.5, %v3085
          %v3087 = vmul.f32 %v3082, %v3086
          %vm3088 = vweird.f32 %v3038
          %vm3089 = vweird.f32 %v3082
          %vm3090 = vmor %vm3088, %vm3089
          %v3091 = vsel %vm3090, %v3082, %v3087
          %v3092 = vrsqrt.pop %v3039
          %v3093 = vmul.f32 %v3092, %v3039
          %v3094 = vmul.f32 %v3093, %v3092
          %v3095 = vmul.f32 0.5, %v3094
          %v3096 = vsub.f32 1.5, %v3095
          %v3097 = vmul.f32 %v3092, %v3096
          %vm3098 = vweird.f32 %v3039
          %vm3099 = vweird.f32 %v3092
          %vm3100 = vmor %vm3098, %vm3099
          %v3101 = vsel %vm3100, %v3092, %v3097
          %v3102 = vrsqrt.pop %v3040
          %v3103 = vmul.f32 %v3102, %v3040
          %v3104 = vmul.f32 %v3103, %v3102
          %v3105 = vmul.f32 0.5, %v3104
          %v3106 = vsub.f32 1.5, %v3105
          %v3107 = vmul.f32 %v3102, %v3106
          %vm3108 = vweird.f32 %v3040
          %vm3109 = vweird.f32 %v3102
          %vm3110 = vmor %vm3108, %vm3109
          %v3111 = vsel %vm3110, %v3102, %v3107
          %v3112 = vrsqrt.pop %v3041
          %v3113 = vmul.f32 %v3112, %v3041
          %v3114 = vmul.f32 %v3113, %v3112
          %v3115 = vmul.f32 0.5, %v3114
          %v3116 = vsub.f32 1.5, %v3115
          %v3117 = vmul.f32 %v3112, %v3116
          %vm3118 = vweird.f32 %v3041
          %vm3119 = vweird.f32 %v3112
          %vm3120 = vmor %vm3118, %vm3119
          %v3121 = vsel %vm3120, %v3112, %v3117
          %v3122 = vmul.f32 %v2866, %v3051
          %v3123 = vmul.f32 %v2935, %v3051
          %v3124 = vmul.f32 %v2868, %v3061
          %v3125 = vmul.f32 %v2937, %v3061
          %v3126 = vmul.f32 %v2871, %v3071
          %v3127 = vmul.f32 %v2940, %v3071
          %v3128 = vmul.f32 %v2873, %v3081
          %v3129 = vmul.f32 %v2942, %v3081
          %v3130 = vmul.f32 %v2876, %v3091
          %v3131 = vmul.f32 %v2945, %v3091
          %v3132 = vmul.f32 %v2878, %v3101
          %v3133 = vmul.f32 %v2947, %v3101
          %v3134 = vmul.f32 %v2881, %v3111
          %v3135 = vmul.f32 %v2950, %v3111
          %v3136 = vmul.f32 %v2883, %v3121
          %v3137 = vmul.f32 %v2952, %v3121
          %v3138 = vmul.f32 %v2886, %v2886
          %v3139 = vmul.f32 %v2955, %v2955
          %v3140 = vmul.f32 %v2888, %v2888
          %v3141 = vmul.f32 %v2957, %v2957
          %v3142 = vmul.f32 %v2891, %v2891
          %v3143 = vmul.f32 %v2960, %v2960
          %v3144 = vmul.f32 %v2893, %v2893
          %v3145 = vmul.f32 %v2962, %v2962
          %v3146 = vmul.f32 %v2896, %v2896
          %v3147 = vmul.f32 %v2965, %v2965
          %v3148 = vmul.f32 %v2898, %v2898
          %v3149 = vmul.f32 %v2967, %v2967
          %v3150 = vmul.f32 %v2901, %v2901
          %v3151 = vmul.f32 %v2970, %v2970
          %v3152 = vmul.f32 %v2903, %v2903
          %v3153 = vmul.f32 %v2972, %v2972
          %v3154 = vadd.f32 %v3138, %v3139
          %3155 = vadd.xlane.f32.xlu0 %v3154
          %v3156 = vpop.xlane.xlu0 %3155
          %v3157 = vadd.f32 %v3140, %v3141
          %3158 = vadd.xlane.f32.xlu0 %v3157
          %v3159 = vpop.xlane.xlu0 %3158
          %v3160 = vadd.f32 %v3142, %v3143
          %3161 = vadd.xlane.f32.xlu0 %v3160
          %v3162 = vpop.xlane.xlu0 %3161
          %v3163 = vadd.f32 %v3144, %v3145
          %3164 = vadd.xlane.f32.xlu0 %v3163
          %v3165 = vpop.xlane.xlu0 %3164
          %v3166 = vadd.f32 %v3146, %v3147
          %3167 = vadd.xlane.f32.xlu0 %v3166
          %v3168 = vpop.xlane.xlu0 %3167
          %v3169 = vadd.f32 %v3148, %v3149
          %3170 = vadd.xlane.f32.xlu0 %v3169
          %v3171 = vpop.xlane.xlu0 %3170
          %v3172 = vadd.f32 %v3150, %v3151
          %3173 = vadd.xlane.f32.xlu0 %v3172
          %v3174 = vpop.xlane.xlu0 %3173
          %v3175 = vadd.f32 %v3152, %v3153
          %3176 = vadd.xlane.f32.xlu0 %v3175
          %v3177 = vpop.xlane.xlu0 %3176
          %v3178 = vmax.f32 %v3156, 1e-24
          %v3179 = vmax.f32 %v3159, 1e-24
          %v3180 = vmax.f32 %v3162, 1e-24
          %v3181 = vmax.f32 %v3165, 1e-24
          %v3182 = vmax.f32 %v3168, 1e-24
          %v3183 = vmax.f32 %v3171, 1e-24
          %v3184 = vmax.f32 %v3174, 1e-24
          %v3185 = vmax.f32 %v3177, 1e-24
          %v3186 = vrsqrt.pop %v3178
          %v3187 = vmul.f32 %v3186, %v3178
          %v3188 = vmul.f32 %v3187, %v3186
          %v3189 = vmul.f32 0.5, %v3188
          %v3190 = vsub.f32 1.5, %v3189
          %v3191 = vmul.f32 %v3186, %v3190
          %vm3192 = vweird.f32 %v3178
          %vm3193 = vweird.f32 %v3186
          %vm3194 = vmor %vm3192, %vm3193
          %v3195 = vsel %vm3194, %v3186, %v3191
          %v3196 = vrsqrt.pop %v3179
          %v3197 = vmul.f32 %v3196, %v3179
          %v3198 = vmul.f32 %v3197, %v3196
          %v3199 = vmul.f32 0.5, %v3198
          %v3200 = vsub.f32 1.5, %v3199
          %v3201 = vmul.f32 %v3196, %v3200
          %vm3202 = vweird.f32 %v3179
          %vm3203 = vweird.f32 %v3196
          %vm3204 = vmor %vm3202, %vm3203
          %v3205 = vsel %vm3204, %v3196, %v3201
          %v3206 = vrsqrt.pop %v3180
          %v3207 = vmul.f32 %v3206, %v3180
          %v3208 = vmul.f32 %v3207, %v3206
          %v3209 = vmul.f32 0.5, %v3208
          %v3210 = vsub.f32 1.5, %v3209
          %v3211 = vmul.f32 %v3206, %v3210
          %vm3212 = vweird.f32 %v3180
          %vm3213 = vweird.f32 %v3206
          %vm3214 = vmor %vm3212, %vm3213
          %v3215 = vsel %vm3214, %v3206, %v3211
          %v3216 = vrsqrt.pop %v3181
          %v3217 = vmul.f32 %v3216, %v3181
          %v3218 = vmul.f32 %v3217, %v3216
          %v3219 = vmul.f32 0.5, %v3218
          %v3220 = vsub.f32 1.5, %v3219
          %v3221 = vmul.f32 %v3216, %v3220
          %vm3222 = vweird.f32 %v3181
          %vm3223 = vweird.f32 %v3216
          %vm3224 = vmor %vm3222, %vm3223
          %v3225 = vsel %vm3224, %v3216, %v3221
          %v3226 = vrsqrt.pop %v3182
          %v3227 = vmul.f32 %v3226, %v3182
          %v3228 = vmul.f32 %v3227, %v3226
          %v3229 = vmul.f32 0.5, %v3228
          %v3230 = vsub.f32 1.5, %v3229
          %v3231 = vmul.f32 %v3226, %v3230
          %vm3232 = vweird.f32 %v3182
          %vm3233 = vweird.f32 %v3226
          %vm3234 = vmor %vm3232, %vm3233
          %v3235 = vsel %vm3234, %v3226, %v3231
          %v3236 = vrsqrt.pop %v3183
          %v3237 = vmul.f32 %v3236, %v3183
          %v3238 = vmul.f32 %v3237, %v3236
          %v3239 = vmul.f32 0.5, %v3238
          %v3240 = vsub.f32 1.5, %v3239
          %v3241 = vmul.f32 %v3236, %v3240
          %vm3242 = vweird.f32 %v3183
          %vm3243 = vweird.f32 %v3236
          %vm3244 = vmor %vm3242, %vm3243
          %v3245 = vsel %vm3244, %v3236, %v3241
          %v3246 = vrsqrt.pop %v3184
          %v3247 = vmul.f32 %v3246, %v3184
          %v3248 = vmul.f32 %v3247, %v3246
          %v3249 = vmul.f32 0.5, %v3248
          %v3250 = vsub.f32 1.5, %v3249
          %v3251 = vmul.f32 %v3246, %v3250
          %vm3252 = vweird.f32 %v3184
          %vm3253 = vweird.f32 %v3246
          %vm3254 = vmor %vm3252, %vm3253
          %v3255 = vsel %vm3254, %v3246, %v3251
          %v3256 = vrsqrt.pop %v3185
          %v3257 = vmul.f32 %v3256, %v3185
          %v3258 = vmul.f32 %v3257, %v3256
          %v3259 = vmul.f32 0.5, %v3258
          %v3260 = vsub.f32 1.5, %v3259
          %v3261 = vmul.f32 %v3256, %v3260
          %vm3262 = vweird.f32 %v3185
          %vm3263 = vweird.f32 %v3256
          %vm3264 = vmor %vm3262, %vm3263
          %v3265 = vsel %vm3264, %v3256, %v3261
          %v3266 = vmul.f32 %v2886, %v3195
          %v3267 = vmul.f32 %v2955, %v3195
          %v3268 = vmul.f32 %v2888, %v3205
          %v3269 = vmul.f32 %v2957, %v3205
          %v3270 = vmul.f32 %v2891, %v3215
          %v3271 = vmul.f32 %v2960, %v3215
          %v3272 = vmul.f32 %v2893, %v3225
          %v3273 = vmul.f32 %v2962, %v3225
          %v3274 = vmul.f32 %v2896, %v3235
          %v3275 = vmul.f32 %v2965, %v3235
          %v3276 = vmul.f32 %v2898, %v3245
          %v3277 = vmul.f32 %v2967, %v3245
          %v3278 = vmul.f32 %v2901, %v3255
          %v3279 = vmul.f32 %v2970, %v3255
          %v3280 = vmul.f32 %v2903, %v3265
          %v3281 = vmul.f32 %v2972, %v3265
          %v3282 = vpack.c.bf16 %v3124, %v3122
          %v3283 = vpack.c.bf16 %v3125, %v3123
          %v3284 = vpack.c.bf16 %v3128, %v3126
          %v3285 = vpack.c.bf16 %v3129, %v3127
          %v3286 = vpack.c.bf16 %v3132, %v3130
          %v3287 = vpack.c.bf16 %v3133, %v3131
          %v3288 = vpack.c.bf16 %v3136, %v3134
          %v3289 = vpack.c.bf16 %v3137, %v3135
          %v3290 = vpack.c.bf16 %v3268, %v3266
          %v3291 = vpack.c.bf16 %v3269, %v3267
          %v3292 = vpack.c.bf16 %v3272, %v3270
          %v3293 = vpack.c.bf16 %v3273, %v3271
          %v3294 = vpack.c.bf16 %v3276, %v3274
          %v3295 = vpack.c.bf16 %v3277, %v3275
          %v3296 = vpack.c.bf16 %v3280, %v3278
          %v3297 = vpack.c.bf16 %v3281, %v3279
          %3298 = vmatpush.bf16.xpose.msra.mxu0 0
          %3299 = vmatpush.bf16.xpose.msra.mxu0 0
          %3300 = vmatpush.bf16.xpose.msra.mxu0 0
          %3301 = vmatpush.bf16.xpose.msra.mxu0 0
          %3302 = vmatpush.bf16.xpose.msra.mxu0 %v3296
          %3303 = vmatpush.bf16.xpose.msra.mxu0 %v3294
          %3304 = vmatpush.bf16.xpose.msra.mxu0 %v3292
          %3305 = vmatpush.bf16.xpose.msra.mxu0 %v3290
          %3306 = vmatmul.bf16.gmra.mxu0 %v3282
          %v3307 = vpop.f32.mrf.mxu0
          %v3308 = vadd.f32 0.0, %v3307
          %v3309 = vpop.f32.mrf.mxu0
          %v3310 = vadd.f32 0.0, %v3309
          %3311 = vmatmul.bf16.gmra.mxu0 %v3284
          %v3312 = vpop.f32.mrf.mxu0
          %v3313 = vadd.f32 0.0, %v3312
          %v3314 = vpop.f32.mrf.mxu0
          %v3315 = vadd.f32 0.0, %v3314
          %3316 = vmatmul.bf16.gmra.mxu0 %v3286
          %v3317 = vpop.f32.mrf.mxu0
          %v3318 = vadd.f32 0.0, %v3317
          %v3319 = vpop.f32.mrf.mxu0
          %v3320 = vadd.f32 0.0, %v3319
          %3321 = vmatmul.bf16.gmra.mxu0 %v3288
          %v3322 = vpop.f32.mrf.mxu0
          %v3323 = vadd.f32 0.0, %v3322
          %v3324 = vpop.f32.mrf.mxu0
          %v3325 = vadd.f32 0.0, %v3324
          %3326 = vdwg.mxu0
          %3327 = vmatpush.bf16.xpose.msra.mxu0 0
          %3328 = vmatpush.bf16.xpose.msra.mxu0 0
          %3329 = vmatpush.bf16.xpose.msra.mxu0 0
          %3330 = vmatpush.bf16.xpose.msra.mxu0 0
          %3331 = vmatpush.bf16.xpose.msra.mxu0 %v3297
          %3332 = vmatpush.bf16.xpose.msra.mxu0 %v3295
          %3333 = vmatpush.bf16.xpose.msra.mxu0 %v3293
          %3334 = vmatpush.bf16.xpose.msra.mxu0 %v3291
          %3335 = vmatmul.bf16.gmra.mxu0 %v3283
          %v3336 = vpop.f32.mrf.mxu0
          %v3337 = vadd.f32 %v3308, %v3336
          %v3338 = vpop.f32.mrf.mxu0
          %v3339 = vadd.f32 %v3310, %v3338
          %3340 = vmatmul.bf16.gmra.mxu0 %v3285
          %v3341 = vpop.f32.mrf.mxu0
          %v3342 = vadd.f32 %v3313, %v3341
          %v3343 = vpop.f32.mrf.mxu0
          %v3344 = vadd.f32 %v3315, %v3343
          %3345 = vmatmul.bf16.gmra.mxu0 %v3287
          %v3346 = vpop.f32.mrf.mxu0
          %v3347 = vadd.f32 %v3318, %v3346
          %v3348 = vpop.f32.mrf.mxu0
          %v3349 = vadd.f32 %v3320, %v3348
          %3350 = vmatmul.bf16.gmra.mxu0 %v3289
          %v3351 = vpop.f32.mrf.mxu0
          %v3352 = vadd.f32 %v3323, %v3351
          %v3353 = vpop.f32.mrf.mxu0
          %v3354 = vadd.f32 %v3325, %v3353
          %3355 = vdwg.mxu0
          %s3356 = scalar_lea.vmem %s2, 64
          %v3357 = vld [vmem:[%s3356] sm:$0xff]
          %v3358 = vld [vmem:[%s3356 + $0x8] sm:$0xff]
          %v3359 = vld [vmem:[%s3356 + $0x10] sm:$0xff]
          %v3360 = vld [vmem:[%s3356 + $0x18] sm:$0xff]
          %v3361 = vld [vmem:[%s3356 + $0x20] sm:$0xff]
          %v3362 = vld [vmem:[%s3356 + $0x28] sm:$0xff]
          %v3363 = vld [vmem:[%s3356 + $0x30] sm:$0xff]
          %v3364 = vld [vmem:[%s3356 + $0x38] sm:$0xff]
          %3366 = vset.pattern.permute.xlu0 0
          %3367 = vperm.xlu0 %3366, %v3357
          %v3368 = vpop.permute.xlu0 %3367
          %3371 = vset.pattern.permute.xlu0 0
          %3372 = vperm.xlu0 %3371, %v3358
          %v3373 = vpop.permute.xlu0 %3372
          %3376 = vset.pattern.permute.xlu0 0
          %3377 = vperm.xlu0 %3376, %v3359
          %v3378 = vpop.permute.xlu0 %3377
          %3381 = vset.pattern.permute.xlu0 0
          %3382 = vperm.xlu0 %3381, %v3360
          %v3383 = vpop.permute.xlu0 %3382
          %3386 = vset.pattern.permute.xlu0 0
          %3387 = vperm.xlu0 %3386, %v3361
          %v3388 = vpop.permute.xlu0 %3387
          %3391 = vset.pattern.permute.xlu0 0
          %3392 = vperm.xlu0 %3391, %v3362
          %v3393 = vpop.permute.xlu0 %3392
          %3396 = vset.pattern.permute.xlu0 0
          %3397 = vperm.xlu0 %3396, %v3363
          %v3398 = vpop.permute.xlu0 %3397
          %3401 = vset.pattern.permute.xlu0 0
          %3402 = vperm.xlu0 %3401, %v3364
          %v3403 = vpop.permute.xlu0 %3402
          %v3405 = vmul.f32 %v3337, %v3368
          %v3406 = vmul.f32 %v3339, %v3373
          %v3407 = vmul.f32 %v3342, %v3378
          %v3408 = vmul.f32 %v3344, %v3383
          %v3409 = vmul.f32 %v3347, %v3388
          %v3410 = vmul.f32 %v3349, %v3393
          %v3411 = vmul.f32 %v3352, %v3398
          %v3412 = vmul.f32 %v3354, %v3403
          %v3413 = vadd.f32 %v3405, %v345
          %v3414 = vadd.f32 %v3406, %v346
          %v3415 = vadd.f32 %v3407, %v347
          %v3416 = vadd.f32 %v3408, %v348
          %v3417 = vadd.f32 %v3409, %v349
          %v3418 = vadd.f32 %v3410, %v350
          %v3419 = vadd.f32 %v3411, %v351
          %v3420 = vadd.f32 %v3412, %v352
          %v3421 = vsel %vm2819, %v3413, -inf
          %3422 = vmax.xlane.f32.xlu0 %v3421
          %v3423 = vpop.xlane.xlu0 %3422
          %v3424 = vsel %vm2819, %v3414, -inf
          %3425 = vmax.xlane.f32.xlu0 %v3424
          %v3426 = vpop.xlane.xlu0 %3425
          %v3427 = vsel %vm2819, %v3415, -inf
          %3428 = vmax.xlane.f32.xlu0 %v3427
          %v3429 = vpop.xlane.xlu0 %3428
          %v3430 = vsel %vm2819, %v3416, -inf
          %3431 = vmax.xlane.f32.xlu0 %v3430
          %v3432 = vpop.xlane.xlu0 %3431
          %v3433 = vsel %vm2819, %v3417, -inf
          %3434 = vmax.xlane.f32.xlu0 %v3433
          %v3435 = vpop.xlane.xlu0 %3434
          %v3436 = vsel %vm2819, %v3418, -inf
          %3437 = vmax.xlane.f32.xlu0 %v3436
          %v3438 = vpop.xlane.xlu0 %3437
          %v3439 = vsel %vm2819, %v3419, -inf
          %3440 = vmax.xlane.f32.xlu0 %v3439
          %v3441 = vpop.xlane.xlu0 %3440
          %v3442 = vsel %vm2819, %v3420, -inf
          %3443 = vmax.xlane.f32.xlu0 %v3442
          %v3444 = vpop.xlane.xlu0 %3443
          %v3445 = vsub.f32 %v3413, %v3423
          %v3446 = vsub.f32 %v3414, %v3426
          %v3447 = vsub.f32 %v3415, %v3429
          %v3448 = vsub.f32 %v3416, %v3432
          %v3449 = vsub.f32 %v3417, %v3435
          %v3450 = vsub.f32 %v3418, %v3438
          %v3451 = vsub.f32 %v3419, %v3441
          %v3452 = vsub.f32 %v3420, %v3444
          %v3453 = vmul.f32 %v3445, 1.442695
          %v3454 = vpow.pop %v3453
          %v3455 = vmul.f32 %v3446, 1.442695
          %v3456 = vpow.pop %v3455
          %v3457 = vmul.f32 %v3447, 1.442695
          %v3458 = vpow.pop %v3457
          %v3459 = vmul.f32 %v3448, 1.442695
          %v3460 = vpow.pop %v3459
          %v3461 = vmul.f32 %v3449, 1.442695
          %v3462 = vpow.pop %v3461
          %v3463 = vmul.f32 %v3450, 1.442695
          %v3464 = vpow.pop %v3463
          %v3465 = vmul.f32 %v3451, 1.442695
          %v3466 = vpow.pop %v3465
          %v3467 = vmul.f32 %v3452, 1.442695
          %v3468 = vpow.pop %v3467
          %v3469 = vsel %vm2819, %v3454, 0.0
          %3470 = vadd.xlane.f32.xlu0 %v3469
          %v3471 = vpop.xlane.xlu0 %3470
          %v3472 = vsel %vm2819, %v3456, 0.0
          %3473 = vadd.xlane.f32.xlu0 %v3472
          %v3474 = vpop.xlane.xlu0 %3473
          %v3475 = vsel %vm2819, %v3458, 0.0
          %3476 = vadd.xlane.f32.xlu0 %v3475
          %v3477 = vpop.xlane.xlu0 %3476
          %v3478 = vsel %vm2819, %v3460, 0.0
          %3479 = vadd.xlane.f32.xlu0 %v3478
          %v3480 = vpop.xlane.xlu0 %3479
          %v3481 = vsel %vm2819, %v3462, 0.0
          %3482 = vadd.xlane.f32.xlu0 %v3481
          %v3483 = vpop.xlane.xlu0 %3482
          %v3484 = vsel %vm2819, %v3464, 0.0
          %3485 = vadd.xlane.f32.xlu0 %v3484
          %v3486 = vpop.xlane.xlu0 %3485
          %v3487 = vsel %vm2819, %v3466, 0.0
          %3488 = vadd.xlane.f32.xlu0 %v3487
          %v3489 = vpop.xlane.xlu0 %3488
          %v3490 = vsel %vm2819, %v3468, 0.0
          %3491 = vadd.xlane.f32.xlu0 %v3490
          %v3492 = vpop.xlane.xlu0 %3491
          %v3493 = vrcp.pop %v3471
          %v3494 = vrcp.pop %v3474
          %v3495 = vrcp.pop %v3477
          %v3496 = vrcp.pop %v3480
          %v3497 = vrcp.pop %v3483
          %v3498 = vrcp.pop %v3486
          %v3499 = vrcp.pop %v3489
          %v3500 = vrcp.pop %v3492
          %v3501 = vmul.f32 %v3454, %v3493
          %v3502 = vmul.f32 %v3456, %v3494
          %v3503 = vmul.f32 %v3458, %v3495
          %v3504 = vmul.f32 %v3460, %v3496
          %v3505 = vmul.f32 %v3462, %v3497
          %v3506 = vmul.f32 %v3464, %v3498
          %v3507 = vmul.f32 %v3466, %v3499
          %v3508 = vmul.f32 %v3468, %v3500
          %v3509 = vpack.c.bf16 %v3502, %v3501
          %v3510 = vpack.c.bf16 %v3504, %v3503
          %v3511 = vpack.c.bf16 %v3506, %v3505
          %v3512 = vpack.c.bf16 %v3508, %v3507
          %v3513 = vpack.c.bf16 %v2908, %v2906
          %v3514 = vpack.c.bf16 %v2977, %v2975
          %v3515 = vpack.c.bf16 %v2913, %v2911
          %v3516 = vpack.c.bf16 %v2982, %v2980
          %v3517 = vpack.c.bf16 %v2918, %v2916
          %v3518 = vpack.c.bf16 %v2987, %v2985
          %v3519 = vpack.c.bf16 %v2923, %v2921
          %v3520 = vpack.c.bf16 %v2992, %v2990
          %v3522 = vsel %vm2819, %v3509, 0
          %v3525 = vsel %vm2819, %v3510, 0
          %v3528 = vsel %vm2819, %v3511, 0
          %v3531 = vsel %vm2819, %v3512, 0
          %3533 = vmatpush.bf16.msra.mxu0 0
          %3534 = vmatpush.bf16.msra.mxu0 0
          %3535 = vmatpush.bf16.msra.mxu0 0
          %3536 = vmatpush.bf16.msra.mxu0 0
          %3537 = vmatpush.bf16.msra.mxu0 %v3519
          %3538 = vmatpush.bf16.msra.mxu0 %v3517
          %3539 = vmatpush.bf16.msra.mxu0 %v3515
          %3540 = vmatpush.bf16.msra.mxu0 %v3513
          %3541 = vmatmul.bf16.gmra.mxu0 %v3522
          %v3542 = vpop.f32.mrf.mxu0
          %v3543 = vadd.f32 0.0, %v3542
          %v3544 = vpop.f32.mrf.mxu0
          %v3545 = vadd.f32 0.0, %v3544
          %3546 = vmatmul.bf16.gmra.mxu0 %v3525
          %v3547 = vpop.f32.mrf.mxu0
          %v3548 = vadd.f32 0.0, %v3547
          %v3549 = vpop.f32.mrf.mxu0
          %v3550 = vadd.f32 0.0, %v3549
          %3551 = vmatmul.bf16.gmra.mxu0 %v3528
          %v3552 = vpop.f32.mrf.mxu0
          %v3553 = vadd.f32 0.0, %v3552
          %v3554 = vpop.f32.mrf.mxu0
          %v3555 = vadd.f32 0.0, %v3554
          %3556 = vmatmul.bf16.gmra.mxu0 %v3531
          %v3557 = vpop.f32.mrf.mxu0
          %v3558 = vadd.f32 0.0, %v3557
          %v3559 = vpop.f32.mrf.mxu0
          %v3560 = vadd.f32 0.0, %v3559
          %3561 = vdwg.mxu0
          %3562 = vmatpush.bf16.msra.mxu0 0
          %3563 = vmatpush.bf16.msra.mxu0 0
          %3564 = vmatpush.bf16.msra.mxu0 0
          %3565 = vmatpush.bf16.msra.mxu0 0
          %3566 = vmatpush.bf16.msra.mxu0 %v3520
          %3567 = vmatpush.bf16.msra.mxu0 %v3518
          %3568 = vmatpush.bf16.msra.mxu0 %v3516
          %3569 = vmatpush.bf16.msra.mxu0 %v3514
          %3570 = vmatmul.bf16.gmra.mxu0 %v3522
          %v3571 = vpop.f32.mrf.mxu0
          %v3572 = vadd.f32 0.0, %v3571
          %v3573 = vpop.f32.mrf.mxu0
          %v3574 = vadd.f32 0.0, %v3573
          %3575 = vmatmul.bf16.gmra.mxu0 %v3525
          %v3576 = vpop.f32.mrf.mxu0
          %v3577 = vadd.f32 0.0, %v3576
          %v3578 = vpop.f32.mrf.mxu0
          %v3579 = vadd.f32 0.0, %v3578
          %3580 = vmatmul.bf16.gmra.mxu0 %v3528
          %v3581 = vpop.f32.mrf.mxu0
          %v3582 = vadd.f32 0.0, %v3581
          %v3583 = vpop.f32.mrf.mxu0
          %v3584 = vadd.f32 0.0, %v3583
          %3585 = vmatmul.bf16.gmra.mxu0 %v3531
          %v3586 = vpop.f32.mrf.mxu0
          %v3587 = vadd.f32 0.0, %v3586
          %v3588 = vpop.f32.mrf.mxu0
          %v3589 = vadd.f32 0.0, %v3588
          %3590 = vdwg.mxu0
          %s3591 = scalar_lea.vmem %s3, 64
          %v3592 = vld [vmem:[%s3591] sm:$0xff]
          %v3593 = vld [vmem:[%s3591 + $0x8] sm:$0xff]
          %v3594 = vld [vmem:[%s3591 + $0x10] sm:$0xff]
          %v3595 = vld [vmem:[%s3591 + $0x18] sm:$0xff]
          %v3596 = vld [vmem:[%s3591 + $0x20] sm:$0xff]
          %v3597 = vld [vmem:[%s3591 + $0x28] sm:$0xff]
          %v3598 = vld [vmem:[%s3591 + $0x30] sm:$0xff]
          %v3599 = vld [vmem:[%s3591 + $0x38] sm:$0xff]
          %3608 = vrot.lane.b32.xlu0 %v3572, 17
          %v3609 = vpop.permute.xlu0 %3608
          %3610 = vrot.lane.b32.xlu0 %v3574, 17
          %v3611 = vpop.permute.xlu0 %3610
          %3612 = vrot.lane.b32.xlu0 %v3577, 17
          %v3613 = vpop.permute.xlu0 %3612
          %3614 = vrot.lane.b32.xlu0 %v3579, 17
          %v3615 = vpop.permute.xlu0 %3614
          %3616 = vrot.lane.b32.xlu0 %v3582, 17
          %v3617 = vpop.permute.xlu0 %3616
          %3618 = vrot.lane.b32.xlu0 %v3584, 17
          %v3619 = vpop.permute.xlu0 %3618
          %3620 = vrot.lane.b32.xlu0 %v3587, 17
          %v3621 = vpop.permute.xlu0 %3620
          %3622 = vrot.lane.b32.xlu0 %v3589, 17
          %v3623 = vpop.permute.xlu0 %3622
          %3640 = vrot.lane.b32.xlu0 %v3543, 17
          %v3641 = vpop.permute.xlu0 %3640
          %3642 = vrot.lane.b32.xlu0 %v3545, 17
          %v3643 = vpop.permute.xlu0 %3642
          %3644 = vrot.lane.b32.xlu0 %v3548, 17
          %v3645 = vpop.permute.xlu0 %3644
          %3646 = vrot.lane.b32.xlu0 %v3550, 17
          %v3647 = vpop.permute.xlu0 %3646
          %3648 = vrot.lane.b32.xlu0 %v3553, 17
          %v3649 = vpop.permute.xlu0 %3648
          %3650 = vrot.lane.b32.xlu0 %v3555, 17
          %v3651 = vpop.permute.xlu0 %3650
          %3652 = vrot.lane.b32.xlu0 %v3558, 17
          %v3653 = vpop.permute.xlu0 %3652
          %3654 = vrot.lane.b32.xlu0 %v3560, 17
          %v3655 = vpop.permute.xlu0 %3654
          %vm3656 = vcmask 138240
          %v3657 = vsel %vm3656, %v3641, %v3609
          %v3658 = vsel %vm3656, %v3643, %v3611
          %v3659 = vsel %vm3656, %v3645, %v3613
          %v3660 = vsel %vm3656, %v3647, %v3615
          %v3661 = vsel %vm3656, %v3649, %v3617
          %v3662 = vsel %vm3656, %v3651, %v3619
          %v3663 = vsel %vm3656, %v3653, %v3621
          %v3664 = vsel %vm3656, %v3655, %v3623
          %v3681 = vsel %vm3656, %v3609, %v3641
          %v3682 = vsel %vm3656, %v3611, %v3643
          %v3683 = vsel %vm3656, %v3613, %v3645
          %v3684 = vsel %vm3656, %v3615, %v3647
          %v3685 = vsel %vm3656, %v3617, %v3649
          %v3686 = vsel %vm3656, %v3619, %v3651
          %v3687 = vsel %vm3656, %v3621, %v3653
          %v3688 = vsel %vm3656, %v3623, %v3655
          %v3689 = vperm.slane %v353, 0
          %v3690 = vperm.slane %v354, 0
          %v3691 = vmul.f32 %v3681, %v3689
          %v3692 = vmul.f32 %v3657, %v3690
          %v3693 = vmul.f32 %v3682, %v3689
          %v3694 = vmul.f32 %v3658, %v3690
          %v3695 = vmul.f32 %v3683, %v3689
          %v3696 = vmul.f32 %v3659, %v3690
          %v3697 = vmul.f32 %v3684, %v3689
          %v3698 = vmul.f32 %v3660, %v3690
          %v3699 = vmul.f32 %v3685, %v3689
          %v3700 = vmul.f32 %v3661, %v3690
          %v3701 = vmul.f32 %v3686, %v3689
          %v3702 = vmul.f32 %v3662, %v3690
          %v3703 = vmul.f32 %v3687, %v3689
          %v3704 = vmul.f32 %v3663, %v3690
          %v3705 = vmul.f32 %v3688, %v3689
          %v3706 = vmul.f32 %v3664, %v3690
          %3708 = vset.pattern.permute.xlu0 0
          %3709 = vperm.xlu0 %3708, %v3592
          %v3710 = vpop.permute.xlu0 %3709
          %3713 = vset.pattern.permute.xlu0 0
          %3714 = vperm.xlu0 %3713, %v3593
          %v3715 = vpop.permute.xlu0 %3714
          %3718 = vset.pattern.permute.xlu0 0
          %3719 = vperm.xlu0 %3718, %v3594
          %v3720 = vpop.permute.xlu0 %3719
          %3723 = vset.pattern.permute.xlu0 0
          %3724 = vperm.xlu0 %3723, %v3595
          %v3725 = vpop.permute.xlu0 %3724
          %3728 = vset.pattern.permute.xlu0 0
          %3729 = vperm.xlu0 %3728, %v3596
          %v3730 = vpop.permute.xlu0 %3729
          %3733 = vset.pattern.permute.xlu0 0
          %3734 = vperm.xlu0 %3733, %v3597
          %v3735 = vpop.permute.xlu0 %3734
          %3738 = vset.pattern.permute.xlu0 0
          %3739 = vperm.xlu0 %3738, %v3598
          %v3740 = vpop.permute.xlu0 %3739
          %3743 = vset.pattern.permute.xlu0 0
          %3744 = vperm.xlu0 %3743, %v3599
          %v3745 = vpop.permute.xlu0 %3744
          %v3747 = vmul.f32 %v3691, %v3710
          %v3748 = vmul.f32 %v3692, %v3710
          %v3749 = vmul.f32 %v3693, %v3715
          %v3750 = vmul.f32 %v3694, %v3715
          %v3751 = vmul.f32 %v3695, %v3720
          %v3752 = vmul.f32 %v3696, %v3720
          %v3753 = vmul.f32 %v3697, %v3725
          %v3754 = vmul.f32 %v3698, %v3725
          %v3755 = vmul.f32 %v3699, %v3730
          %v3756 = vmul.f32 %v3700, %v3730
          %v3757 = vmul.f32 %v3701, %v3735
          %v3758 = vmul.f32 %v3702, %v3735
          %v3759 = vmul.f32 %v3703, %v3740
          %v3760 = vmul.f32 %v3704, %v3740
          %v3761 = vmul.f32 %v3705, %v3745
          %v3762 = vmul.f32 %v3706, %v3745
          %3763 = vrot.lane.b32.xlu0 %v3572, 16
          %v3764 = vpop.permute.xlu0 %3763
          %3765 = vrot.lane.b32.xlu0 %v3574, 16
          %v3766 = vpop.permute.xlu0 %3765
          %3767 = vrot.lane.b32.xlu0 %v3577, 16
          %v3768 = vpop.permute.xlu0 %3767
          %3769 = vrot.lane.b32.xlu0 %v3579, 16
          %v3770 = vpop.permute.xlu0 %3769
          %3771 = vrot.lane.b32.xlu0 %v3582, 16
          %v3772 = vpop.permute.xlu0 %3771
          %3773 = vrot.lane.b32.xlu0 %v3584, 16
          %v3774 = vpop.permute.xlu0 %3773
          %3775 = vrot.lane.b32.xlu0 %v3587, 16
          %v3776 = vpop.permute.xlu0 %3775
          %3777 = vrot.lane.b32.xlu0 %v3589, 16
          %v3778 = vpop.permute.xlu0 %3777
          %3787 = vrot.lane.b32.xlu0 %v3543, 16
          %v3788 = vpop.permute.xlu0 %3787
          %3789 = vrot.lane.b32.xlu0 %v3545, 16
          %v3790 = vpop.permute.xlu0 %3789
          %3791 = vrot.lane.b32.xlu0 %v3548, 16
          %v3792 = vpop.permute.xlu0 %3791
          %3793 = vrot.lane.b32.xlu0 %v3550, 16
          %v3794 = vpop.permute.xlu0 %3793
          %3795 = vrot.lane.b32.xlu0 %v3553, 16
          %v3796 = vpop.permute.xlu0 %3795
          %3797 = vrot.lane.b32.xlu0 %v3555, 16
          %v3798 = vpop.permute.xlu0 %3797
          %3799 = vrot.lane.b32.xlu0 %v3558, 16
          %v3800 = vpop.permute.xlu0 %3799
          %3801 = vrot.lane.b32.xlu0 %v3560, 16
          %v3802 = vpop.permute.xlu0 %3801
          %vm3803 = vcmask 130048
          %v3804 = vsel %vm3803, %v3788, %v3764
          %v3805 = vsel %vm3803, %v3790, %v3766
          %v3806 = vsel %vm3803, %v3792, %v3768
          %v3807 = vsel %vm3803, %v3794, %v3770
          %v3808 = vsel %vm3803, %v3796, %v3772
          %v3809 = vsel %vm3803, %v3798, %v3774
          %v3810 = vsel %vm3803, %v3800, %v3776
          %v3811 = vsel %vm3803, %v3802, %v3778
          %v3828 = vsel %vm3803, %v3764, %v3788
          %v3829 = vsel %vm3803, %v3766, %v3790
          %v3830 = vsel %vm3803, %v3768, %v3792
          %v3831 = vsel %vm3803, %v3770, %v3794
          %v3832 = vsel %vm3803, %v3772, %v3796
          %v3833 = vsel %vm3803, %v3774, %v3798
          %v3834 = vsel %vm3803, %v3776, %v3800
          %v3835 = vsel %vm3803, %v3778, %v3802
          %v3836 = vperm.slane %v353, 1
          %v3837 = vperm.slane %v354, 1
          %v3838 = vmul.f32 %v3828, %v3836
          %v3839 = vmul.f32 %v3804, %v3837
          %v3840 = vmul.f32 %v3829, %v3836
          %v3841 = vmul.f32 %v3805, %v3837
          %v3842 = vmul.f32 %v3830, %v3836
          %v3843 = vmul.f32 %v3806, %v3837
          %v3844 = vmul.f32 %v3831, %v3836
          %v3845 = vmul.f32 %v3807, %v3837
          %v3846 = vmul.f32 %v3832, %v3836
          %v3847 = vmul.f32 %v3808, %v3837
          %v3848 = vmul.f32 %v3833, %v3836
          %v3849 = vmul.f32 %v3809, %v3837
          %v3850 = vmul.f32 %v3834, %v3836
          %v3851 = vmul.f32 %v3810, %v3837
          %v3852 = vmul.f32 %v3835, %v3836
          %v3853 = vmul.f32 %v3811, %v3837
          %3854 = vset.pattern.permute.xlu0 1
          %3855 = vperm.xlu0 %3854, %v3592
          %v3856 = vpop.permute.xlu0 %3855
          %3858 = vset.pattern.permute.xlu0 1
          %3859 = vperm.xlu0 %3858, %v3593
          %v3860 = vpop.permute.xlu0 %3859
          %3862 = vset.pattern.permute.xlu0 1
          %3863 = vperm.xlu0 %3862, %v3594
          %v3864 = vpop.permute.xlu0 %3863
          %3866 = vset.pattern.permute.xlu0 1
          %3867 = vperm.xlu0 %3866, %v3595
          %v3868 = vpop.permute.xlu0 %3867
          %3870 = vset.pattern.permute.xlu0 1
          %3871 = vperm.xlu0 %3870, %v3596
          %v3872 = vpop.permute.xlu0 %3871
          %3874 = vset.pattern.permute.xlu0 1
          %3875 = vperm.xlu0 %3874, %v3597
          %v3876 = vpop.permute.xlu0 %3875
          %3878 = vset.pattern.permute.xlu0 1
          %3879 = vperm.xlu0 %3878, %v3598
          %v3880 = vpop.permute.xlu0 %3879
          %3882 = vset.pattern.permute.xlu0 1
          %3883 = vperm.xlu0 %3882, %v3599
          %v3884 = vpop.permute.xlu0 %3883
          %v3886 = vmul.f32 %v3838, %v3856
          %v3887 = vmul.f32 %v3839, %v3856
          %v3888 = vmul.f32 %v3840, %v3860
          %v3889 = vmul.f32 %v3841, %v3860
          %v3890 = vmul.f32 %v3842, %v3864
          %v3891 = vmul.f32 %v3843, %v3864
          %v3892 = vmul.f32 %v3844, %v3868
          %v3893 = vmul.f32 %v3845, %v3868
          %v3894 = vmul.f32 %v3846, %v3872
          %v3895 = vmul.f32 %v3847, %v3872
          %v3896 = vmul.f32 %v3848, %v3876
          %v3897 = vmul.f32 %v3849, %v3876
          %v3898 = vmul.f32 %v3850, %v3880
          %v3899 = vmul.f32 %v3851, %v3880
          %v3900 = vmul.f32 %v3852, %v3884
          %v3901 = vmul.f32 %v3853, %v3884
          %3902 = vrot.lane.b32.xlu0 %v3572, 15
          %v3903 = vpop.permute.xlu0 %3902
          %3904 = vrot.lane.b32.xlu0 %v3574, 15
          %v3905 = vpop.permute.xlu0 %3904
          %3906 = vrot.lane.b32.xlu0 %v3577, 15
          %v3907 = vpop.permute.xlu0 %3906
          %3908 = vrot.lane.b32.xlu0 %v3579, 15
          %v3909 = vpop.permute.xlu0 %3908
          %3910 = vrot.lane.b32.xlu0 %v3582, 15
          %v3911 = vpop.permute.xlu0 %3910
          %3912 = vrot.lane.b32.xlu0 %v3584, 15
          %v3913 = vpop.permute.xlu0 %3912
          %3914 = vrot.lane.b32.xlu0 %v3587, 15
          %v3915 = vpop.permute.xlu0 %3914
          %3916 = vrot.lane.b32.xlu0 %v3589, 15
          %v3917 = vpop.permute.xlu0 %3916
          %3926 = vrot.lane.b32.xlu0 %v3543, 15
          %v3927 = vpop.permute.xlu0 %3926
          %3928 = vrot.lane.b32.xlu0 %v3545, 15
          %v3929 = vpop.permute.xlu0 %3928
          %3930 = vrot.lane.b32.xlu0 %v3548, 15
          %v3931 = vpop.permute.xlu0 %3930
          %3932 = vrot.lane.b32.xlu0 %v3550, 15
          %v3933 = vpop.permute.xlu0 %3932
          %3934 = vrot.lane.b32.xlu0 %v3553, 15
          %v3935 = vpop.permute.xlu0 %3934
          %3936 = vrot.lane.b32.xlu0 %v3555, 15
          %v3937 = vpop.permute.xlu0 %3936
          %3938 = vrot.lane.b32.xlu0 %v3558, 15
          %v3939 = vpop.permute.xlu0 %3938
          %3940 = vrot.lane.b32.xlu0 %v3560, 15
          %v3941 = vpop.permute.xlu0 %3940
          %vm3942 = vcmask 121856
          %v3943 = vsel %vm3942, %v3927, %v3903
          %v3944 = vsel %vm3942, %v3929, %v3905
          %v3945 = vsel %vm3942, %v3931, %v3907
          %v3946 = vsel %vm3942, %v3933, %v3909
          %v3947 = vsel %vm3942, %v3935, %v3911
          %v3948 = vsel %vm3942, %v3937, %v3913
          %v3949 = vsel %vm3942, %v3939, %v3915
          %v3950 = vsel %vm3942, %v3941, %v3917
          %v3967 = vsel %vm3942, %v3903, %v3927
          %v3968 = vsel %vm3942, %v3905, %v3929
          %v3969 = vsel %vm3942, %v3907, %v3931
          %v3970 = vsel %vm3942, %v3909, %v3933
          %v3971 = vsel %vm3942, %v3911, %v3935
          %v3972 = vsel %vm3942, %v3913, %v3937
          %v3973 = vsel %vm3942, %v3915, %v3939
          %v3974 = vsel %vm3942, %v3917, %v3941
          %v3975 = vperm.slane %v353, 2
          %v3976 = vperm.slane %v354, 2
          %v3977 = vmul.f32 %v3967, %v3975
          %v3978 = vmul.f32 %v3943, %v3976
          %v3979 = vmul.f32 %v3968, %v3975
          %v3980 = vmul.f32 %v3944, %v3976
          %v3981 = vmul.f32 %v3969, %v3975
          %v3982 = vmul.f32 %v3945, %v3976
          %v3983 = vmul.f32 %v3970, %v3975
          %v3984 = vmul.f32 %v3946, %v3976
          %v3985 = vmul.f32 %v3971, %v3975
          %v3986 = vmul.f32 %v3947, %v3976
          %v3987 = vmul.f32 %v3972, %v3975
          %v3988 = vmul.f32 %v3948, %v3976
          %v3989 = vmul.f32 %v3973, %v3975
          %v3990 = vmul.f32 %v3949, %v3976
          %v3991 = vmul.f32 %v3974, %v3975
          %v3992 = vmul.f32 %v3950, %v3976
          %3993 = vset.pattern.permute.xlu0 2
          %3994 = vperm.xlu0 %3993, %v3592
          %v3995 = vpop.permute.xlu0 %3994
          %3997 = vset.pattern.permute.xlu0 2
          %3998 = vperm.xlu0 %3997, %v3593
          %v3999 = vpop.permute.xlu0 %3998
          %4001 = vset.pattern.permute.xlu0 2
          %4002 = vperm.xlu0 %4001, %v3594
          %v4003 = vpop.permute.xlu0 %4002
          %4005 = vset.pattern.permute.xlu0 2
          %4006 = vperm.xlu0 %4005, %v3595
          %v4007 = vpop.permute.xlu0 %4006
          %4009 = vset.pattern.permute.xlu0 2
          %4010 = vperm.xlu0 %4009, %v3596
          %v4011 = vpop.permute.xlu0 %4010
          %4013 = vset.pattern.permute.xlu0 2
          %4014 = vperm.xlu0 %4013, %v3597
          %v4015 = vpop.permute.xlu0 %4014
          %4017 = vset.pattern.permute.xlu0 2
          %4018 = vperm.xlu0 %4017, %v3598
          %v4019 = vpop.permute.xlu0 %4018
          %4021 = vset.pattern.permute.xlu0 2
          %4022 = vperm.xlu0 %4021, %v3599
          %v4023 = vpop.permute.xlu0 %4022
          %v4025 = vmul.f32 %v3977, %v3995
          %v4026 = vmul.f32 %v3978, %v3995
          %v4027 = vmul.f32 %v3979, %v3999
          %v4028 = vmul.f32 %v3980, %v3999
          %v4029 = vmul.f32 %v3981, %v4003
          %v4030 = vmul.f32 %v3982, %v4003
          %v4031 = vmul.f32 %v3983, %v4007
          %v4032 = vmul.f32 %v3984, %v4007
          %v4033 = vmul.f32 %v3985, %v4011
          %v4034 = vmul.f32 %v3986, %v4011
          %v4035 = vmul.f32 %v3987, %v4015
          %v4036 = vmul.f32 %v3988, %v4015
          %v4037 = vmul.f32 %v3989, %v4019
          %v4038 = vmul.f32 %v3990, %v4019
          %v4039 = vmul.f32 %v3991, %v4023
          %v4040 = vmul.f32 %v3992, %v4023
          %4041 = vrot.lane.b32.xlu0 %v3572, 1
          %v4042 = vpop.permute.xlu0 %4041
          %4043 = vrot.lane.b32.xlu0 %v3574, 1
          %v4044 = vpop.permute.xlu0 %4043
          %4045 = vrot.lane.b32.xlu0 %v3577, 1
          %v4046 = vpop.permute.xlu0 %4045
          %4047 = vrot.lane.b32.xlu0 %v3579, 1
          %v4048 = vpop.permute.xlu0 %4047
          %4049 = vrot.lane.b32.xlu0 %v3582, 1
          %v4050 = vpop.permute.xlu0 %4049
          %4051 = vrot.lane.b32.xlu0 %v3584, 1
          %v4052 = vpop.permute.xlu0 %4051
          %4053 = vrot.lane.b32.xlu0 %v3587, 1
          %v4054 = vpop.permute.xlu0 %4053
          %4055 = vrot.lane.b32.xlu0 %v3589, 1
          %v4056 = vpop.permute.xlu0 %4055
          %4065 = vrot.lane.b32.xlu0 %v3543, 1
          %v4066 = vpop.permute.xlu0 %4065
          %4067 = vrot.lane.b32.xlu0 %v3545, 1
          %v4068 = vpop.permute.xlu0 %4067
          %4069 = vrot.lane.b32.xlu0 %v3548, 1
          %v4070 = vpop.permute.xlu0 %4069
          %4071 = vrot.lane.b32.xlu0 %v3550, 1
          %v4072 = vpop.permute.xlu0 %4071
          %4073 = vrot.lane.b32.xlu0 %v3553, 1
          %v4074 = vpop.permute.xlu0 %4073
          %4075 = vrot.lane.b32.xlu0 %v3555, 1
          %v4076 = vpop.permute.xlu0 %4075
          %4077 = vrot.lane.b32.xlu0 %v3558, 1
          %v4078 = vpop.permute.xlu0 %4077
          %4079 = vrot.lane.b32.xlu0 %v3560, 1
          %v4080 = vpop.permute.xlu0 %4079
          %vm4081 = vcmask 7168
          %v4082 = vsel %vm4081, %v4066, %v4042
          %v4083 = vsel %vm4081, %v4068, %v4044
          %v4084 = vsel %vm4081, %v4070, %v4046
          %v4085 = vsel %vm4081, %v4072, %v4048
          %v4086 = vsel %vm4081, %v4074, %v4050
          %v4087 = vsel %vm4081, %v4076, %v4052
          %v4088 = vsel %vm4081, %v4078, %v4054
          %v4089 = vsel %vm4081, %v4080, %v4056
          %v4106 = vsel %vm4081, %v4042, %v4066
          %v4107 = vsel %vm4081, %v4044, %v4068
          %v4108 = vsel %vm4081, %v4046, %v4070
          %v4109 = vsel %vm4081, %v4048, %v4072
          %v4110 = vsel %vm4081, %v4050, %v4074
          %v4111 = vsel %vm4081, %v4052, %v4076
          %v4112 = vsel %vm4081, %v4054, %v4078
          %v4113 = vsel %vm4081, %v4056, %v4080
          %v4114 = vperm.slane %v353, 3
          %v4115 = vperm.slane %v354, 3
          %v4116 = vmul.f32 %v4106, %v4114
          %v4117 = vmul.f32 %v4082, %v4115
          %v4118 = vmul.f32 %v4107, %v4114
          %v4119 = vmul.f32 %v4083, %v4115
          %v4120 = vmul.f32 %v4108, %v4114
          %v4121 = vmul.f32 %v4084, %v4115
          %v4122 = vmul.f32 %v4109, %v4114
          %v4123 = vmul.f32 %v4085, %v4115
          %v4124 = vmul.f32 %v4110, %v4114
          %v4125 = vmul.f32 %v4086, %v4115
          %v4126 = vmul.f32 %v4111, %v4114
          %v4127 = vmul.f32 %v4087, %v4115
          %v4128 = vmul.f32 %v4112, %v4114
          %v4129 = vmul.f32 %v4088, %v4115
          %v4130 = vmul.f32 %v4113, %v4114
          %v4131 = vmul.f32 %v4089, %v4115
          %4132 = vset.pattern.permute.xlu0 3
          %4133 = vperm.xlu0 %4132, %v3592
          %v4134 = vpop.permute.xlu0 %4133
          %4136 = vset.pattern.permute.xlu0 3
          %4137 = vperm.xlu0 %4136, %v3593
          %v4138 = vpop.permute.xlu0 %4137
          %4140 = vset.pattern.permute.xlu0 3
          %4141 = vperm.xlu0 %4140, %v3594
          %v4142 = vpop.permute.xlu0 %4141
          %4144 = vset.pattern.permute.xlu0 3
          %4145 = vperm.xlu0 %4144, %v3595
          %v4146 = vpop.permute.xlu0 %4145
          %4148 = vset.pattern.permute.xlu0 3
          %4149 = vperm.xlu0 %4148, %v3596
          %v4150 = vpop.permute.xlu0 %4149
          %4152 = vset.pattern.permute.xlu0 3
          %4153 = vperm.xlu0 %4152, %v3597
          %v4154 = vpop.permute.xlu0 %4153
          %4156 = vset.pattern.permute.xlu0 3
          %4157 = vperm.xlu0 %4156, %v3598
          %v4158 = vpop.permute.xlu0 %4157
          %4160 = vset.pattern.permute.xlu0 3
          %4161 = vperm.xlu0 %4160, %v3599
          %v4162 = vpop.permute.xlu0 %4161
          %v4164 = vmul.f32 %v4116, %v4134
          %v4165 = vmul.f32 %v4117, %v4134
          %v4166 = vmul.f32 %v4118, %v4138
          %v4167 = vmul.f32 %v4119, %v4138
          %v4168 = vmul.f32 %v4120, %v4142
          %v4169 = vmul.f32 %v4121, %v4142
          %v4170 = vmul.f32 %v4122, %v4146
          %v4171 = vmul.f32 %v4123, %v4146
          %v4172 = vmul.f32 %v4124, %v4150
          %v4173 = vmul.f32 %v4125, %v4150
          %v4174 = vmul.f32 %v4126, %v4154
          %v4175 = vmul.f32 %v4127, %v4154
          %v4176 = vmul.f32 %v4128, %v4158
          %v4177 = vmul.f32 %v4129, %v4158
          %v4178 = vmul.f32 %v4130, %v4162
          %v4179 = vmul.f32 %v4131, %v4162
          %v4180 = vperm.slane %v353, 4
          %v4181 = vperm.slane %v354, 4
          %v4182 = vmul.f32 %v3543, %v4180
          %v4183 = vmul.f32 %v3572, %v4181
          %v4184 = vmul.f32 %v3545, %v4180
          %v4185 = vmul.f32 %v3574, %v4181
          %v4186 = vmul.f32 %v3548, %v4180
          %v4187 = vmul.f32 %v3577, %v4181
          %v4188 = vmul.f32 %v3550, %v4180
          %v4189 = vmul.f32 %v3579, %v4181
          %v4190 = vmul.f32 %v3553, %v4180
          %v4191 = vmul.f32 %v3582, %v4181
          %v4192 = vmul.f32 %v3555, %v4180
          %v4193 = vmul.f32 %v3584, %v4181
          %v4194 = vmul.f32 %v3558, %v4180
          %v4195 = vmul.f32 %v3587, %v4181
          %v4196 = vmul.f32 %v3560, %v4180
          %v4197 = vmul.f32 %v3589, %v4181
          %4198 = vset.pattern.permute.xlu0 4
          %4199 = vperm.xlu0 %4198, %v3592
          %v4200 = vpop.permute.xlu0 %4199
          %4202 = vset.pattern.permute.xlu0 4
          %4203 = vperm.xlu0 %4202, %v3593
          %v4204 = vpop.permute.xlu0 %4203
          %4206 = vset.pattern.permute.xlu0 4
          %4207 = vperm.xlu0 %4206, %v3594
          %v4208 = vpop.permute.xlu0 %4207
          %4210 = vset.pattern.permute.xlu0 4
          %4211 = vperm.xlu0 %4210, %v3595
          %v4212 = vpop.permute.xlu0 %4211
          %4214 = vset.pattern.permute.xlu0 4
          %4215 = vperm.xlu0 %4214, %v3596
          %v4216 = vpop.permute.xlu0 %4215
          %4218 = vset.pattern.permute.xlu0 4
          %4219 = vperm.xlu0 %4218, %v3597
          %v4220 = vpop.permute.xlu0 %4219
          %4222 = vset.pattern.permute.xlu0 4
          %4223 = vperm.xlu0 %4222, %v3598
          %v4224 = vpop.permute.xlu0 %4223
          %4226 = vset.pattern.permute.xlu0 4
          %4227 = vperm.xlu0 %4226, %v3599
          %v4228 = vpop.permute.xlu0 %4227
          %v4230 = vmul.f32 %v4182, %v4200
          %v4231 = vmul.f32 %v4183, %v4200
          %v4232 = vmul.f32 %v4184, %v4204
          %v4233 = vmul.f32 %v4185, %v4204
          %v4234 = vmul.f32 %v4186, %v4208
          %v4235 = vmul.f32 %v4187, %v4208
          %v4236 = vmul.f32 %v4188, %v4212
          %v4237 = vmul.f32 %v4189, %v4212
          %v4238 = vmul.f32 %v4190, %v4216
          %v4239 = vmul.f32 %v4191, %v4216
          %v4240 = vmul.f32 %v4192, %v4220
          %v4241 = vmul.f32 %v4193, %v4220
          %v4242 = vmul.f32 %v4194, %v4224
          %v4243 = vmul.f32 %v4195, %v4224
          %v4244 = vmul.f32 %v4196, %v4228
          %v4245 = vmul.f32 %v4197, %v4228
          %4246 = vrot.lane.b32.xlu0 %v3543, 127
          %v4247 = vpop.permute.xlu0 %4246
          %4248 = vrot.lane.b32.xlu0 %v3572, 127
          %v4249 = vpop.permute.xlu0 %4248
          %4250 = vrot.lane.b32.xlu0 %v3545, 127
          %v4251 = vpop.permute.xlu0 %4250
          %4252 = vrot.lane.b32.xlu0 %v3574, 127
          %v4253 = vpop.permute.xlu0 %4252
          %4254 = vrot.lane.b32.xlu0 %v3548, 127
          %v4255 = vpop.permute.xlu0 %4254
          %4256 = vrot.lane.b32.xlu0 %v3577, 127
          %v4257 = vpop.permute.xlu0 %4256
          %4258 = vrot.lane.b32.xlu0 %v3550, 127
          %v4259 = vpop.permute.xlu0 %4258
          %4260 = vrot.lane.b32.xlu0 %v3579, 127
          %v4261 = vpop.permute.xlu0 %4260
          %4262 = vrot.lane.b32.xlu0 %v3553, 127
          %v4263 = vpop.permute.xlu0 %4262
          %4264 = vrot.lane.b32.xlu0 %v3582, 127
          %v4265 = vpop.permute.xlu0 %4264
          %4266 = vrot.lane.b32.xlu0 %v3555, 127
          %v4267 = vpop.permute.xlu0 %4266
          %4268 = vrot.lane.b32.xlu0 %v3584, 127
          %v4269 = vpop.permute.xlu0 %4268
          %4270 = vrot.lane.b32.xlu0 %v3558, 127
          %v4271 = vpop.permute.xlu0 %4270
          %4272 = vrot.lane.b32.xlu0 %v3587, 127
          %v4273 = vpop.permute.xlu0 %4272
          %4274 = vrot.lane.b32.xlu0 %v3560, 127
          %v4275 = vpop.permute.xlu0 %4274
          %4276 = vrot.lane.b32.xlu0 %v3589, 127
          %v4277 = vpop.permute.xlu0 %4276
          %vm4278 = vcmask 1039360
          %v4279 = vsel %vm4278, %v4247, %v4249
          %v4280 = vsel %vm4278, %v4251, %v4253
          %v4281 = vsel %vm4278, %v4255, %v4257
          %v4282 = vsel %vm4278, %v4259, %v4261
          %v4283 = vsel %vm4278, %v4263, %v4265
          %v4284 = vsel %vm4278, %v4267, %v4269
          %v4285 = vsel %vm4278, %v4271, %v4273
          %v4286 = vsel %vm4278, %v4275, %v4277
          %v4311 = vsel %vm4278, %v4249, %v4247
          %v4312 = vsel %vm4278, %v4253, %v4251
          %v4313 = vsel %vm4278, %v4257, %v4255
          %v4314 = vsel %vm4278, %v4261, %v4259
          %v4315 = vsel %vm4278, %v4265, %v4263
          %v4316 = vsel %vm4278, %v4269, %v4267
          %v4317 = vsel %vm4278, %v4273, %v4271
          %v4318 = vsel %vm4278, %v4277, %v4275
          %v4319 = vperm.slane %v353, 5
          %v4320 = vperm.slane %v354, 5
          %v4321 = vmul.f32 %v4279, %v4319
          %v4322 = vmul.f32 %v4311, %v4320
          %v4323 = vmul.f32 %v4280, %v4319
          %v4324 = vmul.f32 %v4312, %v4320
          %v4325 = vmul.f32 %v4281, %v4319
          %v4326 = vmul.f32 %v4313, %v4320
          %v4327 = vmul.f32 %v4282, %v4319
          %v4328 = vmul.f32 %v4314, %v4320
          %v4329 = vmul.f32 %v4283, %v4319
          %v4330 = vmul.f32 %v4315, %v4320
          %v4331 = vmul.f32 %v4284, %v4319
          %v4332 = vmul.f32 %v4316, %v4320
          %v4333 = vmul.f32 %v4285, %v4319
          %v4334 = vmul.f32 %v4317, %v4320
          %v4335 = vmul.f32 %v4286, %v4319
          %v4336 = vmul.f32 %v4318, %v4320
          %4337 = vset.pattern.permute.xlu0 5
          %4338 = vperm.xlu0 %4337, %v3592
          %v4339 = vpop.permute.xlu0 %4338
          %4341 = vset.pattern.permute.xlu0 5
          %4342 = vperm.xlu0 %4341, %v3593
          %v4343 = vpop.permute.xlu0 %4342
          %4345 = vset.pattern.permute.xlu0 5
          %4346 = vperm.xlu0 %4345, %v3594
          %v4347 = vpop.permute.xlu0 %4346
          %4349 = vset.pattern.permute.xlu0 5
          %4350 = vperm.xlu0 %4349, %v3595
          %v4351 = vpop.permute.xlu0 %4350
          %4353 = vset.pattern.permute.xlu0 5
          %4354 = vperm.xlu0 %4353, %v3596
          %v4355 = vpop.permute.xlu0 %4354
          %4357 = vset.pattern.permute.xlu0 5
          %4358 = vperm.xlu0 %4357, %v3597
          %v4359 = vpop.permute.xlu0 %4358
          %4361 = vset.pattern.permute.xlu0 5
          %4362 = vperm.xlu0 %4361, %v3598
          %v4363 = vpop.permute.xlu0 %4362
          %4365 = vset.pattern.permute.xlu0 5
          %4366 = vperm.xlu0 %4365, %v3599
          %v4367 = vpop.permute.xlu0 %4366
          %v4369 = vmul.f32 %v4321, %v4339
          %v4370 = vmul.f32 %v4322, %v4339
          %v4371 = vmul.f32 %v4323, %v4343
          %v4372 = vmul.f32 %v4324, %v4343
          %v4373 = vmul.f32 %v4325, %v4347
          %v4374 = vmul.f32 %v4326, %v4347
          %v4375 = vmul.f32 %v4327, %v4351
          %v4376 = vmul.f32 %v4328, %v4351
          %v4377 = vmul.f32 %v4329, %v4355
          %v4378 = vmul.f32 %v4330, %v4355
          %v4379 = vmul.f32 %v4331, %v4359
          %v4380 = vmul.f32 %v4332, %v4359
          %v4381 = vmul.f32 %v4333, %v4363
          %v4382 = vmul.f32 %v4334, %v4363
          %v4383 = vmul.f32 %v4335, %v4367
          %v4384 = vmul.f32 %v4336, %v4367
          %4385 = vrot.lane.b32.xlu0 %v3543, 113
          %v4386 = vpop.permute.xlu0 %4385
          %4387 = vrot.lane.b32.xlu0 %v3572, 113
          %v4388 = vpop.permute.xlu0 %4387
          %4389 = vrot.lane.b32.xlu0 %v3545, 113
          %v4390 = vpop.permute.xlu0 %4389
          %4391 = vrot.lane.b32.xlu0 %v3574, 113
          %v4392 = vpop.permute.xlu0 %4391
          %4393 = vrot.lane.b32.xlu0 %v3548, 113
          %v4394 = vpop.permute.xlu0 %4393
          %4395 = vrot.lane.b32.xlu0 %v3577, 113
          %v4396 = vpop.permute.xlu0 %4395
          %4397 = vrot.lane.b32.xlu0 %v3550, 113
          %v4398 = vpop.permute.xlu0 %4397
          %4399 = vrot.lane.b32.xlu0 %v3579, 113
          %v4400 = vpop.permute.xlu0 %4399
          %4401 = vrot.lane.b32.xlu0 %v3553, 113
          %v4402 = vpop.permute.xlu0 %4401
          %4403 = vrot.lane.b32.xlu0 %v3582, 113
          %v4404 = vpop.permute.xlu0 %4403
          %4405 = vrot.lane.b32.xlu0 %v3555, 113
          %v4406 = vpop.permute.xlu0 %4405
          %4407 = vrot.lane.b32.xlu0 %v3584, 113
          %v4408 = vpop.permute.xlu0 %4407
          %4409 = vrot.lane.b32.xlu0 %v3558, 113
          %v4410 = vpop.permute.xlu0 %4409
          %4411 = vrot.lane.b32.xlu0 %v3587, 113
          %v4412 = vpop.permute.xlu0 %4411
          %4413 = vrot.lane.b32.xlu0 %v3560, 113
          %v4414 = vpop.permute.xlu0 %4413
          %4415 = vrot.lane.b32.xlu0 %v3589, 113
          %v4416 = vpop.permute.xlu0 %4415
          %vm4417 = vcmask 924672
          %v4418 = vsel %vm4417, %v4386, %v4388
          %v4419 = vsel %vm4417, %v4390, %v4392
          %v4420 = vsel %vm4417, %v4394, %v4396
          %v4421 = vsel %vm4417, %v4398, %v4400
          %v4422 = vsel %vm4417, %v4402, %v4404
          %v4423 = vsel %vm4417, %v4406, %v4408
          %v4424 = vsel %vm4417, %v4410, %v4412
          %v4425 = vsel %vm4417, %v4414, %v4416
          %v4450 = vsel %vm4417, %v4388, %v4386
          %v4451 = vsel %vm4417, %v4392, %v4390
          %v4452 = vsel %vm4417, %v4396, %v4394
          %v4453 = vsel %vm4417, %v4400, %v4398
          %v4454 = vsel %vm4417, %v4404, %v4402
          %v4455 = vsel %vm4417, %v4408, %v4406
          %v4456 = vsel %vm4417, %v4412, %v4410
          %v4457 = vsel %vm4417, %v4416, %v4414
          %v4458 = vperm.slane %v353, 6
          %v4459 = vperm.slane %v354, 6
          %v4460 = vmul.f32 %v4418, %v4458
          %v4461 = vmul.f32 %v4450, %v4459
          %v4462 = vmul.f32 %v4419, %v4458
          %v4463 = vmul.f32 %v4451, %v4459
          %v4464 = vmul.f32 %v4420, %v4458
          %v4465 = vmul.f32 %v4452, %v4459
          %v4466 = vmul.f32 %v4421, %v4458
          %v4467 = vmul.f32 %v4453, %v4459
          %v4468 = vmul.f32 %v4422, %v4458
          %v4469 = vmul.f32 %v4454, %v4459
          %v4470 = vmul.f32 %v4423, %v4458
          %v4471 = vmul.f32 %v4455, %v4459
          %v4472 = vmul.f32 %v4424, %v4458
          %v4473 = vmul.f32 %v4456, %v4459
          %v4474 = vmul.f32 %v4425, %v4458
          %v4475 = vmul.f32 %v4457, %v4459
          %4476 = vset.pattern.permute.xlu0 6
          %4477 = vperm.xlu0 %4476, %v3592
          %v4478 = vpop.permute.xlu0 %4477
          %4480 = vset.pattern.permute.xlu0 6
          %4481 = vperm.xlu0 %4480, %v3593
          %v4482 = vpop.permute.xlu0 %4481
          %4484 = vset.pattern.permute.xlu0 6
          %4485 = vperm.xlu0 %4484, %v3594
          %v4486 = vpop.permute.xlu0 %4485
          %4488 = vset.pattern.permute.xlu0 6
          %4489 = vperm.xlu0 %4488, %v3595
          %v4490 = vpop.permute.xlu0 %4489
          %4492 = vset.pattern.permute.xlu0 6
          %4493 = vperm.xlu0 %4492, %v3596
          %v4494 = vpop.permute.xlu0 %4493
          %4496 = vset.pattern.permute.xlu0 6
          %4497 = vperm.xlu0 %4496, %v3597
          %v4498 = vpop.permute.xlu0 %4497
          %4500 = vset.pattern.permute.xlu0 6
          %4501 = vperm.xlu0 %4500, %v3598
          %v4502 = vpop.permute.xlu0 %4501
          %4504 = vset.pattern.permute.xlu0 6
          %4505 = vperm.xlu0 %4504, %v3599
          %v4506 = vpop.permute.xlu0 %4505
          %v4508 = vmul.f32 %v4460, %v4478
          %v4509 = vmul.f32 %v4461, %v4478
          %v4510 = vmul.f32 %v4462, %v4482
          %v4511 = vmul.f32 %v4463, %v4482
          %v4512 = vmul.f32 %v4464, %v4486
          %v4513 = vmul.f32 %v4465, %v4486
          %v4514 = vmul.f32 %v4466, %v4490
          %v4515 = vmul.f32 %v4467, %v4490
          %v4516 = vmul.f32 %v4468, %v4494
          %v4517 = vmul.f32 %v4469, %v4494
          %v4518 = vmul.f32 %v4470, %v4498
          %v4519 = vmul.f32 %v4471, %v4498
          %v4520 = vmul.f32 %v4472, %v4502
          %v4521 = vmul.f32 %v4473, %v4502
          %v4522 = vmul.f32 %v4474, %v4506
          %v4523 = vmul.f32 %v4475, %v4506
          %4524 = vrot.lane.b32.xlu0 %v3543, 112
          %v4525 = vpop.permute.xlu0 %4524
          %4526 = vrot.lane.b32.xlu0 %v3572, 112
          %v4527 = vpop.permute.xlu0 %4526
          %4528 = vrot.lane.b32.xlu0 %v3545, 112
          %v4529 = vpop.permute.xlu0 %4528
          %4530 = vrot.lane.b32.xlu0 %v3574, 112
          %v4531 = vpop.permute.xlu0 %4530
          %4532 = vrot.lane.b32.xlu0 %v3548, 112
          %v4533 = vpop.permute.xlu0 %4532
          %4534 = vrot.lane.b32.xlu0 %v3577, 112
          %v4535 = vpop.permute.xlu0 %4534
          %4536 = vrot.lane.b32.xlu0 %v3550, 112
          %v4537 = vpop.permute.xlu0 %4536
          %4538 = vrot.lane.b32.xlu0 %v3579, 112
          %v4539 = vpop.permute.xlu0 %4538
          %4540 = vrot.lane.b32.xlu0 %v3553, 112
          %v4541 = vpop.permute.xlu0 %4540
          %4542 = vrot.lane.b32.xlu0 %v3582, 112
          %v4543 = vpop.permute.xlu0 %4542
          %4544 = vrot.lane.b32.xlu0 %v3555, 112
          %v4545 = vpop.permute.xlu0 %4544
          %4546 = vrot.lane.b32.xlu0 %v3584, 112
          %v4547 = vpop.permute.xlu0 %4546
          %4548 = vrot.lane.b32.xlu0 %v3558, 112
          %v4549 = vpop.permute.xlu0 %4548
          %4550 = vrot.lane.b32.xlu0 %v3587, 112
          %v4551 = vpop.permute.xlu0 %4550
          %4552 = vrot.lane.b32.xlu0 %v3560, 112
          %v4553 = vpop.permute.xlu0 %4552
          %4554 = vrot.lane.b32.xlu0 %v3589, 112
          %v4555 = vpop.permute.xlu0 %4554
          %vm4556 = vcmask 916480
          %v4557 = vsel %vm4556, %v4525, %v4527
          %v4558 = vsel %vm4556, %v4529, %v4531
          %v4559 = vsel %vm4556, %v4533, %v4535
          %v4560 = vsel %vm4556, %v4537, %v4539
          %v4561 = vsel %vm4556, %v4541, %v4543
          %v4562 = vsel %vm4556, %v4545, %v4547
          %v4563 = vsel %vm4556, %v4549, %v4551
          %v4564 = vsel %vm4556, %v4553, %v4555
          %v4589 = vsel %vm4556, %v4527, %v4525
          %v4590 = vsel %vm4556, %v4531, %v4529
          %v4591 = vsel %vm4556, %v4535, %v4533
          %v4592 = vsel %vm4556, %v4539, %v4537
          %v4593 = vsel %vm4556, %v4543, %v4541
          %v4594 = vsel %vm4556, %v4547, %v4545
          %v4595 = vsel %vm4556, %v4551, %v4549
          %v4596 = vsel %vm4556, %v4555, %v4553
          %v4597 = vperm.slane %v353, 7
          %v4598 = vperm.slane %v354, 7
          %v4599 = vmul.f32 %v4557, %v4597
          %v4600 = vmul.f32 %v4589, %v4598
          %v4601 = vmul.f32 %v4558, %v4597
          %v4602 = vmul.f32 %v4590, %v4598
          %v4603 = vmul.f32 %v4559, %v4597
          %v4604 = vmul.f32 %v4591, %v4598
          %v4605 = vmul.f32 %v4560, %v4597
          %v4606 = vmul.f32 %v4592, %v4598
          %v4607 = vmul.f32 %v4561, %v4597
          %v4608 = vmul.f32 %v4593, %v4598
          %v4609 = vmul.f32 %v4562, %v4597
          %v4610 = vmul.f32 %v4594, %v4598
          %v4611 = vmul.f32 %v4563, %v4597
          %v4612 = vmul.f32 %v4595, %v4598
          %v4613 = vmul.f32 %v4564, %v4597
          %v4614 = vmul.f32 %v4596, %v4598
          %4615 = vset.pattern.permute.xlu0 7
          %4616 = vperm.xlu0 %4615, %v3592
          %v4617 = vpop.permute.xlu0 %4616
          %4619 = vset.pattern.permute.xlu0 7
          %4620 = vperm.xlu0 %4619, %v3593
          %v4621 = vpop.permute.xlu0 %4620
          %4623 = vset.pattern.permute.xlu0 7
          %4624 = vperm.xlu0 %4623, %v3594
          %v4625 = vpop.permute.xlu0 %4624
          %4627 = vset.pattern.permute.xlu0 7
          %4628 = vperm.xlu0 %4627, %v3595
          %v4629 = vpop.permute.xlu0 %4628
          %4631 = vset.pattern.permute.xlu0 7
          %4632 = vperm.xlu0 %4631, %v3596
          %v4633 = vpop.permute.xlu0 %4632
          %4635 = vset.pattern.permute.xlu0 7
          %4636 = vperm.xlu0 %4635, %v3597
          %v4637 = vpop.permute.xlu0 %4636
          %4639 = vset.pattern.permute.xlu0 7
          %4640 = vperm.xlu0 %4639, %v3598
          %v4641 = vpop.permute.xlu0 %4640
          %4643 = vset.pattern.permute.xlu0 7
          %4644 = vperm.xlu0 %4643, %v3599
          %v4645 = vpop.permute.xlu0 %4644
          %v4647 = vmul.f32 %v4599, %v4617
          %v4648 = vmul.f32 %v4600, %v4617
          %v4649 = vmul.f32 %v4601, %v4621
          %v4650 = vmul.f32 %v4602, %v4621
          %v4651 = vmul.f32 %v4603, %v4625
          %v4652 = vmul.f32 %v4604, %v4625
          %v4653 = vmul.f32 %v4605, %v4629
          %v4654 = vmul.f32 %v4606, %v4629
          %v4655 = vmul.f32 %v4607, %v4633
          %v4656 = vmul.f32 %v4608, %v4633
          %v4657 = vmul.f32 %v4609, %v4637
          %v4658 = vmul.f32 %v4610, %v4637
          %v4659 = vmul.f32 %v4611, %v4641
          %v4660 = vmul.f32 %v4612, %v4641
          %v4661 = vmul.f32 %v4613, %v4645
          %v4662 = vmul.f32 %v4614, %v4645
          %4663 = vrot.lane.b32.xlu0 %v3543, 111
          %v4664 = vpop.permute.xlu0 %4663
          %4665 = vrot.lane.b32.xlu0 %v3572, 111
          %v4666 = vpop.permute.xlu0 %4665
          %4667 = vrot.lane.b32.xlu0 %v3545, 111
          %v4668 = vpop.permute.xlu0 %4667
          %4669 = vrot.lane.b32.xlu0 %v3574, 111
          %v4670 = vpop.permute.xlu0 %4669
          %4671 = vrot.lane.b32.xlu0 %v3548, 111
          %v4672 = vpop.permute.xlu0 %4671
          %4673 = vrot.lane.b32.xlu0 %v3577, 111
          %v4674 = vpop.permute.xlu0 %4673
          %4675 = vrot.lane.b32.xlu0 %v3550, 111
          %v4676 = vpop.permute.xlu0 %4675
          %4677 = vrot.lane.b32.xlu0 %v3579, 111
          %v4678 = vpop.permute.xlu0 %4677
          %4679 = vrot.lane.b32.xlu0 %v3553, 111
          %v4680 = vpop.permute.xlu0 %4679
          %4681 = vrot.lane.b32.xlu0 %v3582, 111
          %v4682 = vpop.permute.xlu0 %4681
          %4683 = vrot.lane.b32.xlu0 %v3555, 111
          %v4684 = vpop.permute.xlu0 %4683
          %4685 = vrot.lane.b32.xlu0 %v3584, 111
          %v4686 = vpop.permute.xlu0 %4685
          %4687 = vrot.lane.b32.xlu0 %v3558, 111
          %v4688 = vpop.permute.xlu0 %4687
          %4689 = vrot.lane.b32.xlu0 %v3587, 111
          %v4690 = vpop.permute.xlu0 %4689
          %4691 = vrot.lane.b32.xlu0 %v3560, 111
          %v4692 = vpop.permute.xlu0 %4691
          %4693 = vrot.lane.b32.xlu0 %v3589, 111
          %v4694 = vpop.permute.xlu0 %4693
          %vm4695 = vcmask 908288
          %v4696 = vsel %vm4695, %v4664, %v4666
          %v4697 = vsel %vm4695, %v4668, %v4670
          %v4698 = vsel %vm4695, %v4672, %v4674
          %v4699 = vsel %vm4695, %v4676, %v4678
          %v4700 = vsel %vm4695, %v4680, %v4682
          %v4701 = vsel %vm4695, %v4684, %v4686
          %v4702 = vsel %vm4695, %v4688, %v4690
          %v4703 = vsel %vm4695, %v4692, %v4694
          %v4728 = vsel %vm4695, %v4666, %v4664
          %v4729 = vsel %vm4695, %v4670, %v4668
          %v4730 = vsel %vm4695, %v4674, %v4672
          %v4731 = vsel %vm4695, %v4678, %v4676
          %v4732 = vsel %vm4695, %v4682, %v4680
          %v4733 = vsel %vm4695, %v4686, %v4684
          %v4734 = vsel %vm4695, %v4690, %v4688
          %v4735 = vsel %vm4695, %v4694, %v4692
          %v4736 = vperm.slane %v355, 0
          %v4737 = vperm.slane %v356, 0
          %v4738 = vmul.f32 %v4696, %v4736
          %v4739 = vmul.f32 %v4728, %v4737
          %v4740 = vmul.f32 %v4697, %v4736
          %v4741 = vmul.f32 %v4729, %v4737
          %v4742 = vmul.f32 %v4698, %v4736
          %v4743 = vmul.f32 %v4730, %v4737
          %v4744 = vmul.f32 %v4699, %v4736
          %v4745 = vmul.f32 %v4731, %v4737
          %v4746 = vmul.f32 %v4700, %v4736
          %v4747 = vmul.f32 %v4732, %v4737
          %v4748 = vmul.f32 %v4701, %v4736
          %v4749 = vmul.f32 %v4733, %v4737
          %v4750 = vmul.f32 %v4702, %v4736
          %v4751 = vmul.f32 %v4734, %v4737
          %v4752 = vmul.f32 %v4703, %v4736
          %v4753 = vmul.f32 %v4735, %v4737
          %4754 = vset.pattern.permute.xlu0 8
          %4755 = vperm.xlu0 %4754, %v3592
          %v4756 = vpop.permute.xlu0 %4755
          %4758 = vset.pattern.permute.xlu0 8
          %4759 = vperm.xlu0 %4758, %v3593
          %v4760 = vpop.permute.xlu0 %4759
          %4762 = vset.pattern.permute.xlu0 8
          %4763 = vperm.xlu0 %4762, %v3594
          %v4764 = vpop.permute.xlu0 %4763
          %4766 = vset.pattern.permute.xlu0 8
          %4767 = vperm.xlu0 %4766, %v3595
          %v4768 = vpop.permute.xlu0 %4767
          %4770 = vset.pattern.permute.xlu0 8
          %4771 = vperm.xlu0 %4770, %v3596
          %v4772 = vpop.permute.xlu0 %4771
          %4774 = vset.pattern.permute.xlu0 8
          %4775 = vperm.xlu0 %4774, %v3597
          %v4776 = vpop.permute.xlu0 %4775
          %4778 = vset.pattern.permute.xlu0 8
          %4779 = vperm.xlu0 %4778, %v3598
          %v4780 = vpop.permute.xlu0 %4779
          %4782 = vset.pattern.permute.xlu0 8
          %4783 = vperm.xlu0 %4782, %v3599
          %v4784 = vpop.permute.xlu0 %4783
          %v4786 = vmul.f32 %v4738, %v4756
          %v4787 = vmul.f32 %v4739, %v4756
          %v4788 = vmul.f32 %v4740, %v4760
          %v4789 = vmul.f32 %v4741, %v4760
          %v4790 = vmul.f32 %v4742, %v4764
          %v4791 = vmul.f32 %v4743, %v4764
          %v4792 = vmul.f32 %v4744, %v4768
          %v4793 = vmul.f32 %v4745, %v4768
          %v4794 = vmul.f32 %v4746, %v4772
          %v4795 = vmul.f32 %v4747, %v4772
          %v4796 = vmul.f32 %v4748, %v4776
          %v4797 = vmul.f32 %v4749, %v4776
          %v4798 = vmul.f32 %v4750, %v4780
          %v4799 = vmul.f32 %v4751, %v4780
          %v4800 = vmul.f32 %v4752, %v4784
          %v4801 = vmul.f32 %v4753, %v4784
          %v4802 = vadd.f32 %v3747, %v3886
          %v4803 = vadd.f32 %v3748, %v3887
          %v4804 = vadd.f32 %v3749, %v3888
          %v4805 = vadd.f32 %v3750, %v3889
          %v4806 = vadd.f32 %v3751, %v3890
          %v4807 = vadd.f32 %v3752, %v3891
          %v4808 = vadd.f32 %v3753, %v3892
          %v4809 = vadd.f32 %v3754, %v3893
          %v4810 = vadd.f32 %v3755, %v3894
          %v4811 = vadd.f32 %v3756, %v3895
          %v4812 = vadd.f32 %v3757, %v3896
          %v4813 = vadd.f32 %v3758, %v3897
          %v4814 = vadd.f32 %v3759, %v3898
          %v4815 = vadd.f32 %v3760, %v3899
          %v4816 = vadd.f32 %v3761, %v3900
          %v4817 = vadd.f32 %v3762, %v3901
          %v4818 = vadd.f32 %v4025, %v4164
          %v4819 = vadd.f32 %v4026, %v4165
          %v4820 = vadd.f32 %v4027, %v4166
          %v4821 = vadd.f32 %v4028, %v4167
          %v4822 = vadd.f32 %v4029, %v4168
          %v4823 = vadd.f32 %v4030, %v4169
          %v4824 = vadd.f32 %v4031, %v4170
          %v4825 = vadd.f32 %v4032, %v4171
          %v4826 = vadd.f32 %v4033, %v4172
          %v4827 = vadd.f32 %v4034, %v4173
          %v4828 = vadd.f32 %v4035, %v4174
          %v4829 = vadd.f32 %v4036, %v4175
          %v4830 = vadd.f32 %v4037, %v4176
          %v4831 = vadd.f32 %v4038, %v4177
          %v4832 = vadd.f32 %v4039, %v4178
          %v4833 = vadd.f32 %v4040, %v4179
          %v4834 = vadd.f32 %v4230, %v4369
          %v4835 = vadd.f32 %v4231, %v4370
          %v4836 = vadd.f32 %v4232, %v4371
          %v4837 = vadd.f32 %v4233, %v4372
          %v4838 = vadd.f32 %v4234, %v4373
          %v4839 = vadd.f32 %v4235, %v4374
          %v4840 = vadd.f32 %v4236, %v4375
          %v4841 = vadd.f32 %v4237, %v4376
          %v4842 = vadd.f32 %v4238, %v4377
          %v4843 = vadd.f32 %v4239, %v4378
          %v4844 = vadd.f32 %v4240, %v4379
          %v4845 = vadd.f32 %v4241, %v4380
          %v4846 = vadd.f32 %v4242, %v4381
          %v4847 = vadd.f32 %v4243, %v4382
          %v4848 = vadd.f32 %v4244, %v4383
          %v4849 = vadd.f32 %v4245, %v4384
          %v4850 = vadd.f32 %v4508, %v4647
          %v4851 = vadd.f32 %v4509, %v4648
          %v4852 = vadd.f32 %v4510, %v4649
          %v4853 = vadd.f32 %v4511, %v4650
          %v4854 = vadd.f32 %v4512, %v4651
          %v4855 = vadd.f32 %v4513, %v4652
          %v4856 = vadd.f32 %v4514, %v4653
          %v4857 = vadd.f32 %v4515, %v4654
          %v4858 = vadd.f32 %v4516, %v4655
          %v4859 = vadd.f32 %v4517, %v4656
          %v4860 = vadd.f32 %v4518, %v4657
          %v4861 = vadd.f32 %v4519, %v4658
          %v4862 = vadd.f32 %v4520, %v4659
          %v4863 = vadd.f32 %v4521, %v4660
          %v4864 = vadd.f32 %v4522, %v4661
          %v4865 = vadd.f32 %v4523, %v4662
          %v4866 = vadd.f32 %v4802, %v4818
          %v4867 = vadd.f32 %v4803, %v4819
          %v4868 = vadd.f32 %v4804, %v4820
          %v4869 = vadd.f32 %v4805, %v4821
          %v4870 = vadd.f32 %v4806, %v4822
          %v4871 = vadd.f32 %v4807, %v4823
          %v4872 = vadd.f32 %v4808, %v4824
          %v4873 = vadd.f32 %v4809, %v4825
          %v4874 = vadd.f32 %v4810, %v4826
          %v4875 = vadd.f32 %v4811, %v4827
          %v4876 = vadd.f32 %v4812, %v4828
          %v4877 = vadd.f32 %v4813, %v4829
          %v4878 = vadd.f32 %v4814, %v4830
          %v4879 = vadd.f32 %v4815, %v4831
          %v4880 = vadd.f32 %v4816, %v4832
          %v4881 = vadd.f32 %v4817, %v4833
          %v4882 = vadd.f32 %v4834, %v4850
          %v4883 = vadd.f32 %v4835, %v4851
          %v4884 = vadd.f32 %v4836, %v4852
          %v4885 = vadd.f32 %v4837, %v4853
          %v4886 = vadd.f32 %v4838, %v4854
          %v4887 = vadd.f32 %v4839, %v4855
          %v4888 = vadd.f32 %v4840, %v4856
          %v4889 = vadd.f32 %v4841, %v4857
          %v4890 = vadd.f32 %v4842, %v4858
          %v4891 = vadd.f32 %v4843, %v4859
          %v4892 = vadd.f32 %v4844, %v4860
          %v4893 = vadd.f32 %v4845, %v4861
          %v4894 = vadd.f32 %v4846, %v4862
          %v4895 = vadd.f32 %v4847, %v4863
          %v4896 = vadd.f32 %v4848, %v4864
          %v4897 = vadd.f32 %v4849, %v4865
          %v4898 = vadd.f32 %v4866, %v4882
          %v4899 = vadd.f32 %v4867, %v4883
          %v4900 = vadd.f32 %v4868, %v4884
          %v4901 = vadd.f32 %v4869, %v4885
          %v4902 = vadd.f32 %v4870, %v4886
          %v4903 = vadd.f32 %v4871, %v4887
          %v4904 = vadd.f32 %v4872, %v4888
          %v4905 = vadd.f32 %v4873, %v4889
          %v4906 = vadd.f32 %v4874, %v4890
          %v4907 = vadd.f32 %v4875, %v4891
          %v4908 = vadd.f32 %v4876, %v4892
          %v4909 = vadd.f32 %v4877, %v4893
          %v4910 = vadd.f32 %v4878, %v4894
          %v4911 = vadd.f32 %v4879, %v4895
          %v4912 = vadd.f32 %v4880, %v4896
          %v4913 = vadd.f32 %v4881, %v4897
          %v4914 = vadd.f32 %v4898, %v4786
          %v4915 = vadd.f32 %v4899, %v4787
          %v4916 = vadd.f32 %v4900, %v4788
          %v4917 = vadd.f32 %v4901, %v4789
          %v4918 = vadd.f32 %v4902, %v4790
          %v4919 = vadd.f32 %v4903, %v4791
          %v4920 = vadd.f32 %v4904, %v4792
          %v4921 = vadd.f32 %v4905, %v4793
          %v4922 = vadd.f32 %v4906, %v4794
          %v4923 = vadd.f32 %v4907, %v4795
          %v4924 = vadd.f32 %v4908, %v4796
          %v4925 = vadd.f32 %v4909, %v4797
          %v4926 = vadd.f32 %v4910, %v4798
          %v4927 = vadd.f32 %v4911, %v4799
          %v4928 = vadd.f32 %v4912, %v4800
          %v4929 = vadd.f32 %v4913, %v4801
          %s4930 = scalar_lea.vmem %s4, 32
          %v4931 = vld [vmem:[%s4930] sm:$0xf]
          %v4932 = vld [vmem:[%s4930 + $0x4] sm:$0xf]
          %v4933 = vld [vmem:[%s4930 + $0x8] sm:$0xf]
          %v4934 = vld [vmem:[%s4930 + $0xc] sm:$0xf]
          %v4935 = vld [vmem:[%s4930 + $0x10] sm:$0xf]
          %v4936 = vld [vmem:[%s4930 + $0x14] sm:$0xf]
          %v4937 = vld [vmem:[%s4930 + $0x18] sm:$0xf]
          %v4938 = vld [vmem:[%s4930 + $0x1c] sm:$0xf]
          %v4939 = vunpack.c.l.bf16 %v4931
          %v4940 = vunpack.c.l.bf16 %v4932
          %v4941 = vunpack.c.l.bf16 %v4933
          %v4942 = vunpack.c.l.bf16 %v4934
          %v4943 = vunpack.c.l.bf16 %v4935
          %v4944 = vunpack.c.l.bf16 %v4936
          %v4945 = vunpack.c.l.bf16 %v4937
          %v4946 = vunpack.c.l.bf16 %v4938
          %s4947 = sld [smem:[#allocation2 + %s2728]]
          %v4948 = vstv %s4947
          %v4949 = vmul.f32 %v4939, %v4948
          %v4950 = vmul.f32 %v4940, %v4948
          %v4951 = vmul.f32 %v4941, %v4948
          %v4952 = vmul.f32 %v4942, %v4948
          %v4953 = vmul.f32 %v4943, %v4948
          %v4954 = vmul.f32 %v4944, %v4948
          %v4955 = vmul.f32 %v4945, %v4948
          %v4956 = vmul.f32 %v4946, %v4948
          %v4957 = vpack.c.bf16 %v4950, %v4949
          %v4958 = vpack.c.bf16 %v4952, %v4951
          %v4959 = vpack.c.bf16 %v4954, %v4953
          %v4960 = vpack.c.bf16 %v4956, %v4955
          %v4961 = vld [vmem:[%s319] sm:$0xff]
          %v4962 = vld [vmem:[%s319 + $0x8] sm:$0xff]
          %v4963 = vld [vmem:[%s319 + $0x10] sm:$0xff]
          %v4964 = vld [vmem:[%s319 + $0x18] sm:$0xff]
          %v4965 = vld [vmem:[%s319 + $0x20] sm:$0xff]
          %v4966 = vld [vmem:[%s319 + $0x28] sm:$0xff]
          %v4967 = vld [vmem:[%s319 + $0x30] sm:$0xff]
          %v4968 = vld [vmem:[%s319 + $0x38] sm:$0xff]
          %v4969 = vld [vmem:[%s319 + $0x40] sm:$0xff]
          %v4970 = vld [vmem:[%s319 + $0x48] sm:$0xff]
          %v4971 = vld [vmem:[%s319 + $0x50] sm:$0xff]
          %v4972 = vld [vmem:[%s319 + $0x58] sm:$0xff]
          %v4973 = vld [vmem:[%s319 + $0x60] sm:$0xff]
          %v4974 = vld [vmem:[%s319 + $0x68] sm:$0xff]
          %v4975 = vld [vmem:[%s319 + $0x70] sm:$0xff]
          %v4976 = vld [vmem:[%s319 + $0x78] sm:$0xff]
          %v4977 = vpack.c.bf16 %v4916, %v4914
          %v4978 = vpack.c.bf16 %v4917, %v4915
          %v4979 = vpack.c.bf16 %v4920, %v4918
          %v4980 = vpack.c.bf16 %v4921, %v4919
          %v4981 = vpack.c.bf16 %v4924, %v4922
          %v4982 = vpack.c.bf16 %v4925, %v4923
          %v4983 = vpack.c.bf16 %v4928, %v4926
          %v4984 = vpack.c.bf16 %v4929, %v4927
          %v4986 = vsel %vm2819, %v4957, 0
          %v4989 = vsel %vm2819, %v4958, 0
          %v4992 = vsel %vm2819, %v4959, 0
          %v4995 = vsel %vm2819, %v4960, 0
          %4997 = vmatpush.bf16.msra.mxu0 0
          %4998 = vmatpush.bf16.msra.mxu0 0
          %4999 = vmatpush.bf16.msra.mxu0 0
          %5000 = vmatpush.bf16.msra.mxu0 0
          %5001 = vmatpush.bf16.msra.mxu0 %v4983
          %5002 = vmatpush.bf16.msra.mxu0 %v4981
          %5003 = vmatpush.bf16.msra.mxu0 %v4979
          %5004 = vmatpush.bf16.msra.mxu0 %v4977
          %5005 = vmatmul.bf16.gmra.mxu0 %v4986
          %v5006 = vpop.f32.mrf.mxu0
          %v5007 = vadd.f32 0.0, %v5006
          %v5008 = vpop.f32.mrf.mxu0
          %v5009 = vadd.f32 0.0, %v5008
          %5010 = vmatmul.bf16.gmra.mxu0 %v4989
          %v5011 = vpop.f32.mrf.mxu0
          %v5012 = vadd.f32 0.0, %v5011
          %v5013 = vpop.f32.mrf.mxu0
          %v5014 = vadd.f32 0.0, %v5013
          %5015 = vmatmul.bf16.gmra.mxu0 %v4992
          %v5016 = vpop.f32.mrf.mxu0
          %v5017 = vadd.f32 0.0, %v5016
          %v5018 = vpop.f32.mrf.mxu0
          %v5019 = vadd.f32 0.0, %v5018
          %5020 = vmatmul.bf16.gmra.mxu0 %v4995
          %v5021 = vpop.f32.mrf.mxu0
          %v5022 = vadd.f32 0.0, %v5021
          %v5023 = vpop.f32.mrf.mxu0
          %v5024 = vadd.f32 0.0, %v5023
          %5025 = vdwg.mxu0
          %5026 = vmatpush.bf16.msra.mxu0 0
          %5027 = vmatpush.bf16.msra.mxu0 0
          %5028 = vmatpush.bf16.msra.mxu0 0
          %5029 = vmatpush.bf16.msra.mxu0 0
          %5030 = vmatpush.bf16.msra.mxu0 %v4984
          %5031 = vmatpush.bf16.msra.mxu0 %v4982
          %5032 = vmatpush.bf16.msra.mxu0 %v4980
          %5033 = vmatpush.bf16.msra.mxu0 %v4978
          %5034 = vmatmul.bf16.gmra.mxu0 %v4986
          %v5035 = vpop.f32.mrf.mxu0
          %v5036 = vadd.f32 0.0, %v5035
          %v5037 = vpop.f32.mrf.mxu0
          %v5038 = vadd.f32 0.0, %v5037
          %5039 = vmatmul.bf16.gmra.mxu0 %v4989
          %v5040 = vpop.f32.mrf.mxu0
          %v5041 = vadd.f32 0.0, %v5040
          %v5042 = vpop.f32.mrf.mxu0
          %v5043 = vadd.f32 0.0, %v5042
          %5044 = vmatmul.bf16.gmra.mxu0 %v4992
          %v5045 = vpop.f32.mrf.mxu0
          %v5046 = vadd.f32 0.0, %v5045
          %v5047 = vpop.f32.mrf.mxu0
          %v5048 = vadd.f32 0.0, %v5047
          %5049 = vmatmul.bf16.gmra.mxu0 %v4995
          %v5050 = vpop.f32.mrf.mxu0
          %v5051 = vadd.f32 0.0, %v5050
          %v5052 = vpop.f32.mrf.mxu0
          %v5053 = vadd.f32 0.0, %v5052
          %5054 = vdwg.mxu0
          %v5055 = vadd.f32 %v4961, %v5007
          %v5056 = vadd.f32 %v4962, %v5036
          %v5057 = vadd.f32 %v4963, %v5009
          %v5058 = vadd.f32 %v4964, %v5038
          %v5059 = vadd.f32 %v4965, %v5012
          %v5060 = vadd.f32 %v4966, %v5041
          %v5061 = vadd.f32 %v4967, %v5014
          %v5062 = vadd.f32 %v4968, %v5043
          %v5063 = vadd.f32 %v4969, %v5017
          %v5064 = vadd.f32 %v4970, %v5046
          %v5065 = vadd.f32 %v4971, %v5019
          %v5066 = vadd.f32 %v4972, %v5048
          %v5067 = vadd.f32 %v4973, %v5022
          %v5068 = vadd.f32 %v4974, %v5051
          %v5069 = vadd.f32 %v4975, %v5024
          %v5070 = vadd.f32 %v4976, %v5053
          %5071 = vst [vmem:[%s319] sm:$0xff] %v5055
          %5072 = vst [vmem:[%s319 + $0x8] sm:$0xff] %v5056
          %5073 = vst [vmem:[%s319 + $0x10] sm:$0xff] %v5057
          %5074 = vst [vmem:[%s319 + $0x18] sm:$0xff] %v5058
          %5075 = vst [vmem:[%s319 + $0x20] sm:$0xff] %v5059
          %5076 = vst [vmem:[%s319 + $0x28] sm:$0xff] %v5060
          %5077 = vst [vmem:[%s319 + $0x30] sm:$0xff] %v5061
          %5078 = vst [vmem:[%s319 + $0x38] sm:$0xff] %v5062
          %5079 = vst [vmem:[%s319 + $0x40] sm:$0xff] %v5063
          %5080 = vst [vmem:[%s319 + $0x48] sm:$0xff] %v5064
          %5081 = vst [vmem:[%s319 + $0x50] sm:$0xff] %v5065
          %5082 = vst [vmem:[%s319 + $0x58] sm:$0xff] %v5066
          %5083 = vst [vmem:[%s319 + $0x60] sm:$0xff] %v5067
          %5084 = vst [vmem:[%s319 + $0x68] sm:$0xff] %v5068
          %5085 = vst [vmem:[%s319 + $0x70] sm:$0xff] %v5069
          %5086 = vst [vmem:[%s319 + $0x78] sm:$0xff] %v5070
        $region64: #{attention_bank_forward.1} parent=51 // pred_fallthru
          _
        %s5087 = sadd.s32 %s373, 2
        %s5088 = sld [smem:[#allocation2 + %s5087]]
        %p5089 = scmp.gt.f32.partialorder %s5088, 0.0
        // Predicated region
        $region65: #{attention_bank_forward.1} parent=51 // pred_check
          %p5090 = pneg %p5089
        $region66: #{attention_bank_forward.1} parent=51 // pred_check_branch
          %5092 = sbr.rel (%p5090) target = $region68
        $region67: #{attention_bank_forward.1} parent=51 // pred_region
          %s5093 = scalar_lea.vmem %s1, 192
          %v5094 = vld [vmem:[%s5093] sm:$0xf]
          %v5095 = vld [vmem:[%s5093 + $0x4] sm:$0xf]
          %v5096 = vld [vmem:[%s5093 + $0x8] sm:$0xf]
          %v5097 = vld [vmem:[%s5093 + $0xc] sm:$0xf]
          %v5098 = vld [vmem:[%s5093 + $0x10] sm:$0xf]
          %v5099 = vld [vmem:[%s5093 + $0x14] sm:$0xf]
          %v5100 = vld [vmem:[%s5093 + $0x18] sm:$0xf]
          %v5101 = vld [vmem:[%s5093 + $0x1c] sm:$0xf]
          %v5102 = vld [vmem:[%s5093 + $0x20] sm:$0xf]
          %v5103 = vld [vmem:[%s5093 + $0x24] sm:$0xf]
          %v5104 = vld [vmem:[%s5093 + $0x28] sm:$0xf]
          %v5105 = vld [vmem:[%s5093 + $0x2c] sm:$0xf]
          %v5106 = vld [vmem:[%s5093 + $0x30] sm:$0xf]
          %v5107 = vld [vmem:[%s5093 + $0x34] sm:$0xf]
          %v5108 = vld [vmem:[%s5093 + $0x38] sm:$0xf]
          %v5109 = vld [vmem:[%s5093 + $0x3c] sm:$0xf]
          %v5110 = vld [vmem:[%s5093 + $0x40] sm:$0xf]
          %v5111 = vld [vmem:[%s5093 + $0x44] sm:$0xf]
          %v5112 = vld [vmem:[%s5093 + $0x48] sm:$0xf]
          %v5113 = vld [vmem:[%s5093 + $0x4c] sm:$0xf]
          %v5114 = vld [vmem:[%s5093 + $0x50] sm:$0xf]
          %v5115 = vld [vmem:[%s5093 + $0x54] sm:$0xf]
          %v5116 = vld [vmem:[%s5093 + $0x58] sm:$0xf]
          %v5117 = vld [vmem:[%s5093 + $0x5c] sm:$0xf]
          %v5142 = vunpack.c.l.b16 %v5094
          %v5143 = vunpack.c.l.b16 %v5095
          %v5144 = vunpack.c.l.b16 %v5096
          %v5145 = vunpack.c.l.b16 %v5097
          %v5146 = vunpack.c.l.b16 %v5098
          %v5147 = vunpack.c.l.b16 %v5099
          %v5148 = vunpack.c.l.b16 %v5100
          %v5149 = vunpack.c.l.b16 %v5101
          %v5150 = vunpack.c.l.b16 %v5102
          %v5151 = vunpack.c.l.b16 %v5103
          %v5152 = vunpack.c.l.b16 %v5104
          %v5153 = vunpack.c.l.b16 %v5105
          %v5154 = vunpack.c.l.b16 %v5106
          %v5155 = vunpack.c.l.b16 %v5107
          %v5156 = vunpack.c.l.b16 %v5108
          %v5157 = vunpack.c.l.b16 %v5109
          %v5158 = vunpack.c.l.b16 %v5110
          %v5159 = vunpack.c.l.b16 %v5111
          %v5160 = vunpack.c.l.b16 %v5112
          %v5161 = vunpack.c.l.b16 %v5113
          %v5162 = vunpack.c.l.b16 %v5114
          %v5163 = vunpack.c.l.b16 %v5115
          %v5164 = vunpack.c.l.b16 %v5116
          %v5165 = vunpack.c.l.b16 %v5117
          %v5166 = vpack.c.b16 %v5143, %v5142
          %v5167 = vpack.c.b16 %v5145, %v5144
          %v5168 = vpack.c.b16 %v5147, %v5146
          %v5169 = vpack.c.b16 %v5149, %v5148
          %v5170 = vpack.c.b16 %v5151, %v5150
          %v5171 = vpack.c.b16 %v5153, %v5152
          %v5172 = vpack.c.b16 %v5155, %v5154
          %v5173 = vpack.c.b16 %v5157, %v5156
          %v5174 = vpack.c.b16 %v5159, %v5158
          %v5175 = vpack.c.b16 %v5161, %v5160
          %v5176 = vpack.c.b16 %v5163, %v5162
          %v5177 = vpack.c.b16 %v5165, %v5164
          %vm5178 = vcmask 523264
          %v5180 = vsel %vm5178, %v5166, 0
          %v5183 = vsel %vm5178, %v5167, 0
          %v5186 = vsel %vm5178, %v5168, 0
          %v5189 = vsel %vm5178, %v5169, 0
          %v5192 = vsel %vm5178, %v5170, 0
          %v5195 = vsel %vm5178, %v5171, 0
          %v5198 = vsel %vm5178, %v5172, 0
          %v5201 = vsel %vm5178, %v5173, 0
          %v5204 = vsel %vm5178, %v5174, 0
          %v5207 = vsel %vm5178, %v5175, 0
          %v5210 = vsel %vm5178, %v5176, 0
          %v5213 = vsel %vm5178, %v5177, 0
          %5215 = vmatpush.bf16.msra.mxu0 0
          %5216 = vmatpush.bf16.msra.mxu0 0
          %5217 = vmatpush.bf16.msra.mxu0 0
          %5218 = vmatpush.bf16.msra.mxu0 0
          %5219 = vmatpush.bf16.msra.mxu0 %v343
          %5220 = vmatpush.bf16.msra.mxu0 %v341
          %5221 = vmatpush.bf16.msra.mxu0 %v339
          %5222 = vmatpush.bf16.msra.mxu0 %v337
          %5223 = vmatmul.bf16.gmra.mxu0 %v5180
          %v5224 = vpop.f32.mrf.mxu0
          %v5225 = vadd.f32 0.0, %v5224
          %v5226 = vpop.f32.mrf.mxu0
          %v5227 = vadd.f32 0.0, %v5226
          %5228 = vmatmul.bf16.gmra.mxu0 %v5183
          %v5229 = vpop.f32.mrf.mxu0
          %v5230 = vadd.f32 0.0, %v5229
          %v5231 = vpop.f32.mrf.mxu0
          %v5232 = vadd.f32 0.0, %v5231
          %5233 = vmatmul.bf16.gmra.mxu0 %v5186
          %v5234 = vpop.f32.mrf.mxu0
          %v5235 = vadd.f32 0.0, %v5234
          %v5236 = vpop.f32.mrf.mxu0
          %v5237 = vadd.f32 0.0, %v5236
          %5238 = vmatmul.bf16.gmra.mxu0 %v5189
          %v5239 = vpop.f32.mrf.mxu0
          %v5240 = vadd.f32 0.0, %v5239
          %v5241 = vpop.f32.mrf.mxu0
          %v5242 = vadd.f32 0.0, %v5241
          %5243 = vmatmul.bf16.gmra.mxu0 %v5192
          %v5244 = vpop.f32.mrf.mxu0
          %v5245 = vadd.f32 0.0, %v5244
          %v5246 = vpop.f32.mrf.mxu0
          %v5247 = vadd.f32 0.0, %v5246
          %5248 = vmatmul.bf16.gmra.mxu0 %v5195
          %v5249 = vpop.f32.mrf.mxu0
          %v5250 = vadd.f32 0.0, %v5249
          %v5251 = vpop.f32.mrf.mxu0
          %v5252 = vadd.f32 0.0, %v5251
          %5253 = vmatmul.bf16.gmra.mxu0 %v5198
          %v5254 = vpop.f32.mrf.mxu0
          %v5255 = vadd.f32 0.0, %v5254
          %v5256 = vpop.f32.mrf.mxu0
          %v5257 = vadd.f32 0.0, %v5256
          %5258 = vmatmul.bf16.gmra.mxu0 %v5201
          %v5259 = vpop.f32.mrf.mxu0
          %v5260 = vadd.f32 0.0, %v5259
          %v5261 = vpop.f32.mrf.mxu0
          %v5262 = vadd.f32 0.0, %v5261
          %5263 = vmatmul.bf16.gmra.mxu0 %v5204
          %v5264 = vpop.f32.mrf.mxu0
          %v5265 = vadd.f32 0.0, %v5264
          %v5266 = vpop.f32.mrf.mxu0
          %v5267 = vadd.f32 0.0, %v5266
          %5268 = vmatmul.bf16.gmra.mxu0 %v5207
          %v5269 = vpop.f32.mrf.mxu0
          %v5270 = vadd.f32 0.0, %v5269
          %v5271 = vpop.f32.mrf.mxu0
          %v5272 = vadd.f32 0.0, %v5271
          %5273 = vmatmul.bf16.gmra.mxu0 %v5210
          %v5274 = vpop.f32.mrf.mxu0
          %v5275 = vadd.f32 0.0, %v5274
          %v5276 = vpop.f32.mrf.mxu0
          %v5277 = vadd.f32 0.0, %v5276
          %5278 = vmatmul.bf16.gmra.mxu0 %v5213
          %v5279 = vpop.f32.mrf.mxu0
          %v5280 = vadd.f32 0.0, %v5279
          %v5281 = vpop.f32.mrf.mxu0
          %v5282 = vadd.f32 0.0, %v5281
          %5283 = vdwg.mxu0
          %5284 = vmatpush.bf16.msra.mxu0 0
          %5285 = vmatpush.bf16.msra.mxu0 0
          %5286 = vmatpush.bf16.msra.mxu0 0
          %5287 = vmatpush.bf16.msra.mxu0 0
          %5288 = vmatpush.bf16.msra.mxu0 %v344
          %5289 = vmatpush.bf16.msra.mxu0 %v342
          %5290 = vmatpush.bf16.msra.mxu0 %v340
          %5291 = vmatpush.bf16.msra.mxu0 %v338
          %5292 = vmatmul.bf16.gmra.mxu0 %v5180
          %v5293 = vpop.f32.mrf.mxu0
          %v5294 = vadd.f32 0.0, %v5293
          %v5295 = vpop.f32.mrf.mxu0
          %v5296 = vadd.f32 0.0, %v5295
          %5297 = vmatmul.bf16.gmra.mxu0 %v5183
          %v5298 = vpop.f32.mrf.mxu0
          %v5299 = vadd.f32 0.0, %v5298
          %v5300 = vpop.f32.mrf.mxu0
          %v5301 = vadd.f32 0.0, %v5300
          %5302 = vmatmul.bf16.gmra.mxu0 %v5186
          %v5303 = vpop.f32.mrf.mxu0
          %v5304 = vadd.f32 0.0, %v5303
          %v5305 = vpop.f32.mrf.mxu0
          %v5306 = vadd.f32 0.0, %v5305
          %5307 = vmatmul.bf16.gmra.mxu0 %v5189
          %v5308 = vpop.f32.mrf.mxu0
          %v5309 = vadd.f32 0.0, %v5308
          %v5310 = vpop.f32.mrf.mxu0
          %v5311 = vadd.f32 0.0, %v5310
          %5312 = vmatmul.bf16.gmra.mxu0 %v5192
          %v5313 = vpop.f32.mrf.mxu0
          %v5314 = vadd.f32 0.0, %v5313
          %v5315 = vpop.f32.mrf.mxu0
          %v5316 = vadd.f32 0.0, %v5315
          %5317 = vmatmul.bf16.gmra.mxu0 %v5195
          %v5318 = vpop.f32.mrf.mxu0
          %v5319 = vadd.f32 0.0, %v5318
          %v5320 = vpop.f32.mrf.mxu0
          %v5321 = vadd.f32 0.0, %v5320
          %5322 = vmatmul.bf16.gmra.mxu0 %v5198
          %v5323 = vpop.f32.mrf.mxu0
          %v5324 = vadd.f32 0.0, %v5323
          %v5325 = vpop.f32.mrf.mxu0
          %v5326 = vadd.f32 0.0, %v5325
          %5327 = vmatmul.bf16.gmra.mxu0 %v5201
          %v5328 = vpop.f32.mrf.mxu0
          %v5329 = vadd.f32 0.0, %v5328
          %v5330 = vpop.f32.mrf.mxu0
          %v5331 = vadd.f32 0.0, %v5330
          %5332 = vmatmul.bf16.gmra.mxu0 %v5204
          %v5333 = vpop.f32.mrf.mxu0
          %v5334 = vadd.f32 0.0, %v5333
          %v5335 = vpop.f32.mrf.mxu0
          %v5336 = vadd.f32 0.0, %v5335
          %5337 = vmatmul.bf16.gmra.mxu0 %v5207
          %v5338 = vpop.f32.mrf.mxu0
          %v5339 = vadd.f32 0.0, %v5338
          %v5340 = vpop.f32.mrf.mxu0
          %v5341 = vadd.f32 0.0, %v5340
          %5342 = vmatmul.bf16.gmra.mxu0 %v5210
          %v5343 = vpop.f32.mrf.mxu0
          %v5344 = vadd.f32 0.0, %v5343
          %v5345 = vpop.f32.mrf.mxu0
          %v5346 = vadd.f32 0.0, %v5345
          %5347 = vmatmul.bf16.gmra.mxu0 %v5213
          %v5348 = vpop.f32.mrf.mxu0
          %v5349 = vadd.f32 0.0, %v5348
          %v5350 = vpop.f32.mrf.mxu0
          %v5351 = vadd.f32 0.0, %v5350
          %5352 = vdwg.mxu0
          %v5353 = vmul.f32 %v5225, %v5225
          %v5354 = vmul.f32 %v5294, %v5294
          %v5355 = vmul.f32 %v5227, %v5227
          %v5356 = vmul.f32 %v5296, %v5296
          %v5357 = vmul.f32 %v5230, %v5230
          %v5358 = vmul.f32 %v5299, %v5299
          %v5359 = vmul.f32 %v5232, %v5232
          %v5360 = vmul.f32 %v5301, %v5301
          %v5361 = vmul.f32 %v5235, %v5235
          %v5362 = vmul.f32 %v5304, %v5304
          %v5363 = vmul.f32 %v5237, %v5237
          %v5364 = vmul.f32 %v5306, %v5306
          %v5365 = vmul.f32 %v5240, %v5240
          %v5366 = vmul.f32 %v5309, %v5309
          %v5367 = vmul.f32 %v5242, %v5242
          %v5368 = vmul.f32 %v5311, %v5311
          %v5369 = vadd.f32 %v5353, %v5354
          %5370 = vadd.xlane.f32.xlu0 %v5369
          %v5371 = vpop.xlane.xlu0 %5370
          %v5372 = vadd.f32 %v5355, %v5356
          %5373 = vadd.xlane.f32.xlu0 %v5372
          %v5374 = vpop.xlane.xlu0 %5373
          %v5375 = vadd.f32 %v5357, %v5358
          %5376 = vadd.xlane.f32.xlu0 %v5375
          %v5377 = vpop.xlane.xlu0 %5376
          %v5378 = vadd.f32 %v5359, %v5360
          %5379 = vadd.xlane.f32.xlu0 %v5378
          %v5380 = vpop.xlane.xlu0 %5379
          %v5381 = vadd.f32 %v5361, %v5362
          %5382 = vadd.xlane.f32.xlu0 %v5381
          %v5383 = vpop.xlane.xlu0 %5382
          %v5384 = vadd.f32 %v5363, %v5364
          %5385 = vadd.xlane.f32.xlu0 %v5384
          %v5386 = vpop.xlane.xlu0 %5385
          %v5387 = vadd.f32 %v5365, %v5366
          %5388 = vadd.xlane.f32.xlu0 %v5387
          %v5389 = vpop.xlane.xlu0 %5388
          %v5390 = vadd.f32 %v5367, %v5368
          %5391 = vadd.xlane.f32.xlu0 %v5390
          %v5392 = vpop.xlane.xlu0 %5391
          %v5393 = vmax.f32 %v5371, 1e-24
          %v5394 = vmax.f32 %v5374, 1e-24
          %v5395 = vmax.f32 %v5377, 1e-24
          %v5396 = vmax.f32 %v5380, 1e-24
          %v5397 = vmax.f32 %v5383, 1e-24
          %v5398 = vmax.f32 %v5386, 1e-24
          %v5399 = vmax.f32 %v5389, 1e-24
          %v5400 = vmax.f32 %v5392, 1e-24
          %v5401 = vrsqrt.pop %v5393
          %v5402 = vmul.f32 %v5401, %v5393
          %v5403 = vmul.f32 %v5402, %v5401
          %v5404 = vmul.f32 0.5, %v5403
          %v5405 = vsub.f32 1.5, %v5404
          %v5406 = vmul.f32 %v5401, %v5405
          %vm5407 = vweird.f32 %v5393
          %vm5408 = vweird.f32 %v5401
          %vm5409 = vmor %vm5407, %vm5408
          %v5410 = vsel %vm5409, %v5401, %v5406
          %v5411 = vrsqrt.pop %v5394
          %v5412 = vmul.f32 %v5411, %v5394
          %v5413 = vmul.f32 %v5412, %v5411
          %v5414 = vmul.f32 0.5, %v5413
          %v5415 = vsub.f32 1.5, %v5414
          %v5416 = vmul.f32 %v5411, %v5415
          %vm5417 = vweird.f32 %v5394
          %vm5418 = vweird.f32 %v5411
          %vm5419 = vmor %vm5417, %vm5418
          %v5420 = vsel %vm5419, %v5411, %v5416
          %v5421 = vrsqrt.pop %v5395
          %v5422 = vmul.f32 %v5421, %v5395
          %v5423 = vmul.f32 %v5422, %v5421
          %v5424 = vmul.f32 0.5, %v5423
          %v5425 = vsub.f32 1.5, %v5424
          %v5426 = vmul.f32 %v5421, %v5425
          %vm5427 = vweird.f32 %v5395
          %vm5428 = vweird.f32 %v5421
          %vm5429 = vmor %vm5427, %vm5428
          %v5430 = vsel %vm5429, %v5421, %v5426
          %v5431 = vrsqrt.pop %v5396
          %v5432 = vmul.f32 %v5431, %v5396
          %v5433 = vmul.f32 %v5432, %v5431
          %v5434 = vmul.f32 0.5, %v5433
          %v5435 = vsub.f32 1.5, %v5434
          %v5436 = vmul.f32 %v5431, %v5435
          %vm5437 = vweird.f32 %v5396
          %vm5438 = vweird.f32 %v5431
          %vm5439 = vmor %vm5437, %vm5438
          %v5440 = vsel %vm5439, %v5431, %v5436
          %v5441 = vrsqrt.pop %v5397
          %v5442 = vmul.f32 %v5441, %v5397
          %v5443 = vmul.f32 %v5442, %v5441
          %v5444 = vmul.f32 0.5, %v5443
          %v5445 = vsub.f32 1.5, %v5444
          %v5446 = vmul.f32 %v5441, %v5445
          %vm5447 = vweird.f32 %v5397
          %vm5448 = vweird.f32 %v5441
          %vm5449 = vmor %vm5447, %vm5448
          %v5450 = vsel %vm5449, %v5441, %v5446
          %v5451 = vrsqrt.pop %v5398
          %v5452 = vmul.f32 %v5451, %v5398
          %v5453 = vmul.f32 %v5452, %v5451
          %v5454 = vmul.f32 0.5, %v5453
          %v5455 = vsub.f32 1.5, %v5454
          %v5456 = vmul.f32 %v5451, %v5455
          %vm5457 = vweird.f32 %v5398
          %vm5458 = vweird.f32 %v5451
          %vm5459 = vmor %vm5457, %vm5458
          %v5460 = vsel %vm5459, %v5451, %v5456
          %v5461 = vrsqrt.pop %v5399
          %v5462 = vmul.f32 %v5461, %v5399
          %v5463 = vmul.f32 %v5462, %v5461
          %v5464 = vmul.f32 0.5, %v5463
          %v5465 = vsub.f32 1.5, %v5464
          %v5466 = vmul.f32 %v5461, %v5465
          %vm5467 = vweird.f32 %v5399
          %vm5468 = vweird.f32 %v5461
          %vm5469 = vmor %vm5467, %vm5468
          %v5470 = vsel %vm5469, %v5461, %v5466
          %v5471 = vrsqrt.pop %v5400
          %v5472 = vmul.f32 %v5471, %v5400
          %v5473 = vmul.f32 %v5472, %v5471
          %v5474 = vmul.f32 0.5, %v5473
          %v5475 = vsub.f32 1.5, %v5474
          %v5476 = vmul.f32 %v5471, %v5475
          %vm5477 = vweird.f32 %v5400
          %vm5478 = vweird.f32 %v5471
          %vm5479 = vmor %vm5477, %vm5478
          %v5480 = vsel %vm5479, %v5471, %v5476
          %v5481 = vmul.f32 %v5225, %v5410
          %v5482 = vmul.f32 %v5294, %v5410
          %v5483 = vmul.f32 %v5227, %v5420
          %v5484 = vmul.f32 %v5296, %v5420
          %v5485 = vmul.f32 %v5230, %v5430
          %v5486 = vmul.f32 %v5299, %v5430
          %v5487 = vmul.f32 %v5232, %v5440
          %v5488 = vmul.f32 %v5301, %v5440
          %v5489 = vmul.f32 %v5235, %v5450
          %v5490 = vmul.f32 %v5304, %v5450
          %v5491 = vmul.f32 %v5237, %v5460
          %v5492 = vmul.f32 %v5306, %v5460
          %v5493 = vmul.f32 %v5240, %v5470
          %v5494 = vmul.f32 %v5309, %v5470
          %v5495 = vmul.f32 %v5242, %v5480
          %v5496 = vmul.f32 %v5311, %v5480
          %v5497 = vmul.f32 %v5245, %v5245
          %v5498 = vmul.f32 %v5314, %v5314
          %v5499 = vmul.f32 %v5247, %v5247
          %v5500 = vmul.f32 %v5316, %v5316
          %v5501 = vmul.f32 %v5250, %v5250
          %v5502 = vmul.f32 %v5319, %v5319
          %v5503 = vmul.f32 %v5252, %v5252
          %v5504 = vmul.f32 %v5321, %v5321
          %v5505 = vmul.f32 %v5255, %v5255
          %v5506 = vmul.f32 %v5324, %v5324
          %v5507 = vmul.f32 %v5257, %v5257
          %v5508 = vmul.f32 %v5326, %v5326
          %v5509 = vmul.f32 %v5260, %v5260
          %v5510 = vmul.f32 %v5329, %v5329
          %v5511 = vmul.f32 %v5262, %v5262
          %v5512 = vmul.f32 %v5331, %v5331
          %v5513 = vadd.f32 %v5497, %v5498
          %5514 = vadd.xlane.f32.xlu0 %v5513
          %v5515 = vpop.xlane.xlu0 %5514
          %v5516 = vadd.f32 %v5499, %v5500
          %5517 = vadd.xlane.f32.xlu0 %v5516
          %v5518 = vpop.xlane.xlu0 %5517
          %v5519 = vadd.f32 %v5501, %v5502
          %5520 = vadd.xlane.f32.xlu0 %v5519
          %v5521 = vpop.xlane.xlu0 %5520
          %v5522 = vadd.f32 %v5503, %v5504
          %5523 = vadd.xlane.f32.xlu0 %v5522
          %v5524 = vpop.xlane.xlu0 %5523
          %v5525 = vadd.f32 %v5505, %v5506
          %5526 = vadd.xlane.f32.xlu0 %v5525
          %v5527 = vpop.xlane.xlu0 %5526
          %v5528 = vadd.f32 %v5507, %v5508
          %5529 = vadd.xlane.f32.xlu0 %v5528
          %v5530 = vpop.xlane.xlu0 %5529
          %v5531 = vadd.f32 %v5509, %v5510
          %5532 = vadd.xlane.f32.xlu0 %v5531
          %v5533 = vpop.xlane.xlu0 %5532
          %v5534 = vadd.f32 %v5511, %v5512
          %5535 = vadd.xlane.f32.xlu0 %v5534
          %v5536 = vpop.xlane.xlu0 %5535
          %v5537 = vmax.f32 %v5515, 1e-24
          %v5538 = vmax.f32 %v5518, 1e-24
          %v5539 = vmax.f32 %v5521, 1e-24
          %v5540 = vmax.f32 %v5524, 1e-24
          %v5541 = vmax.f32 %v5527, 1e-24
          %v5542 = vmax.f32 %v5530, 1e-24
          %v5543 = vmax.f32 %v5533, 1e-24
          %v5544 = vmax.f32 %v5536, 1e-24
          %v5545 = vrsqrt.pop %v5537
          %v5546 = vmul.f32 %v5545, %v5537
          %v5547 = vmul.f32 %v5546, %v5545
          %v5548 = vmul.f32 0.5, %v5547
          %v5549 = vsub.f32 1.5, %v5548
          %v5550 = vmul.f32 %v5545, %v5549
          %vm5551 = vweird.f32 %v5537
          %vm5552 = vweird.f32 %v5545
          %vm5553 = vmor %vm5551, %vm5552
          %v5554 = vsel %vm5553, %v5545, %v5550
          %v5555 = vrsqrt.pop %v5538
          %v5556 = vmul.f32 %v5555, %v5538
          %v5557 = vmul.f32 %v5556, %v5555
          %v5558 = vmul.f32 0.5, %v5557
          %v5559 = vsub.f32 1.5, %v5558
          %v5560 = vmul.f32 %v5555, %v5559
          %vm5561 = vweird.f32 %v5538
          %vm5562 = vweird.f32 %v5555
          %vm5563 = vmor %vm5561, %vm5562
          %v5564 = vsel %vm5563, %v5555, %v5560
          %v5565 = vrsqrt.pop %v5539
          %v5566 = vmul.f32 %v5565, %v5539
          %v5567 = vmul.f32 %v5566, %v5565
          %v5568 = vmul.f32 0.5, %v5567
          %v5569 = vsub.f32 1.5, %v5568
          %v5570 = vmul.f32 %v5565, %v5569
          %vm5571 = vweird.f32 %v5539
          %vm5572 = vweird.f32 %v5565
          %vm5573 = vmor %vm5571, %vm5572
          %v5574 = vsel %vm5573, %v5565, %v5570
          %v5575 = vrsqrt.pop %v5540
          %v5576 = vmul.f32 %v5575, %v5540
          %v5577 = vmul.f32 %v5576, %v5575
          %v5578 = vmul.f32 0.5, %v5577
          %v5579 = vsub.f32 1.5, %v5578
          %v5580 = vmul.f32 %v5575, %v5579
          %vm5581 = vweird.f32 %v5540
          %vm5582 = vweird.f32 %v5575
          %vm5583 = vmor %vm5581, %vm5582
          %v5584 = vsel %vm5583, %v5575, %v5580
          %v5585 = vrsqrt.pop %v5541
          %v5586 = vmul.f32 %v5585, %v5541
          %v5587 = vmul.f32 %v5586, %v5585
          %v5588 = vmul.f32 0.5, %v5587
          %v5589 = vsub.f32 1.5, %v5588
          %v5590 = vmul.f32 %v5585, %v5589
          %vm5591 = vweird.f32 %v5541
          %vm5592 = vweird.f32 %v5585
          %vm5593 = vmor %vm5591, %vm5592
          %v5594 = vsel %vm5593, %v5585, %v5590
          %v5595 = vrsqrt.pop %v5542
          %v5596 = vmul.f32 %v5595, %v5542
          %v5597 = vmul.f32 %v5596, %v5595
          %v5598 = vmul.f32 0.5, %v5597
          %v5599 = vsub.f32 1.5, %v5598
          %v5600 = vmul.f32 %v5595, %v5599
          %vm5601 = vweird.f32 %v5542
          %vm5602 = vweird.f32 %v5595
          %vm5603 = vmor %vm5601, %vm5602
          %v5604 = vsel %vm5603, %v5595, %v5600
          %v5605 = vrsqrt.pop %v5543
          %v5606 = vmul.f32 %v5605, %v5543
          %v5607 = vmul.f32 %v5606, %v5605
          %v5608 = vmul.f32 0.5, %v5607
          %v5609 = vsub.f32 1.5, %v5608
          %v5610 = vmul.f32 %v5605, %v5609
          %vm5611 = vweird.f32 %v5543
          %vm5612 = vweird.f32 %v5605
          %vm5613 = vmor %vm5611, %vm5612
          %v5614 = vsel %vm5613, %v5605, %v5610
          %v5615 = vrsqrt.pop %v5544
          %v5616 = vmul.f32 %v5615, %v5544
          %v5617 = vmul.f32 %v5616, %v5615
          %v5618 = vmul.f32 0.5, %v5617
          %v5619 = vsub.f32 1.5, %v5618
          %v5620 = vmul.f32 %v5615, %v5619
          %vm5621 = vweird.f32 %v5544
          %vm5622 = vweird.f32 %v5615
          %vm5623 = vmor %vm5621, %vm5622
          %v5624 = vsel %vm5623, %v5615, %v5620
          %v5625 = vmul.f32 %v5245, %v5554
          %v5626 = vmul.f32 %v5314, %v5554
          %v5627 = vmul.f32 %v5247, %v5564
          %v5628 = vmul.f32 %v5316, %v5564
          %v5629 = vmul.f32 %v5250, %v5574
          %v5630 = vmul.f32 %v5319, %v5574
          %v5631 = vmul.f32 %v5252, %v5584
          %v5632 = vmul.f32 %v5321, %v5584
          %v5633 = vmul.f32 %v5255, %v5594
          %v5634 = vmul.f32 %v5324, %v5594
          %v5635 = vmul.f32 %v5257, %v5604
          %v5636 = vmul.f32 %v5326, %v5604
          %v5637 = vmul.f32 %v5260, %v5614
          %v5638 = vmul.f32 %v5329, %v5614
          %v5639 = vmul.f32 %v5262, %v5624
          %v5640 = vmul.f32 %v5331, %v5624
          %v5641 = vpack.c.bf16 %v5483, %v5481
          %v5642 = vpack.c.bf16 %v5484, %v5482
          %v5643 = vpack.c.bf16 %v5487, %v5485
          %v5644 = vpack.c.bf16 %v5488, %v5486
          %v5645 = vpack.c.bf16 %v5491, %v5489
          %v5646 = vpack.c.bf16 %v5492, %v5490
          %v5647 = vpack.c.bf16 %v5495, %v5493
          %v5648 = vpack.c.bf16 %v5496, %v5494
          %v5649 = vpack.c.bf16 %v5627, %v5625
          %v5650 = vpack.c.bf16 %v5628, %v5626
          %v5651 = vpack.c.bf16 %v5631, %v5629
          %v5652 = vpack.c.bf16 %v5632, %v5630
          %v5653 = vpack.c.bf16 %v5635, %v5633
          %v5654 = vpack.c.bf16 %v5636, %v5634
          %v5655 = vpack.c.bf16 %v5639, %v5637
          %v5656 = vpack.c.bf16 %v5640, %v5638
          %5657 = vmatpush.bf16.xpose.msra.mxu0 0
          %5658 = vmatpush.bf16.xpose.msra.mxu0 0
          %5659 = vmatpush.bf16.xpose.msra.mxu0 0
          %5660 = vmatpush.bf16.xpose.msra.mxu0 0
          %5661 = vmatpush.bf16.xpose.msra.mxu0 %v5655
          %5662 = vmatpush.bf16.xpose.msra.mxu0 %v5653
          %5663 = vmatpush.bf16.xpose.msra.mxu0 %v5651
          %5664 = vmatpush.bf16.xpose.msra.mxu0 %v5649
          %5665 = vmatmul.bf16.gmra.mxu0 %v5641
          %v5666 = vpop.f32.mrf.mxu0
          %v5667 = vadd.f32 0.0, %v5666
          %v5668 = vpop.f32.mrf.mxu0
          %v5669 = vadd.f32 0.0, %v5668
          %5670 = vmatmul.bf16.gmra.mxu0 %v5643
          %v5671 = vpop.f32.mrf.mxu0
          %v5672 = vadd.f32 0.0, %v5671
          %v5673 = vpop.f32.mrf.mxu0
          %v5674 = vadd.f32 0.0, %v5673
          %5675 = vmatmul.bf16.gmra.mxu0 %v5645
          %v5676 = vpop.f32.mrf.mxu0
          %v5677 = vadd.f32 0.0, %v5676
          %v5678 = vpop.f32.mrf.mxu0
          %v5679 = vadd.f32 0.0, %v5678
          %5680 = vmatmul.bf16.gmra.mxu0 %v5647
          %v5681 = vpop.f32.mrf.mxu0
          %v5682 = vadd.f32 0.0, %v5681
          %v5683 = vpop.f32.mrf.mxu0
          %v5684 = vadd.f32 0.0, %v5683
          %5685 = vdwg.mxu0
          %5686 = vmatpush.bf16.xpose.msra.mxu0 0
          %5687 = vmatpush.bf16.xpose.msra.mxu0 0
          %5688 = vmatpush.bf16.xpose.msra.mxu0 0
          %5689 = vmatpush.bf16.xpose.msra.mxu0 0
          %5690 = vmatpush.bf16.xpose.msra.mxu0 %v5656
          %5691 = vmatpush.bf16.xpose.msra.mxu0 %v5654
          %5692 = vmatpush.bf16.xpose.msra.mxu0 %v5652
          %5693 = vmatpush.bf16.xpose.msra.mxu0 %v5650
          %5694 = vmatmul.bf16.gmra.mxu0 %v5642
          %v5695 = vpop.f32.mrf.mxu0
          %v5696 = vadd.f32 %v5667, %v5695
          %v5697 = vpop.f32.mrf.mxu0
          %v5698 = vadd.f32 %v5669, %v5697
          %5699 = vmatmul.bf16.gmra.mxu0 %v5644
          %v5700 = vpop.f32.mrf.mxu0
          %v5701 = vadd.f32 %v5672, %v5700
          %v5702 = vpop.f32.mrf.mxu0
          %v5703 = vadd.f32 %v5674, %v5702
          %5704 = vmatmul.bf16.gmra.mxu0 %v5646
          %v5705 = vpop.f32.mrf.mxu0
          %v5706 = vadd.f32 %v5677, %v5705
          %v5707 = vpop.f32.mrf.mxu0
          %v5708 = vadd.f32 %v5679, %v5707
          %5709 = vmatmul.bf16.gmra.mxu0 %v5648
          %v5710 = vpop.f32.mrf.mxu0
          %v5711 = vadd.f32 %v5682, %v5710
          %v5712 = vpop.f32.mrf.mxu0
          %v5713 = vadd.f32 %v5684, %v5712
          %5714 = vdwg.mxu0
          %s5715 = scalar_lea.vmem %s2, 128
          %v5716 = vld [vmem:[%s5715] sm:$0xff]
          %v5717 = vld [vmem:[%s5715 + $0x8] sm:$0xff]
          %v5718 = vld [vmem:[%s5715 + $0x10] sm:$0xff]
          %v5719 = vld [vmem:[%s5715 + $0x18] sm:$0xff]
          %v5720 = vld [vmem:[%s5715 + $0x20] sm:$0xff]
          %v5721 = vld [vmem:[%s5715 + $0x28] sm:$0xff]
          %v5722 = vld [vmem:[%s5715 + $0x30] sm:$0xff]
          %v5723 = vld [vmem:[%s5715 + $0x38] sm:$0xff]
          %5725 = vset.pattern.permute.xlu0 0
          %5726 = vperm.xlu0 %5725, %v5716
          %v5727 = vpop.permute.xlu0 %5726
          %5730 = vset.pattern.permute.xlu0 0
          %5731 = vperm.xlu0 %5730, %v5717
          %v5732 = vpop.permute.xlu0 %5731
          %5735 = vset.pattern.permute.xlu0 0
          %5736 = vperm.xlu0 %5735, %v5718
          %v5737 = vpop.permute.xlu0 %5736
          %5740 = vset.pattern.permute.xlu0 0
          %5741 = vperm.xlu0 %5740, %v5719
          %v5742 = vpop.permute.xlu0 %5741
          %5745 = vset.pattern.permute.xlu0 0
          %5746 = vperm.xlu0 %5745, %v5720
          %v5747 = vpop.permute.xlu0 %5746
          %5750 = vset.pattern.permute.xlu0 0
          %5751 = vperm.xlu0 %5750, %v5721
          %v5752 = vpop.permute.xlu0 %5751
          %5755 = vset.pattern.permute.xlu0 0
          %5756 = vperm.xlu0 %5755, %v5722
          %v5757 = vpop.permute.xlu0 %5756
          %5760 = vset.pattern.permute.xlu0 0
          %5761 = vperm.xlu0 %5760, %v5723
          %v5762 = vpop.permute.xlu0 %5761
          %v5764 = vmul.f32 %v5696, %v5727
          %v5765 = vmul.f32 %v5698, %v5732
          %v5766 = vmul.f32 %v5701, %v5737
          %v5767 = vmul.f32 %v5703, %v5742
          %v5768 = vmul.f32 %v5706, %v5747
          %v5769 = vmul.f32 %v5708, %v5752
          %v5770 = vmul.f32 %v5711, %v5757
          %v5771 = vmul.f32 %v5713, %v5762
          %v5772 = vadd.f32 %v5764, %v345
          %v5773 = vadd.f32 %v5765, %v346
          %v5774 = vadd.f32 %v5766, %v347
          %v5775 = vadd.f32 %v5767, %v348
          %v5776 = vadd.f32 %v5768, %v349
          %v5777 = vadd.f32 %v5769, %v350
          %v5778 = vadd.f32 %v5770, %v351
          %v5779 = vadd.f32 %v5771, %v352
          %v5780 = vsel %vm5178, %v5772, -inf
          %5781 = vmax.xlane.f32.xlu0 %v5780
          %v5782 = vpop.xlane.xlu0 %5781
          %v5783 = vsel %vm5178, %v5773, -inf
          %5784 = vmax.xlane.f32.xlu0 %v5783
          %v5785 = vpop.xlane.xlu0 %5784
          %v5786 = vsel %vm5178, %v5774, -inf
          %5787 = vmax.xlane.f32.xlu0 %v5786
          %v5788 = vpop.xlane.xlu0 %5787
          %v5789 = vsel %vm5178, %v5775, -inf
          %5790 = vmax.xlane.f32.xlu0 %v5789
          %v5791 = vpop.xlane.xlu0 %5790
          %v5792 = vsel %vm5178, %v5776, -inf
          %5793 = vmax.xlane.f32.xlu0 %v5792
          %v5794 = vpop.xlane.xlu0 %5793
          %v5795 = vsel %vm5178, %v5777, -inf
          %5796 = vmax.xlane.f32.xlu0 %v5795
          %v5797 = vpop.xlane.xlu0 %5796
          %v5798 = vsel %vm5178, %v5778, -inf
          %5799 = vmax.xlane.f32.xlu0 %v5798
          %v5800 = vpop.xlane.xlu0 %5799
          %v5801 = vsel %vm5178, %v5779, -inf
          %5802 = vmax.xlane.f32.xlu0 %v5801
          %v5803 = vpop.xlane.xlu0 %5802
          %v5804 = vsub.f32 %v5772, %v5782
          %v5805 = vsub.f32 %v5773, %v5785
          %v5806 = vsub.f32 %v5774, %v5788
          %v5807 = vsub.f32 %v5775, %v5791
          %v5808 = vsub.f32 %v5776, %v5794
          %v5809 = vsub.f32 %v5777, %v5797
          %v5810 = vsub.f32 %v5778, %v5800
          %v5811 = vsub.f32 %v5779, %v5803
          %v5812 = vmul.f32 %v5804, 1.442695
          %v5813 = vpow.pop %v5812
          %v5814 = vmul.f32 %v5805, 1.442695
          %v5815 = vpow.pop %v5814
          %v5816 = vmul.f32 %v5806, 1.442695
          %v5817 = vpow.pop %v5816
          %v5818 = vmul.f32 %v5807, 1.442695
          %v5819 = vpow.pop %v5818
          %v5820 = vmul.f32 %v5808, 1.442695
          %v5821 = vpow.pop %v5820
          %v5822 = vmul.f32 %v5809, 1.442695
          %v5823 = vpow.pop %v5822
          %v5824 = vmul.f32 %v5810, 1.442695
          %v5825 = vpow.pop %v5824
          %v5826 = vmul.f32 %v5811, 1.442695
          %v5827 = vpow.pop %v5826
          %v5828 = vsel %vm5178, %v5813, 0.0
          %5829 = vadd.xlane.f32.xlu0 %v5828
          %v5830 = vpop.xlane.xlu0 %5829
          %v5831 = vsel %vm5178, %v5815, 0.0
          %5832 = vadd.xlane.f32.xlu0 %v5831
          %v5833 = vpop.xlane.xlu0 %5832
          %v5834 = vsel %vm5178, %v5817, 0.0
          %5835 = vadd.xlane.f32.xlu0 %v5834
          %v5836 = vpop.xlane.xlu0 %5835
          %v5837 = vsel %vm5178, %v5819, 0.0
          %5838 = vadd.xlane.f32.xlu0 %v5837
          %v5839 = vpop.xlane.xlu0 %5838
          %v5840 = vsel %vm5178, %v5821, 0.0
          %5841 = vadd.xlane.f32.xlu0 %v5840
          %v5842 = vpop.xlane.xlu0 %5841
          %v5843 = vsel %vm5178, %v5823, 0.0
          %5844 = vadd.xlane.f32.xlu0 %v5843
          %v5845 = vpop.xlane.xlu0 %5844
          %v5846 = vsel %vm5178, %v5825, 0.0
          %5847 = vadd.xlane.f32.xlu0 %v5846
          %v5848 = vpop.xlane.xlu0 %5847
          %v5849 = vsel %vm5178, %v5827, 0.0
          %5850 = vadd.xlane.f32.xlu0 %v5849
          %v5851 = vpop.xlane.xlu0 %5850
          %v5852 = vrcp.pop %v5830
          %v5853 = vrcp.pop %v5833
          %v5854 = vrcp.pop %v5836
          %v5855 = vrcp.pop %v5839
          %v5856 = vrcp.pop %v5842
          %v5857 = vrcp.pop %v5845
          %v5858 = vrcp.pop %v5848
          %v5859 = vrcp.pop %v5851
          %v5860 = vmul.f32 %v5813, %v5852
          %v5861 = vmul.f32 %v5815, %v5853
          %v5862 = vmul.f32 %v5817, %v5854
          %v5863 = vmul.f32 %v5819, %v5855
          %v5864 = vmul.f32 %v5821, %v5856
          %v5865 = vmul.f32 %v5823, %v5857
          %v5866 = vmul.f32 %v5825, %v5858
          %v5867 = vmul.f32 %v5827, %v5859
          %v5868 = vpack.c.bf16 %v5861, %v5860
          %v5869 = vpack.c.bf16 %v5863, %v5862
          %v5870 = vpack.c.bf16 %v5865, %v5864
          %v5871 = vpack.c.bf16 %v5867, %v5866
          %v5872 = vpack.c.bf16 %v5267, %v5265
          %v5873 = vpack.c.bf16 %v5336, %v5334
          %v5874 = vpack.c.bf16 %v5272, %v5270
          %v5875 = vpack.c.bf16 %v5341, %v5339
          %v5876 = vpack.c.bf16 %v5277, %v5275
          %v5877 = vpack.c.bf16 %v5346, %v5344
          %v5878 = vpack.c.bf16 %v5282, %v5280
          %v5879 = vpack.c.bf16 %v5351, %v5349
          %v5881 = vsel %vm5178, %v5868, 0
          %v5884 = vsel %vm5178, %v5869, 0
          %v5887 = vsel %vm5178, %v5870, 0
          %v5890 = vsel %vm5178, %v5871, 0
          %5892 = vmatpush.bf16.msra.mxu0 0
          %5893 = vmatpush.bf16.msra.mxu0 0
          %5894 = vmatpush.bf16.msra.mxu0 0
          %5895 = vmatpush.bf16.msra.mxu0 0
          %5896 = vmatpush.bf16.msra.mxu0 %v5878
          %5897 = vmatpush.bf16.msra.mxu0 %v5876
          %5898 = vmatpush.bf16.msra.mxu0 %v5874
          %5899 = vmatpush.bf16.msra.mxu0 %v5872
          %5900 = vmatmul.bf16.gmra.mxu0 %v5881
          %v5901 = vpop.f32.mrf.mxu0
          %v5902 = vadd.f32 0.0, %v5901
          %v5903 = vpop.f32.mrf.mxu0
          %v5904 = vadd.f32 0.0, %v5903
          %5905 = vmatmul.bf16.gmra.mxu0 %v5884
          %v5906 = vpop.f32.mrf.mxu0
          %v5907 = vadd.f32 0.0, %v5906
          %v5908 = vpop.f32.mrf.mxu0
          %v5909 = vadd.f32 0.0, %v5908
          %5910 = vmatmul.bf16.gmra.mxu0 %v5887
          %v5911 = vpop.f32.mrf.mxu0
          %v5912 = vadd.f32 0.0, %v5911
          %v5913 = vpop.f32.mrf.mxu0
          %v5914 = vadd.f32 0.0, %v5913
          %5915 = vmatmul.bf16.gmra.mxu0 %v5890
          %v5916 = vpop.f32.mrf.mxu0
          %v5917 = vadd.f32 0.0, %v5916
          %v5918 = vpop.f32.mrf.mxu0
          %v5919 = vadd.f32 0.0, %v5918
          %5920 = vdwg.mxu0
          %5921 = vmatpush.bf16.msra.mxu0 0
          %5922 = vmatpush.bf16.msra.mxu0 0
          %5923 = vmatpush.bf16.msra.mxu0 0
          %5924 = vmatpush.bf16.msra.mxu0 0
          %5925 = vmatpush.bf16.msra.mxu0 %v5879
          %5926 = vmatpush.bf16.msra.mxu0 %v5877
          %5927 = vmatpush.bf16.msra.mxu0 %v5875
          %5928 = vmatpush.bf16.msra.mxu0 %v5873
          %5929 = vmatmul.bf16.gmra.mxu0 %v5881
          %v5930 = vpop.f32.mrf.mxu0
          %v5931 = vadd.f32 0.0, %v5930
          %v5932 = vpop.f32.mrf.mxu0
          %v5933 = vadd.f32 0.0, %v5932
          %5934 = vmatmul.bf16.gmra.mxu0 %v5884
          %v5935 = vpop.f32.mrf.mxu0
          %v5936 = vadd.f32 0.0, %v5935
          %v5937 = vpop.f32.mrf.mxu0
          %v5938 = vadd.f32 0.0, %v5937
          %5939 = vmatmul.bf16.gmra.mxu0 %v5887
          %v5940 = vpop.f32.mrf.mxu0
          %v5941 = vadd.f32 0.0, %v5940
          %v5942 = vpop.f32.mrf.mxu0
          %v5943 = vadd.f32 0.0, %v5942
          %5944 = vmatmul.bf16.gmra.mxu0 %v5890
          %v5945 = vpop.f32.mrf.mxu0
          %v5946 = vadd.f32 0.0, %v5945
          %v5947 = vpop.f32.mrf.mxu0
          %v5948 = vadd.f32 0.0, %v5947
          %5949 = vdwg.mxu0
          %s5950 = scalar_lea.vmem %s3, 128
          %v5951 = vld [vmem:[%s5950] sm:$0xff]
          %v5952 = vld [vmem:[%s5950 + $0x8] sm:$0xff]
          %v5953 = vld [vmem:[%s5950 + $0x10] sm:$0xff]
          %v5954 = vld [vmem:[%s5950 + $0x18] sm:$0xff]
          %v5955 = vld [vmem:[%s5950 + $0x20] sm:$0xff]
          %v5956 = vld [vmem:[%s5950 + $0x28] sm:$0xff]
          %v5957 = vld [vmem:[%s5950 + $0x30] sm:$0xff]
          %v5958 = vld [vmem:[%s5950 + $0x38] sm:$0xff]
          %5967 = vrot.lane.b32.xlu0 %v5931, 17
          %v5968 = vpop.permute.xlu0 %5967
          %5969 = vrot.lane.b32.xlu0 %v5933, 17
          %v5970 = vpop.permute.xlu0 %5969
          %5971 = vrot.lane.b32.xlu0 %v5936, 17
          %v5972 = vpop.permute.xlu0 %5971
          %5973 = vrot.lane.b32.xlu0 %v5938, 17
          %v5974 = vpop.permute.xlu0 %5973
          %5975 = vrot.lane.b32.xlu0 %v5941, 17
          %v5976 = vpop.permute.xlu0 %5975
          %5977 = vrot.lane.b32.xlu0 %v5943, 17
          %v5978 = vpop.permute.xlu0 %5977
          %5979 = vrot.lane.b32.xlu0 %v5946, 17
          %v5980 = vpop.permute.xlu0 %5979
          %5981 = vrot.lane.b32.xlu0 %v5948, 17
          %v5982 = vpop.permute.xlu0 %5981
          %5999 = vrot.lane.b32.xlu0 %v5902, 17
          %v6000 = vpop.permute.xlu0 %5999
          %6001 = vrot.lane.b32.xlu0 %v5904, 17
          %v6002 = vpop.permute.xlu0 %6001
          %6003 = vrot.lane.b32.xlu0 %v5907, 17
          %v6004 = vpop.permute.xlu0 %6003
          %6005 = vrot.lane.b32.xlu0 %v5909, 17
          %v6006 = vpop.permute.xlu0 %6005
          %6007 = vrot.lane.b32.xlu0 %v5912, 17
          %v6008 = vpop.permute.xlu0 %6007
          %6009 = vrot.lane.b32.xlu0 %v5914, 17
          %v6010 = vpop.permute.xlu0 %6009
          %6011 = vrot.lane.b32.xlu0 %v5917, 17
          %v6012 = vpop.permute.xlu0 %6011
          %6013 = vrot.lane.b32.xlu0 %v5919, 17
          %v6014 = vpop.permute.xlu0 %6013
          %vm6015 = vcmask 138240
          %v6016 = vsel %vm6015, %v6000, %v5968
          %v6017 = vsel %vm6015, %v6002, %v5970
          %v6018 = vsel %vm6015, %v6004, %v5972
          %v6019 = vsel %vm6015, %v6006, %v5974
          %v6020 = vsel %vm6015, %v6008, %v5976
          %v6021 = vsel %vm6015, %v6010, %v5978
          %v6022 = vsel %vm6015, %v6012, %v5980
          %v6023 = vsel %vm6015, %v6014, %v5982
          %v6040 = vsel %vm6015, %v5968, %v6000
          %v6041 = vsel %vm6015, %v5970, %v6002
          %v6042 = vsel %vm6015, %v5972, %v6004
          %v6043 = vsel %vm6015, %v5974, %v6006
          %v6044 = vsel %vm6015, %v5976, %v6008
          %v6045 = vsel %vm6015, %v5978, %v6010
          %v6046 = vsel %vm6015, %v5980, %v6012
          %v6047 = vsel %vm6015, %v5982, %v6014
          %v6048 = vperm.slane %v353, 0
          %v6049 = vperm.slane %v354, 0
          %v6050 = vmul.f32 %v6040, %v6048
          %v6051 = vmul.f32 %v6016, %v6049
          %v6052 = vmul.f32 %v6041, %v6048
          %v6053 = vmul.f32 %v6017, %v6049
          %v6054 = vmul.f32 %v6042, %v6048
          %v6055 = vmul.f32 %v6018, %v6049
          %v6056 = vmul.f32 %v6043, %v6048
          %v6057 = vmul.f32 %v6019, %v6049
          %v6058 = vmul.f32 %v6044, %v6048
          %v6059 = vmul.f32 %v6020, %v6049
          %v6060 = vmul.f32 %v6045, %v6048
          %v6061 = vmul.f32 %v6021, %v6049
          %v6062 = vmul.f32 %v6046, %v6048
          %v6063 = vmul.f32 %v6022, %v6049
          %v6064 = vmul.f32 %v6047, %v6048
          %v6065 = vmul.f32 %v6023, %v6049
          %6067 = vset.pattern.permute.xlu0 0
          %6068 = vperm.xlu0 %6067, %v5951
          %v6069 = vpop.permute.xlu0 %6068
          %6072 = vset.pattern.permute.xlu0 0
          %6073 = vperm.xlu0 %6072, %v5952
          %v6074 = vpop.permute.xlu0 %6073
          %6077 = vset.pattern.permute.xlu0 0
          %6078 = vperm.xlu0 %6077, %v5953
          %v6079 = vpop.permute.xlu0 %6078
          %6082 = vset.pattern.permute.xlu0 0
          %6083 = vperm.xlu0 %6082, %v5954
          %v6084 = vpop.permute.xlu0 %6083
          %6087 = vset.pattern.permute.xlu0 0
          %6088 = vperm.xlu0 %6087, %v5955
          %v6089 = vpop.permute.xlu0 %6088
          %6092 = vset.pattern.permute.xlu0 0
          %6093 = vperm.xlu0 %6092, %v5956
          %v6094 = vpop.permute.xlu0 %6093
          %6097 = vset.pattern.permute.xlu0 0
          %6098 = vperm.xlu0 %6097, %v5957
          %v6099 = vpop.permute.xlu0 %6098
          %6102 = vset.pattern.permute.xlu0 0
          %6103 = vperm.xlu0 %6102, %v5958
          %v6104 = vpop.permute.xlu0 %6103
          %v6106 = vmul.f32 %v6050, %v6069
          %v6107 = vmul.f32 %v6051, %v6069
          %v6108 = vmul.f32 %v6052, %v6074
          %v6109 = vmul.f32 %v6053, %v6074
          %v6110 = vmul.f32 %v6054, %v6079
          %v6111 = vmul.f32 %v6055, %v6079
          %v6112 = vmul.f32 %v6056, %v6084
          %v6113 = vmul.f32 %v6057, %v6084
          %v6114 = vmul.f32 %v6058, %v6089
          %v6115 = vmul.f32 %v6059, %v6089
          %v6116 = vmul.f32 %v6060, %v6094
          %v6117 = vmul.f32 %v6061, %v6094
          %v6118 = vmul.f32 %v6062, %v6099
          %v6119 = vmul.f32 %v6063, %v6099
          %v6120 = vmul.f32 %v6064, %v6104
          %v6121 = vmul.f32 %v6065, %v6104
          %6122 = vrot.lane.b32.xlu0 %v5931, 16
          %v6123 = vpop.permute.xlu0 %6122
          %6124 = vrot.lane.b32.xlu0 %v5933, 16
          %v6125 = vpop.permute.xlu0 %6124
          %6126 = vrot.lane.b32.xlu0 %v5936, 16
          %v6127 = vpop.permute.xlu0 %6126
          %6128 = vrot.lane.b32.xlu0 %v5938, 16
          %v6129 = vpop.permute.xlu0 %6128
          %6130 = vrot.lane.b32.xlu0 %v5941, 16
          %v6131 = vpop.permute.xlu0 %6130
          %6132 = vrot.lane.b32.xlu0 %v5943, 16
          %v6133 = vpop.permute.xlu0 %6132
          %6134 = vrot.lane.b32.xlu0 %v5946, 16
          %v6135 = vpop.permute.xlu0 %6134
          %6136 = vrot.lane.b32.xlu0 %v5948, 16
          %v6137 = vpop.permute.xlu0 %6136
          %6146 = vrot.lane.b32.xlu0 %v5902, 16
          %v6147 = vpop.permute.xlu0 %6146
          %6148 = vrot.lane.b32.xlu0 %v5904, 16
          %v6149 = vpop.permute.xlu0 %6148
          %6150 = vrot.lane.b32.xlu0 %v5907, 16
          %v6151 = vpop.permute.xlu0 %6150
          %6152 = vrot.lane.b32.xlu0 %v5909, 16
          %v6153 = vpop.permute.xlu0 %6152
          %6154 = vrot.lane.b32.xlu0 %v5912, 16
          %v6155 = vpop.permute.xlu0 %6154
          %6156 = vrot.lane.b32.xlu0 %v5914, 16
          %v6157 = vpop.permute.xlu0 %6156
          %6158 = vrot.lane.b32.xlu0 %v5917, 16
          %v6159 = vpop.permute.xlu0 %6158
          %6160 = vrot.lane.b32.xlu0 %v5919, 16
          %v6161 = vpop.permute.xlu0 %6160
          %vm6162 = vcmask 130048
          %v6163 = vsel %vm6162, %v6147, %v6123
          %v6164 = vsel %vm6162, %v6149, %v6125
          %v6165 = vsel %vm6162, %v6151, %v6127
          %v6166 = vsel %vm6162, %v6153, %v6129
          %v6167 = vsel %vm6162, %v6155, %v6131
          %v6168 = vsel %vm6162, %v6157, %v6133
          %v6169 = vsel %vm6162, %v6159, %v6135
          %v6170 = vsel %vm6162, %v6161, %v6137
          %v6187 = vsel %vm6162, %v6123, %v6147
          %v6188 = vsel %vm6162, %v6125, %v6149
          %v6189 = vsel %vm6162, %v6127, %v6151
          %v6190 = vsel %vm6162, %v6129, %v6153
          %v6191 = vsel %vm6162, %v6131, %v6155
          %v6192 = vsel %vm6162, %v6133, %v6157
          %v6193 = vsel %vm6162, %v6135, %v6159
          %v6194 = vsel %vm6162, %v6137, %v6161
          %v6195 = vperm.slane %v353, 1
          %v6196 = vperm.slane %v354, 1
          %v6197 = vmul.f32 %v6187, %v6195
          %v6198 = vmul.f32 %v6163, %v6196
          %v6199 = vmul.f32 %v6188, %v6195
          %v6200 = vmul.f32 %v6164, %v6196
          %v6201 = vmul.f32 %v6189, %v6195
          %v6202 = vmul.f32 %v6165, %v6196
          %v6203 = vmul.f32 %v6190, %v6195
          %v6204 = vmul.f32 %v6166, %v6196
          %v6205 = vmul.f32 %v6191, %v6195
          %v6206 = vmul.f32 %v6167, %v6196
          %v6207 = vmul.f32 %v6192, %v6195
          %v6208 = vmul.f32 %v6168, %v6196
          %v6209 = vmul.f32 %v6193, %v6195
          %v6210 = vmul.f32 %v6169, %v6196
          %v6211 = vmul.f32 %v6194, %v6195
          %v6212 = vmul.f32 %v6170, %v6196
          %6213 = vset.pattern.permute.xlu0 1
          %6214 = vperm.xlu0 %6213, %v5951
          %v6215 = vpop.permute.xlu0 %6214
          %6217 = vset.pattern.permute.xlu0 1
          %6218 = vperm.xlu0 %6217, %v5952
          %v6219 = vpop.permute.xlu0 %6218
          %6221 = vset.pattern.permute.xlu0 1
          %6222 = vperm.xlu0 %6221, %v5953
          %v6223 = vpop.permute.xlu0 %6222
          %6225 = vset.pattern.permute.xlu0 1
          %6226 = vperm.xlu0 %6225, %v5954
          %v6227 = vpop.permute.xlu0 %6226
          %6229 = vset.pattern.permute.xlu0 1
          %6230 = vperm.xlu0 %6229, %v5955
          %v6231 = vpop.permute.xlu0 %6230
          %6233 = vset.pattern.permute.xlu0 1
          %6234 = vperm.xlu0 %6233, %v5956
          %v6235 = vpop.permute.xlu0 %6234
          %6237 = vset.pattern.permute.xlu0 1
          %6238 = vperm.xlu0 %6237, %v5957
          %v6239 = vpop.permute.xlu0 %6238
          %6241 = vset.pattern.permute.xlu0 1
          %6242 = vperm.xlu0 %6241, %v5958
          %v6243 = vpop.permute.xlu0 %6242
          %v6245 = vmul.f32 %v6197, %v6215
          %v6246 = vmul.f32 %v6198, %v6215
          %v6247 = vmul.f32 %v6199, %v6219
          %v6248 = vmul.f32 %v6200, %v6219
          %v6249 = vmul.f32 %v6201, %v6223
          %v6250 = vmul.f32 %v6202, %v6223
          %v6251 = vmul.f32 %v6203, %v6227
          %v6252 = vmul.f32 %v6204, %v6227
          %v6253 = vmul.f32 %v6205, %v6231
          %v6254 = vmul.f32 %v6206, %v6231
          %v6255 = vmul.f32 %v6207, %v6235
          %v6256 = vmul.f32 %v6208, %v6235
          %v6257 = vmul.f32 %v6209, %v6239
          %v6258 = vmul.f32 %v6210, %v6239
          %v6259 = vmul.f32 %v6211, %v6243
          %v6260 = vmul.f32 %v6212, %v6243
          %6261 = vrot.lane.b32.xlu0 %v5931, 15
          %v6262 = vpop.permute.xlu0 %6261
          %6263 = vrot.lane.b32.xlu0 %v5933, 15
          %v6264 = vpop.permute.xlu0 %6263
          %6265 = vrot.lane.b32.xlu0 %v5936, 15
          %v6266 = vpop.permute.xlu0 %6265
          %6267 = vrot.lane.b32.xlu0 %v5938, 15
          %v6268 = vpop.permute.xlu0 %6267
          %6269 = vrot.lane.b32.xlu0 %v5941, 15
          %v6270 = vpop.permute.xlu0 %6269
          %6271 = vrot.lane.b32.xlu0 %v5943, 15
          %v6272 = vpop.permute.xlu0 %6271
          %6273 = vrot.lane.b32.xlu0 %v5946, 15
          %v6274 = vpop.permute.xlu0 %6273
          %6275 = vrot.lane.b32.xlu0 %v5948, 15
          %v6276 = vpop.permute.xlu0 %6275
          %6285 = vrot.lane.b32.xlu0 %v5902, 15
          %v6286 = vpop.permute.xlu0 %6285
          %6287 = vrot.lane.b32.xlu0 %v5904, 15
          %v6288 = vpop.permute.xlu0 %6287
          %6289 = vrot.lane.b32.xlu0 %v5907, 15
          %v6290 = vpop.permute.xlu0 %6289
          %6291 = vrot.lane.b32.xlu0 %v5909, 15
          %v6292 = vpop.permute.xlu0 %6291
          %6293 = vrot.lane.b32.xlu0 %v5912, 15
          %v6294 = vpop.permute.xlu0 %6293
          %6295 = vrot.lane.b32.xlu0 %v5914, 15
          %v6296 = vpop.permute.xlu0 %6295
          %6297 = vrot.lane.b32.xlu0 %v5917, 15
          %v6298 = vpop.permute.xlu0 %6297
          %6299 = vrot.lane.b32.xlu0 %v5919, 15
          %v6300 = vpop.permute.xlu0 %6299
          %vm6301 = vcmask 121856
          %v6302 = vsel %vm6301, %v6286, %v6262
          %v6303 = vsel %vm6301, %v6288, %v6264
          %v6304 = vsel %vm6301, %v6290, %v6266
          %v6305 = vsel %vm6301, %v6292, %v6268
          %v6306 = vsel %vm6301, %v6294, %v6270
          %v6307 = vsel %vm6301, %v6296, %v6272
          %v6308 = vsel %vm6301, %v6298, %v6274
          %v6309 = vsel %vm6301, %v6300, %v6276
          %v6326 = vsel %vm6301, %v6262, %v6286
          %v6327 = vsel %vm6301, %v6264, %v6288
          %v6328 = vsel %vm6301, %v6266, %v6290
          %v6329 = vsel %vm6301, %v6268, %v6292
          %v6330 = vsel %vm6301, %v6270, %v6294
          %v6331 = vsel %vm6301, %v6272, %v6296
          %v6332 = vsel %vm6301, %v6274, %v6298
          %v6333 = vsel %vm6301, %v6276, %v6300
          %v6334 = vperm.slane %v353, 2
          %v6335 = vperm.slane %v354, 2
          %v6336 = vmul.f32 %v6326, %v6334
          %v6337 = vmul.f32 %v6302, %v6335
          %v6338 = vmul.f32 %v6327, %v6334
          %v6339 = vmul.f32 %v6303, %v6335
          %v6340 = vmul.f32 %v6328, %v6334
          %v6341 = vmul.f32 %v6304, %v6335
          %v6342 = vmul.f32 %v6329, %v6334
          %v6343 = vmul.f32 %v6305, %v6335
          %v6344 = vmul.f32 %v6330, %v6334
          %v6345 = vmul.f32 %v6306, %v6335
          %v6346 = vmul.f32 %v6331, %v6334
          %v6347 = vmul.f32 %v6307, %v6335
          %v6348 = vmul.f32 %v6332, %v6334
          %v6349 = vmul.f32 %v6308, %v6335
          %v6350 = vmul.f32 %v6333, %v6334
          %v6351 = vmul.f32 %v6309, %v6335
          %6352 = vset.pattern.permute.xlu0 2
          %6353 = vperm.xlu0 %6352, %v5951
          %v6354 = vpop.permute.xlu0 %6353
          %6356 = vset.pattern.permute.xlu0 2
          %6357 = vperm.xlu0 %6356, %v5952
          %v6358 = vpop.permute.xlu0 %6357
          %6360 = vset.pattern.permute.xlu0 2
          %6361 = vperm.xlu0 %6360, %v5953
          %v6362 = vpop.permute.xlu0 %6361
          %6364 = vset.pattern.permute.xlu0 2
          %6365 = vperm.xlu0 %6364, %v5954
          %v6366 = vpop.permute.xlu0 %6365
          %6368 = vset.pattern.permute.xlu0 2
          %6369 = vperm.xlu0 %6368, %v5955
          %v6370 = vpop.permute.xlu0 %6369
          %6372 = vset.pattern.permute.xlu0 2
          %6373 = vperm.xlu0 %6372, %v5956
          %v6374 = vpop.permute.xlu0 %6373
          %6376 = vset.pattern.permute.xlu0 2
          %6377 = vperm.xlu0 %6376, %v5957
          %v6378 = vpop.permute.xlu0 %6377
          %6380 = vset.pattern.permute.xlu0 2
          %6381 = vperm.xlu0 %6380, %v5958
          %v6382 = vpop.permute.xlu0 %6381
          %v6384 = vmul.f32 %v6336, %v6354
          %v6385 = vmul.f32 %v6337, %v6354
          %v6386 = vmul.f32 %v6338, %v6358
          %v6387 = vmul.f32 %v6339, %v6358
          %v6388 = vmul.f32 %v6340, %v6362
          %v6389 = vmul.f32 %v6341, %v6362
          %v6390 = vmul.f32 %v6342, %v6366
          %v6391 = vmul.f32 %v6343, %v6366
          %v6392 = vmul.f32 %v6344, %v6370
          %v6393 = vmul.f32 %v6345, %v6370
          %v6394 = vmul.f32 %v6346, %v6374
          %v6395 = vmul.f32 %v6347, %v6374
          %v6396 = vmul.f32 %v6348, %v6378
          %v6397 = vmul.f32 %v6349, %v6378
          %v6398 = vmul.f32 %v6350, %v6382
          %v6399 = vmul.f32 %v6351, %v6382
          %6400 = vrot.lane.b32.xlu0 %v5931, 1
          %v6401 = vpop.permute.xlu0 %6400
          %6402 = vrot.lane.b32.xlu0 %v5933, 1
          %v6403 = vpop.permute.xlu0 %6402
          %6404 = vrot.lane.b32.xlu0 %v5936, 1
          %v6405 = vpop.permute.xlu0 %6404
          %6406 = vrot.lane.b32.xlu0 %v5938, 1
          %v6407 = vpop.permute.xlu0 %6406
          %6408 = vrot.lane.b32.xlu0 %v5941, 1
          %v6409 = vpop.permute.xlu0 %6408
          %6410 = vrot.lane.b32.xlu0 %v5943, 1
          %v6411 = vpop.permute.xlu0 %6410
          %6412 = vrot.lane.b32.xlu0 %v5946, 1
          %v6413 = vpop.permute.xlu0 %6412
          %6414 = vrot.lane.b32.xlu0 %v5948, 1
          %v6415 = vpop.permute.xlu0 %6414
          %6424 = vrot.lane.b32.xlu0 %v5902, 1
          %v6425 = vpop.permute.xlu0 %6424
          %6426 = vrot.lane.b32.xlu0 %v5904, 1
          %v6427 = vpop.permute.xlu0 %6426
          %6428 = vrot.lane.b32.xlu0 %v5907, 1
          %v6429 = vpop.permute.xlu0 %6428
          %6430 = vrot.lane.b32.xlu0 %v5909, 1
          %v6431 = vpop.permute.xlu0 %6430
          %6432 = vrot.lane.b32.xlu0 %v5912, 1
          %v6433 = vpop.permute.xlu0 %6432
          %6434 = vrot.lane.b32.xlu0 %v5914, 1
          %v6435 = vpop.permute.xlu0 %6434
          %6436 = vrot.lane.b32.xlu0 %v5917, 1
          %v6437 = vpop.permute.xlu0 %6436
          %6438 = vrot.lane.b32.xlu0 %v5919, 1
          %v6439 = vpop.permute.xlu0 %6438
          %vm6440 = vcmask 7168
          %v6441 = vsel %vm6440, %v6425, %v6401
          %v6442 = vsel %vm6440, %v6427, %v6403
          %v6443 = vsel %vm6440, %v6429, %v6405
          %v6444 = vsel %vm6440, %v6431, %v6407
          %v6445 = vsel %vm6440, %v6433, %v6409
          %v6446 = vsel %vm6440, %v6435, %v6411
          %v6447 = vsel %vm6440, %v6437, %v6413
          %v6448 = vsel %vm6440, %v6439, %v6415
          %v6465 = vsel %vm6440, %v6401, %v6425
          %v6466 = vsel %vm6440, %v6403, %v6427
          %v6467 = vsel %vm6440, %v6405, %v6429
          %v6468 = vsel %vm6440, %v6407, %v6431
          %v6469 = vsel %vm6440, %v6409, %v6433
          %v6470 = vsel %vm6440, %v6411, %v6435
          %v6471 = vsel %vm6440, %v6413, %v6437
          %v6472 = vsel %vm6440, %v6415, %v6439
          %v6473 = vperm.slane %v353, 3
          %v6474 = vperm.slane %v354, 3
          %v6475 = vmul.f32 %v6465, %v6473
          %v6476 = vmul.f32 %v6441, %v6474
          %v6477 = vmul.f32 %v6466, %v6473
          %v6478 = vmul.f32 %v6442, %v6474
          %v6479 = vmul.f32 %v6467, %v6473
          %v6480 = vmul.f32 %v6443, %v6474
          %v6481 = vmul.f32 %v6468, %v6473
          %v6482 = vmul.f32 %v6444, %v6474
          %v6483 = vmul.f32 %v6469, %v6473
          %v6484 = vmul.f32 %v6445, %v6474
          %v6485 = vmul.f32 %v6470, %v6473
          %v6486 = vmul.f32 %v6446, %v6474
          %v6487 = vmul.f32 %v6471, %v6473
          %v6488 = vmul.f32 %v6447, %v6474
          %v6489 = vmul.f32 %v6472, %v6473
          %v6490 = vmul.f32 %v6448, %v6474
          %6491 = vset.pattern.permute.xlu0 3
          %6492 = vperm.xlu0 %6491, %v5951
          %v6493 = vpop.permute.xlu0 %6492
          %6495 = vset.pattern.permute.xlu0 3
          %6496 = vperm.xlu0 %6495, %v5952
          %v6497 = vpop.permute.xlu0 %6496
          %6499 = vset.pattern.permute.xlu0 3
          %6500 = vperm.xlu0 %6499, %v5953
          %v6501 = vpop.permute.xlu0 %6500
          %6503 = vset.pattern.permute.xlu0 3
          %6504 = vperm.xlu0 %6503, %v5954
          %v6505 = vpop.permute.xlu0 %6504
          %6507 = vset.pattern.permute.xlu0 3
          %6508 = vperm.xlu0 %6507, %v5955
          %v6509 = vpop.permute.xlu0 %6508
          %6511 = vset.pattern.permute.xlu0 3
          %6512 = vperm.xlu0 %6511, %v5956
          %v6513 = vpop.permute.xlu0 %6512
          %6515 = vset.pattern.permute.xlu0 3
          %6516 = vperm.xlu0 %6515, %v5957
          %v6517 = vpop.permute.xlu0 %6516
          %6519 = vset.pattern.permute.xlu0 3
          %6520 = vperm.xlu0 %6519, %v5958
          %v6521 = vpop.permute.xlu0 %6520
          %v6523 = vmul.f32 %v6475, %v6493
          %v6524 = vmul.f32 %v6476, %v6493
          %v6525 = vmul.f32 %v6477, %v6497
          %v6526 = vmul.f32 %v6478, %v6497
          %v6527 = vmul.f32 %v6479, %v6501
          %v6528 = vmul.f32 %v6480, %v6501
          %v6529 = vmul.f32 %v6481, %v6505
          %v6530 = vmul.f32 %v6482, %v6505
          %v6531 = vmul.f32 %v6483, %v6509
          %v6532 = vmul.f32 %v6484, %v6509
          %v6533 = vmul.f32 %v6485, %v6513
          %v6534 = vmul.f32 %v6486, %v6513
          %v6535 = vmul.f32 %v6487, %v6517
          %v6536 = vmul.f32 %v6488, %v6517
          %v6537 = vmul.f32 %v6489, %v6521
          %v6538 = vmul.f32 %v6490, %v6521
          %v6539 = vperm.slane %v353, 4
          %v6540 = vperm.slane %v354, 4
          %v6541 = vmul.f32 %v5902, %v6539
          %v6542 = vmul.f32 %v5931, %v6540
          %v6543 = vmul.f32 %v5904, %v6539
          %v6544 = vmul.f32 %v5933, %v6540
          %v6545 = vmul.f32 %v5907, %v6539
          %v6546 = vmul.f32 %v5936, %v6540
          %v6547 = vmul.f32 %v5909, %v6539
          %v6548 = vmul.f32 %v5938, %v6540
          %v6549 = vmul.f32 %v5912, %v6539
          %v6550 = vmul.f32 %v5941, %v6540
          %v6551 = vmul.f32 %v5914, %v6539
          %v6552 = vmul.f32 %v5943, %v6540
          %v6553 = vmul.f32 %v5917, %v6539
          %v6554 = vmul.f32 %v5946, %v6540
          %v6555 = vmul.f32 %v5919, %v6539
          %v6556 = vmul.f32 %v5948, %v6540
          %6557 = vset.pattern.permute.xlu0 4
          %6558 = vperm.xlu0 %6557, %v5951
          %v6559 = vpop.permute.xlu0 %6558
          %6561 = vset.pattern.permute.xlu0 4
          %6562 = vperm.xlu0 %6561, %v5952
          %v6563 = vpop.permute.xlu0 %6562
          %6565 = vset.pattern.permute.xlu0 4
          %6566 = vperm.xlu0 %6565, %v5953
          %v6567 = vpop.permute.xlu0 %6566
          %6569 = vset.pattern.permute.xlu0 4
          %6570 = vperm.xlu0 %6569, %v5954
          %v6571 = vpop.permute.xlu0 %6570
          %6573 = vset.pattern.permute.xlu0 4
          %6574 = vperm.xlu0 %6573, %v5955
          %v6575 = vpop.permute.xlu0 %6574
          %6577 = vset.pattern.permute.xlu0 4
          %6578 = vperm.xlu0 %6577, %v5956
          %v6579 = vpop.permute.xlu0 %6578
          %6581 = vset.pattern.permute.xlu0 4
          %6582 = vperm.xlu0 %6581, %v5957
          %v6583 = vpop.permute.xlu0 %6582
          %6585 = vset.pattern.permute.xlu0 4
          %6586 = vperm.xlu0 %6585, %v5958
          %v6587 = vpop.permute.xlu0 %6586
          %v6589 = vmul.f32 %v6541, %v6559
          %v6590 = vmul.f32 %v6542, %v6559
          %v6591 = vmul.f32 %v6543, %v6563
          %v6592 = vmul.f32 %v6544, %v6563
          %v6593 = vmul.f32 %v6545, %v6567
          %v6594 = vmul.f32 %v6546, %v6567
          %v6595 = vmul.f32 %v6547, %v6571
          %v6596 = vmul.f32 %v6548, %v6571
          %v6597 = vmul.f32 %v6549, %v6575
          %v6598 = vmul.f32 %v6550, %v6575
          %v6599 = vmul.f32 %v6551, %v6579
          %v6600 = vmul.f32 %v6552, %v6579
          %v6601 = vmul.f32 %v6553, %v6583
          %v6602 = vmul.f32 %v6554, %v6583
          %v6603 = vmul.f32 %v6555, %v6587
          %v6604 = vmul.f32 %v6556, %v6587
          %6605 = vrot.lane.b32.xlu0 %v5902, 127
          %v6606 = vpop.permute.xlu0 %6605
          %6607 = vrot.lane.b32.xlu0 %v5931, 127
          %v6608 = vpop.permute.xlu0 %6607
          %6609 = vrot.lane.b32.xlu0 %v5904, 127
          %v6610 = vpop.permute.xlu0 %6609
          %6611 = vrot.lane.b32.xlu0 %v5933, 127
          %v6612 = vpop.permute.xlu0 %6611
          %6613 = vrot.lane.b32.xlu0 %v5907, 127
          %v6614 = vpop.permute.xlu0 %6613
          %6615 = vrot.lane.b32.xlu0 %v5936, 127
          %v6616 = vpop.permute.xlu0 %6615
          %6617 = vrot.lane.b32.xlu0 %v5909, 127
          %v6618 = vpop.permute.xlu0 %6617
          %6619 = vrot.lane.b32.xlu0 %v5938, 127
          %v6620 = vpop.permute.xlu0 %6619
          %6621 = vrot.lane.b32.xlu0 %v5912, 127
          %v6622 = vpop.permute.xlu0 %6621
          %6623 = vrot.lane.b32.xlu0 %v5941, 127
          %v6624 = vpop.permute.xlu0 %6623
          %6625 = vrot.lane.b32.xlu0 %v5914, 127
          %v6626 = vpop.permute.xlu0 %6625
          %6627 = vrot.lane.b32.xlu0 %v5943, 127
          %v6628 = vpop.permute.xlu0 %6627
          %6629 = vrot.lane.b32.xlu0 %v5917, 127
          %v6630 = vpop.permute.xlu0 %6629
          %6631 = vrot.lane.b32.xlu0 %v5946, 127
          %v6632 = vpop.permute.xlu0 %6631
          %6633 = vrot.lane.b32.xlu0 %v5919, 127
          %v6634 = vpop.permute.xlu0 %6633
          %6635 = vrot.lane.b32.xlu0 %v5948, 127
          %v6636 = vpop.permute.xlu0 %6635
          %vm6637 = vcmask 1039360
          %v6638 = vsel %vm6637, %v6606, %v6608
          %v6639 = vsel %vm6637, %v6610, %v6612
          %v6640 = vsel %vm6637, %v6614, %v6616
          %v6641 = vsel %vm6637, %v6618, %v6620
          %v6642 = vsel %vm6637, %v6622, %v6624
          %v6643 = vsel %vm6637, %v6626, %v6628
          %v6644 = vsel %vm6637, %v6630, %v6632
          %v6645 = vsel %vm6637, %v6634, %v6636
          %v6670 = vsel %vm6637, %v6608, %v6606
          %v6671 = vsel %vm6637, %v6612, %v6610
          %v6672 = vsel %vm6637, %v6616, %v6614
          %v6673 = vsel %vm6637, %v6620, %v6618
          %v6674 = vsel %vm6637, %v6624, %v6622
          %v6675 = vsel %vm6637, %v6628, %v6626
          %v6676 = vsel %vm6637, %v6632, %v6630
          %v6677 = vsel %vm6637, %v6636, %v6634
          %v6678 = vperm.slane %v353, 5
          %v6679 = vperm.slane %v354, 5
          %v6680 = vmul.f32 %v6638, %v6678
          %v6681 = vmul.f32 %v6670, %v6679
          %v6682 = vmul.f32 %v6639, %v6678
          %v6683 = vmul.f32 %v6671, %v6679
          %v6684 = vmul.f32 %v6640, %v6678
          %v6685 = vmul.f32 %v6672, %v6679
          %v6686 = vmul.f32 %v6641, %v6678
          %v6687 = vmul.f32 %v6673, %v6679
          %v6688 = vmul.f32 %v6642, %v6678
          %v6689 = vmul.f32 %v6674, %v6679
          %v6690 = vmul.f32 %v6643, %v6678
          %v6691 = vmul.f32 %v6675, %v6679
          %v6692 = vmul.f32 %v6644, %v6678
          %v6693 = vmul.f32 %v6676, %v6679
          %v6694 = vmul.f32 %v6645, %v6678
          %v6695 = vmul.f32 %v6677, %v6679
          %6696 = vset.pattern.permute.xlu0 5
          %6697 = vperm.xlu0 %6696, %v5951
          %v6698 = vpop.permute.xlu0 %6697
          %6700 = vset.pattern.permute.xlu0 5
          %6701 = vperm.xlu0 %6700, %v5952
          %v6702 = vpop.permute.xlu0 %6701
          %6704 = vset.pattern.permute.xlu0 5
          %6705 = vperm.xlu0 %6704, %v5953
          %v6706 = vpop.permute.xlu0 %6705
          %6708 = vset.pattern.permute.xlu0 5
          %6709 = vperm.xlu0 %6708, %v5954
          %v6710 = vpop.permute.xlu0 %6709
          %6712 = vset.pattern.permute.xlu0 5
          %6713 = vperm.xlu0 %6712, %v5955
          %v6714 = vpop.permute.xlu0 %6713
          %6716 = vset.pattern.permute.xlu0 5
          %6717 = vperm.xlu0 %6716, %v5956
          %v6718 = vpop.permute.xlu0 %6717
          %6720 = vset.pattern.permute.xlu0 5
          %6721 = vperm.xlu0 %6720, %v5957
          %v6722 = vpop.permute.xlu0 %6721
          %6724 = vset.pattern.permute.xlu0 5
          %6725 = vperm.xlu0 %6724, %v5958
          %v6726 = vpop.permute.xlu0 %6725
          %v6728 = vmul.f32 %v6680, %v6698
          %v6729 = vmul.f32 %v6681, %v6698
          %v6730 = vmul.f32 %v6682, %v6702
          %v6731 = vmul.f32 %v6683, %v6702
          %v6732 = vmul.f32 %v6684, %v6706
          %v6733 = vmul.f32 %v6685, %v6706
          %v6734 = vmul.f32 %v6686, %v6710
          %v6735 = vmul.f32 %v6687, %v6710
          %v6736 = vmul.f32 %v6688, %v6714
          %v6737 = vmul.f32 %v6689, %v6714
          %v6738 = vmul.f32 %v6690, %v6718
          %v6739 = vmul.f32 %v6691, %v6718
          %v6740 = vmul.f32 %v6692, %v6722
          %v6741 = vmul.f32 %v6693, %v6722
          %v6742 = vmul.f32 %v6694, %v6726
          %v6743 = vmul.f32 %v6695, %v6726
          %6744 = vrot.lane.b32.xlu0 %v5902, 113
          %v6745 = vpop.permute.xlu0 %6744
          %6746 = vrot.lane.b32.xlu0 %v5931, 113
          %v6747 = vpop.permute.xlu0 %6746
          %6748 = vrot.lane.b32.xlu0 %v5904, 113
          %v6749 = vpop.permute.xlu0 %6748
          %6750 = vrot.lane.b32.xlu0 %v5933, 113
          %v6751 = vpop.permute.xlu0 %6750
          %6752 = vrot.lane.b32.xlu0 %v5907, 113
          %v6753 = vpop.permute.xlu0 %6752
          %6754 = vrot.lane.b32.xlu0 %v5936, 113
          %v6755 = vpop.permute.xlu0 %6754
          %6756 = vrot.lane.b32.xlu0 %v5909, 113
          %v6757 = vpop.permute.xlu0 %6756
          %6758 = vrot.lane.b32.xlu0 %v5938, 113
          %v6759 = vpop.permute.xlu0 %6758
          %6760 = vrot.lane.b32.xlu0 %v5912, 113
          %v6761 = vpop.permute.xlu0 %6760
          %6762 = vrot.lane.b32.xlu0 %v5941, 113
          %v6763 = vpop.permute.xlu0 %6762
          %6764 = vrot.lane.b32.xlu0 %v5914, 113
          %v6765 = vpop.permute.xlu0 %6764
          %6766 = vrot.lane.b32.xlu0 %v5943, 113
          %v6767 = vpop.permute.xlu0 %6766
          %6768 = vrot.lane.b32.xlu0 %v5917, 113
          %v6769 = vpop.permute.xlu0 %6768
          %6770 = vrot.lane.b32.xlu0 %v5946, 113
          %v6771 = vpop.permute.xlu0 %6770
          %6772 = vrot.lane.b32.xlu0 %v5919, 113
          %v6773 = vpop.permute.xlu0 %6772
          %6774 = vrot.lane.b32.xlu0 %v5948, 113
          %v6775 = vpop.permute.xlu0 %6774
          %vm6776 = vcmask 924672
          %v6777 = vsel %vm6776, %v6745, %v6747
          %v6778 = vsel %vm6776, %v6749, %v6751
          %v6779 = vsel %vm6776, %v6753, %v6755
          %v6780 = vsel %vm6776, %v6757, %v6759
          %v6781 = vsel %vm6776, %v6761, %v6763
          %v6782 = vsel %vm6776, %v6765, %v6767
          %v6783 = vsel %vm6776, %v6769, %v6771
          %v6784 = vsel %vm6776, %v6773, %v6775
          %v6809 = vsel %vm6776, %v6747, %v6745
          %v6810 = vsel %vm6776, %v6751, %v6749
          %v6811 = vsel %vm6776, %v6755, %v6753
          %v6812 = vsel %vm6776, %v6759, %v6757
          %v6813 = vsel %vm6776, %v6763, %v6761
          %v6814 = vsel %vm6776, %v6767, %v6765
          %v6815 = vsel %vm6776, %v6771, %v6769
          %v6816 = vsel %vm6776, %v6775, %v6773
          %v6817 = vperm.slane %v353, 6
          %v6818 = vperm.slane %v354, 6
          %v6819 = vmul.f32 %v6777, %v6817
          %v6820 = vmul.f32 %v6809, %v6818
          %v6821 = vmul.f32 %v6778, %v6817
          %v6822 = vmul.f32 %v6810, %v6818
          %v6823 = vmul.f32 %v6779, %v6817
          %v6824 = vmul.f32 %v6811, %v6818
          %v6825 = vmul.f32 %v6780, %v6817
          %v6826 = vmul.f32 %v6812, %v6818
          %v6827 = vmul.f32 %v6781, %v6817
          %v6828 = vmul.f32 %v6813, %v6818
          %v6829 = vmul.f32 %v6782, %v6817
          %v6830 = vmul.f32 %v6814, %v6818
          %v6831 = vmul.f32 %v6783, %v6817
          %v6832 = vmul.f32 %v6815, %v6818
          %v6833 = vmul.f32 %v6784, %v6817
          %v6834 = vmul.f32 %v6816, %v6818
          %6835 = vset.pattern.permute.xlu0 6
          %6836 = vperm.xlu0 %6835, %v5951
          %v6837 = vpop.permute.xlu0 %6836
          %6839 = vset.pattern.permute.xlu0 6
          %6840 = vperm.xlu0 %6839, %v5952
          %v6841 = vpop.permute.xlu0 %6840
          %6843 = vset.pattern.permute.xlu0 6
          %6844 = vperm.xlu0 %6843, %v5953
          %v6845 = vpop.permute.xlu0 %6844
          %6847 = vset.pattern.permute.xlu0 6
          %6848 = vperm.xlu0 %6847, %v5954
          %v6849 = vpop.permute.xlu0 %6848
          %6851 = vset.pattern.permute.xlu0 6
          %6852 = vperm.xlu0 %6851, %v5955
          %v6853 = vpop.permute.xlu0 %6852
          %6855 = vset.pattern.permute.xlu0 6
          %6856 = vperm.xlu0 %6855, %v5956
          %v6857 = vpop.permute.xlu0 %6856
          %6859 = vset.pattern.permute.xlu0 6
          %6860 = vperm.xlu0 %6859, %v5957
          %v6861 = vpop.permute.xlu0 %6860
          %6863 = vset.pattern.permute.xlu0 6
          %6864 = vperm.xlu0 %6863, %v5958
          %v6865 = vpop.permute.xlu0 %6864
          %v6867 = vmul.f32 %v6819, %v6837
          %v6868 = vmul.f32 %v6820, %v6837
          %v6869 = vmul.f32 %v6821, %v6841
          %v6870 = vmul.f32 %v6822, %v6841
          %v6871 = vmul.f32 %v6823, %v6845
          %v6872 = vmul.f32 %v6824, %v6845
          %v6873 = vmul.f32 %v6825, %v6849
          %v6874 = vmul.f32 %v6826, %v6849
          %v6875 = vmul.f32 %v6827, %v6853
          %v6876 = vmul.f32 %v6828, %v6853
          %v6877 = vmul.f32 %v6829, %v6857
          %v6878 = vmul.f32 %v6830, %v6857
          %v6879 = vmul.f32 %v6831, %v6861
          %v6880 = vmul.f32 %v6832, %v6861
          %v6881 = vmul.f32 %v6833, %v6865
          %v6882 = vmul.f32 %v6834, %v6865
          %6883 = vrot.lane.b32.xlu0 %v5902, 112
          %v6884 = vpop.permute.xlu0 %6883
          %6885 = vrot.lane.b32.xlu0 %v5931, 112
          %v6886 = vpop.permute.xlu0 %6885
          %6887 = vrot.lane.b32.xlu0 %v5904, 112
          %v6888 = vpop.permute.xlu0 %6887
          %6889 = vrot.lane.b32.xlu0 %v5933, 112
          %v6890 = vpop.permute.xlu0 %6889
          %6891 = vrot.lane.b32.xlu0 %v5907, 112
          %v6892 = vpop.permute.xlu0 %6891
          %6893 = vrot.lane.b32.xlu0 %v5936, 112
          %v6894 = vpop.permute.xlu0 %6893
          %6895 = vrot.lane.b32.xlu0 %v5909, 112
          %v6896 = vpop.permute.xlu0 %6895
          %6897 = vrot.lane.b32.xlu0 %v5938, 112
          %v6898 = vpop.permute.xlu0 %6897
          %6899 = vrot.lane.b32.xlu0 %v5912, 112
          %v6900 = vpop.permute.xlu0 %6899
          %6901 = vrot.lane.b32.xlu0 %v5941, 112
          %v6902 = vpop.permute.xlu0 %6901
          %6903 = vrot.lane.b32.xlu0 %v5914, 112
          %v6904 = vpop.permute.xlu0 %6903
          %6905 = vrot.lane.b32.xlu0 %v5943, 112
          %v6906 = vpop.permute.xlu0 %6905
          %6907 = vrot.lane.b32.xlu0 %v5917, 112
          %v6908 = vpop.permute.xlu0 %6907
          %6909 = vrot.lane.b32.xlu0 %v5946, 112
          %v6910 = vpop.permute.xlu0 %6909
          %6911 = vrot.lane.b32.xlu0 %v5919, 112
          %v6912 = vpop.permute.xlu0 %6911
          %6913 = vrot.lane.b32.xlu0 %v5948, 112
          %v6914 = vpop.permute.xlu0 %6913
          %vm6915 = vcmask 916480
          %v6916 = vsel %vm6915, %v6884, %v6886
          %v6917 = vsel %vm6915, %v6888, %v6890
          %v6918 = vsel %vm6915, %v6892, %v6894
          %v6919 = vsel %vm6915, %v6896, %v6898
          %v6920 = vsel %vm6915, %v6900, %v6902
          %v6921 = vsel %vm6915, %v6904, %v6906
          %v6922 = vsel %vm6915, %v6908, %v6910
          %v6923 = vsel %vm6915, %v6912, %v6914
          %v6948 = vsel %vm6915, %v6886, %v6884
          %v6949 = vsel %vm6915, %v6890, %v6888
          %v6950 = vsel %vm6915, %v6894, %v6892
          %v6951 = vsel %vm6915, %v6898, %v6896
          %v6952 = vsel %vm6915, %v6902, %v6900
          %v6953 = vsel %vm6915, %v6906, %v6904
          %v6954 = vsel %vm6915, %v6910, %v6908
          %v6955 = vsel %vm6915, %v6914, %v6912
          %v6956 = vperm.slane %v353, 7
          %v6957 = vperm.slane %v354, 7
          %v6958 = vmul.f32 %v6916, %v6956
          %v6959 = vmul.f32 %v6948, %v6957
          %v6960 = vmul.f32 %v6917, %v6956
          %v6961 = vmul.f32 %v6949, %v6957
          %v6962 = vmul.f32 %v6918, %v6956
          %v6963 = vmul.f32 %v6950, %v6957
          %v6964 = vmul.f32 %v6919, %v6956
          %v6965 = vmul.f32 %v6951, %v6957
          %v6966 = vmul.f32 %v6920, %v6956
          %v6967 = vmul.f32 %v6952, %v6957
          %v6968 = vmul.f32 %v6921, %v6956
          %v6969 = vmul.f32 %v6953, %v6957
          %v6970 = vmul.f32 %v6922, %v6956
          %v6971 = vmul.f32 %v6954, %v6957
          %v6972 = vmul.f32 %v6923, %v6956
          %v6973 = vmul.f32 %v6955, %v6957
          %6974 = vset.pattern.permute.xlu0 7
          %6975 = vperm.xlu0 %6974, %v5951
          %v6976 = vpop.permute.xlu0 %6975
          %6978 = vset.pattern.permute.xlu0 7
          %6979 = vperm.xlu0 %6978, %v5952
          %v6980 = vpop.permute.xlu0 %6979
          %6982 = vset.pattern.permute.xlu0 7
          %6983 = vperm.xlu0 %6982, %v5953
          %v6984 = vpop.permute.xlu0 %6983
          %6986 = vset.pattern.permute.xlu0 7
          %6987 = vperm.xlu0 %6986, %v5954
          %v6988 = vpop.permute.xlu0 %6987
          %6990 = vset.pattern.permute.xlu0 7
          %6991 = vperm.xlu0 %6990, %v5955
          %v6992 = vpop.permute.xlu0 %6991
          %6994 = vset.pattern.permute.xlu0 7
          %6995 = vperm.xlu0 %6994, %v5956
          %v6996 = vpop.permute.xlu0 %6995
          %6998 = vset.pattern.permute.xlu0 7
          %6999 = vperm.xlu0 %6998, %v5957
          %v7000 = vpop.permute.xlu0 %6999
          %7002 = vset.pattern.permute.xlu0 7
          %7003 = vperm.xlu0 %7002, %v5958
          %v7004 = vpop.permute.xlu0 %7003
          %v7006 = vmul.f32 %v6958, %v6976
          %v7007 = vmul.f32 %v6959, %v6976
          %v7008 = vmul.f32 %v6960, %v6980
          %v7009 = vmul.f32 %v6961, %v6980
          %v7010 = vmul.f32 %v6962, %v6984
          %v7011 = vmul.f32 %v6963, %v6984
          %v7012 = vmul.f32 %v6964, %v6988
          %v7013 = vmul.f32 %v6965, %v6988
          %v7014 = vmul.f32 %v6966, %v6992
          %v7015 = vmul.f32 %v6967, %v6992
          %v7016 = vmul.f32 %v6968, %v6996
          %v7017 = vmul.f32 %v6969, %v6996
          %v7018 = vmul.f32 %v6970, %v7000
          %v7019 = vmul.f32 %v6971, %v7000
          %v7020 = vmul.f32 %v6972, %v7004
          %v7021 = vmul.f32 %v6973, %v7004
          %7022 = vrot.lane.b32.xlu0 %v5902, 111
          %v7023 = vpop.permute.xlu0 %7022
          %7024 = vrot.lane.b32.xlu0 %v5931, 111
          %v7025 = vpop.permute.xlu0 %7024
          %7026 = vrot.lane.b32.xlu0 %v5904, 111
          %v7027 = vpop.permute.xlu0 %7026
          %7028 = vrot.lane.b32.xlu0 %v5933, 111
          %v7029 = vpop.permute.xlu0 %7028
          %7030 = vrot.lane.b32.xlu0 %v5907, 111
          %v7031 = vpop.permute.xlu0 %7030
          %7032 = vrot.lane.b32.xlu0 %v5936, 111
          %v7033 = vpop.permute.xlu0 %7032
          %7034 = vrot.lane.b32.xlu0 %v5909, 111
          %v7035 = vpop.permute.xlu0 %7034
          %7036 = vrot.lane.b32.xlu0 %v5938, 111
          %v7037 = vpop.permute.xlu0 %7036
          %7038 = vrot.lane.b32.xlu0 %v5912, 111
          %v7039 = vpop.permute.xlu0 %7038
          %7040 = vrot.lane.b32.xlu0 %v5941, 111
          %v7041 = vpop.permute.xlu0 %7040
          %7042 = vrot.lane.b32.xlu0 %v5914, 111
          %v7043 = vpop.permute.xlu0 %7042
          %7044 = vrot.lane.b32.xlu0 %v5943, 111
          %v7045 = vpop.permute.xlu0 %7044
          %7046 = vrot.lane.b32.xlu0 %v5917, 111
          %v7047 = vpop.permute.xlu0 %7046
          %7048 = vrot.lane.b32.xlu0 %v5946, 111
          %v7049 = vpop.permute.xlu0 %7048
          %7050 = vrot.lane.b32.xlu0 %v5919, 111
          %v7051 = vpop.permute.xlu0 %7050
          %7052 = vrot.lane.b32.xlu0 %v5948, 111
          %v7053 = vpop.permute.xlu0 %7052
          %vm7054 = vcmask 908288
          %v7055 = vsel %vm7054, %v7023, %v7025
          %v7056 = vsel %vm7054, %v7027, %v7029
          %v7057 = vsel %vm7054, %v7031, %v7033
          %v7058 = vsel %vm7054, %v7035, %v7037
          %v7059 = vsel %vm7054, %v7039, %v7041
          %v7060 = vsel %vm7054, %v7043, %v7045
          %v7061 = vsel %vm7054, %v7047, %v7049
          %v7062 = vsel %vm7054, %v7051, %v7053
          %v7087 = vsel %vm7054, %v7025, %v7023
          %v7088 = vsel %vm7054, %v7029, %v7027
          %v7089 = vsel %vm7054, %v7033, %v7031
          %v7090 = vsel %vm7054, %v7037, %v7035
          %v7091 = vsel %vm7054, %v7041, %v7039
          %v7092 = vsel %vm7054, %v7045, %v7043
          %v7093 = vsel %vm7054, %v7049, %v7047
          %v7094 = vsel %vm7054, %v7053, %v7051
          %v7095 = vperm.slane %v355, 0
          %v7096 = vperm.slane %v356, 0
          %v7097 = vmul.f32 %v7055, %v7095
          %v7098 = vmul.f32 %v7087, %v7096
          %v7099 = vmul.f32 %v7056, %v7095
          %v7100 = vmul.f32 %v7088, %v7096
          %v7101 = vmul.f32 %v7057, %v7095
          %v7102 = vmul.f32 %v7089, %v7096
          %v7103 = vmul.f32 %v7058, %v7095
          %v7104 = vmul.f32 %v7090, %v7096
          %v7105 = vmul.f32 %v7059, %v7095
          %v7106 = vmul.f32 %v7091, %v7096
          %v7107 = vmul.f32 %v7060, %v7095
          %v7108 = vmul.f32 %v7092, %v7096
          %v7109 = vmul.f32 %v7061, %v7095
          %v7110 = vmul.f32 %v7093, %v7096
          %v7111 = vmul.f32 %v7062, %v7095
          %v7112 = vmul.f32 %v7094, %v7096
          %7113 = vset.pattern.permute.xlu0 8
          %7114 = vperm.xlu0 %7113, %v5951
          %v7115 = vpop.permute.xlu0 %7114
          %7117 = vset.pattern.permute.xlu0 8
          %7118 = vperm.xlu0 %7117, %v5952
          %v7119 = vpop.permute.xlu0 %7118
          %7121 = vset.pattern.permute.xlu0 8
          %7122 = vperm.xlu0 %7121, %v5953
          %v7123 = vpop.permute.xlu0 %7122
          %7125 = vset.pattern.permute.xlu0 8
          %7126 = vperm.xlu0 %7125, %v5954
          %v7127 = vpop.permute.xlu0 %7126
          %7129 = vset.pattern.permute.xlu0 8
          %7130 = vperm.xlu0 %7129, %v5955
          %v7131 = vpop.permute.xlu0 %7130
          %7133 = vset.pattern.permute.xlu0 8
          %7134 = vperm.xlu0 %7133, %v5956
          %v7135 = vpop.permute.xlu0 %7134
          %7137 = vset.pattern.permute.xlu0 8
          %7138 = vperm.xlu0 %7137, %v5957
          %v7139 = vpop.permute.xlu0 %7138
          %7141 = vset.pattern.permute.xlu0 8
          %7142 = vperm.xlu0 %7141, %v5958
          %v7143 = vpop.permute.xlu0 %7142
          %v7145 = vmul.f32 %v7097, %v7115
          %v7146 = vmul.f32 %v7098, %v7115
          %v7147 = vmul.f32 %v7099, %v7119
          %v7148 = vmul.f32 %v7100, %v7119
          %v7149 = vmul.f32 %v7101, %v7123
          %v7150 = vmul.f32 %v7102, %v7123
          %v7151 = vmul.f32 %v7103, %v7127
          %v7152 = vmul.f32 %v7104, %v7127
          %v7153 = vmul.f32 %v7105, %v7131
          %v7154 = vmul.f32 %v7106, %v7131
          %v7155 = vmul.f32 %v7107, %v7135
          %v7156 = vmul.f32 %v7108, %v7135
          %v7157 = vmul.f32 %v7109, %v7139
          %v7158 = vmul.f32 %v7110, %v7139
          %v7159 = vmul.f32 %v7111, %v7143
          %v7160 = vmul.f32 %v7112, %v7143
          %v7161 = vadd.f32 %v6106, %v6245
          %v7162 = vadd.f32 %v6107, %v6246
          %v7163 = vadd.f32 %v6108, %v6247
          %v7164 = vadd.f32 %v6109, %v6248
          %v7165 = vadd.f32 %v6110, %v6249
          %v7166 = vadd.f32 %v6111, %v6250
          %v7167 = vadd.f32 %v6112, %v6251
          %v7168 = vadd.f32 %v6113, %v6252
          %v7169 = vadd.f32 %v6114, %v6253
          %v7170 = vadd.f32 %v6115, %v6254
          %v7171 = vadd.f32 %v6116, %v6255
          %v7172 = vadd.f32 %v6117, %v6256
          %v7173 = vadd.f32 %v6118, %v6257
          %v7174 = vadd.f32 %v6119, %v6258
          %v7175 = vadd.f32 %v6120, %v6259
          %v7176 = vadd.f32 %v6121, %v6260
          %v7177 = vadd.f32 %v6384, %v6523
          %v7178 = vadd.f32 %v6385, %v6524
          %v7179 = vadd.f32 %v6386, %v6525
          %v7180 = vadd.f32 %v6387, %v6526
          %v7181 = vadd.f32 %v6388, %v6527
          %v7182 = vadd.f32 %v6389, %v6528
          %v7183 = vadd.f32 %v6390, %v6529
          %v7184 = vadd.f32 %v6391, %v6530
          %v7185 = vadd.f32 %v6392, %v6531
          %v7186 = vadd.f32 %v6393, %v6532
          %v7187 = vadd.f32 %v6394, %v6533
          %v7188 = vadd.f32 %v6395, %v6534
          %v7189 = vadd.f32 %v6396, %v6535
          %v7190 = vadd.f32 %v6397, %v6536
          %v7191 = vadd.f32 %v6398, %v6537
          %v7192 = vadd.f32 %v6399, %v6538
          %v7193 = vadd.f32 %v6589, %v6728
          %v7194 = vadd.f32 %v6590, %v6729
          %v7195 = vadd.f32 %v6591, %v6730
          %v7196 = vadd.f32 %v6592, %v6731
          %v7197 = vadd.f32 %v6593, %v6732
          %v7198 = vadd.f32 %v6594, %v6733
          %v7199 = vadd.f32 %v6595, %v6734
          %v7200 = vadd.f32 %v6596, %v6735
          %v7201 = vadd.f32 %v6597, %v6736
          %v7202 = vadd.f32 %v6598, %v6737
          %v7203 = vadd.f32 %v6599, %v6738
          %v7204 = vadd.f32 %v6600, %v6739
          %v7205 = vadd.f32 %v6601, %v6740
          %v7206 = vadd.f32 %v6602, %v6741
          %v7207 = vadd.f32 %v6603, %v6742
          %v7208 = vadd.f32 %v6604, %v6743
          %v7209 = vadd.f32 %v6867, %v7006
          %v7210 = vadd.f32 %v6868, %v7007
          %v7211 = vadd.f32 %v6869, %v7008
          %v7212 = vadd.f32 %v6870, %v7009
          %v7213 = vadd.f32 %v6871, %v7010
          %v7214 = vadd.f32 %v6872, %v7011
          %v7215 = vadd.f32 %v6873, %v7012
          %v7216 = vadd.f32 %v6874, %v7013
          %v7217 = vadd.f32 %v6875, %v7014
          %v7218 = vadd.f32 %v6876, %v7015
          %v7219 = vadd.f32 %v6877, %v7016
          %v7220 = vadd.f32 %v6878, %v7017
          %v7221 = vadd.f32 %v6879, %v7018
          %v7222 = vadd.f32 %v6880, %v7019
          %v7223 = vadd.f32 %v6881, %v7020
          %v7224 = vadd.f32 %v6882, %v7021
          %v7225 = vadd.f32 %v7161, %v7177
          %v7226 = vadd.f32 %v7162, %v7178
          %v7227 = vadd.f32 %v7163, %v7179
          %v7228 = vadd.f32 %v7164, %v7180
          %v7229 = vadd.f32 %v7165, %v7181
          %v7230 = vadd.f32 %v7166, %v7182
          %v7231 = vadd.f32 %v7167, %v7183
          %v7232 = vadd.f32 %v7168, %v7184
          %v7233 = vadd.f32 %v7169, %v7185
          %v7234 = vadd.f32 %v7170, %v7186
          %v7235 = vadd.f32 %v7171, %v7187
          %v7236 = vadd.f32 %v7172, %v7188
          %v7237 = vadd.f32 %v7173, %v7189
          %v7238 = vadd.f32 %v7174, %v7190
          %v7239 = vadd.f32 %v7175, %v7191
          %v7240 = vadd.f32 %v7176, %v7192
          %v7241 = vadd.f32 %v7193, %v7209
          %v7242 = vadd.f32 %v7194, %v7210
          %v7243 = vadd.f32 %v7195, %v7211
          %v7244 = vadd.f32 %v7196, %v7212
          %v7245 = vadd.f32 %v7197, %v7213
          %v7246 = vadd.f32 %v7198, %v7214
          %v7247 = vadd.f32 %v7199, %v7215
          %v7248 = vadd.f32 %v7200, %v7216
          %v7249 = vadd.f32 %v7201, %v7217
          %v7250 = vadd.f32 %v7202, %v7218
          %v7251 = vadd.f32 %v7203, %v7219
          %v7252 = vadd.f32 %v7204, %v7220
          %v7253 = vadd.f32 %v7205, %v7221
          %v7254 = vadd.f32 %v7206, %v7222
          %v7255 = vadd.f32 %v7207, %v7223
          %v7256 = vadd.f32 %v7208, %v7224
          %v7257 = vadd.f32 %v7225, %v7241
          %v7258 = vadd.f32 %v7226, %v7242
          %v7259 = vadd.f32 %v7227, %v7243
          %v7260 = vadd.f32 %v7228, %v7244
          %v7261 = vadd.f32 %v7229, %v7245
          %v7262 = vadd.f32 %v7230, %v7246
          %v7263 = vadd.f32 %v7231, %v7247
          %v7264 = vadd.f32 %v7232, %v7248
          %v7265 = vadd.f32 %v7233, %v7249
          %v7266 = vadd.f32 %v7234, %v7250
          %v7267 = vadd.f32 %v7235, %v7251
          %v7268 = vadd.f32 %v7236, %v7252
          %v7269 = vadd.f32 %v7237, %v7253
          %v7270 = vadd.f32 %v7238, %v7254
          %v7271 = vadd.f32 %v7239, %v7255
          %v7272 = vadd.f32 %v7240, %v7256
          %v7273 = vadd.f32 %v7257, %v7145
          %v7274 = vadd.f32 %v7258, %v7146
          %v7275 = vadd.f32 %v7259, %v7147
          %v7276 = vadd.f32 %v7260, %v7148
          %v7277 = vadd.f32 %v7261, %v7149
          %v7278 = vadd.f32 %v7262, %v7150
          %v7279 = vadd.f32 %v7263, %v7151
          %v7280 = vadd.f32 %v7264, %v7152
          %v7281 = vadd.f32 %v7265, %v7153
          %v7282 = vadd.f32 %v7266, %v7154
          %v7283 = vadd.f32 %v7267, %v7155
          %v7284 = vadd.f32 %v7268, %v7156
          %v7285 = vadd.f32 %v7269, %v7157
          %v7286 = vadd.f32 %v7270, %v7158
          %v7287 = vadd.f32 %v7271, %v7159
          %v7288 = vadd.f32 %v7272, %v7160
          %s7289 = scalar_lea.vmem %s4, 64
          %v7290 = vld [vmem:[%s7289] sm:$0xf]
          %v7291 = vld [vmem:[%s7289 + $0x4] sm:$0xf]
          %v7292 = vld [vmem:[%s7289 + $0x8] sm:$0xf]
          %v7293 = vld [vmem:[%s7289 + $0xc] sm:$0xf]
          %v7294 = vld [vmem:[%s7289 + $0x10] sm:$0xf]
          %v7295 = vld [vmem:[%s7289 + $0x14] sm:$0xf]
          %v7296 = vld [vmem:[%s7289 + $0x18] sm:$0xf]
          %v7297 = vld [vmem:[%s7289 + $0x1c] sm:$0xf]
          %v7298 = vunpack.c.l.bf16 %v7290
          %v7299 = vunpack.c.l.bf16 %v7291
          %v7300 = vunpack.c.l.bf16 %v7292
          %v7301 = vunpack.c.l.bf16 %v7293
          %v7302 = vunpack.c.l.bf16 %v7294
          %v7303 = vunpack.c.l.bf16 %v7295
          %v7304 = vunpack.c.l.bf16 %v7296
          %v7305 = vunpack.c.l.bf16 %v7297
          %s7306 = sld [smem:[#allocation2 + %s5087]]
          %v7307 = vstv %s7306
          %v7308 = vmul.f32 %v7298, %v7307
          %v7309 = vmul.f32 %v7299, %v7307
          %v7310 = vmul.f32 %v7300, %v7307
          %v7311 = vmul.f32 %v7301, %v7307
          %v7312 = vmul.f32 %v7302, %v7307
          %v7313 = vmul.f32 %v7303, %v7307
          %v7314 = vmul.f32 %v7304, %v7307
          %v7315 = vmul.f32 %v7305, %v7307
          %v7316 = vpack.c.bf16 %v7309, %v7308
          %v7317 = vpack.c.bf16 %v7311, %v7310
          %v7318 = vpack.c.bf16 %v7313, %v7312
          %v7319 = vpack.c.bf16 %v7315, %v7314
          %v7320 = vld [vmem:[%s319] sm:$0xff]
          %v7321 = vld [vmem:[%s319 + $0x8] sm:$0xff]
          %v7322 = vld [vmem:[%s319 + $0x10] sm:$0xff]
          %v7323 = vld [vmem:[%s319 + $0x18] sm:$0xff]
          %v7324 = vld [vmem:[%s319 + $0x20] sm:$0xff]
          %v7325 = vld [vmem:[%s319 + $0x28] sm:$0xff]
          %v7326 = vld [vmem:[%s319 + $0x30] sm:$0xff]
          %v7327 = vld [vmem:[%s319 + $0x38] sm:$0xff]
          %v7328 = vld [vmem:[%s319 + $0x40] sm:$0xff]
          %v7329 = vld [vmem:[%s319 + $0x48] sm:$0xff]
          %v7330 = vld [vmem:[%s319 + $0x50] sm:$0xff]
          %v7331 = vld [vmem:[%s319 + $0x58] sm:$0xff]
          %v7332 = vld [vmem:[%s319 + $0x60] sm:$0xff]
          %v7333 = vld [vmem:[%s319 + $0x68] sm:$0xff]
          %v7334 = vld [vmem:[%s319 + $0x70] sm:$0xff]
          %v7335 = vld [vmem:[%s319 + $0x78] sm:$0xff]
          %v7336 = vpack.c.bf16 %v7275, %v7273
          %v7337 = vpack.c.bf16 %v7276, %v7274
          %v7338 = vpack.c.bf16 %v7279, %v7277
          %v7339 = vpack.c.bf16 %v7280, %v7278
          %v7340 = vpack.c.bf16 %v7283, %v7281
          %v7341 = vpack.c.bf16 %v7284, %v7282
          %v7342 = vpack.c.bf16 %v7287, %v7285
          %v7343 = vpack.c.bf16 %v7288, %v7286
          %v7345 = vsel %vm5178, %v7316, 0
          %v7348 = vsel %vm5178, %v7317, 0
          %v7351 = vsel %vm5178, %v7318, 0
          %v7354 = vsel %vm5178, %v7319, 0
          %7356 = vmatpush.bf16.msra.mxu0 0
          %7357 = vmatpush.bf16.msra.mxu0 0
          %7358 = vmatpush.bf16.msra.mxu0 0
          %7359 = vmatpush.bf16.msra.mxu0 0
          %7360 = vmatpush.bf16.msra.mxu0 %v7342
          %7361 = vmatpush.bf16.msra.mxu0 %v7340
          %7362 = vmatpush.bf16.msra.mxu0 %v7338
          %7363 = vmatpush.bf16.msra.mxu0 %v7336
          %7364 = vmatmul.bf16.gmra.mxu0 %v7345
          %v7365 = vpop.f32.mrf.mxu0
          %v7366 = vadd.f32 0.0, %v7365
          %v7367 = vpop.f32.mrf.mxu0
          %v7368 = vadd.f32 0.0, %v7367
          %7369 = vmatmul.bf16.gmra.mxu0 %v7348
          %v7370 = vpop.f32.mrf.mxu0
          %v7371 = vadd.f32 0.0, %v7370
          %v7372 = vpop.f32.mrf.mxu0
          %v7373 = vadd.f32 0.0, %v7372
          %7374 = vmatmul.bf16.gmra.mxu0 %v7351
          %v7375 = vpop.f32.mrf.mxu0
          %v7376 = vadd.f32 0.0, %v7375
          %v7377 = vpop.f32.mrf.mxu0
          %v7378 = vadd.f32 0.0, %v7377
          %7379 = vmatmul.bf16.gmra.mxu0 %v7354
          %v7380 = vpop.f32.mrf.mxu0
          %v7381 = vadd.f32 0.0, %v7380
          %v7382 = vpop.f32.mrf.mxu0
          %v7383 = vadd.f32 0.0, %v7382
          %7384 = vdwg.mxu0
          %7385 = vmatpush.bf16.msra.mxu0 0
          %7386 = vmatpush.bf16.msra.mxu0 0
          %7387 = vmatpush.bf16.msra.mxu0 0
          %7388 = vmatpush.bf16.msra.mxu0 0
          %7389 = vmatpush.bf16.msra.mxu0 %v7343
          %7390 = vmatpush.bf16.msra.mxu0 %v7341
          %7391 = vmatpush.bf16.msra.mxu0 %v7339
          %7392 = vmatpush.bf16.msra.mxu0 %v7337
          %7393 = vmatmul.bf16.gmra.mxu0 %v7345
          %v7394 = vpop.f32.mrf.mxu0
          %v7395 = vadd.f32 0.0, %v7394
          %v7396 = vpop.f32.mrf.mxu0
          %v7397 = vadd.f32 0.0, %v7396
          %7398 = vmatmul.bf16.gmra.mxu0 %v7348
          %v7399 = vpop.f32.mrf.mxu0
          %v7400 = vadd.f32 0.0, %v7399
          %v7401 = vpop.f32.mrf.mxu0
          %v7402 = vadd.f32 0.0, %v7401
          %7403 = vmatmul.bf16.gmra.mxu0 %v7351
          %v7404 = vpop.f32.mrf.mxu0
          %v7405 = vadd.f32 0.0, %v7404
          %v7406 = vpop.f32.mrf.mxu0
          %v7407 = vadd.f32 0.0, %v7406
          %7408 = vmatmul.bf16.gmra.mxu0 %v7354
          %v7409 = vpop.f32.mrf.mxu0
          %v7410 = vadd.f32 0.0, %v7409
          %v7411 = vpop.f32.mrf.mxu0
          %v7412 = vadd.f32 0.0, %v7411
          %7413 = vdwg.mxu0
          %v7414 = vadd.f32 %v7320, %v7366
          %v7415 = vadd.f32 %v7321, %v7395
          %v7416 = vadd.f32 %v7322, %v7368
          %v7417 = vadd.f32 %v7323, %v7397
          %v7418 = vadd.f32 %v7324, %v7371
          %v7419 = vadd.f32 %v7325, %v7400
          %v7420 = vadd.f32 %v7326, %v7373
          %v7421 = vadd.f32 %v7327, %v7402
          %v7422 = vadd.f32 %v7328, %v7376
          %v7423 = vadd.f32 %v7329, %v7405
          %v7424 = vadd.f32 %v7330, %v7378
          %v7425 = vadd.f32 %v7331, %v7407
          %v7426 = vadd.f32 %v7332, %v7381
          %v7427 = vadd.f32 %v7333, %v7410
          %v7428 = vadd.f32 %v7334, %v7383
          %v7429 = vadd.f32 %v7335, %v7412
          %7430 = vst [vmem:[%s319] sm:$0xff] %v7414
          %7431 = vst [vmem:[%s319 + $0x8] sm:$0xff] %v7415
          %7432 = vst [vmem:[%s319 + $0x10] sm:$0xff] %v7416
          %7433 = vst [vmem:[%s319 + $0x18] sm:$0xff] %v7417
          %7434 = vst [vmem:[%s319 + $0x20] sm:$0xff] %v7418
          %7435 = vst [vmem:[%s319 + $0x28] sm:$0xff] %v7419
          %7436 = vst [vmem:[%s319 + $0x30] sm:$0xff] %v7420
          %7437 = vst [vmem:[%s319 + $0x38] sm:$0xff] %v7421
          %7438 = vst [vmem:[%s319 + $0x40] sm:$0xff] %v7422
          %7439 = vst [vmem:[%s319 + $0x48] sm:$0xff] %v7423
          %7440 = vst [vmem:[%s319 + $0x50] sm:$0xff] %v7424
          %7441 = vst [vmem:[%s319 + $0x58] sm:$0xff] %v7425
          %7442 = vst [vmem:[%s319 + $0x60] sm:$0xff] %v7426
          %7443 = vst [vmem:[%s319 + $0x68] sm:$0xff] %v7427
          %7444 = vst [vmem:[%s319 + $0x70] sm:$0xff] %v7428
          %7445 = vst [vmem:[%s319 + $0x78] sm:$0xff] %v7429
        $region68: #{attention_bank_forward.1} parent=51 // pred_fallthru
          _
        %p7446 = scmp.lt.s32.totalorder %s20, 1
        %s7447 = scalar_select %p7446, %s20, 1
        %s7448 = smul.addr %s7447, 16
        %s7449 = smul.addr %s7448, 8
        %s7450 = scalar_lea.vmem %s8, %s7449
        // Predicated region
        $region69: #{attention_bank_forward.1} parent=51 // pred_check
          %p7451 = pneg %p211
        $region70: #{attention_bank_forward.1} parent=51 // pred_check_branch
          %7453 = sbr.rel (%p7451) target = $region72
        $region71: #{attention_bank_forward.1} parent=51 // pred_region
          _
        $region72: #{attention_bank_forward.1} parent=51 // pred_fallthru
          _
      $region52: #{attention_bank_forward.1} parent=5 // pred_fallthru
        _
      %p7454 = scmp.le.s32.totalorder 2, %s15
      // Predicated region
      $region73: #{attention_bank_forward.1} parent=5 // pred_check
        %p7455 = pneg %p7454
      $region74: #{attention_bank_forward.1} parent=5 // pred_check_branch
        %7457 = sbr.rel (%p7455) target = $region76
      $region75: #{attention_bank_forward.1} parent=5 // pred_region
        %s7458 = ssub.s32 %s15, 2
        // Predicated region
        $region77: #{attention_bank_forward.1} parent=75 // pred_check
          %p7459 = pneg %p217
        $region78: #{attention_bank_forward.1} parent=75 // pred_check_branch
          %7461 = sbr.rel (%p7459) target = $region80
        $region79: #{attention_bank_forward.1} parent=75 // pred_region
          %p7462 = scmp.lt.s32.totalorder %s21, 1
          %s7463 = scalar_select %p7462, %s21, 1
          %s7464 = smul.addr %s7463, 16
          %s7465 = smul.addr %s7464, 8
          %s7466 = scalar_lea.vmem %s8, %s7465
        $region80: #{attention_bank_forward.1} parent=75 // pred_fallthru
          _
      $region76: #{attention_bank_forward.1} parent=5 // pred_fallthru
        _
    $region6: #{attention_bank_forward.1} parent=1 // loop_footer
      %s19 = sadd.s32 1, %s15
    $region7: #{attention_bank_forward.1} parent=1 // loop_footer_branch
      %14 = sbr.rel target = $region3
    $region8: #{attention_bank_forward.1} parent=1 // loop_exit
      _
    %7467 = vsyncpa [#allocation3], 1
    %s7468 = scalar_lea.sflag [#allocation3], 1
    %7469 = vsyncpa %s7468, 1

</llo_original>
